<compile_context>
chip_gen: v6e
topology: v6e:2x2x1
jax: 0.10.0
libtpu: 0.0.40
codegen_flags: <defaults>
</compile_context>

<pallas_src>
import functools

import jax
import jax.numpy as jnp
from jax.experimental import pallas as pl
from jax.experimental.pallas import tpu as pltpu


# (cin, cout) per conv layer -- matches nn.Conv2d(1,4,3,1,1) ... Conv2d(4,1,3,1,1)
LAYERS = ((1, 4), (4, 4), (4, 4), (4, 1))


def _layer_offsets():
    """Flat offsets of each layer's weight / bias in the packed param vector."""
    offs = []
    off = 0
    for cin, cout in LAYERS:
        w_off = off
        off += cout * cin * 9
        b_off = off
        off += cout
        offs.append((w_off, b_off, cin, cout))
    return tuple(offs), off


def _pack_params(params):
    flat = []
    for w, b in params:
        flat.append(w.reshape(-1).astype(jnp.float32))   # (cout, cin, 3, 3) row-major
        flat.append(b.reshape(-1).astype(jnp.float32))
    return jnp.concatenate(flat)


# ------------------------------ Pallas kernel ------------------------------

def _fused_conv_stack_kernel(params_ref, x_ref, o_ref, buf_a, buf_b, *, H, W, offsets):
    # params_ref : SMEM f32[total_params]    (all conv weights + biases, flat)
    # x_ref      : VMEM f32[cin0, H, W]      (unpadded input, one sample)
    # o_ref      : VMEM f32[cout_last, H, W]
    # buf_a/buf_b: VMEM f32[4, H+2, W+2]     (ping-pong padded activation planes)

    def zero_pad1(v):
        # (H, W) value -> (H+2, W+2) value with a zero border (concat only:
        # avoids unaligned sub-window stores and lax.pad inside the kernel).
        zc = jnp.zeros((H, 1), v.dtype)
        v2 = jnp.concatenate([zc, v, zc], axis=1)          # (H, W+2)
        zr = jnp.zeros((1, W + 2), v.dtype)
        return jnp.concatenate([zr, v2, zr], axis=0)       # (H+2, W+2)

    def conv3x3(read_plane, write_plane, w_off, b_off, cin, cout):
        # Shift-and-MAC 3x3 "same" convolution over padded planes.  All loop
        # bounds are static -> fully unrolled, LLO schedules scalar loads and
        # VPU MACs together.
        accs = [jnp.broadcast_to(params_ref[b_off + co], (H, W)) for co in range(cout)]
        for ci in range(cin):
            plane = read_plane(ci)                          # (H+2, W+2) value
            for dy in range(3):
                for dx in range(3):
                    win = plane[dy:dy + H, dx:dx + W]       # static value slice
                    base = w_off + ci * 9 + dy * 3 + dx
                    for co in range(cout):
                        accs[co] = accs[co] + params_ref[base + co * cin * 9] * win
        for co in range(cout):
            write_plane(co, accs[co])

    def read_x(ci):
        # Pad the raw input plane in-register (pad=1 for the first conv).
        return zero_pad1(x_ref[ci])

    def read_a(ci):
        return buf_a[ci]

    def read_b(ci):
        return buf_b[ci]

    def write_a(co, v):
        buf_a[co] = zero_pad1(v)

    def write_b(co, v):
        buf_b[co] = zero_pad1(v)

    def write_o(co, v):
        o_ref[co] = v

    readers = (read_x, read_a, read_b, read_a)
    writers = (write_a, write_b, write_a, write_o)
    for (w_off, b_off, cin, cout), rd, wr in zip(offsets, readers, writers):
        conv3x3(rd, wr, w_off, b_off, cin, cout)


# -------------------------------- wrapper ----------------------------------

def transformer_forward(x_nchw, params):
    """x_nchw: (B, 1, H, W) float32 -> (B, 1, H, W) float32."""
    B, cin0, H, W = x_nchw.shape
    assert cin0 == LAYERS[0][0]
    cout_last = LAYERS[-1][1]
    offsets, n_params = _layer_offsets()

    flat_params = _pack_params(params)
    assert flat_params.shape == (n_params,)

    Hp, Wp = H + 2, W + 2
    max_c = max(cout for _, cout in LAYERS)

    kernel = functools.partial(_fused_conv_stack_kernel, H=H, W=W, offsets=offsets)

    return pl.pallas_call(
        kernel,
        out_shape=jax.ShapeDtypeStruct((B, cout_last, H, W), jnp.float32),
        grid=(B,),
        in_specs=[
            # Packed weights/biases: tiny, scalar-read -> SMEM, resident for all steps.
            pl.BlockSpec(memory_space=pltpu.MemorySpace.SMEM),
            # One (unpadded) input sample per grid step (batch dim squeezed out).
            pl.BlockSpec((None, cin0, H, W), lambda b: (b, 0, 0, 0)),
        ],
        out_specs=pl.BlockSpec((None, cout_last, H, W), lambda b: (b, 0, 0, 0)),
        scratch_shapes=[
            pltpu.VMEM((max_c, Hp, Wp), jnp.float32),   # ping
            pltpu.VMEM((max_c, Hp, Wp), jnp.float32),   # pong
        ],
        compiler_params=pltpu.CompilerParams(
            # Batch axis is independent -> shard across TensorCores on v7x.
            dimension_semantics=("parallel",),
        ),
    )(flat_params, x_nchw.astype(jnp.float32))


# --------------------------- reference / params -----------------------------

def _init_params(key):
    params = []
    keys = jax.random.split(key, 2 * len(LAYERS))
    for i, (cin, cout) in enumerate(LAYERS):
        w = jax.random.normal(keys[2 * i], (cout, cin, 3, 3), jnp.float32) / jnp.sqrt(9.0 * cin)
        b = 0.1 * jax.random.normal(keys[2 * i + 1], (cout,), jnp.float32)
        params.append((w, b))
    return params


def _reference_forward(x, params):
    out = x.astype(jnp.float32)
    for w, b in params:
        out = jax.lax.conv_general_dilated(
            out, w, window_strides=(1, 1), padding=((1, 1), (1, 1)),
            dimension_numbers=("NCHW", "OIHW", "NCHW"),
            precision=jax.lax.Precision.HIGHEST,
        ) + b.reshape(1, -1, 1, 1)
    return out


# ----------------------------------- main -----------------------------------

if __name__ == "__main__":
    key = jax.random.PRNGKey(0)
    k_in, k_par = jax.random.split(key)

    batch, in_channels, H, W = 2, 1, 16, 16
    x = jax.random.normal(k_in, (batch, in_channels, H, W), jnp.float32)
    params = _init_params(k_par)

    out = transformer_forward(x, params)
    out = jax.block_until_ready(out)

    assert out.shape == (batch, 1, H, W)

    ref = _reference_forward(x, params)
    max_err = float(jnp.max(jnp.abs(out - ref)))
    assert max_err < 1e-3, f"kernel/reference mismatch: {max_err}"

    print("KERNEL_OK")
</pallas_src>

<mosaic_0001>
module attributes {stable_mosaic.version = 11 : i64} {
  func.func @_fused_conv_stack_kernel(%arg0: i32, %arg1: memref<373xf32, #tpu.memory_space<smem>>, %arg2: memref<1x1x16x16xf32, #tpu.memory_space<vmem>>, %arg3: memref<1x1x16x16xf32, #tpu.memory_space<vmem>>, %arg4: memref<4x18x18xf32, #tpu.memory_space<vmem>>, %arg5: memref<4x18x18xf32, #tpu.memory_space<vmem>>) attributes {dimension_semantics = [#tpu.dimension_semantics<parallel>], iteration_bounds = array<i64: 2>, scalar_prefetch = 0 : i64, scratch_operands = 2 : i64, tpu.core_type = #tpu.core_type<tc>, window_params = [{transform_indices = @transform_0, window_bounds = array<i64: 373>}, {transform_indices = @transform_1, window_bounds = array<i64: 1, 1, 16, 16>}, {transform_indices = @transform_2, window_bounds = array<i64: 1, 1, 16, 16>}]} {
    %c36 = arith.constant 36 : index
    %0 = memref.load %arg1[%c36] : memref<373xf32, #tpu.memory_space<smem>>
    %1 = vector.broadcast %0 : f32 to vector<16x16xf32>
    %c37 = arith.constant 37 : index
    %2 = memref.load %arg1[%c37] : memref<373xf32, #tpu.memory_space<smem>>
    %3 = vector.broadcast %2 : f32 to vector<16x16xf32>
    %c38 = arith.constant 38 : index
    %4 = memref.load %arg1[%c38] : memref<373xf32, #tpu.memory_space<smem>>
    %5 = vector.broadcast %4 : f32 to vector<16x16xf32>
    %c39 = arith.constant 39 : index
    %6 = memref.load %arg1[%c39] : memref<373xf32, #tpu.memory_space<smem>>
    %7 = vector.broadcast %6 : f32 to vector<16x16xf32>
    %c0 = arith.constant 0 : index
    %c0_0 = arith.constant 0 : index
    %c0_1 = arith.constant 0 : index
    %c0_2 = arith.constant 0 : index
    %8 = vector.load %arg2[%c0, %c0_0, %c0_1, %c0_2] : memref<1x1x16x16xf32, #tpu.memory_space<vmem>>, vector<1x1x16x16xf32>
    %9 = vector.shape_cast %8 : vector<1x1x16x16xf32> to vector<16x16xf32>
    %cst = arith.constant 0.000000e+00 : f32
    %10 = vector.broadcast %cst : f32 to vector<16x1xf32>
    %11 = tpu.concatenate %10, %9, %10 in 1 : vector<16x1xf32>, vector<16x16xf32>, vector<16x1xf32> -> vector<16x18xf32>
    %cst_3 = arith.constant 0.000000e+00 : f32
    %12 = vector.broadcast %cst_3 : f32 to vector<1x18xf32>
    %13 = tpu.concatenate %12, %11, %12 in 0 : vector<1x18xf32>, vector<16x18xf32>, vector<1x18xf32> -> vector<18x18xf32>
    %14 = vector.extract_strided_slice %13 {offsets = [0, 0], sizes = [16, 16], strides = [1, 1]} : vector<18x18xf32> to vector<16x16xf32>
    %c0_4 = arith.constant 0 : index
    %15 = memref.load %arg1[%c0_4] : memref<373xf32, #tpu.memory_space<smem>>
    %16 = vector.broadcast %15 : f32 to vector<16x16xf32>
    %17 = arith.mulf %16, %14 : vector<16x16xf32>
    %18 = arith.addf %1, %17 : vector<16x16xf32>
    %c9 = arith.constant 9 : index
    %19 = memref.load %arg1[%c9] : memref<373xf32, #tpu.memory_space<smem>>
    %20 = vector.broadcast %19 : f32 to vector<16x16xf32>
    %21 = arith.mulf %20, %14 : vector<16x16xf32>
    %22 = arith.addf %3, %21 : vector<16x16xf32>
    %c18 = arith.constant 18 : index
    %23 = memref.load %arg1[%c18] : memref<373xf32, #tpu.memory_space<smem>>
    %24 = vector.broadcast %23 : f32 to vector<16x16xf32>
    %25 = arith.mulf %24, %14 : vector<16x16xf32>
    %26 = arith.addf %5, %25 : vector<16x16xf32>
    %c27 = arith.constant 27 : index
    %27 = memref.load %arg1[%c27] : memref<373xf32, #tpu.memory_space<smem>>
    %28 = vector.broadcast %27 : f32 to vector<16x16xf32>
    %29 = arith.mulf %28, %14 : vector<16x16xf32>
    %30 = arith.addf %7, %29 : vector<16x16xf32>
    %31 = vector.extract_strided_slice %13 {offsets = [0, 1], sizes = [16, 16], strides = [1, 1]} : vector<18x18xf32> to vector<16x16xf32>
    %c1 = arith.constant 1 : index
    %32 = memref.load %arg1[%c1] : memref<373xf32, #tpu.memory_space<smem>>
    %33 = vector.broadcast %32 : f32 to vector<16x16xf32>
    %34 = arith.mulf %33, %31 : vector<16x16xf32>
    %35 = arith.addf %18, %34 : vector<16x16xf32>
    %c10 = arith.constant 10 : index
    %36 = memref.load %arg1[%c10] : memref<373xf32, #tpu.memory_space<smem>>
    %37 = vector.broadcast %36 : f32 to vector<16x16xf32>
    %38 = arith.mulf %37, %31 : vector<16x16xf32>
    %39 = arith.addf %22, %38 : vector<16x16xf32>
    %c19 = arith.constant 19 : index
    %40 = memref.load %arg1[%c19] : memref<373xf32, #tpu.memory_space<smem>>
    %41 = vector.broadcast %40 : f32 to vector<16x16xf32>
    %42 = arith.mulf %41, %31 : vector<16x16xf32>
    %43 = arith.addf %26, %42 : vector<16x16xf32>
    %c28 = arith.constant 28 : index
    %44 = memref.load %arg1[%c28] : memref<373xf32, #tpu.memory_space<smem>>
    %45 = vector.broadcast %44 : f32 to vector<16x16xf32>
    %46 = arith.mulf %45, %31 : vector<16x16xf32>
    %47 = arith.addf %30, %46 : vector<16x16xf32>
    %48 = vector.extract_strided_slice %13 {offsets = [0, 2], sizes = [16, 16], strides = [1, 1]} : vector<18x18xf32> to vector<16x16xf32>
    %c2 = arith.constant 2 : index
    %49 = memref.load %arg1[%c2] : memref<373xf32, #tpu.memory_space<smem>>
    %50 = vector.broadcast %49 : f32 to vector<16x16xf32>
    %51 = arith.mulf %50, %48 : vector<16x16xf32>
    %52 = arith.addf %35, %51 : vector<16x16xf32>
    %c11 = arith.constant 11 : index
    %53 = memref.load %arg1[%c11] : memref<373xf32, #tpu.memory_space<smem>>
    %54 = vector.broadcast %53 : f32 to vector<16x16xf32>
    %55 = arith.mulf %54, %48 : vector<16x16xf32>
    %56 = arith.addf %39, %55 : vector<16x16xf32>
    %c20 = arith.constant 20 : index
    %57 = memref.load %arg1[%c20] : memref<373xf32, #tpu.memory_space<smem>>
    %58 = vector.broadcast %57 : f32 to vector<16x16xf32>
    %59 = arith.mulf %58, %48 : vector<16x16xf32>
    %60 = arith.addf %43, %59 : vector<16x16xf32>
    %c29 = arith.constant 29 : index
    %61 = memref.load %arg1[%c29] : memref<373xf32, #tpu.memory_space<smem>>
    %62 = vector.broadcast %61 : f32 to vector<16x16xf32>
    %63 = arith.mulf %62, %48 : vector<16x16xf32>
    %64 = arith.addf %47, %63 : vector<16x16xf32>
    %65 = vector.extract_strided_slice %13 {offsets = [1, 0], sizes = [16, 16], strides = [1, 1]} : vector<18x18xf32> to vector<16x16xf32>
    %c3 = arith.constant 3 : index
    %66 = memref.load %arg1[%c3] : memref<373xf32, #tpu.memory_space<smem>>
    %67 = vector.broadcast %66 : f32 to vector<16x16xf32>
    %68 = arith.mulf %67, %65 : vector<16x16xf32>
    %69 = arith.addf %52, %68 : vector<16x16xf32>
    %c12 = arith.constant 12 : index
    %70 = memref.load %arg1[%c12] : memref<373xf32, #tpu.memory_space<smem>>
    %71 = vector.broadcast %70 : f32 to vector<16x16xf32>
    %72 = arith.mulf %71, %65 : vector<16x16xf32>
    %73 = arith.addf %56, %72 : vector<16x16xf32>
    %c21 = arith.constant 21 : index
    %74 = memref.load %arg1[%c21] : memref<373xf32, #tpu.memory_space<smem>>
    %75 = vector.broadcast %74 : f32 to vector<16x16xf32>
    %76 = arith.mulf %75, %65 : vector<16x16xf32>
    %77 = arith.addf %60, %76 : vector<16x16xf32>
    %c30 = arith.constant 30 : index
    %78 = memref.load %arg1[%c30] : memref<373xf32, #tpu.memory_space<smem>>
    %79 = vector.broadcast %78 : f32 to vector<16x16xf32>
    %80 = arith.mulf %79, %65 : vector<16x16xf32>
    %81 = arith.addf %64, %80 : vector<16x16xf32>
    %82 = vector.extract_strided_slice %13 {offsets = [1, 1], sizes = [16, 16], strides = [1, 1]} : vector<18x18xf32> to vector<16x16xf32>
    %c4 = arith.constant 4 : index
    %83 = memref.load %arg1[%c4] : memref<373xf32, #tpu.memory_space<smem>>
    %84 = vector.broadcast %83 : f32 to vector<16x16xf32>
    %85 = arith.mulf %84, %82 : vector<16x16xf32>
    %86 = arith.addf %69, %85 : vector<16x16xf32>
    %c13 = arith.constant 13 : index
    %87 = memref.load %arg1[%c13] : memref<373xf32, #tpu.memory_space<smem>>
    %88 = vector.broadcast %87 : f32 to vector<16x16xf32>
    %89 = arith.mulf %88, %82 : vector<16x16xf32>
    %90 = arith.addf %73, %89 : vector<16x16xf32>
    %c22 = arith.constant 22 : index
    %91 = memref.load %arg1[%c22] : memref<373xf32, #tpu.memory_space<smem>>
    %92 = vector.broadcast %91 : f32 to vector<16x16xf32>
    %93 = arith.mulf %92, %82 : vector<16x16xf32>
    %94 = arith.addf %77, %93 : vector<16x16xf32>
    %c31 = arith.constant 31 : index
    %95 = memref.load %arg1[%c31] : memref<373xf32, #tpu.memory_space<smem>>
    %96 = vector.broadcast %95 : f32 to vector<16x16xf32>
    %97 = arith.mulf %96, %82 : vector<16x16xf32>
    %98 = arith.addf %81, %97 : vector<16x16xf32>
    %99 = vector.extract_strided_slice %13 {offsets = [1, 2], sizes = [16, 16], strides = [1, 1]} : vector<18x18xf32> to vector<16x16xf32>
    %c5 = arith.constant 5 : index
    %100 = memref.load %arg1[%c5] : memref<373xf32, #tpu.memory_space<smem>>
    %101 = vector.broadcast %100 : f32 to vector<16x16xf32>
    %102 = arith.mulf %101, %99 : vector<16x16xf32>
    %103 = arith.addf %86, %102 : vector<16x16xf32>
    %c14 = arith.constant 14 : index
    %104 = memref.load %arg1[%c14] : memref<373xf32, #tpu.memory_space<smem>>
    %105 = vector.broadcast %104 : f32 to vector<16x16xf32>
    %106 = arith.mulf %105, %99 : vector<16x16xf32>
    %107 = arith.addf %90, %106 : vector<16x16xf32>
    %c23 = arith.constant 23 : index
    %108 = memref.load %arg1[%c23] : memref<373xf32, #tpu.memory_space<smem>>
    %109 = vector.broadcast %108 : f32 to vector<16x16xf32>
    %110 = arith.mulf %109, %99 : vector<16x16xf32>
    %111 = arith.addf %94, %110 : vector<16x16xf32>
    %c32 = arith.constant 32 : index
    %112 = memref.load %arg1[%c32] : memref<373xf32, #tpu.memory_space<smem>>
    %113 = vector.broadcast %112 : f32 to vector<16x16xf32>
    %114 = arith.mulf %113, %99 : vector<16x16xf32>
    %115 = arith.addf %98, %114 : vector<16x16xf32>
    %116 = vector.extract_strided_slice %13 {offsets = [2, 0], sizes = [16, 16], strides = [1, 1]} : vector<18x18xf32> to vector<16x16xf32>
    %c6 = arith.constant 6 : index
    %117 = memref.load %arg1[%c6] : memref<373xf32, #tpu.memory_space<smem>>
    %118 = vector.broadcast %117 : f32 to vector<16x16xf32>
    %119 = arith.mulf %118, %116 : vector<16x16xf32>
    %120 = arith.addf %103, %119 : vector<16x16xf32>
    %c15 = arith.constant 15 : index
    %121 = memref.load %arg1[%c15] : memref<373xf32, #tpu.memory_space<smem>>
    %122 = vector.broadcast %121 : f32 to vector<16x16xf32>
    %123 = arith.mulf %122, %116 : vector<16x16xf32>
    %124 = arith.addf %107, %123 : vector<16x16xf32>
    %c24 = arith.constant 24 : index
    %125 = memref.load %arg1[%c24] : memref<373xf32, #tpu.memory_space<smem>>
    %126 = vector.broadcast %125 : f32 to vector<16x16xf32>
    %127 = arith.mulf %126, %116 : vector<16x16xf32>
    %128 = arith.addf %111, %127 : vector<16x16xf32>
    %c33 = arith.constant 33 : index
    %129 = memref.load %arg1[%c33] : memref<373xf32, #tpu.memory_space<smem>>
    %130 = vector.broadcast %129 : f32 to vector<16x16xf32>
    %131 = arith.mulf %130, %116 : vector<16x16xf32>
    %132 = arith.addf %115, %131 : vector<16x16xf32>
    %133 = vector.extract_strided_slice %13 {offsets = [2, 1], sizes = [16, 16], strides = [1, 1]} : vector<18x18xf32> to vector<16x16xf32>
    %c7 = arith.constant 7 : index
    %134 = memref.load %arg1[%c7] : memref<373xf32, #tpu.memory_space<smem>>
    %135 = vector.broadcast %134 : f32 to vector<16x16xf32>
    %136 = arith.mulf %135, %133 : vector<16x16xf32>
    %137 = arith.addf %120, %136 : vector<16x16xf32>
    %c16 = arith.constant 16 : index
    %138 = memref.load %arg1[%c16] : memref<373xf32, #tpu.memory_space<smem>>
    %139 = vector.broadcast %138 : f32 to vector<16x16xf32>
    %140 = arith.mulf %139, %133 : vector<16x16xf32>
    %141 = arith.addf %124, %140 : vector<16x16xf32>
    %c25 = arith.constant 25 : index
    %142 = memref.load %arg1[%c25] : memref<373xf32, #tpu.memory_space<smem>>
    %143 = vector.broadcast %142 : f32 to vector<16x16xf32>
    %144 = arith.mulf %143, %133 : vector<16x16xf32>
    %145 = arith.addf %128, %144 : vector<16x16xf32>
    %c34 = arith.constant 34 : index
    %146 = memref.load %arg1[%c34] : memref<373xf32, #tpu.memory_space<smem>>
    %147 = vector.broadcast %146 : f32 to vector<16x16xf32>
    %148 = arith.mulf %147, %133 : vector<16x16xf32>
    %149 = arith.addf %132, %148 : vector<16x16xf32>
    %150 = vector.extract_strided_slice %13 {offsets = [2, 2], sizes = [16, 16], strides = [1, 1]} : vector<18x18xf32> to vector<16x16xf32>
    %c8 = arith.constant 8 : index
    %151 = memref.load %arg1[%c8] : memref<373xf32, #tpu.memory_space<smem>>
    %152 = vector.broadcast %151 : f32 to vector<16x16xf32>
    %153 = arith.mulf %152, %150 : vector<16x16xf32>
    %154 = arith.addf %137, %153 : vector<16x16xf32>
    %c17 = arith.constant 17 : index
    %155 = memref.load %arg1[%c17] : memref<373xf32, #tpu.memory_space<smem>>
    %156 = vector.broadcast %155 : f32 to vector<16x16xf32>
    %157 = arith.mulf %156, %150 : vector<16x16xf32>
    %158 = arith.addf %141, %157 : vector<16x16xf32>
    %c26 = arith.constant 26 : index
    %159 = memref.load %arg1[%c26] : memref<373xf32, #tpu.memory_space<smem>>
    %160 = vector.broadcast %159 : f32 to vector<16x16xf32>
    %161 = arith.mulf %160, %150 : vector<16x16xf32>
    %162 = arith.addf %145, %161 : vector<16x16xf32>
    %c35 = arith.constant 35 : index
    %163 = memref.load %arg1[%c35] : memref<373xf32, #tpu.memory_space<smem>>
    %164 = vector.broadcast %163 : f32 to vector<16x16xf32>
    %165 = arith.mulf %164, %150 : vector<16x16xf32>
    %166 = arith.addf %149, %165 : vector<16x16xf32>
    %cst_5 = arith.constant 0.000000e+00 : f32
    %167 = vector.broadcast %cst_5 : f32 to vector<16x1xf32>
    %168 = tpu.concatenate %167, %154, %167 in 1 : vector<16x1xf32>, vector<16x16xf32>, vector<16x1xf32> -> vector<16x18xf32>
    %cst_6 = arith.constant 0.000000e+00 : f32
    %169 = vector.broadcast %cst_6 : f32 to vector<1x18xf32>
    %170 = tpu.concatenate %169, %168, %169 in 0 : vector<1x18xf32>, vector<16x18xf32>, vector<1x18xf32> -> vector<18x18xf32>
    %c0_7 = arith.constant 0 : index
    %c0_8 = arith.constant 0 : index
    %c0_9 = arith.constant 0 : index
    %171 = vector.load %arg4[%c0_7, %c0_8, %c0_9] : memref<4x18x18xf32, #tpu.memory_space<vmem>>, vector<1x18x18xf32>
    %172 = vector.shape_cast %171 : vector<1x18x18xf32> to vector<18x18xf32>
    %173 = vector.shape_cast %170 : vector<18x18xf32> to vector<1x18x18xf32>
    tpu.vector_store %arg4[%c0_7, %c0_8, %c0_9], %173 {strides = array<i32>} : memref<4x18x18xf32, #tpu.memory_space<vmem>>, vector<1x18x18xf32>,
    %cst_10 = arith.constant 0.000000e+00 : f32
    %174 = vector.broadcast %cst_10 : f32 to vector<16x1xf32>
    %175 = tpu.concatenate %174, %158, %174 in 1 : vector<16x1xf32>, vector<16x16xf32>, vector<16x1xf32> -> vector<16x18xf32>
    %cst_11 = arith.constant 0.000000e+00 : f32
    %176 = vector.broadcast %cst_11 : f32 to vector<1x18xf32>
    %177 = tpu.concatenate %176, %175, %176 in 0 : vector<1x18xf32>, vector<16x18xf32>, vector<1x18xf32> -> vector<18x18xf32>
    %c1_12 = arith.constant 1 : index
    %c0_13 = arith.constant 0 : index
    %c0_14 = arith.constant 0 : index
    %178 = vector.load %arg4[%c1_12, %c0_13, %c0_14] : memref<4x18x18xf32, #tpu.memory_space<vmem>>, vector<1x18x18xf32>
    %179 = vector.shape_cast %178 : vector<1x18x18xf32> to vector<18x18xf32>
    %180 = vector.shape_cast %177 : vector<18x18xf32> to vector<1x18x18xf32>
    tpu.vector_store %arg4[%c1_12, %c0_13, %c0_14], %180 {strides = array<i32>} : memref<4x18x18xf32, #tpu.memory_space<vmem>>, vector<1x18x18xf32>,
    %cst_15 = arith.constant 0.000000e+00 : f32
    %181 = vector.broadcast %cst_15 : f32 to vector<16x1xf32>
    %182 = tpu.concatenate %181, %162, %181 in 1 : vector<16x1xf32>, vector<16x16xf32>, vector<16x1xf32> -> vector<16x18xf32>
    %cst_16 = arith.constant 0.000000e+00 : f32
    %183 = vector.broadcast %cst_16 : f32 to vector<1x18xf32>
    %184 = tpu.concatenate %183, %182, %183 in 0 : vector<1x18xf32>, vector<16x18xf32>, vector<1x18xf32> -> vector<18x18xf32>
    %c2_17 = arith.constant 2 : index
    %c0_18 = arith.constant 0 : index
    %c0_19 = arith.constant 0 : index
    %185 = vector.load %arg4[%c2_17, %c0_18, %c0_19] : memref<4x18x18xf32, #tpu.memory_space<vmem>>, vector<1x18x18xf32>
    %186 = vector.shape_cast %185 : vector<1x18x18xf32> to vector<18x18xf32>
    %187 = vector.shape_cast %184 : vector<18x18xf32> to vector<1x18x18xf32>
    tpu.vector_store %arg4[%c2_17, %c0_18, %c0_19], %187 {strides = array<i32>} : memref<4x18x18xf32, #tpu.memory_space<vmem>>, vector<1x18x18xf32>,
    %cst_20 = arith.constant 0.000000e+00 : f32
    %188 = vector.broadcast %cst_20 : f32 to vector<16x1xf32>
    %189 = tpu.concatenate %188, %166, %188 in 1 : vector<16x1xf32>, vector<16x16xf32>, vector<16x1xf32> -> vector<16x18xf32>
    %cst_21 = arith.constant 0.000000e+00 : f32
    %190 = vector.broadcast %cst_21 : f32 to vector<1x18xf32>
    %191 = tpu.concatenate %190, %189, %190 in 0 : vector<1x18xf32>, vector<16x18xf32>, vector<1x18xf32> -> vector<18x18xf32>
    %c3_22 = arith.constant 3 : index
    %c0_23 = arith.constant 0 : index
    %c0_24 = arith.constant 0 : index
    %192 = vector.load %arg4[%c3_22, %c0_23, %c0_24] : memref<4x18x18xf32, #tpu.memory_space<vmem>>, vector<1x18x18xf32>
    %193 = vector.shape_cast %192 : vector<1x18x18xf32> to vector<18x18xf32>
    %194 = vector.shape_cast %191 : vector<18x18xf32> to vector<1x18x18xf32>
    tpu.vector_store %arg4[%c3_22, %c0_23, %c0_24], %194 {strides = array<i32>} : memref<4x18x18xf32, #tpu.memory_space<vmem>>, vector<1x18x18xf32>,
    %c184 = arith.constant 184 : index
    %195 = memref.load %arg1[%c184] : memref<373xf32, #tpu.memory_space<smem>>
    %196 = vector.broadcast %195 : f32 to vector<16x16xf32>
    %c185 = arith.constant 185 : index
    %197 = memref.load %arg1[%c185] : memref<373xf32, #tpu.memory_space<smem>>
    %198 = vector.broadcast %197 : f32 to vector<16x16xf32>
    %c186 = arith.constant 186 : index
    %199 = memref.load %arg1[%c186] : memref<373xf32, #tpu.memory_space<smem>>
    %200 = vector.broadcast %199 : f32 to vector<16x16xf32>
    %c187 = arith.constant 187 : index
    %201 = memref.load %arg1[%c187] : memref<373xf32, #tpu.memory_space<smem>>
    %202 = vector.broadcast %201 : f32 to vector<16x16xf32>
    %c0_25 = arith.constant 0 : index
    %c0_26 = arith.constant 0 : index
    %c0_27 = arith.constant 0 : index
    %203 = vector.load %arg4[%c0_25, %c0_26, %c0_27] : memref<4x18x18xf32, #tpu.memory_space<vmem>>, vector<1x18x18xf32>
    %204 = vector.shape_cast %203 : vector<1x18x18xf32> to vector<18x18xf32>
    %205 = vector.extract_strided_slice %204 {offsets = [0, 0], sizes = [16, 16], strides = [1, 1]} : vector<18x18xf32> to vector<16x16xf32>
    %c40 = arith.constant 40 : index
    %206 = memref.load %arg1[%c40] : memref<373xf32, #tpu.memory_space<smem>>
    %207 = vector.broadcast %206 : f32 to vector<16x16xf32>
    %208 = arith.mulf %207, %205 : vector<16x16xf32>
    %209 = arith.addf %196, %208 : vector<16x16xf32>
    %c76 = arith.constant 76 : index
    %210 = memref.load %arg1[%c76] : memref<373xf32, #tpu.memory_space<smem>>
    %211 = vector.broadcast %210 : f32 to vector<16x16xf32>
    %212 = arith.mulf %211, %205 : vector<16x16xf32>
    %213 = arith.addf %198, %212 : vector<16x16xf32>
    %c112 = arith.constant 112 : index
    %214 = memref.load %arg1[%c112] : memref<373xf32, #tpu.memory_space<smem>>
    %215 = vector.broadcast %214 : f32 to vector<16x16xf32>
    %216 = arith.mulf %215, %205 : vector<16x16xf32>
    %217 = arith.addf %200, %216 : vector<16x16xf32>
    %c148 = arith.constant 148 : index
    %218 = memref.load %arg1[%c148] : memref<373xf32, #tpu.memory_space<smem>>
    %219 = vector.broadcast %218 : f32 to vector<16x16xf32>
    %220 = arith.mulf %219, %205 : vector<16x16xf32>
    %221 = arith.addf %202, %220 : vector<16x16xf32>
    %222 = vector.extract_strided_slice %204 {offsets = [0, 1], sizes = [16, 16], strides = [1, 1]} : vector<18x18xf32> to vector<16x16xf32>
    %c41 = arith.constant 41 : index
    %223 = memref.load %arg1[%c41] : memref<373xf32, #tpu.memory_space<smem>>
    %224 = vector.broadcast %223 : f32 to vector<16x16xf32>
    %225 = arith.mulf %224, %222 : vector<16x16xf32>
    %226 = arith.addf %209, %225 : vector<16x16xf32>
    %c77 = arith.constant 77 : index
    %227 = memref.load %arg1[%c77] : memref<373xf32, #tpu.memory_space<smem>>
    %228 = vector.broadcast %227 : f32 to vector<16x16xf32>
    %229 = arith.mulf %228, %222 : vector<16x16xf32>
    %230 = arith.addf %213, %229 : vector<16x16xf32>
    %c113 = arith.constant 113 : index
    %231 = memref.load %arg1[%c113] : memref<373xf32, #tpu.memory_space<smem>>
    %232 = vector.broadcast %231 : f32 to vector<16x16xf32>
    %233 = arith.mulf %232, %222 : vector<16x16xf32>
    %234 = arith.addf %217, %233 : vector<16x16xf32>
    %c149 = arith.constant 149 : index
    %235 = memref.load %arg1[%c149] : memref<373xf32, #tpu.memory_space<smem>>
    %236 = vector.broadcast %235 : f32 to vector<16x16xf32>
    %237 = arith.mulf %236, %222 : vector<16x16xf32>
    %238 = arith.addf %221, %237 : vector<16x16xf32>
    %239 = vector.extract_strided_slice %204 {offsets = [0, 2], sizes = [16, 16], strides = [1, 1]} : vector<18x18xf32> to vector<16x16xf32>
    %c42 = arith.constant 42 : index
    %240 = memref.load %arg1[%c42] : memref<373xf32, #tpu.memory_space<smem>>
    %241 = vector.broadcast %240 : f32 to vector<16x16xf32>
    %242 = arith.mulf %241, %239 : vector<16x16xf32>
    %243 = arith.addf %226, %242 : vector<16x16xf32>
    %c78 = arith.constant 78 : index
    %244 = memref.load %arg1[%c78] : memref<373xf32, #tpu.memory_space<smem>>
    %245 = vector.broadcast %244 : f32 to vector<16x16xf32>
    %246 = arith.mulf %245, %239 : vector<16x16xf32>
    %247 = arith.addf %230, %246 : vector<16x16xf32>
    %c114 = arith.constant 114 : index
    %248 = memref.load %arg1[%c114] : memref<373xf32, #tpu.memory_space<smem>>
    %249 = vector.broadcast %248 : f32 to vector<16x16xf32>
    %250 = arith.mulf %249, %239 : vector<16x16xf32>
    %251 = arith.addf %234, %250 : vector<16x16xf32>
    %c150 = arith.constant 150 : index
    %252 = memref.load %arg1[%c150] : memref<373xf32, #tpu.memory_space<smem>>
    %253 = vector.broadcast %252 : f32 to vector<16x16xf32>
    %254 = arith.mulf %253, %239 : vector<16x16xf32>
    %255 = arith.addf %238, %254 : vector<16x16xf32>
    %256 = vector.extract_strided_slice %204 {offsets = [1, 0], sizes = [16, 16], strides = [1, 1]} : vector<18x18xf32> to vector<16x16xf32>
    %c43 = arith.constant 43 : index
    %257 = memref.load %arg1[%c43] : memref<373xf32, #tpu.memory_space<smem>>
    %258 = vector.broadcast %257 : f32 to vector<16x16xf32>
    %259 = arith.mulf %258, %256 : vector<16x16xf32>
    %260 = arith.addf %243, %259 : vector<16x16xf32>
    %c79 = arith.constant 79 : index
    %261 = memref.load %arg1[%c79] : memref<373xf32, #tpu.memory_space<smem>>
    %262 = vector.broadcast %261 : f32 to vector<16x16xf32>
    %263 = arith.mulf %262, %256 : vector<16x16xf32>
    %264 = arith.addf %247, %263 : vector<16x16xf32>
    %c115 = arith.constant 115 : index
    %265 = memref.load %arg1[%c115] : memref<373xf32, #tpu.memory_space<smem>>
    %266 = vector.broadcast %265 : f32 to vector<16x16xf32>
    %267 = arith.mulf %266, %256 : vector<16x16xf32>
    %268 = arith.addf %251, %267 : vector<16x16xf32>
    %c151 = arith.constant 151 : index
    %269 = memref.load %arg1[%c151] : memref<373xf32, #tpu.memory_space<smem>>
    %270 = vector.broadcast %269 : f32 to vector<16x16xf32>
    %271 = arith.mulf %270, %256 : vector<16x16xf32>
    %272 = arith.addf %255, %271 : vector<16x16xf32>
    %273 = vector.extract_strided_slice %204 {offsets = [1, 1], sizes = [16, 16], strides = [1, 1]} : vector<18x18xf32> to vector<16x16xf32>
    %c44 = arith.constant 44 : index
    %274 = memref.load %arg1[%c44] : memref<373xf32, #tpu.memory_space<smem>>
    %275 = vector.broadcast %274 : f32 to vector<16x16xf32>
    %276 = arith.mulf %275, %273 : vector<16x16xf32>
    %277 = arith.addf %260, %276 : vector<16x16xf32>
    %c80 = arith.constant 80 : index
    %278 = memref.load %arg1[%c80] : memref<373xf32, #tpu.memory_space<smem>>
    %279 = vector.broadcast %278 : f32 to vector<16x16xf32>
    %280 = arith.mulf %279, %273 : vector<16x16xf32>
    %281 = arith.addf %264, %280 : vector<16x16xf32>
    %c116 = arith.constant 116 : index
    %282 = memref.load %arg1[%c116] : memref<373xf32, #tpu.memory_space<smem>>
    %283 = vector.broadcast %282 : f32 to vector<16x16xf32>
    %284 = arith.mulf %283, %273 : vector<16x16xf32>
    %285 = arith.addf %268, %284 : vector<16x16xf32>
    %c152 = arith.constant 152 : index
    %286 = memref.load %arg1[%c152] : memref<373xf32, #tpu.memory_space<smem>>
    %287 = vector.broadcast %286 : f32 to vector<16x16xf32>
    %288 = arith.mulf %287, %273 : vector<16x16xf32>
    %289 = arith.addf %272, %288 : vector<16x16xf32>
    %290 = vector.extract_strided_slice %204 {offsets = [1, 2], sizes = [16, 16], strides = [1, 1]} : vector<18x18xf32> to vector<16x16xf32>
    %c45 = arith.constant 45 : index
    %291 = memref.load %arg1[%c45] : memref<373xf32, #tpu.memory_space<smem>>
    %292 = vector.broadcast %291 : f32 to vector<16x16xf32>
    %293 = arith.mulf %292, %290 : vector<16x16xf32>
    %294 = arith.addf %277, %293 : vector<16x16xf32>
    %c81 = arith.constant 81 : index
    %295 = memref.load %arg1[%c81] : memref<373xf32, #tpu.memory_space<smem>>
    %296 = vector.broadcast %295 : f32 to vector<16x16xf32>
    %297 = arith.mulf %296, %290 : vector<16x16xf32>
    %298 = arith.addf %281, %297 : vector<16x16xf32>
    %c117 = arith.constant 117 : index
    %299 = memref.load %arg1[%c117] : memref<373xf32, #tpu.memory_space<smem>>
    %300 = vector.broadcast %299 : f32 to vector<16x16xf32>
    %301 = arith.mulf %300, %290 : vector<16x16xf32>
    %302 = arith.addf %285, %301 : vector<16x16xf32>
    %c153 = arith.constant 153 : index
    %303 = memref.load %arg1[%c153] : memref<373xf32, #tpu.memory_space<smem>>
    %304 = vector.broadcast %303 : f32 to vector<16x16xf32>
    %305 = arith.mulf %304, %290 : vector<16x16xf32>
    %306 = arith.addf %289, %305 : vector<16x16xf32>
    %307 = vector.extract_strided_slice %204 {offsets = [2, 0], sizes = [16, 16], strides = [1, 1]} : vector<18x18xf32> to vector<16x16xf32>
    %c46 = arith.constant 46 : index
    %308 = memref.load %arg1[%c46] : memref<373xf32, #tpu.memory_space<smem>>
    %309 = vector.broadcast %308 : f32 to vector<16x16xf32>
    %310 = arith.mulf %309, %307 : vector<16x16xf32>
    %311 = arith.addf %294, %310 : vector<16x16xf32>
    %c82 = arith.constant 82 : index
    %312 = memref.load %arg1[%c82] : memref<373xf32, #tpu.memory_space<smem>>
    %313 = vector.broadcast %312 : f32 to vector<16x16xf32>
    %314 = arith.mulf %313, %307 : vector<16x16xf32>
    %315 = arith.addf %298, %314 : vector<16x16xf32>
    %c118 = arith.constant 118 : index
    %316 = memref.load %arg1[%c118] : memref<373xf32, #tpu.memory_space<smem>>
    %317 = vector.broadcast %316 : f32 to vector<16x16xf32>
    %318 = arith.mulf %317, %307 : vector<16x16xf32>
    %319 = arith.addf %302, %318 : vector<16x16xf32>
    %c154 = arith.constant 154 : index
    %320 = memref.load %arg1[%c154] : memref<373xf32, #tpu.memory_space<smem>>
    %321 = vector.broadcast %320 : f32 to vector<16x16xf32>
    %322 = arith.mulf %321, %307 : vector<16x16xf32>
    %323 = arith.addf %306, %322 : vector<16x16xf32>
    %324 = vector.extract_strided_slice %204 {offsets = [2, 1], sizes = [16, 16], strides = [1, 1]} : vector<18x18xf32> to vector<16x16xf32>
    %c47 = arith.constant 47 : index
    %325 = memref.load %arg1[%c47] : memref<373xf32, #tpu.memory_space<smem>>
    %326 = vector.broadcast %325 : f32 to vector<16x16xf32>
    %327 = arith.mulf %326, %324 : vector<16x16xf32>
    %328 = arith.addf %311, %327 : vector<16x16xf32>
    %c83 = arith.constant 83 : index
    %329 = memref.load %arg1[%c83] : memref<373xf32, #tpu.memory_space<smem>>
    %330 = vector.broadcast %329 : f32 to vector<16x16xf32>
    %331 = arith.mulf %330, %324 : vector<16x16xf32>
    %332 = arith.addf %315, %331 : vector<16x16xf32>
    %c119 = arith.constant 119 : index
    %333 = memref.load %arg1[%c119] : memref<373xf32, #tpu.memory_space<smem>>
    %334 = vector.broadcast %333 : f32 to vector<16x16xf32>
    %335 = arith.mulf %334, %324 : vector<16x16xf32>
    %336 = arith.addf %319, %335 : vector<16x16xf32>
    %c155 = arith.constant 155 : index
    %337 = memref.load %arg1[%c155] : memref<373xf32, #tpu.memory_space<smem>>
    %338 = vector.broadcast %337 : f32 to vector<16x16xf32>
    %339 = arith.mulf %338, %324 : vector<16x16xf32>
    %340 = arith.addf %323, %339 : vector<16x16xf32>
    %341 = vector.extract_strided_slice %204 {offsets = [2, 2], sizes = [16, 16], strides = [1, 1]} : vector<18x18xf32> to vector<16x16xf32>
    %c48 = arith.constant 48 : index
    %342 = memref.load %arg1[%c48] : memref<373xf32, #tpu.memory_space<smem>>
    %343 = vector.broadcast %342 : f32 to vector<16x16xf32>
    %344 = arith.mulf %343, %341 : vector<16x16xf32>
    %345 = arith.addf %328, %344 : vector<16x16xf32>
    %c84 = arith.constant 84 : index
    %346 = memref.load %arg1[%c84] : memref<373xf32, #tpu.memory_space<smem>>
    %347 = vector.broadcast %346 : f32 to vector<16x16xf32>
    %348 = arith.mulf %347, %341 : vector<16x16xf32>
    %349 = arith.addf %332, %348 : vector<16x16xf32>
    %c120 = arith.constant 120 : index
    %350 = memref.load %arg1[%c120] : memref<373xf32, #tpu.memory_space<smem>>
    %351 = vector.broadcast %350 : f32 to vector<16x16xf32>
    %352 = arith.mulf %351, %341 : vector<16x16xf32>
    %353 = arith.addf %336, %352 : vector<16x16xf32>
    %c156 = arith.constant 156 : index
    %354 = memref.load %arg1[%c156] : memref<373xf32, #tpu.memory_space<smem>>
    %355 = vector.broadcast %354 : f32 to vector<16x16xf32>
    %356 = arith.mulf %355, %341 : vector<16x16xf32>
    %357 = arith.addf %340, %356 : vector<16x16xf32>
    %c1_28 = arith.constant 1 : index
    %c0_29 = arith.constant 0 : index
    %c0_30 = arith.constant 0 : index
    %358 = vector.load %arg4[%c1_28, %c0_29, %c0_30] : memref<4x18x18xf32, #tpu.memory_space<vmem>>, vector<1x18x18xf32>
    %359 = vector.shape_cast %358 : vector<1x18x18xf32> to vector<18x18xf32>
    %360 = vector.extract_strided_slice %359 {offsets = [0, 0], sizes = [16, 16], strides = [1, 1]} : vector<18x18xf32> to vector<16x16xf32>
    %c49 = arith.constant 49 : index
    %361 = memref.load %arg1[%c49] : memref<373xf32, #tpu.memory_space<smem>>
    %362 = vector.broadcast %361 : f32 to vector<16x16xf32>
    %363 = arith.mulf %362, %360 : vector<16x16xf32>
    %364 = arith.addf %345, %363 : vector<16x16xf32>
    %c85 = arith.constant 85 : index
    %365 = memref.load %arg1[%c85] : memref<373xf32, #tpu.memory_space<smem>>
    %366 = vector.broadcast %365 : f32 to vector<16x16xf32>
    %367 = arith.mulf %366, %360 : vector<16x16xf32>
    %368 = arith.addf %349, %367 : vector<16x16xf32>
    %c121 = arith.constant 121 : index
    %369 = memref.load %arg1[%c121] : memref<373xf32, #tpu.memory_space<smem>>
    %370 = vector.broadcast %369 : f32 to vector<16x16xf32>
    %371 = arith.mulf %370, %360 : vector<16x16xf32>
    %372 = arith.addf %353, %371 : vector<16x16xf32>
    %c157 = arith.constant 157 : index
    %373 = memref.load %arg1[%c157] : memref<373xf32, #tpu.memory_space<smem>>
    %374 = vector.broadcast %373 : f32 to vector<16x16xf32>
    %375 = arith.mulf %374, %360 : vector<16x16xf32>
    %376 = arith.addf %357, %375 : vector<16x16xf32>
    %377 = vector.extract_strided_slice %359 {offsets = [0, 1], sizes = [16, 16], strides = [1, 1]} : vector<18x18xf32> to vector<16x16xf32>
    %c50 = arith.constant 50 : index
    %378 = memref.load %arg1[%c50] : memref<373xf32, #tpu.memory_space<smem>>
    %379 = vector.broadcast %378 : f32 to vector<16x16xf32>
    %380 = arith.mulf %379, %377 : vector<16x16xf32>
    %381 = arith.addf %364, %380 : vector<16x16xf32>
    %c86 = arith.constant 86 : index
    %382 = memref.load %arg1[%c86] : memref<373xf32, #tpu.memory_space<smem>>
    %383 = vector.broadcast %382 : f32 to vector<16x16xf32>
    %384 = arith.mulf %383, %377 : vector<16x16xf32>
    %385 = arith.addf %368, %384 : vector<16x16xf32>
    %c122 = arith.constant 122 : index
    %386 = memref.load %arg1[%c122] : memref<373xf32, #tpu.memory_space<smem>>
    %387 = vector.broadcast %386 : f32 to vector<16x16xf32>
    %388 = arith.mulf %387, %377 : vector<16x16xf32>
    %389 = arith.addf %372, %388 : vector<16x16xf32>
    %c158 = arith.constant 158 : index
    %390 = memref.load %arg1[%c158] : memref<373xf32, #tpu.memory_space<smem>>
    %391 = vector.broadcast %390 : f32 to vector<16x16xf32>
    %392 = arith.mulf %391, %377 : vector<16x16xf32>
    %393 = arith.addf %376, %392 : vector<16x16xf32>
    %394 = vector.extract_strided_slice %359 {offsets = [0, 2], sizes = [16, 16], strides = [1, 1]} : vector<18x18xf32> to vector<16x16xf32>
    %c51 = arith.constant 51 : index
    %395 = memref.load %arg1[%c51] : memref<373xf32, #tpu.memory_space<smem>>
    %396 = vector.broadcast %395 : f32 to vector<16x16xf32>
    %397 = arith.mulf %396, %394 : vector<16x16xf32>
    %398 = arith.addf %381, %397 : vector<16x16xf32>
    %c87 = arith.constant 87 : index
    %399 = memref.load %arg1[%c87] : memref<373xf32, #tpu.memory_space<smem>>
    %400 = vector.broadcast %399 : f32 to vector<16x16xf32>
    %401 = arith.mulf %400, %394 : vector<16x16xf32>
    %402 = arith.addf %385, %401 : vector<16x16xf32>
    %c123 = arith.constant 123 : index
    %403 = memref.load %arg1[%c123] : memref<373xf32, #tpu.memory_space<smem>>
    %404 = vector.broadcast %403 : f32 to vector<16x16xf32>
    %405 = arith.mulf %404, %394 : vector<16x16xf32>
    %406 = arith.addf %389, %405 : vector<16x16xf32>
    %c159 = arith.constant 159 : index
    %407 = memref.load %arg1[%c159] : memref<373xf32, #tpu.memory_space<smem>>
    %408 = vector.broadcast %407 : f32 to vector<16x16xf32>
    %409 = arith.mulf %408, %394 : vector<16x16xf32>
    %410 = arith.addf %393, %409 : vector<16x16xf32>
    %411 = vector.extract_strided_slice %359 {offsets = [1, 0], sizes = [16, 16], strides = [1, 1]} : vector<18x18xf32> to vector<16x16xf32>
    %c52 = arith.constant 52 : index
    %412 = memref.load %arg1[%c52] : memref<373xf32, #tpu.memory_space<smem>>
    %413 = vector.broadcast %412 : f32 to vector<16x16xf32>
    %414 = arith.mulf %413, %411 : vector<16x16xf32>
    %415 = arith.addf %398, %414 : vector<16x16xf32>
    %c88 = arith.constant 88 : index
    %416 = memref.load %arg1[%c88] : memref<373xf32, #tpu.memory_space<smem>>
    %417 = vector.broadcast %416 : f32 to vector<16x16xf32>
    %418 = arith.mulf %417, %411 : vector<16x16xf32>
    %419 = arith.addf %402, %418 : vector<16x16xf32>
    %c124 = arith.constant 124 : index
    %420 = memref.load %arg1[%c124] : memref<373xf32, #tpu.memory_space<smem>>
    %421 = vector.broadcast %420 : f32 to vector<16x16xf32>
    %422 = arith.mulf %421, %411 : vector<16x16xf32>
    %423 = arith.addf %406, %422 : vector<16x16xf32>
    %c160 = arith.constant 160 : index
    %424 = memref.load %arg1[%c160] : memref<373xf32, #tpu.memory_space<smem>>
    %425 = vector.broadcast %424 : f32 to vector<16x16xf32>
    %426 = arith.mulf %425, %411 : vector<16x16xf32>
    %427 = arith.addf %410, %426 : vector<16x16xf32>
    %428 = vector.extract_strided_slice %359 {offsets = [1, 1], sizes = [16, 16], strides = [1, 1]} : vector<18x18xf32> to vector<16x16xf32>
    %c53 = arith.constant 53 : index
    %429 = memref.load %arg1[%c53] : memref<373xf32, #tpu.memory_space<smem>>
    %430 = vector.broadcast %429 : f32 to vector<16x16xf32>
    %431 = arith.mulf %430, %428 : vector<16x16xf32>
    %432 = arith.addf %415, %431 : vector<16x16xf32>
    %c89 = arith.constant 89 : index
    %433 = memref.load %arg1[%c89] : memref<373xf32, #tpu.memory_space<smem>>
    %434 = vector.broadcast %433 : f32 to vector<16x16xf32>
    %435 = arith.mulf %434, %428 : vector<16x16xf32>
    %436 = arith.addf %419, %435 : vector<16x16xf32>
    %c125 = arith.constant 125 : index
    %437 = memref.load %arg1[%c125] : memref<373xf32, #tpu.memory_space<smem>>
    %438 = vector.broadcast %437 : f32 to vector<16x16xf32>
    %439 = arith.mulf %438, %428 : vector<16x16xf32>
    %440 = arith.addf %423, %439 : vector<16x16xf32>
    %c161 = arith.constant 161 : index
    %441 = memref.load %arg1[%c161] : memref<373xf32, #tpu.memory_space<smem>>
    %442 = vector.broadcast %441 : f32 to vector<16x16xf32>
    %443 = arith.mulf %442, %428 : vector<16x16xf32>
    %444 = arith.addf %427, %443 : vector<16x16xf32>
    %445 = vector.extract_strided_slice %359 {offsets = [1, 2], sizes = [16, 16], strides = [1, 1]} : vector<18x18xf32> to vector<16x16xf32>
    %c54 = arith.constant 54 : index
    %446 = memref.load %arg1[%c54] : memref<373xf32, #tpu.memory_space<smem>>
    %447 = vector.broadcast %446 : f32 to vector<16x16xf32>
    %448 = arith.mulf %447, %445 : vector<16x16xf32>
    %449 = arith.addf %432, %448 : vector<16x16xf32>
    %c90 = arith.constant 90 : index
    %450 = memref.load %arg1[%c90] : memref<373xf32, #tpu.memory_space<smem>>
    %451 = vector.broadcast %450 : f32 to vector<16x16xf32>
    %452 = arith.mulf %451, %445 : vector<16x16xf32>
    %453 = arith.addf %436, %452 : vector<16x16xf32>
    %c126 = arith.constant 126 : index
    %454 = memref.load %arg1[%c126] : memref<373xf32, #tpu.memory_space<smem>>
    %455 = vector.broadcast %454 : f32 to vector<16x16xf32>
    %456 = arith.mulf %455, %445 : vector<16x16xf32>
    %457 = arith.addf %440, %456 : vector<16x16xf32>
    %c162 = arith.constant 162 : index
    %458 = memref.load %arg1[%c162] : memref<373xf32, #tpu.memory_space<smem>>
    %459 = vector.broadcast %458 : f32 to vector<16x16xf32>
    %460 = arith.mulf %459, %445 : vector<16x16xf32>
    %461 = arith.addf %444, %460 : vector<16x16xf32>
    %462 = vector.extract_strided_slice %359 {offsets = [2, 0], sizes = [16, 16], strides = [1, 1]} : vector<18x18xf32> to vector<16x16xf32>
    %c55 = arith.constant 55 : index
    %463 = memref.load %arg1[%c55] : memref<373xf32, #tpu.memory_space<smem>>
    %464 = vector.broadcast %463 : f32 to vector<16x16xf32>
    %465 = arith.mulf %464, %462 : vector<16x16xf32>
    %466 = arith.addf %449, %465 : vector<16x16xf32>
    %c91 = arith.constant 91 : index
    %467 = memref.load %arg1[%c91] : memref<373xf32, #tpu.memory_space<smem>>
    %468 = vector.broadcast %467 : f32 to vector<16x16xf32>
    %469 = arith.mulf %468, %462 : vector<16x16xf32>
    %470 = arith.addf %453, %469 : vector<16x16xf32>
    %c127 = arith.constant 127 : index
    %471 = memref.load %arg1[%c127] : memref<373xf32, #tpu.memory_space<smem>>
    %472 = vector.broadcast %471 : f32 to vector<16x16xf32>
    %473 = arith.mulf %472, %462 : vector<16x16xf32>
    %474 = arith.addf %457, %473 : vector<16x16xf32>
    %c163 = arith.constant 163 : index
    %475 = memref.load %arg1[%c163] : memref<373xf32, #tpu.memory_space<smem>>
    %476 = vector.broadcast %475 : f32 to vector<16x16xf32>
    %477 = arith.mulf %476, %462 : vector<16x16xf32>
    %478 = arith.addf %461, %477 : vector<16x16xf32>
    %479 = vector.extract_strided_slice %359 {offsets = [2, 1], sizes = [16, 16], strides = [1, 1]} : vector<18x18xf32> to vector<16x16xf32>
    %c56 = arith.constant 56 : index
    %480 = memref.load %arg1[%c56] : memref<373xf32, #tpu.memory_space<smem>>
    %481 = vector.broadcast %480 : f32 to vector<16x16xf32>
    %482 = arith.mulf %481, %479 : vector<16x16xf32>
    %483 = arith.addf %466, %482 : vector<16x16xf32>
    %c92 = arith.constant 92 : index
    %484 = memref.load %arg1[%c92] : memref<373xf32, #tpu.memory_space<smem>>
    %485 = vector.broadcast %484 : f32 to vector<16x16xf32>
    %486 = arith.mulf %485, %479 : vector<16x16xf32>
    %487 = arith.addf %470, %486 : vector<16x16xf32>
    %c128 = arith.constant 128 : index
    %488 = memref.load %arg1[%c128] : memref<373xf32, #tpu.memory_space<smem>>
    %489 = vector.broadcast %488 : f32 to vector<16x16xf32>
    %490 = arith.mulf %489, %479 : vector<16x16xf32>
    %491 = arith.addf %474, %490 : vector<16x16xf32>
    %c164 = arith.constant 164 : index
    %492 = memref.load %arg1[%c164] : memref<373xf32, #tpu.memory_space<smem>>
    %493 = vector.broadcast %492 : f32 to vector<16x16xf32>
    %494 = arith.mulf %493, %479 : vector<16x16xf32>
    %495 = arith.addf %478, %494 : vector<16x16xf32>
    %496 = vector.extract_strided_slice %359 {offsets = [2, 2], sizes = [16, 16], strides = [1, 1]} : vector<18x18xf32> to vector<16x16xf32>
    %c57 = arith.constant 57 : index
    %497 = memref.load %arg1[%c57] : memref<373xf32, #tpu.memory_space<smem>>
    %498 = vector.broadcast %497 : f32 to vector<16x16xf32>
    %499 = arith.mulf %498, %496 : vector<16x16xf32>
    %500 = arith.addf %483, %499 : vector<16x16xf32>
    %c93 = arith.constant 93 : index
    %501 = memref.load %arg1[%c93] : memref<373xf32, #tpu.memory_space<smem>>
    %502 = vector.broadcast %501 : f32 to vector<16x16xf32>
    %503 = arith.mulf %502, %496 : vector<16x16xf32>
    %504 = arith.addf %487, %503 : vector<16x16xf32>
    %c129 = arith.constant 129 : index
    %505 = memref.load %arg1[%c129] : memref<373xf32, #tpu.memory_space<smem>>
    %506 = vector.broadcast %505 : f32 to vector<16x16xf32>
    %507 = arith.mulf %506, %496 : vector<16x16xf32>
    %508 = arith.addf %491, %507 : vector<16x16xf32>
    %c165 = arith.constant 165 : index
    %509 = memref.load %arg1[%c165] : memref<373xf32, #tpu.memory_space<smem>>
    %510 = vector.broadcast %509 : f32 to vector<16x16xf32>
    %511 = arith.mulf %510, %496 : vector<16x16xf32>
    %512 = arith.addf %495, %511 : vector<16x16xf32>
    %c2_31 = arith.constant 2 : index
    %c0_32 = arith.constant 0 : index
    %c0_33 = arith.constant 0 : index
    %513 = vector.load %arg4[%c2_31, %c0_32, %c0_33] : memref<4x18x18xf32, #tpu.memory_space<vmem>>, vector<1x18x18xf32>
    %514 = vector.shape_cast %513 : vector<1x18x18xf32> to vector<18x18xf32>
    %515 = vector.extract_strided_slice %514 {offsets = [0, 0], sizes = [16, 16], strides = [1, 1]} : vector<18x18xf32> to vector<16x16xf32>
    %c58 = arith.constant 58 : index
    %516 = memref.load %arg1[%c58] : memref<373xf32, #tpu.memory_space<smem>>
    %517 = vector.broadcast %516 : f32 to vector<16x16xf32>
    %518 = arith.mulf %517, %515 : vector<16x16xf32>
    %519 = arith.addf %500, %518 : vector<16x16xf32>
    %c94 = arith.constant 94 : index
    %520 = memref.load %arg1[%c94] : memref<373xf32, #tpu.memory_space<smem>>
    %521 = vector.broadcast %520 : f32 to vector<16x16xf32>
    %522 = arith.mulf %521, %515 : vector<16x16xf32>
    %523 = arith.addf %504, %522 : vector<16x16xf32>
    %c130 = arith.constant 130 : index
    %524 = memref.load %arg1[%c130] : memref<373xf32, #tpu.memory_space<smem>>
    %525 = vector.broadcast %524 : f32 to vector<16x16xf32>
    %526 = arith.mulf %525, %515 : vector<16x16xf32>
    %527 = arith.addf %508, %526 : vector<16x16xf32>
    %c166 = arith.constant 166 : index
    %528 = memref.load %arg1[%c166] : memref<373xf32, #tpu.memory_space<smem>>
    %529 = vector.broadcast %528 : f32 to vector<16x16xf32>
    %530 = arith.mulf %529, %515 : vector<16x16xf32>
    %531 = arith.addf %512, %530 : vector<16x16xf32>
    %532 = vector.extract_strided_slice %514 {offsets = [0, 1], sizes = [16, 16], strides = [1, 1]} : vector<18x18xf32> to vector<16x16xf32>
    %c59 = arith.constant 59 : index
    %533 = memref.load %arg1[%c59] : memref<373xf32, #tpu.memory_space<smem>>
    %534 = vector.broadcast %533 : f32 to vector<16x16xf32>
    %535 = arith.mulf %534, %532 : vector<16x16xf32>
    %536 = arith.addf %519, %535 : vector<16x16xf32>
    %c95 = arith.constant 95 : index
    %537 = memref.load %arg1[%c95] : memref<373xf32, #tpu.memory_space<smem>>
    %538 = vector.broadcast %537 : f32 to vector<16x16xf32>
    %539 = arith.mulf %538, %532 : vector<16x16xf32>
    %540 = arith.addf %523, %539 : vector<16x16xf32>
    %c131 = arith.constant 131 : index
    %541 = memref.load %arg1[%c131] : memref<373xf32, #tpu.memory_space<smem>>
    %542 = vector.broadcast %541 : f32 to vector<16x16xf32>
    %543 = arith.mulf %542, %532 : vector<16x16xf32>
    %544 = arith.addf %527, %543 : vector<16x16xf32>
    %c167 = arith.constant 167 : index
    %545 = memref.load %arg1[%c167] : memref<373xf32, #tpu.memory_space<smem>>
    %546 = vector.broadcast %545 : f32 to vector<16x16xf32>
    %547 = arith.mulf %546, %532 : vector<16x16xf32>
    %548 = arith.addf %531, %547 : vector<16x16xf32>
    %549 = vector.extract_strided_slice %514 {offsets = [0, 2], sizes = [16, 16], strides = [1, 1]} : vector<18x18xf32> to vector<16x16xf32>
    %c60 = arith.constant 60 : index
    %550 = memref.load %arg1[%c60] : memref<373xf32, #tpu.memory_space<smem>>
    %551 = vector.broadcast %550 : f32 to vector<16x16xf32>
    %552 = arith.mulf %551, %549 : vector<16x16xf32>
    %553 = arith.addf %536, %552 : vector<16x16xf32>
    %c96 = arith.constant 96 : index
    %554 = memref.load %arg1[%c96] : memref<373xf32, #tpu.memory_space<smem>>
    %555 = vector.broadcast %554 : f32 to vector<16x16xf32>
    %556 = arith.mulf %555, %549 : vector<16x16xf32>
    %557 = arith.addf %540, %556 : vector<16x16xf32>
    %c132 = arith.constant 132 : index
    %558 = memref.load %arg1[%c132] : memref<373xf32, #tpu.memory_space<smem>>
    %559 = vector.broadcast %558 : f32 to vector<16x16xf32>
    %560 = arith.mulf %559, %549 : vector<16x16xf32>
    %561 = arith.addf %544, %560 : vector<16x16xf32>
    %c168 = arith.constant 168 : index
    %562 = memref.load %arg1[%c168] : memref<373xf32, #tpu.memory_space<smem>>
    %563 = vector.broadcast %562 : f32 to vector<16x16xf32>
    %564 = arith.mulf %563, %549 : vector<16x16xf32>
    %565 = arith.addf %548, %564 : vector<16x16xf32>
    %566 = vector.extract_strided_slice %514 {offsets = [1, 0], sizes = [16, 16], strides = [1, 1]} : vector<18x18xf32> to vector<16x16xf32>
    %c61 = arith.constant 61 : index
    %567 = memref.load %arg1[%c61] : memref<373xf32, #tpu.memory_space<smem>>
    %568 = vector.broadcast %567 : f32 to vector<16x16xf32>
    %569 = arith.mulf %568, %566 : vector<16x16xf32>
    %570 = arith.addf %553, %569 : vector<16x16xf32>
    %c97 = arith.constant 97 : index
    %571 = memref.load %arg1[%c97] : memref<373xf32, #tpu.memory_space<smem>>
    %572 = vector.broadcast %571 : f32 to vector<16x16xf32>
    %573 = arith.mulf %572, %566 : vector<16x16xf32>
    %574 = arith.addf %557, %573 : vector<16x16xf32>
    %c133 = arith.constant 133 : index
    %575 = memref.load %arg1[%c133] : memref<373xf32, #tpu.memory_space<smem>>
    %576 = vector.broadcast %575 : f32 to vector<16x16xf32>
    %577 = arith.mulf %576, %566 : vector<16x16xf32>
    %578 = arith.addf %561, %577 : vector<16x16xf32>
    %c169 = arith.constant 169 : index
    %579 = memref.load %arg1[%c169] : memref<373xf32, #tpu.memory_space<smem>>
    %580 = vector.broadcast %579 : f32 to vector<16x16xf32>
    %581 = arith.mulf %580, %566 : vector<16x16xf32>
    %582 = arith.addf %565, %581 : vector<16x16xf32>
    %583 = vector.extract_strided_slice %514 {offsets = [1, 1], sizes = [16, 16], strides = [1, 1]} : vector<18x18xf32> to vector<16x16xf32>
    %c62 = arith.constant 62 : index
    %584 = memref.load %arg1[%c62] : memref<373xf32, #tpu.memory_space<smem>>
    %585 = vector.broadcast %584 : f32 to vector<16x16xf32>
    %586 = arith.mulf %585, %583 : vector<16x16xf32>
    %587 = arith.addf %570, %586 : vector<16x16xf32>
    %c98 = arith.constant 98 : index
    %588 = memref.load %arg1[%c98] : memref<373xf32, #tpu.memory_space<smem>>
    %589 = vector.broadcast %588 : f32 to vector<16x16xf32>
    %590 = arith.mulf %589, %583 : vector<16x16xf32>
    %591 = arith.addf %574, %590 : vector<16x16xf32>
    %c134 = arith.constant 134 : index
    %592 = memref.load %arg1[%c134] : memref<373xf32, #tpu.memory_space<smem>>
    %593 = vector.broadcast %592 : f32 to vector<16x16xf32>
    %594 = arith.mulf %593, %583 : vector<16x16xf32>
    %595 = arith.addf %578, %594 : vector<16x16xf32>
    %c170 = arith.constant 170 : index
    %596 = memref.load %arg1[%c170] : memref<373xf32, #tpu.memory_space<smem>>
    %597 = vector.broadcast %596 : f32 to vector<16x16xf32>
    %598 = arith.mulf %597, %583 : vector<16x16xf32>
    %599 = arith.addf %582, %598 : vector<16x16xf32>
    %600 = vector.extract_strided_slice %514 {offsets = [1, 2], sizes = [16, 16], strides = [1, 1]} : vector<18x18xf32> to vector<16x16xf32>
    %c63 = arith.constant 63 : index
    %601 = memref.load %arg1[%c63] : memref<373xf32, #tpu.memory_space<smem>>
    %602 = vector.broadcast %601 : f32 to vector<16x16xf32>
    %603 = arith.mulf %602, %600 : vector<16x16xf32>
    %604 = arith.addf %587, %603 : vector<16x16xf32>
    %c99 = arith.constant 99 : index
    %605 = memref.load %arg1[%c99] : memref<373xf32, #tpu.memory_space<smem>>
    %606 = vector.broadcast %605 : f32 to vector<16x16xf32>
    %607 = arith.mulf %606, %600 : vector<16x16xf32>
    %608 = arith.addf %591, %607 : vector<16x16xf32>
    %c135 = arith.constant 135 : index
    %609 = memref.load %arg1[%c135] : memref<373xf32, #tpu.memory_space<smem>>
    %610 = vector.broadcast %609 : f32 to vector<16x16xf32>
    %611 = arith.mulf %610, %600 : vector<16x16xf32>
    %612 = arith.addf %595, %611 : vector<16x16xf32>
    %c171 = arith.constant 171 : index
    %613 = memref.load %arg1[%c171] : memref<373xf32, #tpu.memory_space<smem>>
    %614 = vector.broadcast %613 : f32 to vector<16x16xf32>
    %615 = arith.mulf %614, %600 : vector<16x16xf32>
    %616 = arith.addf %599, %615 : vector<16x16xf32>
    %617 = vector.extract_strided_slice %514 {offsets = [2, 0], sizes = [16, 16], strides = [1, 1]} : vector<18x18xf32> to vector<16x16xf32>
    %c64 = arith.constant 64 : index
    %618 = memref.load %arg1[%c64] : memref<373xf32, #tpu.memory_space<smem>>
    %619 = vector.broadcast %618 : f32 to vector<16x16xf32>
    %620 = arith.mulf %619, %617 : vector<16x16xf32>
    %621 = arith.addf %604, %620 : vector<16x16xf32>
    %c100 = arith.constant 100 : index
    %622 = memref.load %arg1[%c100] : memref<373xf32, #tpu.memory_space<smem>>
    %623 = vector.broadcast %622 : f32 to vector<16x16xf32>
    %624 = arith.mulf %623, %617 : vector<16x16xf32>
    %625 = arith.addf %608, %624 : vector<16x16xf32>
    %c136 = arith.constant 136 : index
    %626 = memref.load %arg1[%c136] : memref<373xf32, #tpu.memory_space<smem>>
    %627 = vector.broadcast %626 : f32 to vector<16x16xf32>
    %628 = arith.mulf %627, %617 : vector<16x16xf32>
    %629 = arith.addf %612, %628 : vector<16x16xf32>
    %c172 = arith.constant 172 : index
    %630 = memref.load %arg1[%c172] : memref<373xf32, #tpu.memory_space<smem>>
    %631 = vector.broadcast %630 : f32 to vector<16x16xf32>
    %632 = arith.mulf %631, %617 : vector<16x16xf32>
    %633 = arith.addf %616, %632 : vector<16x16xf32>
    %634 = vector.extract_strided_slice %514 {offsets = [2, 1], sizes = [16, 16], strides = [1, 1]} : vector<18x18xf32> to vector<16x16xf32>
    %c65 = arith.constant 65 : index
    %635 = memref.load %arg1[%c65] : memref<373xf32, #tpu.memory_space<smem>>
    %636 = vector.broadcast %635 : f32 to vector<16x16xf32>
    %637 = arith.mulf %636, %634 : vector<16x16xf32>
    %638 = arith.addf %621, %637 : vector<16x16xf32>
    %c101 = arith.constant 101 : index
    %639 = memref.load %arg1[%c101] : memref<373xf32, #tpu.memory_space<smem>>
    %640 = vector.broadcast %639 : f32 to vector<16x16xf32>
    %641 = arith.mulf %640, %634 : vector<16x16xf32>
    %642 = arith.addf %625, %641 : vector<16x16xf32>
    %c137 = arith.constant 137 : index
    %643 = memref.load %arg1[%c137] : memref<373xf32, #tpu.memory_space<smem>>
    %644 = vector.broadcast %643 : f32 to vector<16x16xf32>
    %645 = arith.mulf %644, %634 : vector<16x16xf32>
    %646 = arith.addf %629, %645 : vector<16x16xf32>
    %c173 = arith.constant 173 : index
    %647 = memref.load %arg1[%c173] : memref<373xf32, #tpu.memory_space<smem>>
    %648 = vector.broadcast %647 : f32 to vector<16x16xf32>
    %649 = arith.mulf %648, %634 : vector<16x16xf32>
    %650 = arith.addf %633, %649 : vector<16x16xf32>
    %651 = vector.extract_strided_slice %514 {offsets = [2, 2], sizes = [16, 16], strides = [1, 1]} : vector<18x18xf32> to vector<16x16xf32>
    %c66 = arith.constant 66 : index
    %652 = memref.load %arg1[%c66] : memref<373xf32, #tpu.memory_space<smem>>
    %653 = vector.broadcast %652 : f32 to vector<16x16xf32>
    %654 = arith.mulf %653, %651 : vector<16x16xf32>
    %655 = arith.addf %638, %654 : vector<16x16xf32>
    %c102 = arith.constant 102 : index
    %656 = memref.load %arg1[%c102] : memref<373xf32, #tpu.memory_space<smem>>
    %657 = vector.broadcast %656 : f32 to vector<16x16xf32>
    %658 = arith.mulf %657, %651 : vector<16x16xf32>
    %659 = arith.addf %642, %658 : vector<16x16xf32>
    %c138 = arith.constant 138 : index
    %660 = memref.load %arg1[%c138] : memref<373xf32, #tpu.memory_space<smem>>
    %661 = vector.broadcast %660 : f32 to vector<16x16xf32>
    %662 = arith.mulf %661, %651 : vector<16x16xf32>
    %663 = arith.addf %646, %662 : vector<16x16xf32>
    %c174 = arith.constant 174 : index
    %664 = memref.load %arg1[%c174] : memref<373xf32, #tpu.memory_space<smem>>
    %665 = vector.broadcast %664 : f32 to vector<16x16xf32>
    %666 = arith.mulf %665, %651 : vector<16x16xf32>
    %667 = arith.addf %650, %666 : vector<16x16xf32>
    %c3_34 = arith.constant 3 : index
    %c0_35 = arith.constant 0 : index
    %c0_36 = arith.constant 0 : index
    %668 = vector.load %arg4[%c3_34, %c0_35, %c0_36] : memref<4x18x18xf32, #tpu.memory_space<vmem>>, vector<1x18x18xf32>
    %669 = vector.shape_cast %668 : vector<1x18x18xf32> to vector<18x18xf32>
    %670 = vector.extract_strided_slice %669 {offsets = [0, 0], sizes = [16, 16], strides = [1, 1]} : vector<18x18xf32> to vector<16x16xf32>
    %c67 = arith.constant 67 : index
    %671 = memref.load %arg1[%c67] : memref<373xf32, #tpu.memory_space<smem>>
    %672 = vector.broadcast %671 : f32 to vector<16x16xf32>
    %673 = arith.mulf %672, %670 : vector<16x16xf32>
    %674 = arith.addf %655, %673 : vector<16x16xf32>
    %c103 = arith.constant 103 : index
    %675 = memref.load %arg1[%c103] : memref<373xf32, #tpu.memory_space<smem>>
    %676 = vector.broadcast %675 : f32 to vector<16x16xf32>
    %677 = arith.mulf %676, %670 : vector<16x16xf32>
    %678 = arith.addf %659, %677 : vector<16x16xf32>
    %c139 = arith.constant 139 : index
    %679 = memref.load %arg1[%c139] : memref<373xf32, #tpu.memory_space<smem>>
    %680 = vector.broadcast %679 : f32 to vector<16x16xf32>
    %681 = arith.mulf %680, %670 : vector<16x16xf32>
    %682 = arith.addf %663, %681 : vector<16x16xf32>
    %c175 = arith.constant 175 : index
    %683 = memref.load %arg1[%c175] : memref<373xf32, #tpu.memory_space<smem>>
    %684 = vector.broadcast %683 : f32 to vector<16x16xf32>
    %685 = arith.mulf %684, %670 : vector<16x16xf32>
    %686 = arith.addf %667, %685 : vector<16x16xf32>
    %687 = vector.extract_strided_slice %669 {offsets = [0, 1], sizes = [16, 16], strides = [1, 1]} : vector<18x18xf32> to vector<16x16xf32>
    %c68 = arith.constant 68 : index
    %688 = memref.load %arg1[%c68] : memref<373xf32, #tpu.memory_space<smem>>
    %689 = vector.broadcast %688 : f32 to vector<16x16xf32>
    %690 = arith.mulf %689, %687 : vector<16x16xf32>
    %691 = arith.addf %674, %690 : vector<16x16xf32>
    %c104 = arith.constant 104 : index
    %692 = memref.load %arg1[%c104] : memref<373xf32, #tpu.memory_space<smem>>
    %693 = vector.broadcast %692 : f32 to vector<16x16xf32>
    %694 = arith.mulf %693, %687 : vector<16x16xf32>
    %695 = arith.addf %678, %694 : vector<16x16xf32>
    %c140 = arith.constant 140 : index
    %696 = memref.load %arg1[%c140] : memref<373xf32, #tpu.memory_space<smem>>
    %697 = vector.broadcast %696 : f32 to vector<16x16xf32>
    %698 = arith.mulf %697, %687 : vector<16x16xf32>
    %699 = arith.addf %682, %698 : vector<16x16xf32>
    %c176 = arith.constant 176 : index
    %700 = memref.load %arg1[%c176] : memref<373xf32, #tpu.memory_space<smem>>
    %701 = vector.broadcast %700 : f32 to vector<16x16xf32>
    %702 = arith.mulf %701, %687 : vector<16x16xf32>
    %703 = arith.addf %686, %702 : vector<16x16xf32>
    %704 = vector.extract_strided_slice %669 {offsets = [0, 2], sizes = [16, 16], strides = [1, 1]} : vector<18x18xf32> to vector<16x16xf32>
    %c69 = arith.constant 69 : index
    %705 = memref.load %arg1[%c69] : memref<373xf32, #tpu.memory_space<smem>>
    %706 = vector.broadcast %705 : f32 to vector<16x16xf32>
    %707 = arith.mulf %706, %704 : vector<16x16xf32>
    %708 = arith.addf %691, %707 : vector<16x16xf32>
    %c105 = arith.constant 105 : index
    %709 = memref.load %arg1[%c105] : memref<373xf32, #tpu.memory_space<smem>>
    %710 = vector.broadcast %709 : f32 to vector<16x16xf32>
    %711 = arith.mulf %710, %704 : vector<16x16xf32>
    %712 = arith.addf %695, %711 : vector<16x16xf32>
    %c141 = arith.constant 141 : index
    %713 = memref.load %arg1[%c141] : memref<373xf32, #tpu.memory_space<smem>>
    %714 = vector.broadcast %713 : f32 to vector<16x16xf32>
    %715 = arith.mulf %714, %704 : vector<16x16xf32>
    %716 = arith.addf %699, %715 : vector<16x16xf32>
    %c177 = arith.constant 177 : index
    %717 = memref.load %arg1[%c177] : memref<373xf32, #tpu.memory_space<smem>>
    %718 = vector.broadcast %717 : f32 to vector<16x16xf32>
    %719 = arith.mulf %718, %704 : vector<16x16xf32>
    %720 = arith.addf %703, %719 : vector<16x16xf32>
    %721 = vector.extract_strided_slice %669 {offsets = [1, 0], sizes = [16, 16], strides = [1, 1]} : vector<18x18xf32> to vector<16x16xf32>
    %c70 = arith.constant 70 : index
    %722 = memref.load %arg1[%c70] : memref<373xf32, #tpu.memory_space<smem>>
    %723 = vector.broadcast %722 : f32 to vector<16x16xf32>
    %724 = arith.mulf %723, %721 : vector<16x16xf32>
    %725 = arith.addf %708, %724 : vector<16x16xf32>
    %c106 = arith.constant 106 : index
    %726 = memref.load %arg1[%c106] : memref<373xf32, #tpu.memory_space<smem>>
    %727 = vector.broadcast %726 : f32 to vector<16x16xf32>
    %728 = arith.mulf %727, %721 : vector<16x16xf32>
    %729 = arith.addf %712, %728 : vector<16x16xf32>
    %c142 = arith.constant 142 : index
    %730 = memref.load %arg1[%c142] : memref<373xf32, #tpu.memory_space<smem>>
    %731 = vector.broadcast %730 : f32 to vector<16x16xf32>
    %732 = arith.mulf %731, %721 : vector<16x16xf32>
    %733 = arith.addf %716, %732 : vector<16x16xf32>
    %c178 = arith.constant 178 : index
    %734 = memref.load %arg1[%c178] : memref<373xf32, #tpu.memory_space<smem>>
    %735 = vector.broadcast %734 : f32 to vector<16x16xf32>
    %736 = arith.mulf %735, %721 : vector<16x16xf32>
    %737 = arith.addf %720, %736 : vector<16x16xf32>
    %738 = vector.extract_strided_slice %669 {offsets = [1, 1], sizes = [16, 16], strides = [1, 1]} : vector<18x18xf32> to vector<16x16xf32>
    %c71 = arith.constant 71 : index
    %739 = memref.load %arg1[%c71] : memref<373xf32, #tpu.memory_space<smem>>
    %740 = vector.broadcast %739 : f32 to vector<16x16xf32>
    %741 = arith.mulf %740, %738 : vector<16x16xf32>
    %742 = arith.addf %725, %741 : vector<16x16xf32>
    %c107 = arith.constant 107 : index
    %743 = memref.load %arg1[%c107] : memref<373xf32, #tpu.memory_space<smem>>
    %744 = vector.broadcast %743 : f32 to vector<16x16xf32>
    %745 = arith.mulf %744, %738 : vector<16x16xf32>
    %746 = arith.addf %729, %745 : vector<16x16xf32>
    %c143 = arith.constant 143 : index
    %747 = memref.load %arg1[%c143] : memref<373xf32, #tpu.memory_space<smem>>
    %748 = vector.broadcast %747 : f32 to vector<16x16xf32>
    %749 = arith.mulf %748, %738 : vector<16x16xf32>
    %750 = arith.addf %733, %749 : vector<16x16xf32>
    %c179 = arith.constant 179 : index
    %751 = memref.load %arg1[%c179] : memref<373xf32, #tpu.memory_space<smem>>
    %752 = vector.broadcast %751 : f32 to vector<16x16xf32>
    %753 = arith.mulf %752, %738 : vector<16x16xf32>
    %754 = arith.addf %737, %753 : vector<16x16xf32>
    %755 = vector.extract_strided_slice %669 {offsets = [1, 2], sizes = [16, 16], strides = [1, 1]} : vector<18x18xf32> to vector<16x16xf32>
    %c72 = arith.constant 72 : index
    %756 = memref.load %arg1[%c72] : memref<373xf32, #tpu.memory_space<smem>>
    %757 = vector.broadcast %756 : f32 to vector<16x16xf32>
    %758 = arith.mulf %757, %755 : vector<16x16xf32>
    %759 = arith.addf %742, %758 : vector<16x16xf32>
    %c108 = arith.constant 108 : index
    %760 = memref.load %arg1[%c108] : memref<373xf32, #tpu.memory_space<smem>>
    %761 = vector.broadcast %760 : f32 to vector<16x16xf32>
    %762 = arith.mulf %761, %755 : vector<16x16xf32>
    %763 = arith.addf %746, %762 : vector<16x16xf32>
    %c144 = arith.constant 144 : index
    %764 = memref.load %arg1[%c144] : memref<373xf32, #tpu.memory_space<smem>>
    %765 = vector.broadcast %764 : f32 to vector<16x16xf32>
    %766 = arith.mulf %765, %755 : vector<16x16xf32>
    %767 = arith.addf %750, %766 : vector<16x16xf32>
    %c180 = arith.constant 180 : index
    %768 = memref.load %arg1[%c180] : memref<373xf32, #tpu.memory_space<smem>>
    %769 = vector.broadcast %768 : f32 to vector<16x16xf32>
    %770 = arith.mulf %769, %755 : vector<16x16xf32>
    %771 = arith.addf %754, %770 : vector<16x16xf32>
    %772 = vector.extract_strided_slice %669 {offsets = [2, 0], sizes = [16, 16], strides = [1, 1]} : vector<18x18xf32> to vector<16x16xf32>
    %c73 = arith.constant 73 : index
    %773 = memref.load %arg1[%c73] : memref<373xf32, #tpu.memory_space<smem>>
    %774 = vector.broadcast %773 : f32 to vector<16x16xf32>
    %775 = arith.mulf %774, %772 : vector<16x16xf32>
    %776 = arith.addf %759, %775 : vector<16x16xf32>
    %c109 = arith.constant 109 : index
    %777 = memref.load %arg1[%c109] : memref<373xf32, #tpu.memory_space<smem>>
    %778 = vector.broadcast %777 : f32 to vector<16x16xf32>
    %779 = arith.mulf %778, %772 : vector<16x16xf32>
    %780 = arith.addf %763, %779 : vector<16x16xf32>
    %c145 = arith.constant 145 : index
    %781 = memref.load %arg1[%c145] : memref<373xf32, #tpu.memory_space<smem>>
    %782 = vector.broadcast %781 : f32 to vector<16x16xf32>
    %783 = arith.mulf %782, %772 : vector<16x16xf32>
    %784 = arith.addf %767, %783 : vector<16x16xf32>
    %c181 = arith.constant 181 : index
    %785 = memref.load %arg1[%c181] : memref<373xf32, #tpu.memory_space<smem>>
    %786 = vector.broadcast %785 : f32 to vector<16x16xf32>
    %787 = arith.mulf %786, %772 : vector<16x16xf32>
    %788 = arith.addf %771, %787 : vector<16x16xf32>
    %789 = vector.extract_strided_slice %669 {offsets = [2, 1], sizes = [16, 16], strides = [1, 1]} : vector<18x18xf32> to vector<16x16xf32>
    %c74 = arith.constant 74 : index
    %790 = memref.load %arg1[%c74] : memref<373xf32, #tpu.memory_space<smem>>
    %791 = vector.broadcast %790 : f32 to vector<16x16xf32>
    %792 = arith.mulf %791, %789 : vector<16x16xf32>
    %793 = arith.addf %776, %792 : vector<16x16xf32>
    %c110 = arith.constant 110 : index
    %794 = memref.load %arg1[%c110] : memref<373xf32, #tpu.memory_space<smem>>
    %795 = vector.broadcast %794 : f32 to vector<16x16xf32>
    %796 = arith.mulf %795, %789 : vector<16x16xf32>
    %797 = arith.addf %780, %796 : vector<16x16xf32>
    %c146 = arith.constant 146 : index
    %798 = memref.load %arg1[%c146] : memref<373xf32, #tpu.memory_space<smem>>
    %799 = vector.broadcast %798 : f32 to vector<16x16xf32>
    %800 = arith.mulf %799, %789 : vector<16x16xf32>
    %801 = arith.addf %784, %800 : vector<16x16xf32>
    %c182 = arith.constant 182 : index
    %802 = memref.load %arg1[%c182] : memref<373xf32, #tpu.memory_space<smem>>
    %803 = vector.broadcast %802 : f32 to vector<16x16xf32>
    %804 = arith.mulf %803, %789 : vector<16x16xf32>
    %805 = arith.addf %788, %804 : vector<16x16xf32>
    %806 = vector.extract_strided_slice %669 {offsets = [2, 2], sizes = [16, 16], strides = [1, 1]} : vector<18x18xf32> to vector<16x16xf32>
    %c75 = arith.constant 75 : index
    %807 = memref.load %arg1[%c75] : memref<373xf32, #tpu.memory_space<smem>>
    %808 = vector.broadcast %807 : f32 to vector<16x16xf32>
    %809 = arith.mulf %808, %806 : vector<16x16xf32>
    %810 = arith.addf %793, %809 : vector<16x16xf32>
    %c111 = arith.constant 111 : index
    %811 = memref.load %arg1[%c111] : memref<373xf32, #tpu.memory_space<smem>>
    %812 = vector.broadcast %811 : f32 to vector<16x16xf32>
    %813 = arith.mulf %812, %806 : vector<16x16xf32>
    %814 = arith.addf %797, %813 : vector<16x16xf32>
    %c147 = arith.constant 147 : index
    %815 = memref.load %arg1[%c147] : memref<373xf32, #tpu.memory_space<smem>>
    %816 = vector.broadcast %815 : f32 to vector<16x16xf32>
    %817 = arith.mulf %816, %806 : vector<16x16xf32>
    %818 = arith.addf %801, %817 : vector<16x16xf32>
    %c183 = arith.constant 183 : index
    %819 = memref.load %arg1[%c183] : memref<373xf32, #tpu.memory_space<smem>>
    %820 = vector.broadcast %819 : f32 to vector<16x16xf32>
    %821 = arith.mulf %820, %806 : vector<16x16xf32>
    %822 = arith.addf %805, %821 : vector<16x16xf32>
    %cst_37 = arith.constant 0.000000e+00 : f32
    %823 = vector.broadcast %cst_37 : f32 to vector<16x1xf32>
    %824 = tpu.concatenate %823, %810, %823 in 1 : vector<16x1xf32>, vector<16x16xf32>, vector<16x1xf32> -> vector<16x18xf32>
    %cst_38 = arith.constant 0.000000e+00 : f32
    %825 = vector.broadcast %cst_38 : f32 to vector<1x18xf32>
    %826 = tpu.concatenate %825, %824, %825 in 0 : vector<1x18xf32>, vector<16x18xf32>, vector<1x18xf32> -> vector<18x18xf32>
    %c0_39 = arith.constant 0 : index
    %c0_40 = arith.constant 0 : index
    %c0_41 = arith.constant 0 : index
    %827 = vector.load %arg5[%c0_39, %c0_40, %c0_41] : memref<4x18x18xf32, #tpu.memory_space<vmem>>, vector<1x18x18xf32>
    %828 = vector.shape_cast %827 : vector<1x18x18xf32> to vector<18x18xf32>
    %829 = vector.shape_cast %826 : vector<18x18xf32> to vector<1x18x18xf32>
    tpu.vector_store %arg5[%c0_39, %c0_40, %c0_41], %829 {strides = array<i32>} : memref<4x18x18xf32, #tpu.memory_space<vmem>>, vector<1x18x18xf32>,
    %cst_42 = arith.constant 0.000000e+00 : f32
    %830 = vector.broadcast %cst_42 : f32 to vector<16x1xf32>
    %831 = tpu.concatenate %830, %814, %830 in 1 : vector<16x1xf32>, vector<16x16xf32>, vector<16x1xf32> -> vector<16x18xf32>
    %cst_43 = arith.constant 0.000000e+00 : f32
    %832 = vector.broadcast %cst_43 : f32 to vector<1x18xf32>
    %833 = tpu.concatenate %832, %831, %832 in 0 : vector<1x18xf32>, vector<16x18xf32>, vector<1x18xf32> -> vector<18x18xf32>
    %c1_44 = arith.constant 1 : index
    %c0_45 = arith.constant 0 : index
    %c0_46 = arith.constant 0 : index
    %834 = vector.load %arg5[%c1_44, %c0_45, %c0_46] : memref<4x18x18xf32, #tpu.memory_space<vmem>>, vector<1x18x18xf32>
    %835 = vector.shape_cast %834 : vector<1x18x18xf32> to vector<18x18xf32>
    %836 = vector.shape_cast %833 : vector<18x18xf32> to vector<1x18x18xf32>
    tpu.vector_store %arg5[%c1_44, %c0_45, %c0_46], %836 {strides = array<i32>} : memref<4x18x18xf32, #tpu.memory_space<vmem>>, vector<1x18x18xf32>,
    %cst_47 = arith.constant 0.000000e+00 : f32
    %837 = vector.broadcast %cst_47 : f32 to vector<16x1xf32>
    %838 = tpu.concatenate %837, %818, %837 in 1 : vector<16x1xf32>, vector<16x16xf32>, vector<16x1xf32> -> vector<16x18xf32>
    %cst_48 = arith.constant 0.000000e+00 : f32
    %839 = vector.broadcast %cst_48 : f32 to vector<1x18xf32>
    %840 = tpu.concatenate %839, %838, %839 in 0 : vector<1x18xf32>, vector<16x18xf32>, vector<1x18xf32> -> vector<18x18xf32>
    %c2_49 = arith.constant 2 : index
    %c0_50 = arith.constant 0 : index
    %c0_51 = arith.constant 0 : index
    %841 = vector.load %arg5[%c2_49, %c0_50, %c0_51] : memref<4x18x18xf32, #tpu.memory_space<vmem>>, vector<1x18x18xf32>
    %842 = vector.shape_cast %841 : vector<1x18x18xf32> to vector<18x18xf32>
    %843 = vector.shape_cast %840 : vector<18x18xf32> to vector<1x18x18xf32>
    tpu.vector_store %arg5[%c2_49, %c0_50, %c0_51], %843 {strides = array<i32>} : memref<4x18x18xf32, #tpu.memory_space<vmem>>, vector<1x18x18xf32>,
    %cst_52 = arith.constant 0.000000e+00 : f32
    %844 = vector.broadcast %cst_52 : f32 to vector<16x1xf32>
    %845 = tpu.concatenate %844, %822, %844 in 1 : vector<16x1xf32>, vector<16x16xf32>, vector<16x1xf32> -> vector<16x18xf32>
    %cst_53 = arith.constant 0.000000e+00 : f32
    %846 = vector.broadcast %cst_53 : f32 to vector<1x18xf32>
    %847 = tpu.concatenate %846, %845, %846 in 0 : vector<1x18xf32>, vector<16x18xf32>, vector<1x18xf32> -> vector<18x18xf32>
    %c3_54 = arith.constant 3 : index
    %c0_55 = arith.constant 0 : index
    %c0_56 = arith.constant 0 : index
    %848 = vector.load %arg5[%c3_54, %c0_55, %c0_56] : memref<4x18x18xf32, #tpu.memory_space<vmem>>, vector<1x18x18xf32>
    %849 = vector.shape_cast %848 : vector<1x18x18xf32> to vector<18x18xf32>
    %850 = vector.shape_cast %847 : vector<18x18xf32> to vector<1x18x18xf32>
    tpu.vector_store %arg5[%c3_54, %c0_55, %c0_56], %850 {strides = array<i32>} : memref<4x18x18xf32, #tpu.memory_space<vmem>>, vector<1x18x18xf32>,
    %c332 = arith.constant 332 : index
    %851 = memref.load %arg1[%c332] : memref<373xf32, #tpu.memory_space<smem>>
    %852 = vector.broadcast %851 : f32 to vector<16x16xf32>
    %c333 = arith.constant 333 : index
    %853 = memref.load %arg1[%c333] : memref<373xf32, #tpu.memory_space<smem>>
    %854 = vector.broadcast %853 : f32 to vector<16x16xf32>
    %c334 = arith.constant 334 : index
    %855 = memref.load %arg1[%c334] : memref<373xf32, #tpu.memory_space<smem>>
    %856 = vector.broadcast %855 : f32 to vector<16x16xf32>
    %c335 = arith.constant 335 : index
    %857 = memref.load %arg1[%c335] : memref<373xf32, #tpu.memory_space<smem>>
    %858 = vector.broadcast %857 : f32 to vector<16x16xf32>
    %c0_57 = arith.constant 0 : index
    %c0_58 = arith.constant 0 : index
    %c0_59 = arith.constant 0 : index
    %859 = vector.load %arg5[%c0_57, %c0_58, %c0_59] : memref<4x18x18xf32, #tpu.memory_space<vmem>>, vector<1x18x18xf32>
    %860 = vector.shape_cast %859 : vector<1x18x18xf32> to vector<18x18xf32>
    %861 = vector.extract_strided_slice %860 {offsets = [0, 0], sizes = [16, 16], strides = [1, 1]} : vector<18x18xf32> to vector<16x16xf32>
    %c188 = arith.constant 188 : index
    %862 = memref.load %arg1[%c188] : memref<373xf32, #tpu.memory_space<smem>>
    %863 = vector.broadcast %862 : f32 to vector<16x16xf32>
    %864 = arith.mulf %863, %861 : vector<16x16xf32>
    %865 = arith.addf %852, %864 : vector<16x16xf32>
    %c224 = arith.constant 224 : index
    %866 = memref.load %arg1[%c224] : memref<373xf32, #tpu.memory_space<smem>>
    %867 = vector.broadcast %866 : f32 to vector<16x16xf32>
    %868 = arith.mulf %867, %861 : vector<16x16xf32>
    %869 = arith.addf %854, %868 : vector<16x16xf32>
    %c260 = arith.constant 260 : index
    %870 = memref.load %arg1[%c260] : memref<373xf32, #tpu.memory_space<smem>>
    %871 = vector.broadcast %870 : f32 to vector<16x16xf32>
    %872 = arith.mulf %871, %861 : vector<16x16xf32>
    %873 = arith.addf %856, %872 : vector<16x16xf32>
    %c296 = arith.constant 296 : index
    %874 = memref.load %arg1[%c296] : memref<373xf32, #tpu.memory_space<smem>>
    %875 = vector.broadcast %874 : f32 to vector<16x16xf32>
    %876 = arith.mulf %875, %861 : vector<16x16xf32>
    %877 = arith.addf %858, %876 : vector<16x16xf32>
    %878 = vector.extract_strided_slice %860 {offsets = [0, 1], sizes = [16, 16], strides = [1, 1]} : vector<18x18xf32> to vector<16x16xf32>
    %c189 = arith.constant 189 : index
    %879 = memref.load %arg1[%c189] : memref<373xf32, #tpu.memory_space<smem>>
    %880 = vector.broadcast %879 : f32 to vector<16x16xf32>
    %881 = arith.mulf %880, %878 : vector<16x16xf32>
    %882 = arith.addf %865, %881 : vector<16x16xf32>
    %c225 = arith.constant 225 : index
    %883 = memref.load %arg1[%c225] : memref<373xf32, #tpu.memory_space<smem>>
    %884 = vector.broadcast %883 : f32 to vector<16x16xf32>
    %885 = arith.mulf %884, %878 : vector<16x16xf32>
    %886 = arith.addf %869, %885 : vector<16x16xf32>
    %c261 = arith.constant 261 : index
    %887 = memref.load %arg1[%c261] : memref<373xf32, #tpu.memory_space<smem>>
    %888 = vector.broadcast %887 : f32 to vector<16x16xf32>
    %889 = arith.mulf %888, %878 : vector<16x16xf32>
    %890 = arith.addf %873, %889 : vector<16x16xf32>
    %c297 = arith.constant 297 : index
    %891 = memref.load %arg1[%c297] : memref<373xf32, #tpu.memory_space<smem>>
    %892 = vector.broadcast %891 : f32 to vector<16x16xf32>
    %893 = arith.mulf %892, %878 : vector<16x16xf32>
    %894 = arith.addf %877, %893 : vector<16x16xf32>
    %895 = vector.extract_strided_slice %860 {offsets = [0, 2], sizes = [16, 16], strides = [1, 1]} : vector<18x18xf32> to vector<16x16xf32>
    %c190 = arith.constant 190 : index
    %896 = memref.load %arg1[%c190] : memref<373xf32, #tpu.memory_space<smem>>
    %897 = vector.broadcast %896 : f32 to vector<16x16xf32>
    %898 = arith.mulf %897, %895 : vector<16x16xf32>
    %899 = arith.addf %882, %898 : vector<16x16xf32>
    %c226 = arith.constant 226 : index
    %900 = memref.load %arg1[%c226] : memref<373xf32, #tpu.memory_space<smem>>
    %901 = vector.broadcast %900 : f32 to vector<16x16xf32>
    %902 = arith.mulf %901, %895 : vector<16x16xf32>
    %903 = arith.addf %886, %902 : vector<16x16xf32>
    %c262 = arith.constant 262 : index
    %904 = memref.load %arg1[%c262] : memref<373xf32, #tpu.memory_space<smem>>
    %905 = vector.broadcast %904 : f32 to vector<16x16xf32>
    %906 = arith.mulf %905, %895 : vector<16x16xf32>
    %907 = arith.addf %890, %906 : vector<16x16xf32>
    %c298 = arith.constant 298 : index
    %908 = memref.load %arg1[%c298] : memref<373xf32, #tpu.memory_space<smem>>
    %909 = vector.broadcast %908 : f32 to vector<16x16xf32>
    %910 = arith.mulf %909, %895 : vector<16x16xf32>
    %911 = arith.addf %894, %910 : vector<16x16xf32>
    %912 = vector.extract_strided_slice %860 {offsets = [1, 0], sizes = [16, 16], strides = [1, 1]} : vector<18x18xf32> to vector<16x16xf32>
    %c191 = arith.constant 191 : index
    %913 = memref.load %arg1[%c191] : memref<373xf32, #tpu.memory_space<smem>>
    %914 = vector.broadcast %913 : f32 to vector<16x16xf32>
    %915 = arith.mulf %914, %912 : vector<16x16xf32>
    %916 = arith.addf %899, %915 : vector<16x16xf32>
    %c227 = arith.constant 227 : index
    %917 = memref.load %arg1[%c227] : memref<373xf32, #tpu.memory_space<smem>>
    %918 = vector.broadcast %917 : f32 to vector<16x16xf32>
    %919 = arith.mulf %918, %912 : vector<16x16xf32>
    %920 = arith.addf %903, %919 : vector<16x16xf32>
    %c263 = arith.constant 263 : index
    %921 = memref.load %arg1[%c263] : memref<373xf32, #tpu.memory_space<smem>>
    %922 = vector.broadcast %921 : f32 to vector<16x16xf32>
    %923 = arith.mulf %922, %912 : vector<16x16xf32>
    %924 = arith.addf %907, %923 : vector<16x16xf32>
    %c299 = arith.constant 299 : index
    %925 = memref.load %arg1[%c299] : memref<373xf32, #tpu.memory_space<smem>>
    %926 = vector.broadcast %925 : f32 to vector<16x16xf32>
    %927 = arith.mulf %926, %912 : vector<16x16xf32>
    %928 = arith.addf %911, %927 : vector<16x16xf32>
    %929 = vector.extract_strided_slice %860 {offsets = [1, 1], sizes = [16, 16], strides = [1, 1]} : vector<18x18xf32> to vector<16x16xf32>
    %c192 = arith.constant 192 : index
    %930 = memref.load %arg1[%c192] : memref<373xf32, #tpu.memory_space<smem>>
    %931 = vector.broadcast %930 : f32 to vector<16x16xf32>
    %932 = arith.mulf %931, %929 : vector<16x16xf32>
    %933 = arith.addf %916, %932 : vector<16x16xf32>
    %c228 = arith.constant 228 : index
    %934 = memref.load %arg1[%c228] : memref<373xf32, #tpu.memory_space<smem>>
    %935 = vector.broadcast %934 : f32 to vector<16x16xf32>
    %936 = arith.mulf %935, %929 : vector<16x16xf32>
    %937 = arith.addf %920, %936 : vector<16x16xf32>
    %c264 = arith.constant 264 : index
    %938 = memref.load %arg1[%c264] : memref<373xf32, #tpu.memory_space<smem>>
    %939 = vector.broadcast %938 : f32 to vector<16x16xf32>
    %940 = arith.mulf %939, %929 : vector<16x16xf32>
    %941 = arith.addf %924, %940 : vector<16x16xf32>
    %c300 = arith.constant 300 : index
    %942 = memref.load %arg1[%c300] : memref<373xf32, #tpu.memory_space<smem>>
    %943 = vector.broadcast %942 : f32 to vector<16x16xf32>
    %944 = arith.mulf %943, %929 : vector<16x16xf32>
    %945 = arith.addf %928, %944 : vector<16x16xf32>
    %946 = vector.extract_strided_slice %860 {offsets = [1, 2], sizes = [16, 16], strides = [1, 1]} : vector<18x18xf32> to vector<16x16xf32>
    %c193 = arith.constant 193 : index
    %947 = memref.load %arg1[%c193] : memref<373xf32, #tpu.memory_space<smem>>
    %948 = vector.broadcast %947 : f32 to vector<16x16xf32>
    %949 = arith.mulf %948, %946 : vector<16x16xf32>
    %950 = arith.addf %933, %949 : vector<16x16xf32>
    %c229 = arith.constant 229 : index
    %951 = memref.load %arg1[%c229] : memref<373xf32, #tpu.memory_space<smem>>
    %952 = vector.broadcast %951 : f32 to vector<16x16xf32>
    %953 = arith.mulf %952, %946 : vector<16x16xf32>
    %954 = arith.addf %937, %953 : vector<16x16xf32>
    %c265 = arith.constant 265 : index
    %955 = memref.load %arg1[%c265] : memref<373xf32, #tpu.memory_space<smem>>
    %956 = vector.broadcast %955 : f32 to vector<16x16xf32>
    %957 = arith.mulf %956, %946 : vector<16x16xf32>
    %958 = arith.addf %941, %957 : vector<16x16xf32>
    %c301 = arith.constant 301 : index
    %959 = memref.load %arg1[%c301] : memref<373xf32, #tpu.memory_space<smem>>
    %960 = vector.broadcast %959 : f32 to vector<16x16xf32>
    %961 = arith.mulf %960, %946 : vector<16x16xf32>
    %962 = arith.addf %945, %961 : vector<16x16xf32>
    %963 = vector.extract_strided_slice %860 {offsets = [2, 0], sizes = [16, 16], strides = [1, 1]} : vector<18x18xf32> to vector<16x16xf32>
    %c194 = arith.constant 194 : index
    %964 = memref.load %arg1[%c194] : memref<373xf32, #tpu.memory_space<smem>>
    %965 = vector.broadcast %964 : f32 to vector<16x16xf32>
    %966 = arith.mulf %965, %963 : vector<16x16xf32>
    %967 = arith.addf %950, %966 : vector<16x16xf32>
    %c230 = arith.constant 230 : index
    %968 = memref.load %arg1[%c230] : memref<373xf32, #tpu.memory_space<smem>>
    %969 = vector.broadcast %968 : f32 to vector<16x16xf32>
    %970 = arith.mulf %969, %963 : vector<16x16xf32>
    %971 = arith.addf %954, %970 : vector<16x16xf32>
    %c266 = arith.constant 266 : index
    %972 = memref.load %arg1[%c266] : memref<373xf32, #tpu.memory_space<smem>>
    %973 = vector.broadcast %972 : f32 to vector<16x16xf32>
    %974 = arith.mulf %973, %963 : vector<16x16xf32>
    %975 = arith.addf %958, %974 : vector<16x16xf32>
    %c302 = arith.constant 302 : index
    %976 = memref.load %arg1[%c302] : memref<373xf32, #tpu.memory_space<smem>>
    %977 = vector.broadcast %976 : f32 to vector<16x16xf32>
    %978 = arith.mulf %977, %963 : vector<16x16xf32>
    %979 = arith.addf %962, %978 : vector<16x16xf32>
    %980 = vector.extract_strided_slice %860 {offsets = [2, 1], sizes = [16, 16], strides = [1, 1]} : vector<18x18xf32> to vector<16x16xf32>
    %c195 = arith.constant 195 : index
    %981 = memref.load %arg1[%c195] : memref<373xf32, #tpu.memory_space<smem>>
    %982 = vector.broadcast %981 : f32 to vector<16x16xf32>
    %983 = arith.mulf %982, %980 : vector<16x16xf32>
    %984 = arith.addf %967, %983 : vector<16x16xf32>
    %c231 = arith.constant 231 : index
    %985 = memref.load %arg1[%c231] : memref<373xf32, #tpu.memory_space<smem>>
    %986 = vector.broadcast %985 : f32 to vector<16x16xf32>
    %987 = arith.mulf %986, %980 : vector<16x16xf32>
    %988 = arith.addf %971, %987 : vector<16x16xf32>
    %c267 = arith.constant 267 : index
    %989 = memref.load %arg1[%c267] : memref<373xf32, #tpu.memory_space<smem>>
    %990 = vector.broadcast %989 : f32 to vector<16x16xf32>
    %991 = arith.mulf %990, %980 : vector<16x16xf32>
    %992 = arith.addf %975, %991 : vector<16x16xf32>
    %c303 = arith.constant 303 : index
    %993 = memref.load %arg1[%c303] : memref<373xf32, #tpu.memory_space<smem>>
    %994 = vector.broadcast %993 : f32 to vector<16x16xf32>
    %995 = arith.mulf %994, %980 : vector<16x16xf32>
    %996 = arith.addf %979, %995 : vector<16x16xf32>
    %997 = vector.extract_strided_slice %860 {offsets = [2, 2], sizes = [16, 16], strides = [1, 1]} : vector<18x18xf32> to vector<16x16xf32>
    %c196 = arith.constant 196 : index
    %998 = memref.load %arg1[%c196] : memref<373xf32, #tpu.memory_space<smem>>
    %999 = vector.broadcast %998 : f32 to vector<16x16xf32>
    %1000 = arith.mulf %999, %997 : vector<16x16xf32>
    %1001 = arith.addf %984, %1000 : vector<16x16xf32>
    %c232 = arith.constant 232 : index
    %1002 = memref.load %arg1[%c232] : memref<373xf32, #tpu.memory_space<smem>>
    %1003 = vector.broadcast %1002 : f32 to vector<16x16xf32>
    %1004 = arith.mulf %1003, %997 : vector<16x16xf32>
    %1005 = arith.addf %988, %1004 : vector<16x16xf32>
    %c268 = arith.constant 268 : index
    %1006 = memref.load %arg1[%c268] : memref<373xf32, #tpu.memory_space<smem>>
    %1007 = vector.broadcast %1006 : f32 to vector<16x16xf32>
    %1008 = arith.mulf %1007, %997 : vector<16x16xf32>
    %1009 = arith.addf %992, %1008 : vector<16x16xf32>
    %c304 = arith.constant 304 : index
    %1010 = memref.load %arg1[%c304] : memref<373xf32, #tpu.memory_space<smem>>
    %1011 = vector.broadcast %1010 : f32 to vector<16x16xf32>
    %1012 = arith.mulf %1011, %997 : vector<16x16xf32>
    %1013 = arith.addf %996, %1012 : vector<16x16xf32>
    %c1_60 = arith.constant 1 : index
    %c0_61 = arith.constant 0 : index
    %c0_62 = arith.constant 0 : index
    %1014 = vector.load %arg5[%c1_60, %c0_61, %c0_62] : memref<4x18x18xf32, #tpu.memory_space<vmem>>, vector<1x18x18xf32>
    %1015 = vector.shape_cast %1014 : vector<1x18x18xf32> to vector<18x18xf32>
    %1016 = vector.extract_strided_slice %1015 {offsets = [0, 0], sizes = [16, 16], strides = [1, 1]} : vector<18x18xf32> to vector<16x16xf32>
    %c197 = arith.constant 197 : index
    %1017 = memref.load %arg1[%c197] : memref<373xf32, #tpu.memory_space<smem>>
    %1018 = vector.broadcast %1017 : f32 to vector<16x16xf32>
    %1019 = arith.mulf %1018, %1016 : vector<16x16xf32>
    %1020 = arith.addf %1001, %1019 : vector<16x16xf32>
    %c233 = arith.constant 233 : index
    %1021 = memref.load %arg1[%c233] : memref<373xf32, #tpu.memory_space<smem>>
    %1022 = vector.broadcast %1021 : f32 to vector<16x16xf32>
    %1023 = arith.mulf %1022, %1016 : vector<16x16xf32>
    %1024 = arith.addf %1005, %1023 : vector<16x16xf32>
    %c269 = arith.constant 269 : index
    %1025 = memref.load %arg1[%c269] : memref<373xf32, #tpu.memory_space<smem>>
    %1026 = vector.broadcast %1025 : f32 to vector<16x16xf32>
    %1027 = arith.mulf %1026, %1016 : vector<16x16xf32>
    %1028 = arith.addf %1009, %1027 : vector<16x16xf32>
    %c305 = arith.constant 305 : index
    %1029 = memref.load %arg1[%c305] : memref<373xf32, #tpu.memory_space<smem>>
    %1030 = vector.broadcast %1029 : f32 to vector<16x16xf32>
    %1031 = arith.mulf %1030, %1016 : vector<16x16xf32>
    %1032 = arith.addf %1013, %1031 : vector<16x16xf32>
    %1033 = vector.extract_strided_slice %1015 {offsets = [0, 1], sizes = [16, 16], strides = [1, 1]} : vector<18x18xf32> to vector<16x16xf32>
    %c198 = arith.constant 198 : index
    %1034 = memref.load %arg1[%c198] : memref<373xf32, #tpu.memory_space<smem>>
    %1035 = vector.broadcast %1034 : f32 to vector<16x16xf32>
    %1036 = arith.mulf %1035, %1033 : vector<16x16xf32>
    %1037 = arith.addf %1020, %1036 : vector<16x16xf32>
    %c234 = arith.constant 234 : index
    %1038 = memref.load %arg1[%c234] : memref<373xf32, #tpu.memory_space<smem>>
    %1039 = vector.broadcast %1038 : f32 to vector<16x16xf32>
    %1040 = arith.mulf %1039, %1033 : vector<16x16xf32>
    %1041 = arith.addf %1024, %1040 : vector<16x16xf32>
    %c270 = arith.constant 270 : index
    %1042 = memref.load %arg1[%c270] : memref<373xf32, #tpu.memory_space<smem>>
    %1043 = vector.broadcast %1042 : f32 to vector<16x16xf32>
    %1044 = arith.mulf %1043, %1033 : vector<16x16xf32>
    %1045 = arith.addf %1028, %1044 : vector<16x16xf32>
    %c306 = arith.constant 306 : index
    %1046 = memref.load %arg1[%c306] : memref<373xf32, #tpu.memory_space<smem>>
    %1047 = vector.broadcast %1046 : f32 to vector<16x16xf32>
    %1048 = arith.mulf %1047, %1033 : vector<16x16xf32>
    %1049 = arith.addf %1032, %1048 : vector<16x16xf32>
    %1050 = vector.extract_strided_slice %1015 {offsets = [0, 2], sizes = [16, 16], strides = [1, 1]} : vector<18x18xf32> to vector<16x16xf32>
    %c199 = arith.constant 199 : index
    %1051 = memref.load %arg1[%c199] : memref<373xf32, #tpu.memory_space<smem>>
    %1052 = vector.broadcast %1051 : f32 to vector<16x16xf32>
    %1053 = arith.mulf %1052, %1050 : vector<16x16xf32>
    %1054 = arith.addf %1037, %1053 : vector<16x16xf32>
    %c235 = arith.constant 235 : index
    %1055 = memref.load %arg1[%c235] : memref<373xf32, #tpu.memory_space<smem>>
    %1056 = vector.broadcast %1055 : f32 to vector<16x16xf32>
    %1057 = arith.mulf %1056, %1050 : vector<16x16xf32>
    %1058 = arith.addf %1041, %1057 : vector<16x16xf32>
    %c271 = arith.constant 271 : index
    %1059 = memref.load %arg1[%c271] : memref<373xf32, #tpu.memory_space<smem>>
    %1060 = vector.broadcast %1059 : f32 to vector<16x16xf32>
    %1061 = arith.mulf %1060, %1050 : vector<16x16xf32>
    %1062 = arith.addf %1045, %1061 : vector<16x16xf32>
    %c307 = arith.constant 307 : index
    %1063 = memref.load %arg1[%c307] : memref<373xf32, #tpu.memory_space<smem>>
    %1064 = vector.broadcast %1063 : f32 to vector<16x16xf32>
    %1065 = arith.mulf %1064, %1050 : vector<16x16xf32>
    %1066 = arith.addf %1049, %1065 : vector<16x16xf32>
    %1067 = vector.extract_strided_slice %1015 {offsets = [1, 0], sizes = [16, 16], strides = [1, 1]} : vector<18x18xf32> to vector<16x16xf32>
    %c200 = arith.constant 200 : index
    %1068 = memref.load %arg1[%c200] : memref<373xf32, #tpu.memory_space<smem>>
    %1069 = vector.broadcast %1068 : f32 to vector<16x16xf32>
    %1070 = arith.mulf %1069, %1067 : vector<16x16xf32>
    %1071 = arith.addf %1054, %1070 : vector<16x16xf32>
    %c236 = arith.constant 236 : index
    %1072 = memref.load %arg1[%c236] : memref<373xf32, #tpu.memory_space<smem>>
    %1073 = vector.broadcast %1072 : f32 to vector<16x16xf32>
    %1074 = arith.mulf %1073, %1067 : vector<16x16xf32>
    %1075 = arith.addf %1058, %1074 : vector<16x16xf32>
    %c272 = arith.constant 272 : index
    %1076 = memref.load %arg1[%c272] : memref<373xf32, #tpu.memory_space<smem>>
    %1077 = vector.broadcast %1076 : f32 to vector<16x16xf32>
    %1078 = arith.mulf %1077, %1067 : vector<16x16xf32>
    %1079 = arith.addf %1062, %1078 : vector<16x16xf32>
    %c308 = arith.constant 308 : index
    %1080 = memref.load %arg1[%c308] : memref<373xf32, #tpu.memory_space<smem>>
    %1081 = vector.broadcast %1080 : f32 to vector<16x16xf32>
    %1082 = arith.mulf %1081, %1067 : vector<16x16xf32>
    %1083 = arith.addf %1066, %1082 : vector<16x16xf32>
    %1084 = vector.extract_strided_slice %1015 {offsets = [1, 1], sizes = [16, 16], strides = [1, 1]} : vector<18x18xf32> to vector<16x16xf32>
    %c201 = arith.constant 201 : index
    %1085 = memref.load %arg1[%c201] : memref<373xf32, #tpu.memory_space<smem>>
    %1086 = vector.broadcast %1085 : f32 to vector<16x16xf32>
    %1087 = arith.mulf %1086, %1084 : vector<16x16xf32>
    %1088 = arith.addf %1071, %1087 : vector<16x16xf32>
    %c237 = arith.constant 237 : index
    %1089 = memref.load %arg1[%c237] : memref<373xf32, #tpu.memory_space<smem>>
    %1090 = vector.broadcast %1089 : f32 to vector<16x16xf32>
    %1091 = arith.mulf %1090, %1084 : vector<16x16xf32>
    %1092 = arith.addf %1075, %1091 : vector<16x16xf32>
    %c273 = arith.constant 273 : index
    %1093 = memref.load %arg1[%c273] : memref<373xf32, #tpu.memory_space<smem>>
    %1094 = vector.broadcast %1093 : f32 to vector<16x16xf32>
    %1095 = arith.mulf %1094, %1084 : vector<16x16xf32>
    %1096 = arith.addf %1079, %1095 : vector<16x16xf32>
    %c309 = arith.constant 309 : index
    %1097 = memref.load %arg1[%c309] : memref<373xf32, #tpu.memory_space<smem>>
    %1098 = vector.broadcast %1097 : f32 to vector<16x16xf32>
    %1099 = arith.mulf %1098, %1084 : vector<16x16xf32>
    %1100 = arith.addf %1083, %1099 : vector<16x16xf32>
    %1101 = vector.extract_strided_slice %1015 {offsets = [1, 2], sizes = [16, 16], strides = [1, 1]} : vector<18x18xf32> to vector<16x16xf32>
    %c202 = arith.constant 202 : index
    %1102 = memref.load %arg1[%c202] : memref<373xf32, #tpu.memory_space<smem>>
    %1103 = vector.broadcast %1102 : f32 to vector<16x16xf32>
    %1104 = arith.mulf %1103, %1101 : vector<16x16xf32>
    %1105 = arith.addf %1088, %1104 : vector<16x16xf32>
    %c238 = arith.constant 238 : index
    %1106 = memref.load %arg1[%c238] : memref<373xf32, #tpu.memory_space<smem>>
    %1107 = vector.broadcast %1106 : f32 to vector<16x16xf32>
    %1108 = arith.mulf %1107, %1101 : vector<16x16xf32>
    %1109 = arith.addf %1092, %1108 : vector<16x16xf32>
    %c274 = arith.constant 274 : index
    %1110 = memref.load %arg1[%c274] : memref<373xf32, #tpu.memory_space<smem>>
    %1111 = vector.broadcast %1110 : f32 to vector<16x16xf32>
    %1112 = arith.mulf %1111, %1101 : vector<16x16xf32>
    %1113 = arith.addf %1096, %1112 : vector<16x16xf32>
    %c310 = arith.constant 310 : index
    %1114 = memref.load %arg1[%c310] : memref<373xf32, #tpu.memory_space<smem>>
    %1115 = vector.broadcast %1114 : f32 to vector<16x16xf32>
    %1116 = arith.mulf %1115, %1101 : vector<16x16xf32>
    %1117 = arith.addf %1100, %1116 : vector<16x16xf32>
    %1118 = vector.extract_strided_slice %1015 {offsets = [2, 0], sizes = [16, 16], strides = [1, 1]} : vector<18x18xf32> to vector<16x16xf32>
    %c203 = arith.constant 203 : index
    %1119 = memref.load %arg1[%c203] : memref<373xf32, #tpu.memory_space<smem>>
    %1120 = vector.broadcast %1119 : f32 to vector<16x16xf32>
    %1121 = arith.mulf %1120, %1118 : vector<16x16xf32>
    %1122 = arith.addf %1105, %1121 : vector<16x16xf32>
    %c239 = arith.constant 239 : index
    %1123 = memref.load %arg1[%c239] : memref<373xf32, #tpu.memory_space<smem>>
    %1124 = vector.broadcast %1123 : f32 to vector<16x16xf32>
    %1125 = arith.mulf %1124, %1118 : vector<16x16xf32>
    %1126 = arith.addf %1109, %1125 : vector<16x16xf32>
    %c275 = arith.constant 275 : index
    %1127 = memref.load %arg1[%c275] : memref<373xf32, #tpu.memory_space<smem>>
    %1128 = vector.broadcast %1127 : f32 to vector<16x16xf32>
    %1129 = arith.mulf %1128, %1118 : vector<16x16xf32>
    %1130 = arith.addf %1113, %1129 : vector<16x16xf32>
    %c311 = arith.constant 311 : index
    %1131 = memref.load %arg1[%c311] : memref<373xf32, #tpu.memory_space<smem>>
    %1132 = vector.broadcast %1131 : f32 to vector<16x16xf32>
    %1133 = arith.mulf %1132, %1118 : vector<16x16xf32>
    %1134 = arith.addf %1117, %1133 : vector<16x16xf32>
    %1135 = vector.extract_strided_slice %1015 {offsets = [2, 1], sizes = [16, 16], strides = [1, 1]} : vector<18x18xf32> to vector<16x16xf32>
    %c204 = arith.constant 204 : index
    %1136 = memref.load %arg1[%c204] : memref<373xf32, #tpu.memory_space<smem>>
    %1137 = vector.broadcast %1136 : f32 to vector<16x16xf32>
    %1138 = arith.mulf %1137, %1135 : vector<16x16xf32>
    %1139 = arith.addf %1122, %1138 : vector<16x16xf32>
    %c240 = arith.constant 240 : index
    %1140 = memref.load %arg1[%c240] : memref<373xf32, #tpu.memory_space<smem>>
    %1141 = vector.broadcast %1140 : f32 to vector<16x16xf32>
    %1142 = arith.mulf %1141, %1135 : vector<16x16xf32>
    %1143 = arith.addf %1126, %1142 : vector<16x16xf32>
    %c276 = arith.constant 276 : index
    %1144 = memref.load %arg1[%c276] : memref<373xf32, #tpu.memory_space<smem>>
    %1145 = vector.broadcast %1144 : f32 to vector<16x16xf32>
    %1146 = arith.mulf %1145, %1135 : vector<16x16xf32>
    %1147 = arith.addf %1130, %1146 : vector<16x16xf32>
    %c312 = arith.constant 312 : index
    %1148 = memref.load %arg1[%c312] : memref<373xf32, #tpu.memory_space<smem>>
    %1149 = vector.broadcast %1148 : f32 to vector<16x16xf32>
    %1150 = arith.mulf %1149, %1135 : vector<16x16xf32>
    %1151 = arith.addf %1134, %1150 : vector<16x16xf32>
    %1152 = vector.extract_strided_slice %1015 {offsets = [2, 2], sizes = [16, 16], strides = [1, 1]} : vector<18x18xf32> to vector<16x16xf32>
    %c205 = arith.constant 205 : index
    %1153 = memref.load %arg1[%c205] : memref<373xf32, #tpu.memory_space<smem>>
    %1154 = vector.broadcast %1153 : f32 to vector<16x16xf32>
    %1155 = arith.mulf %1154, %1152 : vector<16x16xf32>
    %1156 = arith.addf %1139, %1155 : vector<16x16xf32>
    %c241 = arith.constant 241 : index
    %1157 = memref.load %arg1[%c241] : memref<373xf32, #tpu.memory_space<smem>>
    %1158 = vector.broadcast %1157 : f32 to vector<16x16xf32>
    %1159 = arith.mulf %1158, %1152 : vector<16x16xf32>
    %1160 = arith.addf %1143, %1159 : vector<16x16xf32>
    %c277 = arith.constant 277 : index
    %1161 = memref.load %arg1[%c277] : memref<373xf32, #tpu.memory_space<smem>>
    %1162 = vector.broadcast %1161 : f32 to vector<16x16xf32>
    %1163 = arith.mulf %1162, %1152 : vector<16x16xf32>
    %1164 = arith.addf %1147, %1163 : vector<16x16xf32>
    %c313 = arith.constant 313 : index
    %1165 = memref.load %arg1[%c313] : memref<373xf32, #tpu.memory_space<smem>>
    %1166 = vector.broadcast %1165 : f32 to vector<16x16xf32>
    %1167 = arith.mulf %1166, %1152 : vector<16x16xf32>
    %1168 = arith.addf %1151, %1167 : vector<16x16xf32>
    %c2_63 = arith.constant 2 : index
    %c0_64 = arith.constant 0 : index
    %c0_65 = arith.constant 0 : index
    %1169 = vector.load %arg5[%c2_63, %c0_64, %c0_65] : memref<4x18x18xf32, #tpu.memory_space<vmem>>, vector<1x18x18xf32>
    %1170 = vector.shape_cast %1169 : vector<1x18x18xf32> to vector<18x18xf32>
    %1171 = vector.extract_strided_slice %1170 {offsets = [0, 0], sizes = [16, 16], strides = [1, 1]} : vector<18x18xf32> to vector<16x16xf32>
    %c206 = arith.constant 206 : index
    %1172 = memref.load %arg1[%c206] : memref<373xf32, #tpu.memory_space<smem>>
    %1173 = vector.broadcast %1172 : f32 to vector<16x16xf32>
    %1174 = arith.mulf %1173, %1171 : vector<16x16xf32>
    %1175 = arith.addf %1156, %1174 : vector<16x16xf32>
    %c242 = arith.constant 242 : index
    %1176 = memref.load %arg1[%c242] : memref<373xf32, #tpu.memory_space<smem>>
    %1177 = vector.broadcast %1176 : f32 to vector<16x16xf32>
    %1178 = arith.mulf %1177, %1171 : vector<16x16xf32>
    %1179 = arith.addf %1160, %1178 : vector<16x16xf32>
    %c278 = arith.constant 278 : index
    %1180 = memref.load %arg1[%c278] : memref<373xf32, #tpu.memory_space<smem>>
    %1181 = vector.broadcast %1180 : f32 to vector<16x16xf32>
    %1182 = arith.mulf %1181, %1171 : vector<16x16xf32>
    %1183 = arith.addf %1164, %1182 : vector<16x16xf32>
    %c314 = arith.constant 314 : index
    %1184 = memref.load %arg1[%c314] : memref<373xf32, #tpu.memory_space<smem>>
    %1185 = vector.broadcast %1184 : f32 to vector<16x16xf32>
    %1186 = arith.mulf %1185, %1171 : vector<16x16xf32>
    %1187 = arith.addf %1168, %1186 : vector<16x16xf32>
    %1188 = vector.extract_strided_slice %1170 {offsets = [0, 1], sizes = [16, 16], strides = [1, 1]} : vector<18x18xf32> to vector<16x16xf32>
    %c207 = arith.constant 207 : index
    %1189 = memref.load %arg1[%c207] : memref<373xf32, #tpu.memory_space<smem>>
    %1190 = vector.broadcast %1189 : f32 to vector<16x16xf32>
    %1191 = arith.mulf %1190, %1188 : vector<16x16xf32>
    %1192 = arith.addf %1175, %1191 : vector<16x16xf32>
    %c243 = arith.constant 243 : index
    %1193 = memref.load %arg1[%c243] : memref<373xf32, #tpu.memory_space<smem>>
    %1194 = vector.broadcast %1193 : f32 to vector<16x16xf32>
    %1195 = arith.mulf %1194, %1188 : vector<16x16xf32>
    %1196 = arith.addf %1179, %1195 : vector<16x16xf32>
    %c279 = arith.constant 279 : index
    %1197 = memref.load %arg1[%c279] : memref<373xf32, #tpu.memory_space<smem>>
    %1198 = vector.broadcast %1197 : f32 to vector<16x16xf32>
    %1199 = arith.mulf %1198, %1188 : vector<16x16xf32>
    %1200 = arith.addf %1183, %1199 : vector<16x16xf32>
    %c315 = arith.constant 315 : index
    %1201 = memref.load %arg1[%c315] : memref<373xf32, #tpu.memory_space<smem>>
    %1202 = vector.broadcast %1201 : f32 to vector<16x16xf32>
    %1203 = arith.mulf %1202, %1188 : vector<16x16xf32>
    %1204 = arith.addf %1187, %1203 : vector<16x16xf32>
    %1205 = vector.extract_strided_slice %1170 {offsets = [0, 2], sizes = [16, 16], strides = [1, 1]} : vector<18x18xf32> to vector<16x16xf32>
    %c208 = arith.constant 208 : index
    %1206 = memref.load %arg1[%c208] : memref<373xf32, #tpu.memory_space<smem>>
    %1207 = vector.broadcast %1206 : f32 to vector<16x16xf32>
    %1208 = arith.mulf %1207, %1205 : vector<16x16xf32>
    %1209 = arith.addf %1192, %1208 : vector<16x16xf32>
    %c244 = arith.constant 244 : index
    %1210 = memref.load %arg1[%c244] : memref<373xf32, #tpu.memory_space<smem>>
    %1211 = vector.broadcast %1210 : f32 to vector<16x16xf32>
    %1212 = arith.mulf %1211, %1205 : vector<16x16xf32>
    %1213 = arith.addf %1196, %1212 : vector<16x16xf32>
    %c280 = arith.constant 280 : index
    %1214 = memref.load %arg1[%c280] : memref<373xf32, #tpu.memory_space<smem>>
    %1215 = vector.broadcast %1214 : f32 to vector<16x16xf32>
    %1216 = arith.mulf %1215, %1205 : vector<16x16xf32>
    %1217 = arith.addf %1200, %1216 : vector<16x16xf32>
    %c316 = arith.constant 316 : index
    %1218 = memref.load %arg1[%c316] : memref<373xf32, #tpu.memory_space<smem>>
    %1219 = vector.broadcast %1218 : f32 to vector<16x16xf32>
    %1220 = arith.mulf %1219, %1205 : vector<16x16xf32>
    %1221 = arith.addf %1204, %1220 : vector<16x16xf32>
    %1222 = vector.extract_strided_slice %1170 {offsets = [1, 0], sizes = [16, 16], strides = [1, 1]} : vector<18x18xf32> to vector<16x16xf32>
    %c209 = arith.constant 209 : index
    %1223 = memref.load %arg1[%c209] : memref<373xf32, #tpu.memory_space<smem>>
    %1224 = vector.broadcast %1223 : f32 to vector<16x16xf32>
    %1225 = arith.mulf %1224, %1222 : vector<16x16xf32>
    %1226 = arith.addf %1209, %1225 : vector<16x16xf32>
    %c245 = arith.constant 245 : index
    %1227 = memref.load %arg1[%c245] : memref<373xf32, #tpu.memory_space<smem>>
    %1228 = vector.broadcast %1227 : f32 to vector<16x16xf32>
    %1229 = arith.mulf %1228, %1222 : vector<16x16xf32>
    %1230 = arith.addf %1213, %1229 : vector<16x16xf32>
    %c281 = arith.constant 281 : index
    %1231 = memref.load %arg1[%c281] : memref<373xf32, #tpu.memory_space<smem>>
    %1232 = vector.broadcast %1231 : f32 to vector<16x16xf32>
    %1233 = arith.mulf %1232, %1222 : vector<16x16xf32>
    %1234 = arith.addf %1217, %1233 : vector<16x16xf32>
    %c317 = arith.constant 317 : index
    %1235 = memref.load %arg1[%c317] : memref<373xf32, #tpu.memory_space<smem>>
    %1236 = vector.broadcast %1235 : f32 to vector<16x16xf32>
    %1237 = arith.mulf %1236, %1222 : vector<16x16xf32>
    %1238 = arith.addf %1221, %1237 : vector<16x16xf32>
    %1239 = vector.extract_strided_slice %1170 {offsets = [1, 1], sizes = [16, 16], strides = [1, 1]} : vector<18x18xf32> to vector<16x16xf32>
    %c210 = arith.constant 210 : index
    %1240 = memref.load %arg1[%c210] : memref<373xf32, #tpu.memory_space<smem>>
    %1241 = vector.broadcast %1240 : f32 to vector<16x16xf32>
    %1242 = arith.mulf %1241, %1239 : vector<16x16xf32>
    %1243 = arith.addf %1226, %1242 : vector<16x16xf32>
    %c246 = arith.constant 246 : index
    %1244 = memref.load %arg1[%c246] : memref<373xf32, #tpu.memory_space<smem>>
    %1245 = vector.broadcast %1244 : f32 to vector<16x16xf32>
    %1246 = arith.mulf %1245, %1239 : vector<16x16xf32>
    %1247 = arith.addf %1230, %1246 : vector<16x16xf32>
    %c282 = arith.constant 282 : index
    %1248 = memref.load %arg1[%c282] : memref<373xf32, #tpu.memory_space<smem>>
    %1249 = vector.broadcast %1248 : f32 to vector<16x16xf32>
    %1250 = arith.mulf %1249, %1239 : vector<16x16xf32>
    %1251 = arith.addf %1234, %1250 : vector<16x16xf32>
    %c318 = arith.constant 318 : index
    %1252 = memref.load %arg1[%c318] : memref<373xf32, #tpu.memory_space<smem>>
    %1253 = vector.broadcast %1252 : f32 to vector<16x16xf32>
    %1254 = arith.mulf %1253, %1239 : vector<16x16xf32>
    %1255 = arith.addf %1238, %1254 : vector<16x16xf32>
    %1256 = vector.extract_strided_slice %1170 {offsets = [1, 2], sizes = [16, 16], strides = [1, 1]} : vector<18x18xf32> to vector<16x16xf32>
    %c211 = arith.constant 211 : index
    %1257 = memref.load %arg1[%c211] : memref<373xf32, #tpu.memory_space<smem>>
    %1258 = vector.broadcast %1257 : f32 to vector<16x16xf32>
    %1259 = arith.mulf %1258, %1256 : vector<16x16xf32>
    %1260 = arith.addf %1243, %1259 : vector<16x16xf32>
    %c247 = arith.constant 247 : index
    %1261 = memref.load %arg1[%c247] : memref<373xf32, #tpu.memory_space<smem>>
    %1262 = vector.broadcast %1261 : f32 to vector<16x16xf32>
    %1263 = arith.mulf %1262, %1256 : vector<16x16xf32>
    %1264 = arith.addf %1247, %1263 : vector<16x16xf32>
    %c283 = arith.constant 283 : index
    %1265 = memref.load %arg1[%c283] : memref<373xf32, #tpu.memory_space<smem>>
    %1266 = vector.broadcast %1265 : f32 to vector<16x16xf32>
    %1267 = arith.mulf %1266, %1256 : vector<16x16xf32>
    %1268 = arith.addf %1251, %1267 : vector<16x16xf32>
    %c319 = arith.constant 319 : index
    %1269 = memref.load %arg1[%c319] : memref<373xf32, #tpu.memory_space<smem>>
    %1270 = vector.broadcast %1269 : f32 to vector<16x16xf32>
    %1271 = arith.mulf %1270, %1256 : vector<16x16xf32>
    %1272 = arith.addf %1255, %1271 : vector<16x16xf32>
    %1273 = vector.extract_strided_slice %1170 {offsets = [2, 0], sizes = [16, 16], strides = [1, 1]} : vector<18x18xf32> to vector<16x16xf32>
    %c212 = arith.constant 212 : index
    %1274 = memref.load %arg1[%c212] : memref<373xf32, #tpu.memory_space<smem>>
    %1275 = vector.broadcast %1274 : f32 to vector<16x16xf32>
    %1276 = arith.mulf %1275, %1273 : vector<16x16xf32>
    %1277 = arith.addf %1260, %1276 : vector<16x16xf32>
    %c248 = arith.constant 248 : index
    %1278 = memref.load %arg1[%c248] : memref<373xf32, #tpu.memory_space<smem>>
    %1279 = vector.broadcast %1278 : f32 to vector<16x16xf32>
    %1280 = arith.mulf %1279, %1273 : vector<16x16xf32>
    %1281 = arith.addf %1264, %1280 : vector<16x16xf32>
    %c284 = arith.constant 284 : index
    %1282 = memref.load %arg1[%c284] : memref<373xf32, #tpu.memory_space<smem>>
    %1283 = vector.broadcast %1282 : f32 to vector<16x16xf32>
    %1284 = arith.mulf %1283, %1273 : vector<16x16xf32>
    %1285 = arith.addf %1268, %1284 : vector<16x16xf32>
    %c320 = arith.constant 320 : index
    %1286 = memref.load %arg1[%c320] : memref<373xf32, #tpu.memory_space<smem>>
    %1287 = vector.broadcast %1286 : f32 to vector<16x16xf32>
    %1288 = arith.mulf %1287, %1273 : vector<16x16xf32>
    %1289 = arith.addf %1272, %1288 : vector<16x16xf32>
    %1290 = vector.extract_strided_slice %1170 {offsets = [2, 1], sizes = [16, 16], strides = [1, 1]} : vector<18x18xf32> to vector<16x16xf32>
    %c213 = arith.constant 213 : index
    %1291 = memref.load %arg1[%c213] : memref<373xf32, #tpu.memory_space<smem>>
    %1292 = vector.broadcast %1291 : f32 to vector<16x16xf32>
    %1293 = arith.mulf %1292, %1290 : vector<16x16xf32>
    %1294 = arith.addf %1277, %1293 : vector<16x16xf32>
    %c249 = arith.constant 249 : index
    %1295 = memref.load %arg1[%c249] : memref<373xf32, #tpu.memory_space<smem>>
    %1296 = vector.broadcast %1295 : f32 to vector<16x16xf32>
    %1297 = arith.mulf %1296, %1290 : vector<16x16xf32>
    %1298 = arith.addf %1281, %1297 : vector<16x16xf32>
    %c285 = arith.constant 285 : index
    %1299 = memref.load %arg1[%c285] : memref<373xf32, #tpu.memory_space<smem>>
    %1300 = vector.broadcast %1299 : f32 to vector<16x16xf32>
    %1301 = arith.mulf %1300, %1290 : vector<16x16xf32>
    %1302 = arith.addf %1285, %1301 : vector<16x16xf32>
    %c321 = arith.constant 321 : index
    %1303 = memref.load %arg1[%c321] : memref<373xf32, #tpu.memory_space<smem>>
    %1304 = vector.broadcast %1303 : f32 to vector<16x16xf32>
    %1305 = arith.mulf %1304, %1290 : vector<16x16xf32>
    %1306 = arith.addf %1289, %1305 : vector<16x16xf32>
    %1307 = vector.extract_strided_slice %1170 {offsets = [2, 2], sizes = [16, 16], strides = [1, 1]} : vector<18x18xf32> to vector<16x16xf32>
    %c214 = arith.constant 214 : index
    %1308 = memref.load %arg1[%c214] : memref<373xf32, #tpu.memory_space<smem>>
    %1309 = vector.broadcast %1308 : f32 to vector<16x16xf32>
    %1310 = arith.mulf %1309, %1307 : vector<16x16xf32>
    %1311 = arith.addf %1294, %1310 : vector<16x16xf32>
    %c250 = arith.constant 250 : index
    %1312 = memref.load %arg1[%c250] : memref<373xf32, #tpu.memory_space<smem>>
    %1313 = vector.broadcast %1312 : f32 to vector<16x16xf32>
    %1314 = arith.mulf %1313, %1307 : vector<16x16xf32>
    %1315 = arith.addf %1298, %1314 : vector<16x16xf32>
    %c286 = arith.constant 286 : index
    %1316 = memref.load %arg1[%c286] : memref<373xf32, #tpu.memory_space<smem>>
    %1317 = vector.broadcast %1316 : f32 to vector<16x16xf32>
    %1318 = arith.mulf %1317, %1307 : vector<16x16xf32>
    %1319 = arith.addf %1302, %1318 : vector<16x16xf32>
    %c322 = arith.constant 322 : index
    %1320 = memref.load %arg1[%c322] : memref<373xf32, #tpu.memory_space<smem>>
    %1321 = vector.broadcast %1320 : f32 to vector<16x16xf32>
    %1322 = arith.mulf %1321, %1307 : vector<16x16xf32>
    %1323 = arith.addf %1306, %1322 : vector<16x16xf32>
    %c3_66 = arith.constant 3 : index
    %c0_67 = arith.constant 0 : index
    %c0_68 = arith.constant 0 : index
    %1324 = vector.load %arg5[%c3_66, %c0_67, %c0_68] : memref<4x18x18xf32, #tpu.memory_space<vmem>>, vector<1x18x18xf32>
    %1325 = vector.shape_cast %1324 : vector<1x18x18xf32> to vector<18x18xf32>
    %1326 = vector.extract_strided_slice %1325 {offsets = [0, 0], sizes = [16, 16], strides = [1, 1]} : vector<18x18xf32> to vector<16x16xf32>
    %c215 = arith.constant 215 : index
    %1327 = memref.load %arg1[%c215] : memref<373xf32, #tpu.memory_space<smem>>
    %1328 = vector.broadcast %1327 : f32 to vector<16x16xf32>
    %1329 = arith.mulf %1328, %1326 : vector<16x16xf32>
    %1330 = arith.addf %1311, %1329 : vector<16x16xf32>
    %c251 = arith.constant 251 : index
    %1331 = memref.load %arg1[%c251] : memref<373xf32, #tpu.memory_space<smem>>
    %1332 = vector.broadcast %1331 : f32 to vector<16x16xf32>
    %1333 = arith.mulf %1332, %1326 : vector<16x16xf32>
    %1334 = arith.addf %1315, %1333 : vector<16x16xf32>
    %c287 = arith.constant 287 : index
    %1335 = memref.load %arg1[%c287] : memref<373xf32, #tpu.memory_space<smem>>
    %1336 = vector.broadcast %1335 : f32 to vector<16x16xf32>
    %1337 = arith.mulf %1336, %1326 : vector<16x16xf32>
    %1338 = arith.addf %1319, %1337 : vector<16x16xf32>
    %c323 = arith.constant 323 : index
    %1339 = memref.load %arg1[%c323] : memref<373xf32, #tpu.memory_space<smem>>
    %1340 = vector.broadcast %1339 : f32 to vector<16x16xf32>
    %1341 = arith.mulf %1340, %1326 : vector<16x16xf32>
    %1342 = arith.addf %1323, %1341 : vector<16x16xf32>
    %1343 = vector.extract_strided_slice %1325 {offsets = [0, 1], sizes = [16, 16], strides = [1, 1]} : vector<18x18xf32> to vector<16x16xf32>
    %c216 = arith.constant 216 : index
    %1344 = memref.load %arg1[%c216] : memref<373xf32, #tpu.memory_space<smem>>
    %1345 = vector.broadcast %1344 : f32 to vector<16x16xf32>
    %1346 = arith.mulf %1345, %1343 : vector<16x16xf32>
    %1347 = arith.addf %1330, %1346 : vector<16x16xf32>
    %c252 = arith.constant 252 : index
    %1348 = memref.load %arg1[%c252] : memref<373xf32, #tpu.memory_space<smem>>
    %1349 = vector.broadcast %1348 : f32 to vector<16x16xf32>
    %1350 = arith.mulf %1349, %1343 : vector<16x16xf32>
    %1351 = arith.addf %1334, %1350 : vector<16x16xf32>
    %c288 = arith.constant 288 : index
    %1352 = memref.load %arg1[%c288] : memref<373xf32, #tpu.memory_space<smem>>
    %1353 = vector.broadcast %1352 : f32 to vector<16x16xf32>
    %1354 = arith.mulf %1353, %1343 : vector<16x16xf32>
    %1355 = arith.addf %1338, %1354 : vector<16x16xf32>
    %c324 = arith.constant 324 : index
    %1356 = memref.load %arg1[%c324] : memref<373xf32, #tpu.memory_space<smem>>
    %1357 = vector.broadcast %1356 : f32 to vector<16x16xf32>
    %1358 = arith.mulf %1357, %1343 : vector<16x16xf32>
    %1359 = arith.addf %1342, %1358 : vector<16x16xf32>
    %1360 = vector.extract_strided_slice %1325 {offsets = [0, 2], sizes = [16, 16], strides = [1, 1]} : vector<18x18xf32> to vector<16x16xf32>
    %c217 = arith.constant 217 : index
    %1361 = memref.load %arg1[%c217] : memref<373xf32, #tpu.memory_space<smem>>
    %1362 = vector.broadcast %1361 : f32 to vector<16x16xf32>
    %1363 = arith.mulf %1362, %1360 : vector<16x16xf32>
    %1364 = arith.addf %1347, %1363 : vector<16x16xf32>
    %c253 = arith.constant 253 : index
    %1365 = memref.load %arg1[%c253] : memref<373xf32, #tpu.memory_space<smem>>
    %1366 = vector.broadcast %1365 : f32 to vector<16x16xf32>
    %1367 = arith.mulf %1366, %1360 : vector<16x16xf32>
    %1368 = arith.addf %1351, %1367 : vector<16x16xf32>
    %c289 = arith.constant 289 : index
    %1369 = memref.load %arg1[%c289] : memref<373xf32, #tpu.memory_space<smem>>
    %1370 = vector.broadcast %1369 : f32 to vector<16x16xf32>
    %1371 = arith.mulf %1370, %1360 : vector<16x16xf32>
    %1372 = arith.addf %1355, %1371 : vector<16x16xf32>
    %c325 = arith.constant 325 : index
    %1373 = memref.load %arg1[%c325] : memref<373xf32, #tpu.memory_space<smem>>
    %1374 = vector.broadcast %1373 : f32 to vector<16x16xf32>
    %1375 = arith.mulf %1374, %1360 : vector<16x16xf32>
    %1376 = arith.addf %1359, %1375 : vector<16x16xf32>
    %1377 = vector.extract_strided_slice %1325 {offsets = [1, 0], sizes = [16, 16], strides = [1, 1]} : vector<18x18xf32> to vector<16x16xf32>
    %c218 = arith.constant 218 : index
    %1378 = memref.load %arg1[%c218] : memref<373xf32, #tpu.memory_space<smem>>
    %1379 = vector.broadcast %1378 : f32 to vector<16x16xf32>
    %1380 = arith.mulf %1379, %1377 : vector<16x16xf32>
    %1381 = arith.addf %1364, %1380 : vector<16x16xf32>
    %c254 = arith.constant 254 : index
    %1382 = memref.load %arg1[%c254] : memref<373xf32, #tpu.memory_space<smem>>
    %1383 = vector.broadcast %1382 : f32 to vector<16x16xf32>
    %1384 = arith.mulf %1383, %1377 : vector<16x16xf32>
    %1385 = arith.addf %1368, %1384 : vector<16x16xf32>
    %c290 = arith.constant 290 : index
    %1386 = memref.load %arg1[%c290] : memref<373xf32, #tpu.memory_space<smem>>
    %1387 = vector.broadcast %1386 : f32 to vector<16x16xf32>
    %1388 = arith.mulf %1387, %1377 : vector<16x16xf32>
    %1389 = arith.addf %1372, %1388 : vector<16x16xf32>
    %c326 = arith.constant 326 : index
    %1390 = memref.load %arg1[%c326] : memref<373xf32, #tpu.memory_space<smem>>
    %1391 = vector.broadcast %1390 : f32 to vector<16x16xf32>
    %1392 = arith.mulf %1391, %1377 : vector<16x16xf32>
    %1393 = arith.addf %1376, %1392 : vector<16x16xf32>
    %1394 = vector.extract_strided_slice %1325 {offsets = [1, 1], sizes = [16, 16], strides = [1, 1]} : vector<18x18xf32> to vector<16x16xf32>
    %c219 = arith.constant 219 : index
    %1395 = memref.load %arg1[%c219] : memref<373xf32, #tpu.memory_space<smem>>
    %1396 = vector.broadcast %1395 : f32 to vector<16x16xf32>
    %1397 = arith.mulf %1396, %1394 : vector<16x16xf32>
    %1398 = arith.addf %1381, %1397 : vector<16x16xf32>
    %c255 = arith.constant 255 : index
    %1399 = memref.load %arg1[%c255] : memref<373xf32, #tpu.memory_space<smem>>
    %1400 = vector.broadcast %1399 : f32 to vector<16x16xf32>
    %1401 = arith.mulf %1400, %1394 : vector<16x16xf32>
    %1402 = arith.addf %1385, %1401 : vector<16x16xf32>
    %c291 = arith.constant 291 : index
    %1403 = memref.load %arg1[%c291] : memref<373xf32, #tpu.memory_space<smem>>
    %1404 = vector.broadcast %1403 : f32 to vector<16x16xf32>
    %1405 = arith.mulf %1404, %1394 : vector<16x16xf32>
    %1406 = arith.addf %1389, %1405 : vector<16x16xf32>
    %c327 = arith.constant 327 : index
    %1407 = memref.load %arg1[%c327] : memref<373xf32, #tpu.memory_space<smem>>
    %1408 = vector.broadcast %1407 : f32 to vector<16x16xf32>
    %1409 = arith.mulf %1408, %1394 : vector<16x16xf32>
    %1410 = arith.addf %1393, %1409 : vector<16x16xf32>
    %1411 = vector.extract_strided_slice %1325 {offsets = [1, 2], sizes = [16, 16], strides = [1, 1]} : vector<18x18xf32> to vector<16x16xf32>
    %c220 = arith.constant 220 : index
    %1412 = memref.load %arg1[%c220] : memref<373xf32, #tpu.memory_space<smem>>
    %1413 = vector.broadcast %1412 : f32 to vector<16x16xf32>
    %1414 = arith.mulf %1413, %1411 : vector<16x16xf32>
    %1415 = arith.addf %1398, %1414 : vector<16x16xf32>
    %c256 = arith.constant 256 : index
    %1416 = memref.load %arg1[%c256] : memref<373xf32, #tpu.memory_space<smem>>
    %1417 = vector.broadcast %1416 : f32 to vector<16x16xf32>
    %1418 = arith.mulf %1417, %1411 : vector<16x16xf32>
    %1419 = arith.addf %1402, %1418 : vector<16x16xf32>
    %c292 = arith.constant 292 : index
    %1420 = memref.load %arg1[%c292] : memref<373xf32, #tpu.memory_space<smem>>
    %1421 = vector.broadcast %1420 : f32 to vector<16x16xf32>
    %1422 = arith.mulf %1421, %1411 : vector<16x16xf32>
    %1423 = arith.addf %1406, %1422 : vector<16x16xf32>
    %c328 = arith.constant 328 : index
    %1424 = memref.load %arg1[%c328] : memref<373xf32, #tpu.memory_space<smem>>
    %1425 = vector.broadcast %1424 : f32 to vector<16x16xf32>
    %1426 = arith.mulf %1425, %1411 : vector<16x16xf32>
    %1427 = arith.addf %1410, %1426 : vector<16x16xf32>
    %1428 = vector.extract_strided_slice %1325 {offsets = [2, 0], sizes = [16, 16], strides = [1, 1]} : vector<18x18xf32> to vector<16x16xf32>
    %c221 = arith.constant 221 : index
    %1429 = memref.load %arg1[%c221] : memref<373xf32, #tpu.memory_space<smem>>
    %1430 = vector.broadcast %1429 : f32 to vector<16x16xf32>
    %1431 = arith.mulf %1430, %1428 : vector<16x16xf32>
    %1432 = arith.addf %1415, %1431 : vector<16x16xf32>
    %c257 = arith.constant 257 : index
    %1433 = memref.load %arg1[%c257] : memref<373xf32, #tpu.memory_space<smem>>
    %1434 = vector.broadcast %1433 : f32 to vector<16x16xf32>
    %1435 = arith.mulf %1434, %1428 : vector<16x16xf32>
    %1436 = arith.addf %1419, %1435 : vector<16x16xf32>
    %c293 = arith.constant 293 : index
    %1437 = memref.load %arg1[%c293] : memref<373xf32, #tpu.memory_space<smem>>
    %1438 = vector.broadcast %1437 : f32 to vector<16x16xf32>
    %1439 = arith.mulf %1438, %1428 : vector<16x16xf32>
    %1440 = arith.addf %1423, %1439 : vector<16x16xf32>
    %c329 = arith.constant 329 : index
    %1441 = memref.load %arg1[%c329] : memref<373xf32, #tpu.memory_space<smem>>
    %1442 = vector.broadcast %1441 : f32 to vector<16x16xf32>
    %1443 = arith.mulf %1442, %1428 : vector<16x16xf32>
    %1444 = arith.addf %1427, %1443 : vector<16x16xf32>
    %1445 = vector.extract_strided_slice %1325 {offsets = [2, 1], sizes = [16, 16], strides = [1, 1]} : vector<18x18xf32> to vector<16x16xf32>
    %c222 = arith.constant 222 : index
    %1446 = memref.load %arg1[%c222] : memref<373xf32, #tpu.memory_space<smem>>
    %1447 = vector.broadcast %1446 : f32 to vector<16x16xf32>
    %1448 = arith.mulf %1447, %1445 : vector<16x16xf32>
    %1449 = arith.addf %1432, %1448 : vector<16x16xf32>
    %c258 = arith.constant 258 : index
    %1450 = memref.load %arg1[%c258] : memref<373xf32, #tpu.memory_space<smem>>
    %1451 = vector.broadcast %1450 : f32 to vector<16x16xf32>
    %1452 = arith.mulf %1451, %1445 : vector<16x16xf32>
    %1453 = arith.addf %1436, %1452 : vector<16x16xf32>
    %c294 = arith.constant 294 : index
    %1454 = memref.load %arg1[%c294] : memref<373xf32, #tpu.memory_space<smem>>
    %1455 = vector.broadcast %1454 : f32 to vector<16x16xf32>
    %1456 = arith.mulf %1455, %1445 : vector<16x16xf32>
    %1457 = arith.addf %1440, %1456 : vector<16x16xf32>
    %c330 = arith.constant 330 : index
    %1458 = memref.load %arg1[%c330] : memref<373xf32, #tpu.memory_space<smem>>
    %1459 = vector.broadcast %1458 : f32 to vector<16x16xf32>
    %1460 = arith.mulf %1459, %1445 : vector<16x16xf32>
    %1461 = arith.addf %1444, %1460 : vector<16x16xf32>
    %1462 = vector.extract_strided_slice %1325 {offsets = [2, 2], sizes = [16, 16], strides = [1, 1]} : vector<18x18xf32> to vector<16x16xf32>
    %c223 = arith.constant 223 : index
    %1463 = memref.load %arg1[%c223] : memref<373xf32, #tpu.memory_space<smem>>
    %1464 = vector.broadcast %1463 : f32 to vector<16x16xf32>
    %1465 = arith.mulf %1464, %1462 : vector<16x16xf32>
    %1466 = arith.addf %1449, %1465 : vector<16x16xf32>
    %c259 = arith.constant 259 : index
    %1467 = memref.load %arg1[%c259] : memref<373xf32, #tpu.memory_space<smem>>
    %1468 = vector.broadcast %1467 : f32 to vector<16x16xf32>
    %1469 = arith.mulf %1468, %1462 : vector<16x16xf32>
    %1470 = arith.addf %1453, %1469 : vector<16x16xf32>
    %c295 = arith.constant 295 : index
    %1471 = memref.load %arg1[%c295] : memref<373xf32, #tpu.memory_space<smem>>
    %1472 = vector.broadcast %1471 : f32 to vector<16x16xf32>
    %1473 = arith.mulf %1472, %1462 : vector<16x16xf32>
    %1474 = arith.addf %1457, %1473 : vector<16x16xf32>
    %c331 = arith.constant 331 : index
    %1475 = memref.load %arg1[%c331] : memref<373xf32, #tpu.memory_space<smem>>
    %1476 = vector.broadcast %1475 : f32 to vector<16x16xf32>
    %1477 = arith.mulf %1476, %1462 : vector<16x16xf32>
    %1478 = arith.addf %1461, %1477 : vector<16x16xf32>
    %cst_69 = arith.constant 0.000000e+00 : f32
    %1479 = vector.broadcast %cst_69 : f32 to vector<16x1xf32>
    %1480 = tpu.concatenate %1479, %1466, %1479 in 1 : vector<16x1xf32>, vector<16x16xf32>, vector<16x1xf32> -> vector<16x18xf32>
    %cst_70 = arith.constant 0.000000e+00 : f32
    %1481 = vector.broadcast %cst_70 : f32 to vector<1x18xf32>
    %1482 = tpu.concatenate %1481, %1480, %1481 in 0 : vector<1x18xf32>, vector<16x18xf32>, vector<1x18xf32> -> vector<18x18xf32>
    %c0_71 = arith.constant 0 : index
    %c0_72 = arith.constant 0 : index
    %c0_73 = arith.constant 0 : index
    %1483 = vector.load %arg4[%c0_71, %c0_72, %c0_73] : memref<4x18x18xf32, #tpu.memory_space<vmem>>, vector<1x18x18xf32>
    %1484 = vector.shape_cast %1483 : vector<1x18x18xf32> to vector<18x18xf32>
    %1485 = vector.shape_cast %1482 : vector<18x18xf32> to vector<1x18x18xf32>
    tpu.vector_store %arg4[%c0_71, %c0_72, %c0_73], %1485 {strides = array<i32>} : memref<4x18x18xf32, #tpu.memory_space<vmem>>, vector<1x18x18xf32>,
    %cst_74 = arith.constant 0.000000e+00 : f32
    %1486 = vector.broadcast %cst_74 : f32 to vector<16x1xf32>
    %1487 = tpu.concatenate %1486, %1470, %1486 in 1 : vector<16x1xf32>, vector<16x16xf32>, vector<16x1xf32> -> vector<16x18xf32>
    %cst_75 = arith.constant 0.000000e+00 : f32
    %1488 = vector.broadcast %cst_75 : f32 to vector<1x18xf32>
    %1489 = tpu.concatenate %1488, %1487, %1488 in 0 : vector<1x18xf32>, vector<16x18xf32>, vector<1x18xf32> -> vector<18x18xf32>
    %c1_76 = arith.constant 1 : index
    %c0_77 = arith.constant 0 : index
    %c0_78 = arith.constant 0 : index
    %1490 = vector.load %arg4[%c1_76, %c0_77, %c0_78] : memref<4x18x18xf32, #tpu.memory_space<vmem>>, vector<1x18x18xf32>
    %1491 = vector.shape_cast %1490 : vector<1x18x18xf32> to vector<18x18xf32>
    %1492 = vector.shape_cast %1489 : vector<18x18xf32> to vector<1x18x18xf32>
    tpu.vector_store %arg4[%c1_76, %c0_77, %c0_78], %1492 {strides = array<i32>} : memref<4x18x18xf32, #tpu.memory_space<vmem>>, vector<1x18x18xf32>,
    %cst_79 = arith.constant 0.000000e+00 : f32
    %1493 = vector.broadcast %cst_79 : f32 to vector<16x1xf32>
    %1494 = tpu.concatenate %1493, %1474, %1493 in 1 : vector<16x1xf32>, vector<16x16xf32>, vector<16x1xf32> -> vector<16x18xf32>
    %cst_80 = arith.constant 0.000000e+00 : f32
    %1495 = vector.broadcast %cst_80 : f32 to vector<1x18xf32>
    %1496 = tpu.concatenate %1495, %1494, %1495 in 0 : vector<1x18xf32>, vector<16x18xf32>, vector<1x18xf32> -> vector<18x18xf32>
    %c2_81 = arith.constant 2 : index
    %c0_82 = arith.constant 0 : index
    %c0_83 = arith.constant 0 : index
    %1497 = vector.load %arg4[%c2_81, %c0_82, %c0_83] : memref<4x18x18xf32, #tpu.memory_space<vmem>>, vector<1x18x18xf32>
    %1498 = vector.shape_cast %1497 : vector<1x18x18xf32> to vector<18x18xf32>
    %1499 = vector.shape_cast %1496 : vector<18x18xf32> to vector<1x18x18xf32>
    tpu.vector_store %arg4[%c2_81, %c0_82, %c0_83], %1499 {strides = array<i32>} : memref<4x18x18xf32, #tpu.memory_space<vmem>>, vector<1x18x18xf32>,
    %cst_84 = arith.constant 0.000000e+00 : f32
    %1500 = vector.broadcast %cst_84 : f32 to vector<16x1xf32>
    %1501 = tpu.concatenate %1500, %1478, %1500 in 1 : vector<16x1xf32>, vector<16x16xf32>, vector<16x1xf32> -> vector<16x18xf32>
    %cst_85 = arith.constant 0.000000e+00 : f32
    %1502 = vector.broadcast %cst_85 : f32 to vector<1x18xf32>
    %1503 = tpu.concatenate %1502, %1501, %1502 in 0 : vector<1x18xf32>, vector<16x18xf32>, vector<1x18xf32> -> vector<18x18xf32>
    %c3_86 = arith.constant 3 : index
    %c0_87 = arith.constant 0 : index
    %c0_88 = arith.constant 0 : index
    %1504 = vector.load %arg4[%c3_86, %c0_87, %c0_88] : memref<4x18x18xf32, #tpu.memory_space<vmem>>, vector<1x18x18xf32>
    %1505 = vector.shape_cast %1504 : vector<1x18x18xf32> to vector<18x18xf32>
    %1506 = vector.shape_cast %1503 : vector<18x18xf32> to vector<1x18x18xf32>
    tpu.vector_store %arg4[%c3_86, %c0_87, %c0_88], %1506 {strides = array<i32>} : memref<4x18x18xf32, #tpu.memory_space<vmem>>, vector<1x18x18xf32>,
    %c372 = arith.constant 372 : index
    %1507 = memref.load %arg1[%c372] : memref<373xf32, #tpu.memory_space<smem>>
    %1508 = vector.broadcast %1507 : f32 to vector<16x16xf32>
    %c0_89 = arith.constant 0 : index
    %c0_90 = arith.constant 0 : index
    %c0_91 = arith.constant 0 : index
    %1509 = vector.load %arg4[%c0_89, %c0_90, %c0_91] : memref<4x18x18xf32, #tpu.memory_space<vmem>>, vector<1x18x18xf32>
    %1510 = vector.shape_cast %1509 : vector<1x18x18xf32> to vector<18x18xf32>
    %1511 = vector.extract_strided_slice %1510 {offsets = [0, 0], sizes = [16, 16], strides = [1, 1]} : vector<18x18xf32> to vector<16x16xf32>
    %c336 = arith.constant 336 : index
    %1512 = memref.load %arg1[%c336] : memref<373xf32, #tpu.memory_space<smem>>
    %1513 = vector.broadcast %1512 : f32 to vector<16x16xf32>
    %1514 = arith.mulf %1513, %1511 : vector<16x16xf32>
    %1515 = arith.addf %1508, %1514 : vector<16x16xf32>
    %1516 = vector.extract_strided_slice %1510 {offsets = [0, 1], sizes = [16, 16], strides = [1, 1]} : vector<18x18xf32> to vector<16x16xf32>
    %c337 = arith.constant 337 : index
    %1517 = memref.load %arg1[%c337] : memref<373xf32, #tpu.memory_space<smem>>
    %1518 = vector.broadcast %1517 : f32 to vector<16x16xf32>
    %1519 = arith.mulf %1518, %1516 : vector<16x16xf32>
    %1520 = arith.addf %1515, %1519 : vector<16x16xf32>
    %1521 = vector.extract_strided_slice %1510 {offsets = [0, 2], sizes = [16, 16], strides = [1, 1]} : vector<18x18xf32> to vector<16x16xf32>
    %c338 = arith.constant 338 : index
    %1522 = memref.load %arg1[%c338] : memref<373xf32, #tpu.memory_space<smem>>
    %1523 = vector.broadcast %1522 : f32 to vector<16x16xf32>
    %1524 = arith.mulf %1523, %1521 : vector<16x16xf32>
    %1525 = arith.addf %1520, %1524 : vector<16x16xf32>
    %1526 = vector.extract_strided_slice %1510 {offsets = [1, 0], sizes = [16, 16], strides = [1, 1]} : vector<18x18xf32> to vector<16x16xf32>
    %c339 = arith.constant 339 : index
    %1527 = memref.load %arg1[%c339] : memref<373xf32, #tpu.memory_space<smem>>
    %1528 = vector.broadcast %1527 : f32 to vector<16x16xf32>
    %1529 = arith.mulf %1528, %1526 : vector<16x16xf32>
    %1530 = arith.addf %1525, %1529 : vector<16x16xf32>
    %1531 = vector.extract_strided_slice %1510 {offsets = [1, 1], sizes = [16, 16], strides = [1, 1]} : vector<18x18xf32> to vector<16x16xf32>
    %c340 = arith.constant 340 : index
    %1532 = memref.load %arg1[%c340] : memref<373xf32, #tpu.memory_space<smem>>
    %1533 = vector.broadcast %1532 : f32 to vector<16x16xf32>
    %1534 = arith.mulf %1533, %1531 : vector<16x16xf32>
    %1535 = arith.addf %1530, %1534 : vector<16x16xf32>
    %1536 = vector.extract_strided_slice %1510 {offsets = [1, 2], sizes = [16, 16], strides = [1, 1]} : vector<18x18xf32> to vector<16x16xf32>
    %c341 = arith.constant 341 : index
    %1537 = memref.load %arg1[%c341] : memref<373xf32, #tpu.memory_space<smem>>
    %1538 = vector.broadcast %1537 : f32 to vector<16x16xf32>
    %1539 = arith.mulf %1538, %1536 : vector<16x16xf32>
    %1540 = arith.addf %1535, %1539 : vector<16x16xf32>
    %1541 = vector.extract_strided_slice %1510 {offsets = [2, 0], sizes = [16, 16], strides = [1, 1]} : vector<18x18xf32> to vector<16x16xf32>
    %c342 = arith.constant 342 : index
    %1542 = memref.load %arg1[%c342] : memref<373xf32, #tpu.memory_space<smem>>
    %1543 = vector.broadcast %1542 : f32 to vector<16x16xf32>
    %1544 = arith.mulf %1543, %1541 : vector<16x16xf32>
    %1545 = arith.addf %1540, %1544 : vector<16x16xf32>
    %1546 = vector.extract_strided_slice %1510 {offsets = [2, 1], sizes = [16, 16], strides = [1, 1]} : vector<18x18xf32> to vector<16x16xf32>
    %c343 = arith.constant 343 : index
    %1547 = memref.load %arg1[%c343] : memref<373xf32, #tpu.memory_space<smem>>
    %1548 = vector.broadcast %1547 : f32 to vector<16x16xf32>
    %1549 = arith.mulf %1548, %1546 : vector<16x16xf32>
    %1550 = arith.addf %1545, %1549 : vector<16x16xf32>
    %1551 = vector.extract_strided_slice %1510 {offsets = [2, 2], sizes = [16, 16], strides = [1, 1]} : vector<18x18xf32> to vector<16x16xf32>
    %c344 = arith.constant 344 : index
    %1552 = memref.load %arg1[%c344] : memref<373xf32, #tpu.memory_space<smem>>
    %1553 = vector.broadcast %1552 : f32 to vector<16x16xf32>
    %1554 = arith.mulf %1553, %1551 : vector<16x16xf32>
    %1555 = arith.addf %1550, %1554 : vector<16x16xf32>
    %c1_92 = arith.constant 1 : index
    %c0_93 = arith.constant 0 : index
    %c0_94 = arith.constant 0 : index
    %1556 = vector.load %arg4[%c1_92, %c0_93, %c0_94] : memref<4x18x18xf32, #tpu.memory_space<vmem>>, vector<1x18x18xf32>
    %1557 = vector.shape_cast %1556 : vector<1x18x18xf32> to vector<18x18xf32>
    %1558 = vector.extract_strided_slice %1557 {offsets = [0, 0], sizes = [16, 16], strides = [1, 1]} : vector<18x18xf32> to vector<16x16xf32>
    %c345 = arith.constant 345 : index
    %1559 = memref.load %arg1[%c345] : memref<373xf32, #tpu.memory_space<smem>>
    %1560 = vector.broadcast %1559 : f32 to vector<16x16xf32>
    %1561 = arith.mulf %1560, %1558 : vector<16x16xf32>
    %1562 = arith.addf %1555, %1561 : vector<16x16xf32>
    %1563 = vector.extract_strided_slice %1557 {offsets = [0, 1], sizes = [16, 16], strides = [1, 1]} : vector<18x18xf32> to vector<16x16xf32>
    %c346 = arith.constant 346 : index
    %1564 = memref.load %arg1[%c346] : memref<373xf32, #tpu.memory_space<smem>>
    %1565 = vector.broadcast %1564 : f32 to vector<16x16xf32>
    %1566 = arith.mulf %1565, %1563 : vector<16x16xf32>
    %1567 = arith.addf %1562, %1566 : vector<16x16xf32>
    %1568 = vector.extract_strided_slice %1557 {offsets = [0, 2], sizes = [16, 16], strides = [1, 1]} : vector<18x18xf32> to vector<16x16xf32>
    %c347 = arith.constant 347 : index
    %1569 = memref.load %arg1[%c347] : memref<373xf32, #tpu.memory_space<smem>>
    %1570 = vector.broadcast %1569 : f32 to vector<16x16xf32>
    %1571 = arith.mulf %1570, %1568 : vector<16x16xf32>
    %1572 = arith.addf %1567, %1571 : vector<16x16xf32>
    %1573 = vector.extract_strided_slice %1557 {offsets = [1, 0], sizes = [16, 16], strides = [1, 1]} : vector<18x18xf32> to vector<16x16xf32>
    %c348 = arith.constant 348 : index
    %1574 = memref.load %arg1[%c348] : memref<373xf32, #tpu.memory_space<smem>>
    %1575 = vector.broadcast %1574 : f32 to vector<16x16xf32>
    %1576 = arith.mulf %1575, %1573 : vector<16x16xf32>
    %1577 = arith.addf %1572, %1576 : vector<16x16xf32>
    %1578 = vector.extract_strided_slice %1557 {offsets = [1, 1], sizes = [16, 16], strides = [1, 1]} : vector<18x18xf32> to vector<16x16xf32>
    %c349 = arith.constant 349 : index
    %1579 = memref.load %arg1[%c349] : memref<373xf32, #tpu.memory_space<smem>>
    %1580 = vector.broadcast %1579 : f32 to vector<16x16xf32>
    %1581 = arith.mulf %1580, %1578 : vector<16x16xf32>
    %1582 = arith.addf %1577, %1581 : vector<16x16xf32>
    %1583 = vector.extract_strided_slice %1557 {offsets = [1, 2], sizes = [16, 16], strides = [1, 1]} : vector<18x18xf32> to vector<16x16xf32>
    %c350 = arith.constant 350 : index
    %1584 = memref.load %arg1[%c350] : memref<373xf32, #tpu.memory_space<smem>>
    %1585 = vector.broadcast %1584 : f32 to vector<16x16xf32>
    %1586 = arith.mulf %1585, %1583 : vector<16x16xf32>
    %1587 = arith.addf %1582, %1586 : vector<16x16xf32>
    %1588 = vector.extract_strided_slice %1557 {offsets = [2, 0], sizes = [16, 16], strides = [1, 1]} : vector<18x18xf32> to vector<16x16xf32>
    %c351 = arith.constant 351 : index
    %1589 = memref.load %arg1[%c351] : memref<373xf32, #tpu.memory_space<smem>>
    %1590 = vector.broadcast %1589 : f32 to vector<16x16xf32>
    %1591 = arith.mulf %1590, %1588 : vector<16x16xf32>
    %1592 = arith.addf %1587, %1591 : vector<16x16xf32>
    %1593 = vector.extract_strided_slice %1557 {offsets = [2, 1], sizes = [16, 16], strides = [1, 1]} : vector<18x18xf32> to vector<16x16xf32>
    %c352 = arith.constant 352 : index
    %1594 = memref.load %arg1[%c352] : memref<373xf32, #tpu.memory_space<smem>>
    %1595 = vector.broadcast %1594 : f32 to vector<16x16xf32>
    %1596 = arith.mulf %1595, %1593 : vector<16x16xf32>
    %1597 = arith.addf %1592, %1596 : vector<16x16xf32>
    %1598 = vector.extract_strided_slice %1557 {offsets = [2, 2], sizes = [16, 16], strides = [1, 1]} : vector<18x18xf32> to vector<16x16xf32>
    %c353 = arith.constant 353 : index
    %1599 = memref.load %arg1[%c353] : memref<373xf32, #tpu.memory_space<smem>>
    %1600 = vector.broadcast %1599 : f32 to vector<16x16xf32>
    %1601 = arith.mulf %1600, %1598 : vector<16x16xf32>
    %1602 = arith.addf %1597, %1601 : vector<16x16xf32>
    %c2_95 = arith.constant 2 : index
    %c0_96 = arith.constant 0 : index
    %c0_97 = arith.constant 0 : index
    %1603 = vector.load %arg4[%c2_95, %c0_96, %c0_97] : memref<4x18x18xf32, #tpu.memory_space<vmem>>, vector<1x18x18xf32>
    %1604 = vector.shape_cast %1603 : vector<1x18x18xf32> to vector<18x18xf32>
    %1605 = vector.extract_strided_slice %1604 {offsets = [0, 0], sizes = [16, 16], strides = [1, 1]} : vector<18x18xf32> to vector<16x16xf32>
    %c354 = arith.constant 354 : index
    %1606 = memref.load %arg1[%c354] : memref<373xf32, #tpu.memory_space<smem>>
    %1607 = vector.broadcast %1606 : f32 to vector<16x16xf32>
    %1608 = arith.mulf %1607, %1605 : vector<16x16xf32>
    %1609 = arith.addf %1602, %1608 : vector<16x16xf32>
    %1610 = vector.extract_strided_slice %1604 {offsets = [0, 1], sizes = [16, 16], strides = [1, 1]} : vector<18x18xf32> to vector<16x16xf32>
    %c355 = arith.constant 355 : index
    %1611 = memref.load %arg1[%c355] : memref<373xf32, #tpu.memory_space<smem>>
    %1612 = vector.broadcast %1611 : f32 to vector<16x16xf32>
    %1613 = arith.mulf %1612, %1610 : vector<16x16xf32>
    %1614 = arith.addf %1609, %1613 : vector<16x16xf32>
    %1615 = vector.extract_strided_slice %1604 {offsets = [0, 2], sizes = [16, 16], strides = [1, 1]} : vector<18x18xf32> to vector<16x16xf32>
    %c356 = arith.constant 356 : index
    %1616 = memref.load %arg1[%c356] : memref<373xf32, #tpu.memory_space<smem>>
    %1617 = vector.broadcast %1616 : f32 to vector<16x16xf32>
    %1618 = arith.mulf %1617, %1615 : vector<16x16xf32>
    %1619 = arith.addf %1614, %1618 : vector<16x16xf32>
    %1620 = vector.extract_strided_slice %1604 {offsets = [1, 0], sizes = [16, 16], strides = [1, 1]} : vector<18x18xf32> to vector<16x16xf32>
    %c357 = arith.constant 357 : index
    %1621 = memref.load %arg1[%c357] : memref<373xf32, #tpu.memory_space<smem>>
    %1622 = vector.broadcast %1621 : f32 to vector<16x16xf32>
    %1623 = arith.mulf %1622, %1620 : vector<16x16xf32>
    %1624 = arith.addf %1619, %1623 : vector<16x16xf32>
    %1625 = vector.extract_strided_slice %1604 {offsets = [1, 1], sizes = [16, 16], strides = [1, 1]} : vector<18x18xf32> to vector<16x16xf32>
    %c358 = arith.constant 358 : index
    %1626 = memref.load %arg1[%c358] : memref<373xf32, #tpu.memory_space<smem>>
    %1627 = vector.broadcast %1626 : f32 to vector<16x16xf32>
    %1628 = arith.mulf %1627, %1625 : vector<16x16xf32>
    %1629 = arith.addf %1624, %1628 : vector<16x16xf32>
    %1630 = vector.extract_strided_slice %1604 {offsets = [1, 2], sizes = [16, 16], strides = [1, 1]} : vector<18x18xf32> to vector<16x16xf32>
    %c359 = arith.constant 359 : index
    %1631 = memref.load %arg1[%c359] : memref<373xf32, #tpu.memory_space<smem>>
    %1632 = vector.broadcast %1631 : f32 to vector<16x16xf32>
    %1633 = arith.mulf %1632, %1630 : vector<16x16xf32>
    %1634 = arith.addf %1629, %1633 : vector<16x16xf32>
    %1635 = vector.extract_strided_slice %1604 {offsets = [2, 0], sizes = [16, 16], strides = [1, 1]} : vector<18x18xf32> to vector<16x16xf32>
    %c360 = arith.constant 360 : index
    %1636 = memref.load %arg1[%c360] : memref<373xf32, #tpu.memory_space<smem>>
    %1637 = vector.broadcast %1636 : f32 to vector<16x16xf32>
    %1638 = arith.mulf %1637, %1635 : vector<16x16xf32>
    %1639 = arith.addf %1634, %1638 : vector<16x16xf32>
    %1640 = vector.extract_strided_slice %1604 {offsets = [2, 1], sizes = [16, 16], strides = [1, 1]} : vector<18x18xf32> to vector<16x16xf32>
    %c361 = arith.constant 361 : index
    %1641 = memref.load %arg1[%c361] : memref<373xf32, #tpu.memory_space<smem>>
    %1642 = vector.broadcast %1641 : f32 to vector<16x16xf32>
    %1643 = arith.mulf %1642, %1640 : vector<16x16xf32>
    %1644 = arith.addf %1639, %1643 : vector<16x16xf32>
    %1645 = vector.extract_strided_slice %1604 {offsets = [2, 2], sizes = [16, 16], strides = [1, 1]} : vector<18x18xf32> to vector<16x16xf32>
    %c362 = arith.constant 362 : index
    %1646 = memref.load %arg1[%c362] : memref<373xf32, #tpu.memory_space<smem>>
    %1647 = vector.broadcast %1646 : f32 to vector<16x16xf32>
    %1648 = arith.mulf %1647, %1645 : vector<16x16xf32>
    %1649 = arith.addf %1644, %1648 : vector<16x16xf32>
    %c3_98 = arith.constant 3 : index
    %c0_99 = arith.constant 0 : index
    %c0_100 = arith.constant 0 : index
    %1650 = vector.load %arg4[%c3_98, %c0_99, %c0_100] : memref<4x18x18xf32, #tpu.memory_space<vmem>>, vector<1x18x18xf32>
    %1651 = vector.shape_cast %1650 : vector<1x18x18xf32> to vector<18x18xf32>
    %1652 = vector.extract_strided_slice %1651 {offsets = [0, 0], sizes = [16, 16], strides = [1, 1]} : vector<18x18xf32> to vector<16x16xf32>
    %c363 = arith.constant 363 : index
    %1653 = memref.load %arg1[%c363] : memref<373xf32, #tpu.memory_space<smem>>
    %1654 = vector.broadcast %1653 : f32 to vector<16x16xf32>
    %1655 = arith.mulf %1654, %1652 : vector<16x16xf32>
    %1656 = arith.addf %1649, %1655 : vector<16x16xf32>
    %1657 = vector.extract_strided_slice %1651 {offsets = [0, 1], sizes = [16, 16], strides = [1, 1]} : vector<18x18xf32> to vector<16x16xf32>
    %c364 = arith.constant 364 : index
    %1658 = memref.load %arg1[%c364] : memref<373xf32, #tpu.memory_space<smem>>
    %1659 = vector.broadcast %1658 : f32 to vector<16x16xf32>
    %1660 = arith.mulf %1659, %1657 : vector<16x16xf32>
    %1661 = arith.addf %1656, %1660 : vector<16x16xf32>
    %1662 = vector.extract_strided_slice %1651 {offsets = [0, 2], sizes = [16, 16], strides = [1, 1]} : vector<18x18xf32> to vector<16x16xf32>
    %c365 = arith.constant 365 : index
    %1663 = memref.load %arg1[%c365] : memref<373xf32, #tpu.memory_space<smem>>
    %1664 = vector.broadcast %1663 : f32 to vector<16x16xf32>
    %1665 = arith.mulf %1664, %1662 : vector<16x16xf32>
    %1666 = arith.addf %1661, %1665 : vector<16x16xf32>
    %1667 = vector.extract_strided_slice %1651 {offsets = [1, 0], sizes = [16, 16], strides = [1, 1]} : vector<18x18xf32> to vector<16x16xf32>
    %c366 = arith.constant 366 : index
    %1668 = memref.load %arg1[%c366] : memref<373xf32, #tpu.memory_space<smem>>
    %1669 = vector.broadcast %1668 : f32 to vector<16x16xf32>
    %1670 = arith.mulf %1669, %1667 : vector<16x16xf32>
    %1671 = arith.addf %1666, %1670 : vector<16x16xf32>
    %1672 = vector.extract_strided_slice %1651 {offsets = [1, 1], sizes = [16, 16], strides = [1, 1]} : vector<18x18xf32> to vector<16x16xf32>
    %c367 = arith.constant 367 : index
    %1673 = memref.load %arg1[%c367] : memref<373xf32, #tpu.memory_space<smem>>
    %1674 = vector.broadcast %1673 : f32 to vector<16x16xf32>
    %1675 = arith.mulf %1674, %1672 : vector<16x16xf32>
    %1676 = arith.addf %1671, %1675 : vector<16x16xf32>
    %1677 = vector.extract_strided_slice %1651 {offsets = [1, 2], sizes = [16, 16], strides = [1, 1]} : vector<18x18xf32> to vector<16x16xf32>
    %c368 = arith.constant 368 : index
    %1678 = memref.load %arg1[%c368] : memref<373xf32, #tpu.memory_space<smem>>
    %1679 = vector.broadcast %1678 : f32 to vector<16x16xf32>
    %1680 = arith.mulf %1679, %1677 : vector<16x16xf32>
    %1681 = arith.addf %1676, %1680 : vector<16x16xf32>
    %1682 = vector.extract_strided_slice %1651 {offsets = [2, 0], sizes = [16, 16], strides = [1, 1]} : vector<18x18xf32> to vector<16x16xf32>
    %c369 = arith.constant 369 : index
    %1683 = memref.load %arg1[%c369] : memref<373xf32, #tpu.memory_space<smem>>
    %1684 = vector.broadcast %1683 : f32 to vector<16x16xf32>
    %1685 = arith.mulf %1684, %1682 : vector<16x16xf32>
    %1686 = arith.addf %1681, %1685 : vector<16x16xf32>
    %1687 = vector.extract_strided_slice %1651 {offsets = [2, 1], sizes = [16, 16], strides = [1, 1]} : vector<18x18xf32> to vector<16x16xf32>
    %c370 = arith.constant 370 : index
    %1688 = memref.load %arg1[%c370] : memref<373xf32, #tpu.memory_space<smem>>
    %1689 = vector.broadcast %1688 : f32 to vector<16x16xf32>
    %1690 = arith.mulf %1689, %1687 : vector<16x16xf32>
    %1691 = arith.addf %1686, %1690 : vector<16x16xf32>
    %1692 = vector.extract_strided_slice %1651 {offsets = [2, 2], sizes = [16, 16], strides = [1, 1]} : vector<18x18xf32> to vector<16x16xf32>
    %c371 = arith.constant 371 : index
    %1693 = memref.load %arg1[%c371] : memref<373xf32, #tpu.memory_space<smem>>
    %1694 = vector.broadcast %1693 : f32 to vector<16x16xf32>
    %1695 = arith.mulf %1694, %1692 : vector<16x16xf32>
    %1696 = arith.addf %1691, %1695 : vector<16x16xf32>
    %c0_101 = arith.constant 0 : index
    %c0_102 = arith.constant 0 : index
    %c0_103 = arith.constant 0 : index
    %c0_104 = arith.constant 0 : index
    %1697 = vector.load %arg3[%c0_101, %c0_102, %c0_103, %c0_104] : memref<1x1x16x16xf32, #tpu.memory_space<vmem>>, vector<1x1x16x16xf32>
    %1698 = vector.shape_cast %1697 : vector<1x1x16x16xf32> to vector<16x16xf32>
    %1699 = vector.shape_cast %1696 : vector<16x16xf32> to vector<1x1x16x16xf32>
    tpu.vector_store %arg3[%c0_101, %c0_102, %c0_103, %c0_104], %1699 {strides = array<i32>} : memref<1x1x16x16xf32, #tpu.memory_space<vmem>>, vector<1x1x16x16xf32>,
    return
  }
  func.func @transform_0(%arg0: i32) -> i32 {
    %c0_i32 = arith.constant 0 : i32
    %c0_i32_0 = arith.constant 0 : i32
    return %c0_i32 : i32
  }
  func.func @transform_1(%arg0: i32) -> (i32, i32, i32, i32) {
    %c0_i32 = arith.constant 0 : i32
    %c0_i32_0 = arith.constant 0 : i32
    %c0_i32_1 = arith.constant 0 : i32
    %c0_i32_2 = arith.constant 0 : i32
    return %arg0, %c0_i32, %c0_i32_0, %c0_i32_1 : i32, i32, i32, i32
  }
  func.func @transform_2(%arg0: i32) -> (i32, i32, i32, i32) {
    %c0_i32 = arith.constant 0 : i32
    %c0_i32_0 = arith.constant 0 : i32
    %c0_i32_1 = arith.constant 0 : i32
    %c0_i32_2 = arith.constant 0 : i32
    return %arg0, %c0_i32, %c0_i32_0, %c0_i32_1 : i32, i32, i32, i32
  }
}

</mosaic_0001>

<llo_original>
// kernel: tpu_custom_call.1
$region0: #{tpu_custom_call.1}
  #allocation0 [shape = 'u32[]', space=smem, size = 0x4, offset = 0x4, fixed_abs, tag = 'smem constant byte address 0x4 - core index']
  #allocation1 [shape = 'u32[144,128]{1,0:T(1,128)}', space=vmem, size = 0x12000, scoped, tag = 'internal scratch']
  #allocation2 [shape = 'f32[4,18,18]{2,1,0:T(8,128)}', space=vmem, size = 0xc000, scoped, tag = 'scratch operand']
  #allocation3 [shape = 'f32[4,18,18]{2,1,0:T(8,128)}', space=vmem, size = 0xc000, scoped, tag = 'scratch operand']
  %s0 = inlined_call_operand.hbm [shape: f32[373], index: 0, kind: input, shape index: {}]
  %s1 = inlined_call_operand.hbm [shape: f32[2,1,16,16], index: 1, kind: input, shape index: {}]
  %s2 = inlined_call_operand.hbm [shape: f32[2,1,16,16], index: 2, kind: output, shape index: {}]
  %s3 = sld [smem:[#allocation0]]
  $region49: #{tpu_custom_call.1} parent=0
    _
  %s5 = ssub.s32 1, %s3
  %s6 = scalar_select 0, %s5, %s3
  $region1: #{tpu_custom_call.1} parent=0
    #allocation4 [shape = 'u8[1536]{0}', space=smem, size = 0x600, scoped, tag = 'input window, operand 0, single buffered']
    #allocation5 [shape = 's32[2]{0}', space=sflag, size = 0x8, scoped, tag = 'scoped memory for tpu_custom_call.1']
    #allocation6 [shape = 's32[2]{0}', space=sflag, size = 0x8, scoped, tag = 'scoped memory for tpu_custom_call.1']
    #allocation7 [shape = 's32[2]{0}', space=sflag, size = 0x8, scoped, tag = 'scoped memory for tpu_custom_call.1']
    #allocation8 [shape = 'u8[16384]{0}', space=vmem, size = 0x4000, scoped, tag = 'input window, operand 1']
    #allocation9 [shape = 'u8[16384]{0}', space=vmem, size = 0x4000, scoped, tag = 'output window, operand 0']
    %7 = vsyncpa [#allocation7], 0
    %8 = vsyncpa [#allocation5], 0
    %s9 = scalar_lea.sflag [#allocation5], 1
    %10 = vsyncpa %s9, 0
    %11 = vsyncpa [#allocation6], 0
    %s12 = scalar_lea.sflag [#allocation6], 1
    %13 = vsyncpa %s12, 0
    loop: start=0, step=1, limit=4
    $region2: #{tpu_custom_call.1} parent=1 // loop_pre_header
      _
    $region3: #{tpu_custom_call.1} parent=1 // loop_header
      %s15 = sphi 0, %s19
      %p16 = scmp.ge.s32.totalorder %s15, 4
      %s23 = sphi 0, %s23
      %s25 = sphi 0, %s23
      %s26 = sphi 0, %s25
      %s40 = sphi 0, %s26
      %s46 = sphi 0, %s48
      %s49 = sphi 0, %s46
      %s50 = sphi 0, %s49
      %s66 = sphi 0, %s50
      %s72 = sphi 0, %s74
      %s75 = sphi 0, %s72
      %s76 = sphi 0, %s75
      %s92 = sphi 0, %s76
    $region4: #{tpu_custom_call.1} parent=1 // loop_header_branch
      %18 = sbr.rel (%p16) target = $region8
    $region5: #{tpu_custom_call.1} parent=1 // loop_body
      %s20 = ssub.s32 %s15, 1
      %s21 = ssub.s32 %s15, 2
      %s22 = sadd.s32 %s15, 1
      %s24 = sadd.s32 %s23, 1
      %p27 = scmp.eq.s32.totalorder %s15, 1
      %p28 = scmp.ne.s32.totalorder %s23, %s25
      %p29 = scmp.eq.s32.totalorder %s15, 0
      %p30 = por %p28, %p29
      %p31 = scmp.ne.s32.totalorder %s23, %s25
      %p32 = scmp.eq.s32.totalorder %s20, 1
      %p33 = por %p31, %p32
      %p34 = scmp.ne.s32.totalorder %s25, %s26
      %p35 = scmp.eq.s32.totalorder %s20, 0
      %p36 = por %p34, %p35
      %p37 = scmp.ne.s32.totalorder %s25, %s26
      %p38 = scmp.eq.s32.totalorder %s21, 1
      %p39 = por %p37, %p38
      %p41 = scmp.ne.s32.totalorder %s26, %s40
      %p42 = scmp.eq.s32.totalorder %s21, 0
      %p43 = por %p41, %p42
      %s44 = ssub.s32 %s15, %s22
      %p45 = scmp.eq.s32.totalorder %s44, 0
      %s47 = sadd.s32 %s46, 1
      %s48 = scalar_select %p45, %s46, %s47
      %p51 = pneg %p45
      %p52 = scmp.eq.s32.totalorder %s15, 1
      %p53 = por %p51, %p52
      %p54 = scmp.ne.s32.totalorder %s46, %s49
      %p55 = scmp.eq.s32.totalorder %s15, 0
      %p56 = por %p54, %p55
      %p57 = scmp.ne.s32.totalorder %s46, %s49
      %p58 = scmp.eq.s32.totalorder %s20, 1
      %p59 = por %p57, %p58
      %p60 = scmp.ne.s32.totalorder %s49, %s50
      %p61 = scmp.eq.s32.totalorder %s20, 0
      %p62 = por %p60, %p61
      %p63 = scmp.ne.s32.totalorder %s49, %s50
      %p64 = scmp.eq.s32.totalorder %s21, 1
      %p65 = por %p63, %p64
      %p67 = scmp.ne.s32.totalorder %s50, %s66
      %p68 = scmp.eq.s32.totalorder %s21, 0
      %p69 = por %p67, %p68
      %s70 = ssub.s32 %s15, %s22
      %p71 = scmp.eq.s32.totalorder %s70, 0
      %s73 = sadd.s32 %s72, 1
      %s74 = scalar_select %p71, %s72, %s73
      %p77 = pneg %p71
      %p78 = scmp.eq.s32.totalorder %s15, 1
      %p79 = por %p77, %p78
      %p80 = scmp.ne.s32.totalorder %s72, %s75
      %p81 = scmp.eq.s32.totalorder %s15, 0
      %p82 = por %p80, %p81
      %p83 = scmp.ne.s32.totalorder %s72, %s75
      %p84 = scmp.eq.s32.totalorder %s20, 1
      %p85 = por %p83, %p84
      %p86 = scmp.ne.s32.totalorder %s75, %s76
      %p87 = scmp.eq.s32.totalorder %s20, 0
      %p88 = por %p86, %p87
      %p89 = scmp.ne.s32.totalorder %s75, %s76
      %p90 = scmp.eq.s32.totalorder %s21, 1
      %p91 = por %p89, %p90
      %p93 = scmp.ne.s32.totalorder %s76, %s92
      %p94 = scmp.eq.s32.totalorder %s21, 0
      %p95 = por %p93, %p94
      %p96 = scmp.le.s32.totalorder 1, %s15
      %p97 = scmp.lt.s32.totalorder %s15, 3
      %p98 = pnand %p96, %p97
      %p99 = pneg %p98
      // Predicated region
      $region9: #{tpu_custom_call.1} parent=5 // pred_check
        _
      $region10: #{tpu_custom_call.1} parent=5 // pred_check_branch
        %101 = sbr.rel (%p98) target = $region12
      $region11: #{tpu_custom_call.1} parent=5 // pred_region
        %s102 = ssub.s32 %s15, 1
        // Predicated region
        $region13: #{tpu_custom_call.1} parent=11 // pred_check
          %p103 = pneg %p36
        $region14: #{tpu_custom_call.1} parent=11 // pred_check_branch
          %105 = sbr.rel (%p103) target = $region16
        $region15: #{tpu_custom_call.1} parent=11 // pred_region
          %s107 = ssub.s32 48, 48
          %108 = vsyncadd [#allocation7], %s107
          %111 = dma.hbm_to_smem %s0, 48, [#allocation4], [#allocation7]
        $region16: #{tpu_custom_call.1} parent=11 // pred_fallthru
          _
      $region12: #{tpu_custom_call.1} parent=5 // pred_fallthru
        _
      %p112 = scmp.lt.s32.totalorder %s15, 2
      // Predicated region
      $region17: #{tpu_custom_call.1} parent=5 // pred_check
        %p113 = pneg %p112
      $region18: #{tpu_custom_call.1} parent=5 // pred_check_branch
        %115 = sbr.rel (%p113) target = $region20
      $region19: #{tpu_custom_call.1} parent=5 // pred_region
        // Predicated region
        $region21: #{tpu_custom_call.1} parent=19 // pred_check
          %p116 = pneg %p56
        $region22: #{tpu_custom_call.1} parent=19 // pred_check_branch
          %118 = sbr.rel (%p116) target = $region24
        $region23: #{tpu_custom_call.1} parent=19 // pred_region
          %s119 = sand.u32 %s46, 1
          %s120 = scalar_lea.sflag [#allocation5], %s119
          %s121 = sand.u32 %s46, 1
          %s122 = smul.addr %s121, 16
          %s123 = scalar_lea.vmem [#allocation8], %s122
          %s125 = ssub.s32 256, 256
          %126 = vsyncadd %s120, %s125
          %s127 = smul.addr %s15, 2
          %s128 = smul.addr %s127, 128
          %s129 = scalar_lea.hbm %s1, %s128
          %s130 = sshll.u32 %s123, 4
          %s131 = int_to_ptr.vmem [resolvable:$true] %s130
          %136 = dma.hbm_to_vmem [thread:$0]  %s129, 256, %s131, %s120, 128, 128, 8
        $region24: #{tpu_custom_call.1} parent=19 // pred_fallthru
          _
      $region20: #{tpu_custom_call.1} parent=5 // pred_fallthru
        _
      %p137 = scmp.le.s32.totalorder 1, %s15
      %p138 = scmp.lt.s32.totalorder %s15, 3
      %p139 = pnand %p137, %p138
      %p140 = pneg %p139
      // Predicated region
      $region25: #{tpu_custom_call.1} parent=5 // pred_check
        _
      $region26: #{tpu_custom_call.1} parent=5 // pred_check_branch
        %142 = sbr.rel (%p139) target = $region28
      $region27: #{tpu_custom_call.1} parent=5 // pred_region
        %s143 = ssub.s32 %s15, 1
        // Predicated region
        $region29: #{tpu_custom_call.1} parent=27 // pred_check
          %p144 = pneg %p36
        $region30: #{tpu_custom_call.1} parent=27 // pred_check_branch
          %146 = sbr.rel (%p144) target = $region32
        $region31: #{tpu_custom_call.1} parent=27 // pred_region
          %147 = dma.done [#allocation7], 48
        $region32: #{tpu_custom_call.1} parent=27 // pred_fallthru
          _
        %s148 = sand.u32 %s49, 1
        %s149 = scalar_lea.sflag [#allocation5], %s148
        %s150 = sand.u32 %s49, 1
        %s151 = smul.addr %s150, 16
        %s152 = scalar_lea.vmem [#allocation8], %s151
        // Predicated region
        $region33: #{tpu_custom_call.1} parent=27 // pred_check
          %p153 = pneg %p62
        $region34: #{tpu_custom_call.1} parent=27 // pred_check_branch
          %155 = sbr.rel (%p153) target = $region36
        $region35: #{tpu_custom_call.1} parent=27 // pred_region
          %156 = dma.done %s149, 256
        $region36: #{tpu_custom_call.1} parent=27 // pred_fallthru
          _
        %157 = sfence
        %p158 = pneg %p36
        %p159 = pneg %p33
        %s160 = sand.u32 %s49, 1
        %s161 = scalar_lea.sflag [#allocation5], %s160
        %s162 = sand.u32 %s49, 1
        %s163 = smul.addr %s162, 16
        %s164 = scalar_lea.vmem [#allocation8], %s163
        %p165 = pneg %p62
        %p166 = pneg %p59
        %p167 = pneg %p88
        %p168 = pneg %p85
        %s169 = sand.u32 %s75, 1
        %s170 = scalar_lea.sflag [#allocation6], %s169
        %s171 = sand.u32 %s75, 1
        %s172 = smul.addr %s171, 16
        %s173 = scalar_lea.vmem [#allocation9], %s172
        %s174 = sld [smem:[#allocation4 + $0x24]]
        %v175 = vstv %s174
        %s176 = sld [smem:[#allocation4 + $0x25]]
        %v177 = vstv %s176
        %s178 = sld [smem:[#allocation4 + $0x26]]
        %v179 = vstv %s178
        %s180 = sld [smem:[#allocation4 + $0x27]]
        %v181 = vstv %s180
        %v182 = vld [vmem:[%s152] sm:$0xff]
        %v183 = vld [vmem:[%s152 + $0x8] sm:$0xff]
        %186 = vrot.lane.b32.xlu0 %v182, 1
        %v187 = vpop.permute.xlu0 %186
        %188 = vrot.lane.b32.xlu0 %v183, 1
        %v189 = vpop.permute.xlu0 %188
        %vm192 = vcmask 7168
        %v193 = vsel %vm192, 0.0, %v187
        %v194 = vsel %vm192, 0.0, %v189
        %vm195 = vcmask 138240
        %v196 = vsel %vm195, %v193, 0.0
        %v197 = vsel %vm195, %v194, 0.0
        %vm200 = vcmask 1040384
        %v201 = vrot.slane %v196, 7
        %v202 = vrot.slane %v197, 7
        %v203 = vsel %vm200, %v201, %v202
        %v207 = vsel %vm200, 0.0, %v201
        %v208 = vsel %vm200, %v202, 0.0
        %s209 = sld [smem:[#allocation4]]
        %v210 = vstv %s209
        %v211 = vmul.f32 %v210, %v207
        %v212 = vmul.f32 %v210, %v203
        %v213 = vadd.f32 %v175, %v211
        %v214 = vadd.f32 %v175, %v212
        %s215 = sld [smem:[#allocation4 + $0x9]]
        %v216 = vstv %s215
        %v217 = vmul.f32 %v216, %v207
        %v218 = vmul.f32 %v216, %v203
        %v219 = vadd.f32 %v177, %v217
        %v220 = vadd.f32 %v177, %v218
        %s221 = sld [smem:[#allocation4 + $0x12]]
        %v222 = vstv %s221
        %v223 = vmul.f32 %v222, %v207
        %v224 = vmul.f32 %v222, %v203
        %v225 = vadd.f32 %v179, %v223
        %v226 = vadd.f32 %v179, %v224
        %s227 = sld [smem:[#allocation4 + $0x1b]]
        %v228 = vstv %s227
        %v229 = vmul.f32 %v228, %v207
        %v230 = vmul.f32 %v228, %v203
        %v231 = vadd.f32 %v181, %v229
        %v232 = vadd.f32 %v181, %v230
        %s233 = sld [smem:[#allocation4 + $0x1]]
        %v234 = vstv %s233
        %v235 = vmul.f32 %v234, %v207
        %v236 = vmul.f32 %v234, %v203
        %239 = vrot.lane.b32.xlu0 %v235, 127
        %v240 = vpop.permute.xlu0 %239
        %241 = vrot.lane.b32.xlu0 %v236, 127
        %v242 = vpop.permute.xlu0 %241
        %v245 = vadd.f32 %v213, %v240
        %v246 = vadd.f32 %v214, %v242
        %s247 = sld [smem:[#allocation4 + $0xa]]
        %v248 = vstv %s247
        %v249 = vmul.f32 %v248, %v207
        %v250 = vmul.f32 %v248, %v203
        %253 = vrot.lane.b32.xlu0 %v249, 127
        %v254 = vpop.permute.xlu0 %253
        %255 = vrot.lane.b32.xlu0 %v250, 127
        %v256 = vpop.permute.xlu0 %255
        %v259 = vadd.f32 %v219, %v254
        %v260 = vadd.f32 %v220, %v256
        %s261 = sld [smem:[#allocation4 + $0x13]]
        %v262 = vstv %s261
        %v263 = vmul.f32 %v262, %v207
        %v264 = vmul.f32 %v262, %v203
        %267 = vrot.lane.b32.xlu0 %v263, 127
        %v268 = vpop.permute.xlu0 %267
        %269 = vrot.lane.b32.xlu0 %v264, 127
        %v270 = vpop.permute.xlu0 %269
        %v273 = vadd.f32 %v225, %v268
        %v274 = vadd.f32 %v226, %v270
        %s275 = sld [smem:[#allocation4 + $0x1c]]
        %v276 = vstv %s275
        %v277 = vmul.f32 %v276, %v207
        %v278 = vmul.f32 %v276, %v203
        %281 = vrot.lane.b32.xlu0 %v277, 127
        %v282 = vpop.permute.xlu0 %281
        %283 = vrot.lane.b32.xlu0 %v278, 127
        %v284 = vpop.permute.xlu0 %283
        %v287 = vadd.f32 %v231, %v282
        %v288 = vadd.f32 %v232, %v284
        %s289 = sld [smem:[#allocation4 + $0x2]]
        %v290 = vstv %s289
        %v291 = vmul.f32 %v290, %v207
        %v292 = vmul.f32 %v290, %v203
        %295 = vrot.lane.b32.xlu0 %v291, 126
        %v296 = vpop.permute.xlu0 %295
        %297 = vrot.lane.b32.xlu0 %v292, 126
        %v298 = vpop.permute.xlu0 %297
        %v301 = vadd.f32 %v245, %v296
        %v302 = vadd.f32 %v246, %v298
        %s303 = sld [smem:[#allocation4 + $0xb]]
        %v304 = vstv %s303
        %v305 = vmul.f32 %v304, %v207
        %v306 = vmul.f32 %v304, %v203
        %309 = vrot.lane.b32.xlu0 %v305, 126
        %v310 = vpop.permute.xlu0 %309
        %311 = vrot.lane.b32.xlu0 %v306, 126
        %v312 = vpop.permute.xlu0 %311
        %v315 = vadd.f32 %v259, %v310
        %v316 = vadd.f32 %v260, %v312
        %s317 = sld [smem:[#allocation4 + $0x14]]
        %v318 = vstv %s317
        %v319 = vmul.f32 %v318, %v207
        %v320 = vmul.f32 %v318, %v203
        %323 = vrot.lane.b32.xlu0 %v319, 126
        %v324 = vpop.permute.xlu0 %323
        %325 = vrot.lane.b32.xlu0 %v320, 126
        %v326 = vpop.permute.xlu0 %325
        %v329 = vadd.f32 %v273, %v324
        %v330 = vadd.f32 %v274, %v326
        %s331 = sld [smem:[#allocation4 + $0x1d]]
        %v332 = vstv %s331
        %v333 = vmul.f32 %v332, %v207
        %v334 = vmul.f32 %v332, %v203
        %337 = vrot.lane.b32.xlu0 %v333, 126
        %v338 = vpop.permute.xlu0 %337
        %339 = vrot.lane.b32.xlu0 %v334, 126
        %v340 = vpop.permute.xlu0 %339
        %v343 = vadd.f32 %v287, %v338
        %v344 = vadd.f32 %v288, %v340
        %s345 = sld [smem:[#allocation4 + $0x3]]
        %v346 = vstv %s345
        %v347 = vmul.f32 %v346, %v207
        %v348 = vmul.f32 %v346, %v203
        %v349 = vmul.f32 %v346, %v208
        %vm353 = vcmask 1046528
        %v354 = vrot.slane %v347, 1
        %v355 = vrot.slane %v348, 1
        %v356 = vsel %vm353, %v354, %v355
        %v357 = vrot.slane %v349, 1
        %v358 = vsel %vm353, %v355, %v357
        %v361 = vadd.f32 %v301, %v356
        %v362 = vadd.f32 %v302, %v358
        %s363 = sld [smem:[#allocation4 + $0xc]]
        %v364 = vstv %s363
        %v365 = vmul.f32 %v364, %v207
        %v366 = vmul.f32 %v364, %v203
        %v367 = vmul.f32 %v364, %v208
        %v371 = vrot.slane %v365, 1
        %v372 = vrot.slane %v366, 1
        %v373 = vsel %vm353, %v371, %v372
        %v374 = vrot.slane %v367, 1
        %v375 = vsel %vm353, %v372, %v374
        %v378 = vadd.f32 %v315, %v373
        %v379 = vadd.f32 %v316, %v375
        %s380 = sld [smem:[#allocation4 + $0x15]]
        %v381 = vstv %s380
        %v382 = vmul.f32 %v381, %v207
        %v383 = vmul.f32 %v381, %v203
        %v384 = vmul.f32 %v381, %v208
        %v388 = vrot.slane %v382, 1
        %v389 = vrot.slane %v383, 1
        %v390 = vsel %vm353, %v388, %v389
        %v391 = vrot.slane %v384, 1
        %v392 = vsel %vm353, %v389, %v391
        %v395 = vadd.f32 %v329, %v390
        %v396 = vadd.f32 %v330, %v392
        %s397 = sld [smem:[#allocation4 + $0x1e]]
        %v398 = vstv %s397
        %v399 = vmul.f32 %v398, %v207
        %v400 = vmul.f32 %v398, %v203
        %v401 = vmul.f32 %v398, %v208
        %v405 = vrot.slane %v399, 1
        %v406 = vrot.slane %v400, 1
        %v407 = vsel %vm353, %v405, %v406
        %v408 = vrot.slane %v401, 1
        %v409 = vsel %vm353, %v406, %v408
        %v412 = vadd.f32 %v343, %v407
        %v413 = vadd.f32 %v344, %v409
        %s414 = sld [smem:[#allocation4 + $0x4]]
        %v415 = vstv %s414
        %v416 = vmul.f32 %v415, %v207
        %v417 = vmul.f32 %v415, %v203
        %v418 = vmul.f32 %v415, %v208
        %v422 = vrot.slane %v416, 1
        %v423 = vrot.slane %v417, 1
        %v424 = vsel %vm353, %v422, %v423
        %v425 = vrot.slane %v418, 1
        %v426 = vsel %vm353, %v423, %v425
        %427 = vrot.lane.b32.xlu0 %v424, 127
        %v428 = vpop.permute.xlu0 %427
        %429 = vrot.lane.b32.xlu0 %v426, 127
        %v430 = vpop.permute.xlu0 %429
        %v433 = vadd.f32 %v361, %v428
        %v434 = vadd.f32 %v362, %v430
        %s435 = sld [smem:[#allocation4 + $0xd]]
        %v436 = vstv %s435
        %v437 = vmul.f32 %v436, %v207
        %v438 = vmul.f32 %v436, %v203
        %v439 = vmul.f32 %v436, %v208
        %v443 = vrot.slane %v437, 1
        %v444 = vrot.slane %v438, 1
        %v445 = vsel %vm353, %v443, %v444
        %v446 = vrot.slane %v439, 1
        %v447 = vsel %vm353, %v444, %v446
        %448 = vrot.lane.b32.xlu0 %v445, 127
        %v449 = vpop.permute.xlu0 %448
        %450 = vrot.lane.b32.xlu0 %v447, 127
        %v451 = vpop.permute.xlu0 %450
        %v454 = vadd.f32 %v378, %v449
        %v455 = vadd.f32 %v379, %v451
        %s456 = sld [smem:[#allocation4 + $0x16]]
        %v457 = vstv %s456
        %v458 = vmul.f32 %v457, %v207
        %v459 = vmul.f32 %v457, %v203
        %v460 = vmul.f32 %v457, %v208
        %v464 = vrot.slane %v458, 1
        %v465 = vrot.slane %v459, 1
        %v466 = vsel %vm353, %v464, %v465
        %v467 = vrot.slane %v460, 1
        %v468 = vsel %vm353, %v465, %v467
        %469 = vrot.lane.b32.xlu0 %v466, 127
        %v470 = vpop.permute.xlu0 %469
        %471 = vrot.lane.b32.xlu0 %v468, 127
        %v472 = vpop.permute.xlu0 %471
        %v475 = vadd.f32 %v395, %v470
        %v476 = vadd.f32 %v396, %v472
        %s477 = sld [smem:[#allocation4 + $0x1f]]
        %v478 = vstv %s477
        %v479 = vmul.f32 %v478, %v207
        %v480 = vmul.f32 %v478, %v203
        %v481 = vmul.f32 %v478, %v208
        %v485 = vrot.slane %v479, 1
        %v486 = vrot.slane %v480, 1
        %v487 = vsel %vm353, %v485, %v486
        %v488 = vrot.slane %v481, 1
        %v489 = vsel %vm353, %v486, %v488
        %490 = vrot.lane.b32.xlu0 %v487, 127
        %v491 = vpop.permute.xlu0 %490
        %492 = vrot.lane.b32.xlu0 %v489, 127
        %v493 = vpop.permute.xlu0 %492
        %v496 = vadd.f32 %v412, %v491
        %v497 = vadd.f32 %v413, %v493
        %s498 = sld [smem:[#allocation4 + $0x5]]
        %v499 = vstv %s498
        %v500 = vmul.f32 %v499, %v207
        %v501 = vmul.f32 %v499, %v203
        %v502 = vmul.f32 %v499, %v208
        %v506 = vrot.slane %v500, 1
        %v507 = vrot.slane %v501, 1
        %v508 = vsel %vm353, %v506, %v507
        %v509 = vrot.slane %v502, 1
        %v510 = vsel %vm353, %v507, %v509
        %511 = vrot.lane.b32.xlu0 %v508, 126
        %v512 = vpop.permute.xlu0 %511
        %513 = vrot.lane.b32.xlu0 %v510, 126
        %v514 = vpop.permute.xlu0 %513
        %v517 = vadd.f32 %v433, %v512
        %v518 = vadd.f32 %v434, %v514
        %s519 = sld [smem:[#allocation4 + $0xe]]
        %v520 = vstv %s519
        %v521 = vmul.f32 %v520, %v207
        %v522 = vmul.f32 %v520, %v203
        %v523 = vmul.f32 %v520, %v208
        %v527 = vrot.slane %v521, 1
        %v528 = vrot.slane %v522, 1
        %v529 = vsel %vm353, %v527, %v528
        %v530 = vrot.slane %v523, 1
        %v531 = vsel %vm353, %v528, %v530
        %532 = vrot.lane.b32.xlu0 %v529, 126
        %v533 = vpop.permute.xlu0 %532
        %534 = vrot.lane.b32.xlu0 %v531, 126
        %v535 = vpop.permute.xlu0 %534
        %v538 = vadd.f32 %v454, %v533
        %v539 = vadd.f32 %v455, %v535
        %s540 = sld [smem:[#allocation4 + $0x17]]
        %v541 = vstv %s540
        %v542 = vmul.f32 %v541, %v207
        %v543 = vmul.f32 %v541, %v203
        %v544 = vmul.f32 %v541, %v208
        %v548 = vrot.slane %v542, 1
        %v549 = vrot.slane %v543, 1
        %v550 = vsel %vm353, %v548, %v549
        %v551 = vrot.slane %v544, 1
        %v552 = vsel %vm353, %v549, %v551
        %553 = vrot.lane.b32.xlu0 %v550, 126
        %v554 = vpop.permute.xlu0 %553
        %555 = vrot.lane.b32.xlu0 %v552, 126
        %v556 = vpop.permute.xlu0 %555
        %v559 = vadd.f32 %v475, %v554
        %v560 = vadd.f32 %v476, %v556
        %s561 = sld [smem:[#allocation4 + $0x20]]
        %v562 = vstv %s561
        %v563 = vmul.f32 %v562, %v207
        %v564 = vmul.f32 %v562, %v203
        %v565 = vmul.f32 %v562, %v208
        %v569 = vrot.slane %v563, 1
        %v570 = vrot.slane %v564, 1
        %v571 = vsel %vm353, %v569, %v570
        %v572 = vrot.slane %v565, 1
        %v573 = vsel %vm353, %v570, %v572
        %574 = vrot.lane.b32.xlu0 %v571, 126
        %v575 = vpop.permute.xlu0 %574
        %576 = vrot.lane.b32.xlu0 %v573, 126
        %v577 = vpop.permute.xlu0 %576
        %v580 = vadd.f32 %v496, %v575
        %v581 = vadd.f32 %v497, %v577
        %s582 = sld [smem:[#allocation4 + $0x6]]
        %v583 = vstv %s582
        %v584 = vmul.f32 %v583, %v207
        %v585 = vmul.f32 %v583, %v203
        %v586 = vmul.f32 %v583, %v208
        %vm590 = vcmask 1045504
        %v591 = vrot.slane %v584, 2
        %v592 = vrot.slane %v585, 2
        %v593 = vsel %vm590, %v591, %v592
        %v594 = vrot.slane %v586, 2
        %v595 = vsel %vm590, %v592, %v594
        %v598 = vadd.f32 %v517, %v593
        %v599 = vadd.f32 %v518, %v595
        %s600 = sld [smem:[#allocation4 + $0xf]]
        %v601 = vstv %s600
        %v602 = vmul.f32 %v601, %v207
        %v603 = vmul.f32 %v601, %v203
        %v604 = vmul.f32 %v601, %v208
        %v608 = vrot.slane %v602, 2
        %v609 = vrot.slane %v603, 2
        %v610 = vsel %vm590, %v608, %v609
        %v611 = vrot.slane %v604, 2
        %v612 = vsel %vm590, %v609, %v611
        %v615 = vadd.f32 %v538, %v610
        %v616 = vadd.f32 %v539, %v612
        %s617 = sld [smem:[#allocation4 + $0x18]]
        %v618 = vstv %s617
        %v619 = vmul.f32 %v618, %v207
        %v620 = vmul.f32 %v618, %v203
        %v621 = vmul.f32 %v618, %v208
        %v625 = vrot.slane %v619, 2
        %v626 = vrot.slane %v620, 2
        %v627 = vsel %vm590, %v625, %v626
        %v628 = vrot.slane %v621, 2
        %v629 = vsel %vm590, %v626, %v628
        %v632 = vadd.f32 %v559, %v627
        %v633 = vadd.f32 %v560, %v629
        %s634 = sld [smem:[#allocation4 + $0x21]]
        %v635 = vstv %s634
        %v636 = vmul.f32 %v635, %v207
        %v637 = vmul.f32 %v635, %v203
        %v638 = vmul.f32 %v635, %v208
        %v642 = vrot.slane %v636, 2
        %v643 = vrot.slane %v637, 2
        %v644 = vsel %vm590, %v642, %v643
        %v645 = vrot.slane %v638, 2
        %v646 = vsel %vm590, %v643, %v645
        %v649 = vadd.f32 %v580, %v644
        %v650 = vadd.f32 %v581, %v646
        %s651 = sld [smem:[#allocation4 + $0x7]]
        %v652 = vstv %s651
        %v653 = vmul.f32 %v652, %v207
        %v654 = vmul.f32 %v652, %v203
        %v655 = vmul.f32 %v652, %v208
        %v659 = vrot.slane %v653, 2
        %v660 = vrot.slane %v654, 2
        %v661 = vsel %vm590, %v659, %v660
        %v662 = vrot.slane %v655, 2
        %v663 = vsel %vm590, %v660, %v662
        %664 = vrot.lane.b32.xlu0 %v661, 127
        %v665 = vpop.permute.xlu0 %664
        %666 = vrot.lane.b32.xlu0 %v663, 127
        %v667 = vpop.permute.xlu0 %666
        %v670 = vadd.f32 %v598, %v665
        %v671 = vadd.f32 %v599, %v667
        %s672 = sld [smem:[#allocation4 + $0x10]]
        %v673 = vstv %s672
        %v674 = vmul.f32 %v673, %v207
        %v675 = vmul.f32 %v673, %v203
        %v676 = vmul.f32 %v673, %v208
        %v680 = vrot.slane %v674, 2
        %v681 = vrot.slane %v675, 2
        %v682 = vsel %vm590, %v680, %v681
        %v683 = vrot.slane %v676, 2
        %v684 = vsel %vm590, %v681, %v683
        %685 = vrot.lane.b32.xlu0 %v682, 127
        %v686 = vpop.permute.xlu0 %685
        %687 = vrot.lane.b32.xlu0 %v684, 127
        %v688 = vpop.permute.xlu0 %687
        %v691 = vadd.f32 %v615, %v686
        %v692 = vadd.f32 %v616, %v688
        %s693 = sld [smem:[#allocation4 + $0x19]]
        %v694 = vstv %s693
        %v695 = vmul.f32 %v694, %v207
        %v696 = vmul.f32 %v694, %v203
        %v697 = vmul.f32 %v694, %v208
        %v701 = vrot.slane %v695, 2
        %v702 = vrot.slane %v696, 2
        %v703 = vsel %vm590, %v701, %v702
        %v704 = vrot.slane %v697, 2
        %v705 = vsel %vm590, %v702, %v704
        %706 = vrot.lane.b32.xlu0 %v703, 127
        %v707 = vpop.permute.xlu0 %706
        %708 = vrot.lane.b32.xlu0 %v705, 127
        %v709 = vpop.permute.xlu0 %708
        %v712 = vadd.f32 %v632, %v707
        %v713 = vadd.f32 %v633, %v709
        %s714 = sld [smem:[#allocation4 + $0x22]]
        %v715 = vstv %s714
        %v716 = vmul.f32 %v715, %v207
        %v717 = vmul.f32 %v715, %v203
        %v718 = vmul.f32 %v715, %v208
        %v722 = vrot.slane %v716, 2
        %v723 = vrot.slane %v717, 2
        %v724 = vsel %vm590, %v722, %v723
        %v725 = vrot.slane %v718, 2
        %v726 = vsel %vm590, %v723, %v725
        %727 = vrot.lane.b32.xlu0 %v724, 127
        %v728 = vpop.permute.xlu0 %727
        %729 = vrot.lane.b32.xlu0 %v726, 127
        %v730 = vpop.permute.xlu0 %729
        %v733 = vadd.f32 %v649, %v728
        %v734 = vadd.f32 %v650, %v730
        %s735 = sld [smem:[#allocation4 + $0x8]]
        %v736 = vstv %s735
        %v737 = vmul.f32 %v736, %v207
        %v738 = vmul.f32 %v736, %v203
        %v739 = vmul.f32 %v736, %v208
        %v743 = vrot.slane %v737, 2
        %v744 = vrot.slane %v738, 2
        %v745 = vsel %vm590, %v743, %v744
        %v746 = vrot.slane %v739, 2
        %v747 = vsel %vm590, %v744, %v746
        %748 = vrot.lane.b32.xlu0 %v745, 126
        %v749 = vpop.permute.xlu0 %748
        %750 = vrot.lane.b32.xlu0 %v747, 126
        %v751 = vpop.permute.xlu0 %750
        %v754 = vadd.f32 %v670, %v749
        %v755 = vadd.f32 %v671, %v751
        %s756 = sld [smem:[#allocation4 + $0x11]]
        %v757 = vstv %s756
        %v758 = vmul.f32 %v757, %v207
        %v759 = vmul.f32 %v757, %v203
        %v760 = vmul.f32 %v757, %v208
        %v764 = vrot.slane %v758, 2
        %v765 = vrot.slane %v759, 2
        %v766 = vsel %vm590, %v764, %v765
        %v767 = vrot.slane %v760, 2
        %v768 = vsel %vm590, %v765, %v767
        %769 = vrot.lane.b32.xlu0 %v766, 126
        %v770 = vpop.permute.xlu0 %769
        %771 = vrot.lane.b32.xlu0 %v768, 126
        %v772 = vpop.permute.xlu0 %771
        %v775 = vadd.f32 %v691, %v770
        %v776 = vadd.f32 %v692, %v772
        %s777 = sld [smem:[#allocation4 + $0x1a]]
        %v778 = vstv %s777
        %v779 = vmul.f32 %v778, %v207
        %v780 = vmul.f32 %v778, %v203
        %v781 = vmul.f32 %v778, %v208
        %v785 = vrot.slane %v779, 2
        %v786 = vrot.slane %v780, 2
        %v787 = vsel %vm590, %v785, %v786
        %v788 = vrot.slane %v781, 2
        %v789 = vsel %vm590, %v786, %v788
        %790 = vrot.lane.b32.xlu0 %v787, 126
        %v791 = vpop.permute.xlu0 %790
        %792 = vrot.lane.b32.xlu0 %v789, 126
        %v793 = vpop.permute.xlu0 %792
        %v796 = vadd.f32 %v712, %v791
        %v797 = vadd.f32 %v713, %v793
        %s798 = sld [smem:[#allocation4 + $0x23]]
        %v799 = vstv %s798
        %v800 = vmul.f32 %v799, %v207
        %v801 = vmul.f32 %v799, %v203
        %v802 = vmul.f32 %v799, %v208
        %v806 = vrot.slane %v800, 2
        %v807 = vrot.slane %v801, 2
        %v808 = vsel %vm590, %v806, %v807
        %v809 = vrot.slane %v802, 2
        %v810 = vsel %vm590, %v807, %v809
        %811 = vrot.lane.b32.xlu0 %v808, 126
        %v812 = vpop.permute.xlu0 %811
        %813 = vrot.lane.b32.xlu0 %v810, 126
        %v814 = vpop.permute.xlu0 %813
        %v817 = vadd.f32 %v733, %v812
        %v818 = vadd.f32 %v734, %v814
        %821 = vrot.lane.b32.xlu0 %v754, 1
        %v822 = vpop.permute.xlu0 %821
        %823 = vrot.lane.b32.xlu0 %v755, 1
        %v824 = vpop.permute.xlu0 %823
        %v827 = vsel %vm192, 0.0, %v822
        %v828 = vsel %vm192, 0.0, %v824
        %v829 = vsel %vm195, %v827, 0.0
        %v830 = vsel %vm195, %v828, 0.0
        %v833 = vrot.slane %v829, 7
        %v834 = vrot.slane %v830, 7
        %v835 = vsel %vm200, %v833, %v834
        %v839 = vsel %vm200, 0.0, %v833
        %v840 = vsel %vm200, %v834, 0.0
        %vm841 = vcmask 146432
        %842 = vst.msk [vmem:[#allocation2] sm:$0xff] %vm841, %v839
        %843 = vst.msk [vmem:[#allocation2 + $0x8] sm:$0xff] %vm841, %v835
        %vm844 = vcmask 140288
        %845 = vst.msk [vmem:[#allocation2 + $0x10] sm:$0x3] %vm844, %v840
        %848 = vrot.lane.b32.xlu0 %v775, 1
        %v849 = vpop.permute.xlu0 %848
        %850 = vrot.lane.b32.xlu0 %v776, 1
        %v851 = vpop.permute.xlu0 %850
        %v854 = vsel %vm192, 0.0, %v849
        %v855 = vsel %vm192, 0.0, %v851
        %v856 = vsel %vm195, %v854, 0.0
        %v857 = vsel %vm195, %v855, 0.0
        %v860 = vrot.slane %v856, 7
        %v861 = vrot.slane %v857, 7
        %v862 = vsel %vm200, %v860, %v861
        %v866 = vsel %vm200, 0.0, %v860
        %v867 = vsel %vm200, %v861, 0.0
        %s868 = scalar_lea.vmem [#allocation2], 24
        %869 = vst.msk [vmem:[%s868] sm:$0xff] %vm841, %v866
        %870 = vst.msk [vmem:[%s868 + $0x8] sm:$0xff] %vm841, %v862
        %871 = vst.msk [vmem:[%s868 + $0x10] sm:$0x3] %vm844, %v867
        %874 = vrot.lane.b32.xlu0 %v796, 1
        %v875 = vpop.permute.xlu0 %874
        %876 = vrot.lane.b32.xlu0 %v797, 1
        %v877 = vpop.permute.xlu0 %876
        %v880 = vsel %vm192, 0.0, %v875
        %v881 = vsel %vm192, 0.0, %v877
        %v882 = vsel %vm195, %v880, 0.0
        %v883 = vsel %vm195, %v881, 0.0
        %v886 = vrot.slane %v882, 7
        %v887 = vrot.slane %v883, 7
        %v888 = vsel %vm200, %v886, %v887
        %v892 = vsel %vm200, 0.0, %v886
        %v893 = vsel %vm200, %v887, 0.0
        %s894 = scalar_lea.vmem [#allocation2], 48
        %895 = vst.msk [vmem:[%s894] sm:$0xff] %vm841, %v892
        %896 = vst.msk [vmem:[%s894 + $0x8] sm:$0xff] %vm841, %v888
        %897 = vst.msk [vmem:[%s894 + $0x10] sm:$0x3] %vm844, %v893
        %900 = vrot.lane.b32.xlu0 %v817, 1
        %v901 = vpop.permute.xlu0 %900
        %902 = vrot.lane.b32.xlu0 %v818, 1
        %v903 = vpop.permute.xlu0 %902
        %v906 = vsel %vm192, 0.0, %v901
        %v907 = vsel %vm192, 0.0, %v903
        %v908 = vsel %vm195, %v906, 0.0
        %v909 = vsel %vm195, %v907, 0.0
        %v912 = vrot.slane %v908, 7
        %v913 = vrot.slane %v909, 7
        %v914 = vsel %vm200, %v912, %v913
        %v918 = vsel %vm200, 0.0, %v912
        %v919 = vsel %vm200, %v913, 0.0
        %s920 = scalar_lea.vmem [#allocation2], 72
        %921 = vst.msk [vmem:[%s920] sm:$0xff] %vm841, %v918
        %922 = vst.msk [vmem:[%s920 + $0x8] sm:$0xff] %vm841, %v914
        %923 = vst.msk [vmem:[%s920 + $0x10] sm:$0x3] %vm844, %v919
        %s924 = sld [smem:[#allocation4 + $0xb8]]
        %v925 = vstv %s924
        %s926 = sld [smem:[#allocation4 + $0xb9]]
        %v927 = vstv %s926
        %s928 = sld [smem:[#allocation4 + $0xba]]
        %v929 = vstv %s928
        %s930 = sld [smem:[#allocation4 + $0xbb]]
        %v931 = vstv %s930
        %v932 = vld [vmem:[#allocation2] sm:$0xff]
        %v933 = vld [vmem:[#allocation2 + $0x8] sm:$0xff]
        %v934 = vld [vmem:[#allocation2 + $0x10] sm:$0x3]
        %s935 = sld [smem:[#allocation4 + $0x28]]
        %v936 = vstv %s935
        %v937 = vmul.f32 %v936, %v932
        %v938 = vmul.f32 %v936, %v933
        %v939 = vadd.f32 %v925, %v937
        %v940 = vadd.f32 %v925, %v938
        %s941 = sld [smem:[#allocation4 + $0x4c]]
        %v942 = vstv %s941
        %v943 = vmul.f32 %v942, %v932
        %v944 = vmul.f32 %v942, %v933
        %v945 = vadd.f32 %v927, %v943
        %v946 = vadd.f32 %v927, %v944
        %s947 = sld [smem:[#allocation4 + $0x70]]
        %v948 = vstv %s947
        %v949 = vmul.f32 %v948, %v932
        %v950 = vmul.f32 %v948, %v933
        %v951 = vadd.f32 %v929, %v949
        %v952 = vadd.f32 %v929, %v950
        %s953 = sld [smem:[#allocation4 + $0x94]]
        %v954 = vstv %s953
        %v955 = vmul.f32 %v954, %v932
        %v956 = vmul.f32 %v954, %v933
        %v957 = vadd.f32 %v931, %v955
        %v958 = vadd.f32 %v931, %v956
        %s959 = sld [smem:[#allocation4 + $0x29]]
        %v960 = vstv %s959
        %v961 = vmul.f32 %v960, %v932
        %v962 = vmul.f32 %v960, %v933
        %965 = vrot.lane.b32.xlu0 %v961, 127
        %v966 = vpop.permute.xlu0 %965
        %967 = vrot.lane.b32.xlu0 %v962, 127
        %v968 = vpop.permute.xlu0 %967
        %v971 = vadd.f32 %v939, %v966
        %v972 = vadd.f32 %v940, %v968
        %s973 = sld [smem:[#allocation4 + $0x4d]]
        %v974 = vstv %s973
        %v975 = vmul.f32 %v974, %v932
        %v976 = vmul.f32 %v974, %v933
        %979 = vrot.lane.b32.xlu0 %v975, 127
        %v980 = vpop.permute.xlu0 %979
        %981 = vrot.lane.b32.xlu0 %v976, 127
        %v982 = vpop.permute.xlu0 %981
        %v985 = vadd.f32 %v945, %v980
        %v986 = vadd.f32 %v946, %v982
        %s987 = sld [smem:[#allocation4 + $0x71]]
        %v988 = vstv %s987
        %v989 = vmul.f32 %v988, %v932
        %v990 = vmul.f32 %v988, %v933
        %993 = vrot.lane.b32.xlu0 %v989, 127
        %v994 = vpop.permute.xlu0 %993
        %995 = vrot.lane.b32.xlu0 %v990, 127
        %v996 = vpop.permute.xlu0 %995
        %v999 = vadd.f32 %v951, %v994
        %v1000 = vadd.f32 %v952, %v996
        %s1001 = sld [smem:[#allocation4 + $0x95]]
        %v1002 = vstv %s1001
        %v1003 = vmul.f32 %v1002, %v932
        %v1004 = vmul.f32 %v1002, %v933
        %1007 = vrot.lane.b32.xlu0 %v1003, 127
        %v1008 = vpop.permute.xlu0 %1007
        %1009 = vrot.lane.b32.xlu0 %v1004, 127
        %v1010 = vpop.permute.xlu0 %1009
        %v1013 = vadd.f32 %v957, %v1008
        %v1014 = vadd.f32 %v958, %v1010
        %s1015 = sld [smem:[#allocation4 + $0x2a]]
        %v1016 = vstv %s1015
        %v1017 = vmul.f32 %v1016, %v932
        %v1018 = vmul.f32 %v1016, %v933
        %1021 = vrot.lane.b32.xlu0 %v1017, 126
        %v1022 = vpop.permute.xlu0 %1021
        %1023 = vrot.lane.b32.xlu0 %v1018, 126
        %v1024 = vpop.permute.xlu0 %1023
        %v1027 = vadd.f32 %v971, %v1022
        %v1028 = vadd.f32 %v972, %v1024
        %s1029 = sld [smem:[#allocation4 + $0x4e]]
        %v1030 = vstv %s1029
        %v1031 = vmul.f32 %v1030, %v932
        %v1032 = vmul.f32 %v1030, %v933
        %1035 = vrot.lane.b32.xlu0 %v1031, 126
        %v1036 = vpop.permute.xlu0 %1035
        %1037 = vrot.lane.b32.xlu0 %v1032, 126
        %v1038 = vpop.permute.xlu0 %1037
        %v1041 = vadd.f32 %v985, %v1036
        %v1042 = vadd.f32 %v986, %v1038
        %s1043 = sld [smem:[#allocation4 + $0x72]]
        %v1044 = vstv %s1043
        %v1045 = vmul.f32 %v1044, %v932
        %v1046 = vmul.f32 %v1044, %v933
        %1049 = vrot.lane.b32.xlu0 %v1045, 126
        %v1050 = vpop.permute.xlu0 %1049
        %1051 = vrot.lane.b32.xlu0 %v1046, 126
        %v1052 = vpop.permute.xlu0 %1051
        %v1055 = vadd.f32 %v999, %v1050
        %v1056 = vadd.f32 %v1000, %v1052
        %s1057 = sld [smem:[#allocation4 + $0x96]]
        %v1058 = vstv %s1057
        %v1059 = vmul.f32 %v1058, %v932
        %v1060 = vmul.f32 %v1058, %v933
        %1063 = vrot.lane.b32.xlu0 %v1059, 126
        %v1064 = vpop.permute.xlu0 %1063
        %1065 = vrot.lane.b32.xlu0 %v1060, 126
        %v1066 = vpop.permute.xlu0 %1065
        %v1069 = vadd.f32 %v1013, %v1064
        %v1070 = vadd.f32 %v1014, %v1066
        %s1071 = sld [smem:[#allocation4 + $0x2b]]
        %v1072 = vstv %s1071
        %v1073 = vmul.f32 %v1072, %v932
        %v1074 = vmul.f32 %v1072, %v933
        %v1075 = vmul.f32 %v1072, %v934
        %v1079 = vrot.slane %v1073, 1
        %v1080 = vrot.slane %v1074, 1
        %v1081 = vsel %vm353, %v1079, %v1080
        %v1082 = vrot.slane %v1075, 1
        %v1083 = vsel %vm353, %v1080, %v1082
        %v1086 = vadd.f32 %v1027, %v1081
        %v1087 = vadd.f32 %v1028, %v1083
        %s1088 = sld [smem:[#allocation4 + $0x4f]]
        %v1089 = vstv %s1088
        %v1090 = vmul.f32 %v1089, %v932
        %v1091 = vmul.f32 %v1089, %v933
        %v1092 = vmul.f32 %v1089, %v934
        %v1096 = vrot.slane %v1090, 1
        %v1097 = vrot.slane %v1091, 1
        %v1098 = vsel %vm353, %v1096, %v1097
        %v1099 = vrot.slane %v1092, 1
        %v1100 = vsel %vm353, %v1097, %v1099
        %v1103 = vadd.f32 %v1041, %v1098
        %v1104 = vadd.f32 %v1042, %v1100
        %s1105 = sld [smem:[#allocation4 + $0x73]]
        %v1106 = vstv %s1105
        %v1107 = vmul.f32 %v1106, %v932
        %v1108 = vmul.f32 %v1106, %v933
        %v1109 = vmul.f32 %v1106, %v934
        %v1113 = vrot.slane %v1107, 1
        %v1114 = vrot.slane %v1108, 1
        %v1115 = vsel %vm353, %v1113, %v1114
        %v1116 = vrot.slane %v1109, 1
        %v1117 = vsel %vm353, %v1114, %v1116
        %v1120 = vadd.f32 %v1055, %v1115
        %v1121 = vadd.f32 %v1056, %v1117
        %s1122 = sld [smem:[#allocation4 + $0x97]]
        %v1123 = vstv %s1122
        %v1124 = vmul.f32 %v1123, %v932
        %v1125 = vmul.f32 %v1123, %v933
        %v1126 = vmul.f32 %v1123, %v934
        %v1130 = vrot.slane %v1124, 1
        %v1131 = vrot.slane %v1125, 1
        %v1132 = vsel %vm353, %v1130, %v1131
        %v1133 = vrot.slane %v1126, 1
        %v1134 = vsel %vm353, %v1131, %v1133
        %v1137 = vadd.f32 %v1069, %v1132
        %v1138 = vadd.f32 %v1070, %v1134
        %s1139 = sld [smem:[#allocation4 + $0x2c]]
        %v1140 = vstv %s1139
        %v1141 = vmul.f32 %v1140, %v932
        %v1142 = vmul.f32 %v1140, %v933
        %v1143 = vmul.f32 %v1140, %v934
        %v1147 = vrot.slane %v1141, 1
        %v1148 = vrot.slane %v1142, 1
        %v1149 = vsel %vm353, %v1147, %v1148
        %v1150 = vrot.slane %v1143, 1
        %v1151 = vsel %vm353, %v1148, %v1150
        %1152 = vrot.lane.b32.xlu0 %v1149, 127
        %v1153 = vpop.permute.xlu0 %1152
        %1154 = vrot.lane.b32.xlu0 %v1151, 127
        %v1155 = vpop.permute.xlu0 %1154
        %v1158 = vadd.f32 %v1086, %v1153
        %v1159 = vadd.f32 %v1087, %v1155
        %s1160 = sld [smem:[#allocation4 + $0x50]]
        %v1161 = vstv %s1160
        %v1162 = vmul.f32 %v1161, %v932
        %v1163 = vmul.f32 %v1161, %v933
        %v1164 = vmul.f32 %v1161, %v934
        %v1168 = vrot.slane %v1162, 1
        %v1169 = vrot.slane %v1163, 1
        %v1170 = vsel %vm353, %v1168, %v1169
        %v1171 = vrot.slane %v1164, 1
        %v1172 = vsel %vm353, %v1169, %v1171
        %1173 = vrot.lane.b32.xlu0 %v1170, 127
        %v1174 = vpop.permute.xlu0 %1173
        %1175 = vrot.lane.b32.xlu0 %v1172, 127
        %v1176 = vpop.permute.xlu0 %1175
        %v1179 = vadd.f32 %v1103, %v1174
        %v1180 = vadd.f32 %v1104, %v1176
        %s1181 = sld [smem:[#allocation4 + $0x74]]
        %v1182 = vstv %s1181
        %v1183 = vmul.f32 %v1182, %v932
        %v1184 = vmul.f32 %v1182, %v933
        %v1185 = vmul.f32 %v1182, %v934
        %v1189 = vrot.slane %v1183, 1
        %v1190 = vrot.slane %v1184, 1
        %v1191 = vsel %vm353, %v1189, %v1190
        %v1192 = vrot.slane %v1185, 1
        %v1193 = vsel %vm353, %v1190, %v1192
        %1194 = vrot.lane.b32.xlu0 %v1191, 127
        %v1195 = vpop.permute.xlu0 %1194
        %1196 = vrot.lane.b32.xlu0 %v1193, 127
        %v1197 = vpop.permute.xlu0 %1196
        %v1200 = vadd.f32 %v1120, %v1195
        %v1201 = vadd.f32 %v1121, %v1197
        %s1202 = sld [smem:[#allocation4 + $0x98]]
        %v1203 = vstv %s1202
        %v1204 = vmul.f32 %v1203, %v932
        %v1205 = vmul.f32 %v1203, %v933
        %v1206 = vmul.f32 %v1203, %v934
        %v1210 = vrot.slane %v1204, 1
        %v1211 = vrot.slane %v1205, 1
        %v1212 = vsel %vm353, %v1210, %v1211
        %v1213 = vrot.slane %v1206, 1
        %v1214 = vsel %vm353, %v1211, %v1213
        %1215 = vrot.lane.b32.xlu0 %v1212, 127
        %v1216 = vpop.permute.xlu0 %1215
        %1217 = vrot.lane.b32.xlu0 %v1214, 127
        %v1218 = vpop.permute.xlu0 %1217
        %v1221 = vadd.f32 %v1137, %v1216
        %v1222 = vadd.f32 %v1138, %v1218
        %s1223 = sld [smem:[#allocation4 + $0x2d]]
        %v1224 = vstv %s1223
        %v1225 = vmul.f32 %v1224, %v932
        %v1226 = vmul.f32 %v1224, %v933
        %v1227 = vmul.f32 %v1224, %v934
        %v1231 = vrot.slane %v1225, 1
        %v1232 = vrot.slane %v1226, 1
        %v1233 = vsel %vm353, %v1231, %v1232
        %v1234 = vrot.slane %v1227, 1
        %v1235 = vsel %vm353, %v1232, %v1234
        %1236 = vrot.lane.b32.xlu0 %v1233, 126
        %v1237 = vpop.permute.xlu0 %1236
        %1238 = vrot.lane.b32.xlu0 %v1235, 126
        %v1239 = vpop.permute.xlu0 %1238
        %v1242 = vadd.f32 %v1158, %v1237
        %v1243 = vadd.f32 %v1159, %v1239
        %s1244 = sld [smem:[#allocation4 + $0x51]]
        %v1245 = vstv %s1244
        %v1246 = vmul.f32 %v1245, %v932
        %v1247 = vmul.f32 %v1245, %v933
        %v1248 = vmul.f32 %v1245, %v934
        %v1252 = vrot.slane %v1246, 1
        %v1253 = vrot.slane %v1247, 1
        %v1254 = vsel %vm353, %v1252, %v1253
        %v1255 = vrot.slane %v1248, 1
        %v1256 = vsel %vm353, %v1253, %v1255
        %1257 = vrot.lane.b32.xlu0 %v1254, 126
        %v1258 = vpop.permute.xlu0 %1257
        %1259 = vrot.lane.b32.xlu0 %v1256, 126
        %v1260 = vpop.permute.xlu0 %1259
        %v1263 = vadd.f32 %v1179, %v1258
        %v1264 = vadd.f32 %v1180, %v1260
        %s1265 = sld [smem:[#allocation4 + $0x75]]
        %v1266 = vstv %s1265
        %v1267 = vmul.f32 %v1266, %v932
        %v1268 = vmul.f32 %v1266, %v933
        %v1269 = vmul.f32 %v1266, %v934
        %v1273 = vrot.slane %v1267, 1
        %v1274 = vrot.slane %v1268, 1
        %v1275 = vsel %vm353, %v1273, %v1274
        %v1276 = vrot.slane %v1269, 1
        %v1277 = vsel %vm353, %v1274, %v1276
        %1278 = vrot.lane.b32.xlu0 %v1275, 126
        %v1279 = vpop.permute.xlu0 %1278
        %1280 = vrot.lane.b32.xlu0 %v1277, 126
        %v1281 = vpop.permute.xlu0 %1280
        %v1284 = vadd.f32 %v1200, %v1279
        %v1285 = vadd.f32 %v1201, %v1281
        %s1286 = sld [smem:[#allocation4 + $0x99]]
        %v1287 = vstv %s1286
        %v1288 = vmul.f32 %v1287, %v932
        %v1289 = vmul.f32 %v1287, %v933
        %v1290 = vmul.f32 %v1287, %v934
        %v1294 = vrot.slane %v1288, 1
        %v1295 = vrot.slane %v1289, 1
        %v1296 = vsel %vm353, %v1294, %v1295
        %v1297 = vrot.slane %v1290, 1
        %v1298 = vsel %vm353, %v1295, %v1297
        %1299 = vrot.lane.b32.xlu0 %v1296, 126
        %v1300 = vpop.permute.xlu0 %1299
        %1301 = vrot.lane.b32.xlu0 %v1298, 126
        %v1302 = vpop.permute.xlu0 %1301
        %v1305 = vadd.f32 %v1221, %v1300
        %v1306 = vadd.f32 %v1222, %v1302
        %s1307 = sld [smem:[#allocation4 + $0x2e]]
        %v1308 = vstv %s1307
        %v1309 = vmul.f32 %v1308, %v932
        %v1310 = vmul.f32 %v1308, %v933
        %v1311 = vmul.f32 %v1308, %v934
        %v1315 = vrot.slane %v1309, 2
        %v1316 = vrot.slane %v1310, 2
        %v1317 = vsel %vm590, %v1315, %v1316
        %v1318 = vrot.slane %v1311, 2
        %v1319 = vsel %vm590, %v1316, %v1318
        %v1322 = vadd.f32 %v1242, %v1317
        %v1323 = vadd.f32 %v1243, %v1319
        %s1324 = sld [smem:[#allocation4 + $0x52]]
        %v1325 = vstv %s1324
        %v1326 = vmul.f32 %v1325, %v932
        %v1327 = vmul.f32 %v1325, %v933
        %v1328 = vmul.f32 %v1325, %v934
        %v1332 = vrot.slane %v1326, 2
        %v1333 = vrot.slane %v1327, 2
        %v1334 = vsel %vm590, %v1332, %v1333
        %v1335 = vrot.slane %v1328, 2
        %v1336 = vsel %vm590, %v1333, %v1335
        %v1339 = vadd.f32 %v1263, %v1334
        %v1340 = vadd.f32 %v1264, %v1336
        %s1341 = sld [smem:[#allocation4 + $0x76]]
        %v1342 = vstv %s1341
        %v1343 = vmul.f32 %v1342, %v932
        %v1344 = vmul.f32 %v1342, %v933
        %v1345 = vmul.f32 %v1342, %v934
        %v1349 = vrot.slane %v1343, 2
        %v1350 = vrot.slane %v1344, 2
        %v1351 = vsel %vm590, %v1349, %v1350
        %v1352 = vrot.slane %v1345, 2
        %v1353 = vsel %vm590, %v1350, %v1352
        %v1356 = vadd.f32 %v1284, %v1351
        %v1357 = vadd.f32 %v1285, %v1353
        %s1358 = sld [smem:[#allocation4 + $0x9a]]
        %v1359 = vstv %s1358
        %v1360 = vmul.f32 %v1359, %v932
        %v1361 = vmul.f32 %v1359, %v933
        %v1362 = vmul.f32 %v1359, %v934
        %v1366 = vrot.slane %v1360, 2
        %v1367 = vrot.slane %v1361, 2
        %v1368 = vsel %vm590, %v1366, %v1367
        %v1369 = vrot.slane %v1362, 2
        %v1370 = vsel %vm590, %v1367, %v1369
        %v1373 = vadd.f32 %v1305, %v1368
        %v1374 = vadd.f32 %v1306, %v1370
        %s1375 = sld [smem:[#allocation4 + $0x2f]]
        %v1376 = vstv %s1375
        %v1377 = vmul.f32 %v1376, %v932
        %v1378 = vmul.f32 %v1376, %v933
        %v1379 = vmul.f32 %v1376, %v934
        %v1383 = vrot.slane %v1377, 2
        %v1384 = vrot.slane %v1378, 2
        %v1385 = vsel %vm590, %v1383, %v1384
        %v1386 = vrot.slane %v1379, 2
        %v1387 = vsel %vm590, %v1384, %v1386
        %1388 = vrot.lane.b32.xlu0 %v1385, 127
        %v1389 = vpop.permute.xlu0 %1388
        %1390 = vrot.lane.b32.xlu0 %v1387, 127
        %v1391 = vpop.permute.xlu0 %1390
        %v1394 = vadd.f32 %v1322, %v1389
        %v1395 = vadd.f32 %v1323, %v1391
        %s1396 = sld [smem:[#allocation4 + $0x53]]
        %v1397 = vstv %s1396
        %v1398 = vmul.f32 %v1397, %v932
        %v1399 = vmul.f32 %v1397, %v933
        %v1400 = vmul.f32 %v1397, %v934
        %v1404 = vrot.slane %v1398, 2
        %v1405 = vrot.slane %v1399, 2
        %v1406 = vsel %vm590, %v1404, %v1405
        %v1407 = vrot.slane %v1400, 2
        %v1408 = vsel %vm590, %v1405, %v1407
        %1409 = vrot.lane.b32.xlu0 %v1406, 127
        %v1410 = vpop.permute.xlu0 %1409
        %1411 = vrot.lane.b32.xlu0 %v1408, 127
        %v1412 = vpop.permute.xlu0 %1411
        %v1415 = vadd.f32 %v1339, %v1410
        %v1416 = vadd.f32 %v1340, %v1412
        %s1417 = sld [smem:[#allocation4 + $0x77]]
        %v1418 = vstv %s1417
        %v1419 = vmul.f32 %v1418, %v932
        %v1420 = vmul.f32 %v1418, %v933
        %v1421 = vmul.f32 %v1418, %v934
        %v1425 = vrot.slane %v1419, 2
        %v1426 = vrot.slane %v1420, 2
        %v1427 = vsel %vm590, %v1425, %v1426
        %v1428 = vrot.slane %v1421, 2
        %v1429 = vsel %vm590, %v1426, %v1428
        %1430 = vrot.lane.b32.xlu0 %v1427, 127
        %v1431 = vpop.permute.xlu0 %1430
        %1432 = vrot.lane.b32.xlu0 %v1429, 127
        %v1433 = vpop.permute.xlu0 %1432
        %v1436 = vadd.f32 %v1356, %v1431
        %v1437 = vadd.f32 %v1357, %v1433
        %s1438 = sld [smem:[#allocation4 + $0x9b]]
        %v1439 = vstv %s1438
        %v1440 = vmul.f32 %v1439, %v932
        %v1441 = vmul.f32 %v1439, %v933
        %v1442 = vmul.f32 %v1439, %v934
        %v1446 = vrot.slane %v1440, 2
        %v1447 = vrot.slane %v1441, 2
        %v1448 = vsel %vm590, %v1446, %v1447
        %v1449 = vrot.slane %v1442, 2
        %v1450 = vsel %vm590, %v1447, %v1449
        %1451 = vrot.lane.b32.xlu0 %v1448, 127
        %v1452 = vpop.permute.xlu0 %1451
        %1453 = vrot.lane.b32.xlu0 %v1450, 127
        %v1454 = vpop.permute.xlu0 %1453
        %v1457 = vadd.f32 %v1373, %v1452
        %v1458 = vadd.f32 %v1374, %v1454
        %s1459 = sld [smem:[#allocation4 + $0x30]]
        %v1460 = vstv %s1459
        %v1461 = vmul.f32 %v1460, %v932
        %v1462 = vmul.f32 %v1460, %v933
        %v1463 = vmul.f32 %v1460, %v934
        %v1467 = vrot.slane %v1461, 2
        %v1468 = vrot.slane %v1462, 2
        %v1469 = vsel %vm590, %v1467, %v1468
        %v1470 = vrot.slane %v1463, 2
        %v1471 = vsel %vm590, %v1468, %v1470
        %1472 = vrot.lane.b32.xlu0 %v1469, 126
        %v1473 = vpop.permute.xlu0 %1472
        %1474 = vrot.lane.b32.xlu0 %v1471, 126
        %v1475 = vpop.permute.xlu0 %1474
        %v1478 = vadd.f32 %v1394, %v1473
        %v1479 = vadd.f32 %v1395, %v1475
        %s1480 = sld [smem:[#allocation4 + $0x54]]
        %v1481 = vstv %s1480
        %v1482 = vmul.f32 %v1481, %v932
        %v1483 = vmul.f32 %v1481, %v933
        %v1484 = vmul.f32 %v1481, %v934
        %v1488 = vrot.slane %v1482, 2
        %v1489 = vrot.slane %v1483, 2
        %v1490 = vsel %vm590, %v1488, %v1489
        %v1491 = vrot.slane %v1484, 2
        %v1492 = vsel %vm590, %v1489, %v1491
        %1493 = vrot.lane.b32.xlu0 %v1490, 126
        %v1494 = vpop.permute.xlu0 %1493
        %1495 = vrot.lane.b32.xlu0 %v1492, 126
        %v1496 = vpop.permute.xlu0 %1495
        %v1499 = vadd.f32 %v1415, %v1494
        %v1500 = vadd.f32 %v1416, %v1496
        %s1501 = sld [smem:[#allocation4 + $0x78]]
        %v1502 = vstv %s1501
        %v1503 = vmul.f32 %v1502, %v932
        %v1504 = vmul.f32 %v1502, %v933
        %v1505 = vmul.f32 %v1502, %v934
        %v1509 = vrot.slane %v1503, 2
        %v1510 = vrot.slane %v1504, 2
        %v1511 = vsel %vm590, %v1509, %v1510
        %v1512 = vrot.slane %v1505, 2
        %v1513 = vsel %vm590, %v1510, %v1512
        %1514 = vrot.lane.b32.xlu0 %v1511, 126
        %v1515 = vpop.permute.xlu0 %1514
        %1516 = vrot.lane.b32.xlu0 %v1513, 126
        %v1517 = vpop.permute.xlu0 %1516
        %v1520 = vadd.f32 %v1436, %v1515
        %v1521 = vadd.f32 %v1437, %v1517
        %s1522 = sld [smem:[#allocation4 + $0x9c]]
        %v1523 = vstv %s1522
        %v1524 = vmul.f32 %v1523, %v932
        %v1525 = vmul.f32 %v1523, %v933
        %v1526 = vmul.f32 %v1523, %v934
        %v1530 = vrot.slane %v1524, 2
        %v1531 = vrot.slane %v1525, 2
        %v1532 = vsel %vm590, %v1530, %v1531
        %v1533 = vrot.slane %v1526, 2
        %v1534 = vsel %vm590, %v1531, %v1533
        %1535 = vrot.lane.b32.xlu0 %v1532, 126
        %v1536 = vpop.permute.xlu0 %1535
        %1537 = vrot.lane.b32.xlu0 %v1534, 126
        %v1538 = vpop.permute.xlu0 %1537
        %v1541 = vadd.f32 %v1457, %v1536
        %v1542 = vadd.f32 %v1458, %v1538
        %v1543 = vld [vmem:[%s868] sm:$0xff]
        %v1544 = vld [vmem:[%s868 + $0x8] sm:$0xff]
        %v1545 = vld [vmem:[%s868 + $0x10] sm:$0x3]
        %s1546 = sld [smem:[#allocation4 + $0x31]]
        %v1547 = vstv %s1546
        %v1548 = vmul.f32 %v1547, %v1543
        %v1549 = vmul.f32 %v1547, %v1544
        %v1550 = vadd.f32 %v1478, %v1548
        %v1551 = vadd.f32 %v1479, %v1549
        %s1552 = sld [smem:[#allocation4 + $0x55]]
        %v1553 = vstv %s1552
        %v1554 = vmul.f32 %v1553, %v1543
        %v1555 = vmul.f32 %v1553, %v1544
        %v1556 = vadd.f32 %v1499, %v1554
        %v1557 = vadd.f32 %v1500, %v1555
        %s1558 = sld [smem:[#allocation4 + $0x79]]
        %v1559 = vstv %s1558
        %v1560 = vmul.f32 %v1559, %v1543
        %v1561 = vmul.f32 %v1559, %v1544
        %v1562 = vadd.f32 %v1520, %v1560
        %v1563 = vadd.f32 %v1521, %v1561
        %s1564 = sld [smem:[#allocation4 + $0x9d]]
        %v1565 = vstv %s1564
        %v1566 = vmul.f32 %v1565, %v1543
        %v1567 = vmul.f32 %v1565, %v1544
        %v1568 = vadd.f32 %v1541, %v1566
        %v1569 = vadd.f32 %v1542, %v1567
        %s1570 = sld [smem:[#allocation4 + $0x32]]
        %v1571 = vstv %s1570
        %v1572 = vmul.f32 %v1571, %v1543
        %v1573 = vmul.f32 %v1571, %v1544
        %1576 = vrot.lane.b32.xlu0 %v1572, 127
        %v1577 = vpop.permute.xlu0 %1576
        %1578 = vrot.lane.b32.xlu0 %v1573, 127
        %v1579 = vpop.permute.xlu0 %1578
        %v1582 = vadd.f32 %v1550, %v1577
        %v1583 = vadd.f32 %v1551, %v1579
        %s1584 = sld [smem:[#allocation4 + $0x56]]
        %v1585 = vstv %s1584
        %v1586 = vmul.f32 %v1585, %v1543
        %v1587 = vmul.f32 %v1585, %v1544
        %1590 = vrot.lane.b32.xlu0 %v1586, 127
        %v1591 = vpop.permute.xlu0 %1590
        %1592 = vrot.lane.b32.xlu0 %v1587, 127
        %v1593 = vpop.permute.xlu0 %1592
        %v1596 = vadd.f32 %v1556, %v1591
        %v1597 = vadd.f32 %v1557, %v1593
        %s1598 = sld [smem:[#allocation4 + $0x7a]]
        %v1599 = vstv %s1598
        %v1600 = vmul.f32 %v1599, %v1543
        %v1601 = vmul.f32 %v1599, %v1544
        %1604 = vrot.lane.b32.xlu0 %v1600, 127
        %v1605 = vpop.permute.xlu0 %1604
        %1606 = vrot.lane.b32.xlu0 %v1601, 127
        %v1607 = vpop.permute.xlu0 %1606
        %v1610 = vadd.f32 %v1562, %v1605
        %v1611 = vadd.f32 %v1563, %v1607
        %s1612 = sld [smem:[#allocation4 + $0x9e]]
        %v1613 = vstv %s1612
        %v1614 = vmul.f32 %v1613, %v1543
        %v1615 = vmul.f32 %v1613, %v1544
        %1618 = vrot.lane.b32.xlu0 %v1614, 127
        %v1619 = vpop.permute.xlu0 %1618
        %1620 = vrot.lane.b32.xlu0 %v1615, 127
        %v1621 = vpop.permute.xlu0 %1620
        %v1624 = vadd.f32 %v1568, %v1619
        %v1625 = vadd.f32 %v1569, %v1621
        %s1626 = sld [smem:[#allocation4 + $0x33]]
        %v1627 = vstv %s1626
        %v1628 = vmul.f32 %v1627, %v1543
        %v1629 = vmul.f32 %v1627, %v1544
        %1632 = vrot.lane.b32.xlu0 %v1628, 126
        %v1633 = vpop.permute.xlu0 %1632
        %1634 = vrot.lane.b32.xlu0 %v1629, 126
        %v1635 = vpop.permute.xlu0 %1634
        %v1638 = vadd.f32 %v1582, %v1633
        %v1639 = vadd.f32 %v1583, %v1635
        %s1640 = sld [smem:[#allocation4 + $0x57]]
        %v1641 = vstv %s1640
        %v1642 = vmul.f32 %v1641, %v1543
        %v1643 = vmul.f32 %v1641, %v1544
        %1646 = vrot.lane.b32.xlu0 %v1642, 126
        %v1647 = vpop.permute.xlu0 %1646
        %1648 = vrot.lane.b32.xlu0 %v1643, 126
        %v1649 = vpop.permute.xlu0 %1648
        %v1652 = vadd.f32 %v1596, %v1647
        %v1653 = vadd.f32 %v1597, %v1649
        %s1654 = sld [smem:[#allocation4 + $0x7b]]
        %v1655 = vstv %s1654
        %v1656 = vmul.f32 %v1655, %v1543
        %v1657 = vmul.f32 %v1655, %v1544
        %1660 = vrot.lane.b32.xlu0 %v1656, 126
        %v1661 = vpop.permute.xlu0 %1660
        %1662 = vrot.lane.b32.xlu0 %v1657, 126
        %v1663 = vpop.permute.xlu0 %1662
        %v1666 = vadd.f32 %v1610, %v1661
        %v1667 = vadd.f32 %v1611, %v1663
        %s1668 = sld [smem:[#allocation4 + $0x9f]]
        %v1669 = vstv %s1668
        %v1670 = vmul.f32 %v1669, %v1543
        %v1671 = vmul.f32 %v1669, %v1544
        %1674 = vrot.lane.b32.xlu0 %v1670, 126
        %v1675 = vpop.permute.xlu0 %1674
        %1676 = vrot.lane.b32.xlu0 %v1671, 126
        %v1677 = vpop.permute.xlu0 %1676
        %v1680 = vadd.f32 %v1624, %v1675
        %v1681 = vadd.f32 %v1625, %v1677
        %s1682 = sld [smem:[#allocation4 + $0x34]]
        %v1683 = vstv %s1682
        %v1684 = vmul.f32 %v1683, %v1543
        %v1685 = vmul.f32 %v1683, %v1544
        %v1686 = vmul.f32 %v1683, %v1545
        %v1690 = vrot.slane %v1684, 1
        %v1691 = vrot.slane %v1685, 1
        %v1692 = vsel %vm353, %v1690, %v1691
        %v1693 = vrot.slane %v1686, 1
        %v1694 = vsel %vm353, %v1691, %v1693
        %v1697 = vadd.f32 %v1638, %v1692
        %v1698 = vadd.f32 %v1639, %v1694
        %s1699 = sld [smem:[#allocation4 + $0x58]]
        %v1700 = vstv %s1699
        %v1701 = vmul.f32 %v1700, %v1543
        %v1702 = vmul.f32 %v1700, %v1544
        %v1703 = vmul.f32 %v1700, %v1545
        %v1707 = vrot.slane %v1701, 1
        %v1708 = vrot.slane %v1702, 1
        %v1709 = vsel %vm353, %v1707, %v1708
        %v1710 = vrot.slane %v1703, 1
        %v1711 = vsel %vm353, %v1708, %v1710
        %v1714 = vadd.f32 %v1652, %v1709
        %v1715 = vadd.f32 %v1653, %v1711
        %s1716 = sld [smem:[#allocation4 + $0x7c]]
        %v1717 = vstv %s1716
        %v1718 = vmul.f32 %v1717, %v1543
        %v1719 = vmul.f32 %v1717, %v1544
        %v1720 = vmul.f32 %v1717, %v1545
        %v1724 = vrot.slane %v1718, 1
        %v1725 = vrot.slane %v1719, 1
        %v1726 = vsel %vm353, %v1724, %v1725
        %v1727 = vrot.slane %v1720, 1
        %v1728 = vsel %vm353, %v1725, %v1727
        %v1731 = vadd.f32 %v1666, %v1726
        %v1732 = vadd.f32 %v1667, %v1728
        %s1733 = sld [smem:[#allocation4 + $0xa0]]
        %v1734 = vstv %s1733
        %v1735 = vmul.f32 %v1734, %v1543
        %v1736 = vmul.f32 %v1734, %v1544
        %v1737 = vmul.f32 %v1734, %v1545
        %v1741 = vrot.slane %v1735, 1
        %v1742 = vrot.slane %v1736, 1
        %v1743 = vsel %vm353, %v1741, %v1742
        %v1744 = vrot.slane %v1737, 1
        %v1745 = vsel %vm353, %v1742, %v1744
        %v1748 = vadd.f32 %v1680, %v1743
        %v1749 = vadd.f32 %v1681, %v1745
        %s1750 = sld [smem:[#allocation4 + $0x35]]
        %v1751 = vstv %s1750
        %v1752 = vmul.f32 %v1751, %v1543
        %v1753 = vmul.f32 %v1751, %v1544
        %v1754 = vmul.f32 %v1751, %v1545
        %v1758 = vrot.slane %v1752, 1
        %v1759 = vrot.slane %v1753, 1
        %v1760 = vsel %vm353, %v1758, %v1759
        %v1761 = vrot.slane %v1754, 1
        %v1762 = vsel %vm353, %v1759, %v1761
        %1763 = vrot.lane.b32.xlu0 %v1760, 127
        %v1764 = vpop.permute.xlu0 %1763
        %1765 = vrot.lane.b32.xlu0 %v1762, 127
        %v1766 = vpop.permute.xlu0 %1765
        %v1769 = vadd.f32 %v1697, %v1764
        %v1770 = vadd.f32 %v1698, %v1766
        %s1771 = sld [smem:[#allocation4 + $0x59]]
        %v1772 = vstv %s1771
        %v1773 = vmul.f32 %v1772, %v1543
        %v1774 = vmul.f32 %v1772, %v1544
        %v1775 = vmul.f32 %v1772, %v1545
        %v1779 = vrot.slane %v1773, 1
        %v1780 = vrot.slane %v1774, 1
        %v1781 = vsel %vm353, %v1779, %v1780
        %v1782 = vrot.slane %v1775, 1
        %v1783 = vsel %vm353, %v1780, %v1782
        %1784 = vrot.lane.b32.xlu0 %v1781, 127
        %v1785 = vpop.permute.xlu0 %1784
        %1786 = vrot.lane.b32.xlu0 %v1783, 127
        %v1787 = vpop.permute.xlu0 %1786
        %v1790 = vadd.f32 %v1714, %v1785
        %v1791 = vadd.f32 %v1715, %v1787
        %s1792 = sld [smem:[#allocation4 + $0x7d]]
        %v1793 = vstv %s1792
        %v1794 = vmul.f32 %v1793, %v1543
        %v1795 = vmul.f32 %v1793, %v1544
        %v1796 = vmul.f32 %v1793, %v1545
        %v1800 = vrot.slane %v1794, 1
        %v1801 = vrot.slane %v1795, 1
        %v1802 = vsel %vm353, %v1800, %v1801
        %v1803 = vrot.slane %v1796, 1
        %v1804 = vsel %vm353, %v1801, %v1803
        %1805 = vrot.lane.b32.xlu0 %v1802, 127
        %v1806 = vpop.permute.xlu0 %1805
        %1807 = vrot.lane.b32.xlu0 %v1804, 127
        %v1808 = vpop.permute.xlu0 %1807
        %v1811 = vadd.f32 %v1731, %v1806
        %v1812 = vadd.f32 %v1732, %v1808
        %s1813 = sld [smem:[#allocation4 + $0xa1]]
        %v1814 = vstv %s1813
        %v1815 = vmul.f32 %v1814, %v1543
        %v1816 = vmul.f32 %v1814, %v1544
        %v1817 = vmul.f32 %v1814, %v1545
        %v1821 = vrot.slane %v1815, 1
        %v1822 = vrot.slane %v1816, 1
        %v1823 = vsel %vm353, %v1821, %v1822
        %v1824 = vrot.slane %v1817, 1
        %v1825 = vsel %vm353, %v1822, %v1824
        %1826 = vrot.lane.b32.xlu0 %v1823, 127
        %v1827 = vpop.permute.xlu0 %1826
        %1828 = vrot.lane.b32.xlu0 %v1825, 127
        %v1829 = vpop.permute.xlu0 %1828
        %v1832 = vadd.f32 %v1748, %v1827
        %v1833 = vadd.f32 %v1749, %v1829
        %s1834 = sld [smem:[#allocation4 + $0x36]]
        %v1835 = vstv %s1834
        %v1836 = vmul.f32 %v1835, %v1543
        %v1837 = vmul.f32 %v1835, %v1544
        %v1838 = vmul.f32 %v1835, %v1545
        %v1842 = vrot.slane %v1836, 1
        %v1843 = vrot.slane %v1837, 1
        %v1844 = vsel %vm353, %v1842, %v1843
        %v1845 = vrot.slane %v1838, 1
        %v1846 = vsel %vm353, %v1843, %v1845
        %1847 = vrot.lane.b32.xlu0 %v1844, 126
        %v1848 = vpop.permute.xlu0 %1847
        %1849 = vrot.lane.b32.xlu0 %v1846, 126
        %v1850 = vpop.permute.xlu0 %1849
        %v1853 = vadd.f32 %v1769, %v1848
        %v1854 = vadd.f32 %v1770, %v1850
        %s1855 = sld [smem:[#allocation4 + $0x5a]]
        %v1856 = vstv %s1855
        %v1857 = vmul.f32 %v1856, %v1543
        %v1858 = vmul.f32 %v1856, %v1544
        %v1859 = vmul.f32 %v1856, %v1545
        %v1863 = vrot.slane %v1857, 1
        %v1864 = vrot.slane %v1858, 1
        %v1865 = vsel %vm353, %v1863, %v1864
        %v1866 = vrot.slane %v1859, 1
        %v1867 = vsel %vm353, %v1864, %v1866
        %1868 = vrot.lane.b32.xlu0 %v1865, 126
        %v1869 = vpop.permute.xlu0 %1868
        %1870 = vrot.lane.b32.xlu0 %v1867, 126
        %v1871 = vpop.permute.xlu0 %1870
        %v1874 = vadd.f32 %v1790, %v1869
        %v1875 = vadd.f32 %v1791, %v1871
        %s1876 = sld [smem:[#allocation4 + $0x7e]]
        %v1877 = vstv %s1876
        %v1878 = vmul.f32 %v1877, %v1543
        %v1879 = vmul.f32 %v1877, %v1544
        %v1880 = vmul.f32 %v1877, %v1545
        %v1884 = vrot.slane %v1878, 1
        %v1885 = vrot.slane %v1879, 1
        %v1886 = vsel %vm353, %v1884, %v1885
        %v1887 = vrot.slane %v1880, 1
        %v1888 = vsel %vm353, %v1885, %v1887
        %1889 = vrot.lane.b32.xlu0 %v1886, 126
        %v1890 = vpop.permute.xlu0 %1889
        %1891 = vrot.lane.b32.xlu0 %v1888, 126
        %v1892 = vpop.permute.xlu0 %1891
        %v1895 = vadd.f32 %v1811, %v1890
        %v1896 = vadd.f32 %v1812, %v1892
        %s1897 = sld [smem:[#allocation4 + $0xa2]]
        %v1898 = vstv %s1897
        %v1899 = vmul.f32 %v1898, %v1543
        %v1900 = vmul.f32 %v1898, %v1544
        %v1901 = vmul.f32 %v1898, %v1545
        %v1905 = vrot.slane %v1899, 1
        %v1906 = vrot.slane %v1900, 1
        %v1907 = vsel %vm353, %v1905, %v1906
        %v1908 = vrot.slane %v1901, 1
        %v1909 = vsel %vm353, %v1906, %v1908
        %1910 = vrot.lane.b32.xlu0 %v1907, 126
        %v1911 = vpop.permute.xlu0 %1910
        %1912 = vrot.lane.b32.xlu0 %v1909, 126
        %v1913 = vpop.permute.xlu0 %1912
        %v1916 = vadd.f32 %v1832, %v1911
        %v1917 = vadd.f32 %v1833, %v1913
        %s1918 = sld [smem:[#allocation4 + $0x37]]
        %v1919 = vstv %s1918
        %v1920 = vmul.f32 %v1919, %v1543
        %v1921 = vmul.f32 %v1919, %v1544
        %v1922 = vmul.f32 %v1919, %v1545
        %v1926 = vrot.slane %v1920, 2
        %v1927 = vrot.slane %v1921, 2
        %v1928 = vsel %vm590, %v1926, %v1927
        %v1929 = vrot.slane %v1922, 2
        %v1930 = vsel %vm590, %v1927, %v1929
        %v1933 = vadd.f32 %v1853, %v1928
        %v1934 = vadd.f32 %v1854, %v1930
        %s1935 = sld [smem:[#allocation4 + $0x5b]]
        %v1936 = vstv %s1935
        %v1937 = vmul.f32 %v1936, %v1543
        %v1938 = vmul.f32 %v1936, %v1544
        %v1939 = vmul.f32 %v1936, %v1545
        %v1943 = vrot.slane %v1937, 2
        %v1944 = vrot.slane %v1938, 2
        %v1945 = vsel %vm590, %v1943, %v1944
        %v1946 = vrot.slane %v1939, 2
        %v1947 = vsel %vm590, %v1944, %v1946
        %v1950 = vadd.f32 %v1874, %v1945
        %v1951 = vadd.f32 %v1875, %v1947
        %s1952 = sld [smem:[#allocation4 + $0x7f]]
        %v1953 = vstv %s1952
        %v1954 = vmul.f32 %v1953, %v1543
        %v1955 = vmul.f32 %v1953, %v1544
        %v1956 = vmul.f32 %v1953, %v1545
        %v1960 = vrot.slane %v1954, 2
        %v1961 = vrot.slane %v1955, 2
        %v1962 = vsel %vm590, %v1960, %v1961
        %v1963 = vrot.slane %v1956, 2
        %v1964 = vsel %vm590, %v1961, %v1963
        %v1967 = vadd.f32 %v1895, %v1962
        %v1968 = vadd.f32 %v1896, %v1964
        %s1969 = sld [smem:[#allocation4 + $0xa3]]
        %v1970 = vstv %s1969
        %v1971 = vmul.f32 %v1970, %v1543
        %v1972 = vmul.f32 %v1970, %v1544
        %v1973 = vmul.f32 %v1970, %v1545
        %v1977 = vrot.slane %v1971, 2
        %v1978 = vrot.slane %v1972, 2
        %v1979 = vsel %vm590, %v1977, %v1978
        %v1980 = vrot.slane %v1973, 2
        %v1981 = vsel %vm590, %v1978, %v1980
        %v1984 = vadd.f32 %v1916, %v1979
        %v1985 = vadd.f32 %v1917, %v1981
        %s1986 = sld [smem:[#allocation4 + $0x38]]
        %v1987 = vstv %s1986
        %v1988 = vmul.f32 %v1987, %v1543
        %v1989 = vmul.f32 %v1987, %v1544
        %v1990 = vmul.f32 %v1987, %v1545
        %v1994 = vrot.slane %v1988, 2
        %v1995 = vrot.slane %v1989, 2
        %v1996 = vsel %vm590, %v1994, %v1995
        %v1997 = vrot.slane %v1990, 2
        %v1998 = vsel %vm590, %v1995, %v1997
        %1999 = vrot.lane.b32.xlu0 %v1996, 127
        %v2000 = vpop.permute.xlu0 %1999
        %2001 = vrot.lane.b32.xlu0 %v1998, 127
        %v2002 = vpop.permute.xlu0 %2001
        %v2005 = vadd.f32 %v1933, %v2000
        %v2006 = vadd.f32 %v1934, %v2002
        %s2007 = sld [smem:[#allocation4 + $0x5c]]
        %v2008 = vstv %s2007
        %v2009 = vmul.f32 %v2008, %v1543
        %v2010 = vmul.f32 %v2008, %v1544
        %v2011 = vmul.f32 %v2008, %v1545
        %v2015 = vrot.slane %v2009, 2
        %v2016 = vrot.slane %v2010, 2
        %v2017 = vsel %vm590, %v2015, %v2016
        %v2018 = vrot.slane %v2011, 2
        %v2019 = vsel %vm590, %v2016, %v2018
        %2020 = vrot.lane.b32.xlu0 %v2017, 127
        %v2021 = vpop.permute.xlu0 %2020
        %2022 = vrot.lane.b32.xlu0 %v2019, 127
        %v2023 = vpop.permute.xlu0 %2022
        %v2026 = vadd.f32 %v1950, %v2021
        %v2027 = vadd.f32 %v1951, %v2023
        %s2028 = sld [smem:[#allocation4 + $0x80]]
        %v2029 = vstv %s2028
        %v2030 = vmul.f32 %v2029, %v1543
        %v2031 = vmul.f32 %v2029, %v1544
        %v2032 = vmul.f32 %v2029, %v1545
        %v2036 = vrot.slane %v2030, 2
        %v2037 = vrot.slane %v2031, 2
        %v2038 = vsel %vm590, %v2036, %v2037
        %v2039 = vrot.slane %v2032, 2
        %v2040 = vsel %vm590, %v2037, %v2039
        %2041 = vrot.lane.b32.xlu0 %v2038, 127
        %v2042 = vpop.permute.xlu0 %2041
        %2043 = vrot.lane.b32.xlu0 %v2040, 127
        %v2044 = vpop.permute.xlu0 %2043
        %v2047 = vadd.f32 %v1967, %v2042
        %v2048 = vadd.f32 %v1968, %v2044
        %s2049 = sld [smem:[#allocation4 + $0xa4]]
        %v2050 = vstv %s2049
        %v2051 = vmul.f32 %v2050, %v1543
        %v2052 = vmul.f32 %v2050, %v1544
        %v2053 = vmul.f32 %v2050, %v1545
        %v2057 = vrot.slane %v2051, 2
        %v2058 = vrot.slane %v2052, 2
        %v2059 = vsel %vm590, %v2057, %v2058
        %v2060 = vrot.slane %v2053, 2
        %v2061 = vsel %vm590, %v2058, %v2060
        %2062 = vrot.lane.b32.xlu0 %v2059, 127
        %v2063 = vpop.permute.xlu0 %2062
        %2064 = vrot.lane.b32.xlu0 %v2061, 127
        %v2065 = vpop.permute.xlu0 %2064
        %v2068 = vadd.f32 %v1984, %v2063
        %v2069 = vadd.f32 %v1985, %v2065
        %s2070 = sld [smem:[#allocation4 + $0x39]]
        %v2071 = vstv %s2070
        %v2072 = vmul.f32 %v2071, %v1543
        %v2073 = vmul.f32 %v2071, %v1544
        %v2074 = vmul.f32 %v2071, %v1545
        %v2078 = vrot.slane %v2072, 2
        %v2079 = vrot.slane %v2073, 2
        %v2080 = vsel %vm590, %v2078, %v2079
        %v2081 = vrot.slane %v2074, 2
        %v2082 = vsel %vm590, %v2079, %v2081
        %2083 = vrot.lane.b32.xlu0 %v2080, 126
        %v2084 = vpop.permute.xlu0 %2083
        %2085 = vrot.lane.b32.xlu0 %v2082, 126
        %v2086 = vpop.permute.xlu0 %2085
        %v2089 = vadd.f32 %v2005, %v2084
        %v2090 = vadd.f32 %v2006, %v2086
        %s2091 = sld [smem:[#allocation4 + $0x5d]]
        %v2092 = vstv %s2091
        %v2093 = vmul.f32 %v2092, %v1543
        %v2094 = vmul.f32 %v2092, %v1544
        %v2095 = vmul.f32 %v2092, %v1545
        %v2099 = vrot.slane %v2093, 2
        %v2100 = vrot.slane %v2094, 2
        %v2101 = vsel %vm590, %v2099, %v2100
        %v2102 = vrot.slane %v2095, 2
        %v2103 = vsel %vm590, %v2100, %v2102
        %2104 = vrot.lane.b32.xlu0 %v2101, 126
        %v2105 = vpop.permute.xlu0 %2104
        %2106 = vrot.lane.b32.xlu0 %v2103, 126
        %v2107 = vpop.permute.xlu0 %2106
        %v2110 = vadd.f32 %v2026, %v2105
        %v2111 = vadd.f32 %v2027, %v2107
        %s2112 = sld [smem:[#allocation4 + $0x81]]
        %v2113 = vstv %s2112
        %v2114 = vmul.f32 %v2113, %v1543
        %v2115 = vmul.f32 %v2113, %v1544
        %v2116 = vmul.f32 %v2113, %v1545
        %v2120 = vrot.slane %v2114, 2
        %v2121 = vrot.slane %v2115, 2
        %v2122 = vsel %vm590, %v2120, %v2121
        %v2123 = vrot.slane %v2116, 2
        %v2124 = vsel %vm590, %v2121, %v2123
        %2125 = vrot.lane.b32.xlu0 %v2122, 126
        %v2126 = vpop.permute.xlu0 %2125
        %2127 = vrot.lane.b32.xlu0 %v2124, 126
        %v2128 = vpop.permute.xlu0 %2127
        %v2131 = vadd.f32 %v2047, %v2126
        %v2132 = vadd.f32 %v2048, %v2128
        %s2133 = sld [smem:[#allocation4 + $0xa5]]
        %v2134 = vstv %s2133
        %v2135 = vmul.f32 %v2134, %v1543
        %v2136 = vmul.f32 %v2134, %v1544
        %v2137 = vmul.f32 %v2134, %v1545
        %v2141 = vrot.slane %v2135, 2
        %v2142 = vrot.slane %v2136, 2
        %v2143 = vsel %vm590, %v2141, %v2142
        %v2144 = vrot.slane %v2137, 2
        %v2145 = vsel %vm590, %v2142, %v2144
        %2146 = vrot.lane.b32.xlu0 %v2143, 126
        %v2147 = vpop.permute.xlu0 %2146
        %2148 = vrot.lane.b32.xlu0 %v2145, 126
        %v2149 = vpop.permute.xlu0 %2148
        %v2152 = vadd.f32 %v2068, %v2147
        %v2153 = vadd.f32 %v2069, %v2149
        %v2154 = vld [vmem:[%s894] sm:$0xff]
        %v2155 = vld [vmem:[%s894 + $0x8] sm:$0xff]
        %v2156 = vld [vmem:[%s894 + $0x10] sm:$0x3]
        %s2157 = sld [smem:[#allocation4 + $0x3a]]
        %v2158 = vstv %s2157
        %v2159 = vmul.f32 %v2158, %v2154
        %v2160 = vmul.f32 %v2158, %v2155
        %v2161 = vadd.f32 %v2089, %v2159
        %v2162 = vadd.f32 %v2090, %v2160
        %s2163 = sld [smem:[#allocation4 + $0x5e]]
        %v2164 = vstv %s2163
        %v2165 = vmul.f32 %v2164, %v2154
        %v2166 = vmul.f32 %v2164, %v2155
        %v2167 = vadd.f32 %v2110, %v2165
        %v2168 = vadd.f32 %v2111, %v2166
        %s2169 = sld [smem:[#allocation4 + $0x82]]
        %v2170 = vstv %s2169
        %v2171 = vmul.f32 %v2170, %v2154
        %v2172 = vmul.f32 %v2170, %v2155
        %v2173 = vadd.f32 %v2131, %v2171
        %v2174 = vadd.f32 %v2132, %v2172
        %s2175 = sld [smem:[#allocation4 + $0xa6]]
        %v2176 = vstv %s2175
        %v2177 = vmul.f32 %v2176, %v2154
        %v2178 = vmul.f32 %v2176, %v2155
        %v2179 = vadd.f32 %v2152, %v2177
        %v2180 = vadd.f32 %v2153, %v2178
        %s2181 = sld [smem:[#allocation4 + $0x3b]]
        %v2182 = vstv %s2181
        %v2183 = vmul.f32 %v2182, %v2154
        %v2184 = vmul.f32 %v2182, %v2155
        %2187 = vrot.lane.b32.xlu0 %v2183, 127
        %v2188 = vpop.permute.xlu0 %2187
        %2189 = vrot.lane.b32.xlu0 %v2184, 127
        %v2190 = vpop.permute.xlu0 %2189
        %v2193 = vadd.f32 %v2161, %v2188
        %v2194 = vadd.f32 %v2162, %v2190
        %s2195 = sld [smem:[#allocation4 + $0x5f]]
        %v2196 = vstv %s2195
        %v2197 = vmul.f32 %v2196, %v2154
        %v2198 = vmul.f32 %v2196, %v2155
        %2201 = vrot.lane.b32.xlu0 %v2197, 127
        %v2202 = vpop.permute.xlu0 %2201
        %2203 = vrot.lane.b32.xlu0 %v2198, 127
        %v2204 = vpop.permute.xlu0 %2203
        %v2207 = vadd.f32 %v2167, %v2202
        %v2208 = vadd.f32 %v2168, %v2204
        %s2209 = sld [smem:[#allocation4 + $0x83]]
        %v2210 = vstv %s2209
        %v2211 = vmul.f32 %v2210, %v2154
        %v2212 = vmul.f32 %v2210, %v2155
        %2215 = vrot.lane.b32.xlu0 %v2211, 127
        %v2216 = vpop.permute.xlu0 %2215
        %2217 = vrot.lane.b32.xlu0 %v2212, 127
        %v2218 = vpop.permute.xlu0 %2217
        %v2221 = vadd.f32 %v2173, %v2216
        %v2222 = vadd.f32 %v2174, %v2218
        %s2223 = sld [smem:[#allocation4 + $0xa7]]
        %v2224 = vstv %s2223
        %v2225 = vmul.f32 %v2224, %v2154
        %v2226 = vmul.f32 %v2224, %v2155
        %2229 = vrot.lane.b32.xlu0 %v2225, 127
        %v2230 = vpop.permute.xlu0 %2229
        %2231 = vrot.lane.b32.xlu0 %v2226, 127
        %v2232 = vpop.permute.xlu0 %2231
        %v2235 = vadd.f32 %v2179, %v2230
        %v2236 = vadd.f32 %v2180, %v2232
        %s2237 = sld [smem:[#allocation4 + $0x3c]]
        %v2238 = vstv %s2237
        %v2239 = vmul.f32 %v2238, %v2154
        %v2240 = vmul.f32 %v2238, %v2155
        %2243 = vrot.lane.b32.xlu0 %v2239, 126
        %v2244 = vpop.permute.xlu0 %2243
        %2245 = vrot.lane.b32.xlu0 %v2240, 126
        %v2246 = vpop.permute.xlu0 %2245
        %v2249 = vadd.f32 %v2193, %v2244
        %v2250 = vadd.f32 %v2194, %v2246
        %s2251 = sld [smem:[#allocation4 + $0x60]]
        %v2252 = vstv %s2251
        %v2253 = vmul.f32 %v2252, %v2154
        %v2254 = vmul.f32 %v2252, %v2155
        %2257 = vrot.lane.b32.xlu0 %v2253, 126
        %v2258 = vpop.permute.xlu0 %2257
        %2259 = vrot.lane.b32.xlu0 %v2254, 126
        %v2260 = vpop.permute.xlu0 %2259
        %v2263 = vadd.f32 %v2207, %v2258
        %v2264 = vadd.f32 %v2208, %v2260
        %s2265 = sld [smem:[#allocation4 + $0x84]]
        %v2266 = vstv %s2265
        %v2267 = vmul.f32 %v2266, %v2154
        %v2268 = vmul.f32 %v2266, %v2155
        %2271 = vrot.lane.b32.xlu0 %v2267, 126
        %v2272 = vpop.permute.xlu0 %2271
        %2273 = vrot.lane.b32.xlu0 %v2268, 126
        %v2274 = vpop.permute.xlu0 %2273
        %v2277 = vadd.f32 %v2221, %v2272
        %v2278 = vadd.f32 %v2222, %v2274
        %s2279 = sld [smem:[#allocation4 + $0xa8]]
        %v2280 = vstv %s2279
        %v2281 = vmul.f32 %v2280, %v2154
        %v2282 = vmul.f32 %v2280, %v2155
        %2285 = vrot.lane.b32.xlu0 %v2281, 126
        %v2286 = vpop.permute.xlu0 %2285
        %2287 = vrot.lane.b32.xlu0 %v2282, 126
        %v2288 = vpop.permute.xlu0 %2287
        %v2291 = vadd.f32 %v2235, %v2286
        %v2292 = vadd.f32 %v2236, %v2288
        %s2293 = sld [smem:[#allocation4 + $0x3d]]
        %v2294 = vstv %s2293
        %v2295 = vmul.f32 %v2294, %v2154
        %v2296 = vmul.f32 %v2294, %v2155
        %v2297 = vmul.f32 %v2294, %v2156
        %v2301 = vrot.slane %v2295, 1
        %v2302 = vrot.slane %v2296, 1
        %v2303 = vsel %vm353, %v2301, %v2302
        %v2304 = vrot.slane %v2297, 1
        %v2305 = vsel %vm353, %v2302, %v2304
        %v2308 = vadd.f32 %v2249, %v2303
        %v2309 = vadd.f32 %v2250, %v2305
        %s2310 = sld [smem:[#allocation4 + $0x61]]
        %v2311 = vstv %s2310
        %v2312 = vmul.f32 %v2311, %v2154
        %v2313 = vmul.f32 %v2311, %v2155
        %v2314 = vmul.f32 %v2311, %v2156
        %v2318 = vrot.slane %v2312, 1
        %v2319 = vrot.slane %v2313, 1
        %v2320 = vsel %vm353, %v2318, %v2319
        %v2321 = vrot.slane %v2314, 1
        %v2322 = vsel %vm353, %v2319, %v2321
        %v2325 = vadd.f32 %v2263, %v2320
        %v2326 = vadd.f32 %v2264, %v2322
        %s2327 = sld [smem:[#allocation4 + $0x85]]
        %v2328 = vstv %s2327
        %v2329 = vmul.f32 %v2328, %v2154
        %v2330 = vmul.f32 %v2328, %v2155
        %v2331 = vmul.f32 %v2328, %v2156
        %v2335 = vrot.slane %v2329, 1
        %v2336 = vrot.slane %v2330, 1
        %v2337 = vsel %vm353, %v2335, %v2336
        %v2338 = vrot.slane %v2331, 1
        %v2339 = vsel %vm353, %v2336, %v2338
        %v2342 = vadd.f32 %v2277, %v2337
        %v2343 = vadd.f32 %v2278, %v2339
        %s2344 = sld [smem:[#allocation4 + $0xa9]]
        %v2345 = vstv %s2344
        %v2346 = vmul.f32 %v2345, %v2154
        %v2347 = vmul.f32 %v2345, %v2155
        %v2348 = vmul.f32 %v2345, %v2156
        %v2352 = vrot.slane %v2346, 1
        %v2353 = vrot.slane %v2347, 1
        %v2354 = vsel %vm353, %v2352, %v2353
        %v2355 = vrot.slane %v2348, 1
        %v2356 = vsel %vm353, %v2353, %v2355
        %v2359 = vadd.f32 %v2291, %v2354
        %v2360 = vadd.f32 %v2292, %v2356
        %s2361 = sld [smem:[#allocation4 + $0x3e]]
        %v2362 = vstv %s2361
        %v2363 = vmul.f32 %v2362, %v2154
        %v2364 = vmul.f32 %v2362, %v2155
        %v2365 = vmul.f32 %v2362, %v2156
        %v2369 = vrot.slane %v2363, 1
        %v2370 = vrot.slane %v2364, 1
        %v2371 = vsel %vm353, %v2369, %v2370
        %v2372 = vrot.slane %v2365, 1
        %v2373 = vsel %vm353, %v2370, %v2372
        %2374 = vrot.lane.b32.xlu0 %v2371, 127
        %v2375 = vpop.permute.xlu0 %2374
        %2376 = vrot.lane.b32.xlu0 %v2373, 127
        %v2377 = vpop.permute.xlu0 %2376
        %v2380 = vadd.f32 %v2308, %v2375
        %v2381 = vadd.f32 %v2309, %v2377
        %s2382 = sld [smem:[#allocation4 + $0x62]]
        %v2383 = vstv %s2382
        %v2384 = vmul.f32 %v2383, %v2154
        %v2385 = vmul.f32 %v2383, %v2155
        %v2386 = vmul.f32 %v2383, %v2156
        %v2390 = vrot.slane %v2384, 1
        %v2391 = vrot.slane %v2385, 1
        %v2392 = vsel %vm353, %v2390, %v2391
        %v2393 = vrot.slane %v2386, 1
        %v2394 = vsel %vm353, %v2391, %v2393
        %2395 = vrot.lane.b32.xlu0 %v2392, 127
        %v2396 = vpop.permute.xlu0 %2395
        %2397 = vrot.lane.b32.xlu0 %v2394, 127
        %v2398 = vpop.permute.xlu0 %2397
        %v2401 = vadd.f32 %v2325, %v2396
        %v2402 = vadd.f32 %v2326, %v2398
        %s2403 = sld [smem:[#allocation4 + $0x86]]
        %v2404 = vstv %s2403
        %v2405 = vmul.f32 %v2404, %v2154
        %v2406 = vmul.f32 %v2404, %v2155
        %v2407 = vmul.f32 %v2404, %v2156
        %v2411 = vrot.slane %v2405, 1
        %v2412 = vrot.slane %v2406, 1
        %v2413 = vsel %vm353, %v2411, %v2412
        %v2414 = vrot.slane %v2407, 1
        %v2415 = vsel %vm353, %v2412, %v2414
        %2416 = vrot.lane.b32.xlu0 %v2413, 127
        %v2417 = vpop.permute.xlu0 %2416
        %2418 = vrot.lane.b32.xlu0 %v2415, 127
        %v2419 = vpop.permute.xlu0 %2418
        %v2422 = vadd.f32 %v2342, %v2417
        %v2423 = vadd.f32 %v2343, %v2419
        %s2424 = sld [smem:[#allocation4 + $0xaa]]
        %v2425 = vstv %s2424
        %v2426 = vmul.f32 %v2425, %v2154
        %v2427 = vmul.f32 %v2425, %v2155
        %v2428 = vmul.f32 %v2425, %v2156
        %v2432 = vrot.slane %v2426, 1
        %v2433 = vrot.slane %v2427, 1
        %v2434 = vsel %vm353, %v2432, %v2433
        %v2435 = vrot.slane %v2428, 1
        %v2436 = vsel %vm353, %v2433, %v2435
        %2437 = vrot.lane.b32.xlu0 %v2434, 127
        %v2438 = vpop.permute.xlu0 %2437
        %2439 = vrot.lane.b32.xlu0 %v2436, 127
        %v2440 = vpop.permute.xlu0 %2439
        %v2443 = vadd.f32 %v2359, %v2438
        %v2444 = vadd.f32 %v2360, %v2440
        %s2445 = sld [smem:[#allocation4 + $0x3f]]
        %v2446 = vstv %s2445
        %v2447 = vmul.f32 %v2446, %v2154
        %v2448 = vmul.f32 %v2446, %v2155
        %v2449 = vmul.f32 %v2446, %v2156
        %v2453 = vrot.slane %v2447, 1
        %v2454 = vrot.slane %v2448, 1
        %v2455 = vsel %vm353, %v2453, %v2454
        %v2456 = vrot.slane %v2449, 1
        %v2457 = vsel %vm353, %v2454, %v2456
        %2458 = vrot.lane.b32.xlu0 %v2455, 126
        %v2459 = vpop.permute.xlu0 %2458
        %2460 = vrot.lane.b32.xlu0 %v2457, 126
        %v2461 = vpop.permute.xlu0 %2460
        %v2464 = vadd.f32 %v2380, %v2459
        %v2465 = vadd.f32 %v2381, %v2461
        %s2466 = sld [smem:[#allocation4 + $0x63]]
        %v2467 = vstv %s2466
        %v2468 = vmul.f32 %v2467, %v2154
        %v2469 = vmul.f32 %v2467, %v2155
        %v2470 = vmul.f32 %v2467, %v2156
        %v2474 = vrot.slane %v2468, 1
        %v2475 = vrot.slane %v2469, 1
        %v2476 = vsel %vm353, %v2474, %v2475
        %v2477 = vrot.slane %v2470, 1
        %v2478 = vsel %vm353, %v2475, %v2477
        %2479 = vrot.lane.b32.xlu0 %v2476, 126
        %v2480 = vpop.permute.xlu0 %2479
        %2481 = vrot.lane.b32.xlu0 %v2478, 126
        %v2482 = vpop.permute.xlu0 %2481
        %v2485 = vadd.f32 %v2401, %v2480
        %v2486 = vadd.f32 %v2402, %v2482
        %s2487 = sld [smem:[#allocation4 + $0x87]]
        %v2488 = vstv %s2487
        %v2489 = vmul.f32 %v2488, %v2154
        %v2490 = vmul.f32 %v2488, %v2155
        %v2491 = vmul.f32 %v2488, %v2156
        %v2495 = vrot.slane %v2489, 1
        %v2496 = vrot.slane %v2490, 1
        %v2497 = vsel %vm353, %v2495, %v2496
        %v2498 = vrot.slane %v2491, 1
        %v2499 = vsel %vm353, %v2496, %v2498
        %2500 = vrot.lane.b32.xlu0 %v2497, 126
        %v2501 = vpop.permute.xlu0 %2500
        %2502 = vrot.lane.b32.xlu0 %v2499, 126
        %v2503 = vpop.permute.xlu0 %2502
        %v2506 = vadd.f32 %v2422, %v2501
        %v2507 = vadd.f32 %v2423, %v2503
        %s2508 = sld [smem:[#allocation4 + $0xab]]
        %v2509 = vstv %s2508
        %v2510 = vmul.f32 %v2509, %v2154
        %v2511 = vmul.f32 %v2509, %v2155
        %v2512 = vmul.f32 %v2509, %v2156
        %v2516 = vrot.slane %v2510, 1
        %v2517 = vrot.slane %v2511, 1
        %v2518 = vsel %vm353, %v2516, %v2517
        %v2519 = vrot.slane %v2512, 1
        %v2520 = vsel %vm353, %v2517, %v2519
        %2521 = vrot.lane.b32.xlu0 %v2518, 126
        %v2522 = vpop.permute.xlu0 %2521
        %2523 = vrot.lane.b32.xlu0 %v2520, 126
        %v2524 = vpop.permute.xlu0 %2523
        %v2527 = vadd.f32 %v2443, %v2522
        %v2528 = vadd.f32 %v2444, %v2524
        %s2529 = sld [smem:[#allocation4 + $0x40]]
        %v2530 = vstv %s2529
        %v2531 = vmul.f32 %v2530, %v2154
        %v2532 = vmul.f32 %v2530, %v2155
        %v2533 = vmul.f32 %v2530, %v2156
        %v2537 = vrot.slane %v2531, 2
        %v2538 = vrot.slane %v2532, 2
        %v2539 = vsel %vm590, %v2537, %v2538
        %v2540 = vrot.slane %v2533, 2
        %v2541 = vsel %vm590, %v2538, %v2540
        %v2544 = vadd.f32 %v2464, %v2539
        %v2545 = vadd.f32 %v2465, %v2541
        %s2546 = sld [smem:[#allocation4 + $0x64]]
        %v2547 = vstv %s2546
        %v2548 = vmul.f32 %v2547, %v2154
        %v2549 = vmul.f32 %v2547, %v2155
        %v2550 = vmul.f32 %v2547, %v2156
        %v2554 = vrot.slane %v2548, 2
        %v2555 = vrot.slane %v2549, 2
        %v2556 = vsel %vm590, %v2554, %v2555
        %v2557 = vrot.slane %v2550, 2
        %v2558 = vsel %vm590, %v2555, %v2557
        %v2561 = vadd.f32 %v2485, %v2556
        %v2562 = vadd.f32 %v2486, %v2558
        %s2563 = sld [smem:[#allocation4 + $0x88]]
        %v2564 = vstv %s2563
        %v2565 = vmul.f32 %v2564, %v2154
        %v2566 = vmul.f32 %v2564, %v2155
        %v2567 = vmul.f32 %v2564, %v2156
        %v2571 = vrot.slane %v2565, 2
        %v2572 = vrot.slane %v2566, 2
        %v2573 = vsel %vm590, %v2571, %v2572
        %v2574 = vrot.slane %v2567, 2
        %v2575 = vsel %vm590, %v2572, %v2574
        %v2578 = vadd.f32 %v2506, %v2573
        %v2579 = vadd.f32 %v2507, %v2575
        %s2580 = sld [smem:[#allocation4 + $0xac]]
        %v2581 = vstv %s2580
        %v2582 = vmul.f32 %v2581, %v2154
        %v2583 = vmul.f32 %v2581, %v2155
        %v2584 = vmul.f32 %v2581, %v2156
        %v2588 = vrot.slane %v2582, 2
        %v2589 = vrot.slane %v2583, 2
        %v2590 = vsel %vm590, %v2588, %v2589
        %v2591 = vrot.slane %v2584, 2
        %v2592 = vsel %vm590, %v2589, %v2591
        %v2595 = vadd.f32 %v2527, %v2590
        %v2596 = vadd.f32 %v2528, %v2592
        %s2597 = sld [smem:[#allocation4 + $0x41]]
        %v2598 = vstv %s2597
        %v2599 = vmul.f32 %v2598, %v2154
        %v2600 = vmul.f32 %v2598, %v2155
        %v2601 = vmul.f32 %v2598, %v2156
        %v2605 = vrot.slane %v2599, 2
        %v2606 = vrot.slane %v2600, 2
        %v2607 = vsel %vm590, %v2605, %v2606
        %v2608 = vrot.slane %v2601, 2
        %v2609 = vsel %vm590, %v2606, %v2608
        %2610 = vrot.lane.b32.xlu0 %v2607, 127
        %v2611 = vpop.permute.xlu0 %2610
        %2612 = vrot.lane.b32.xlu0 %v2609, 127
        %v2613 = vpop.permute.xlu0 %2612
        %v2616 = vadd.f32 %v2544, %v2611
        %v2617 = vadd.f32 %v2545, %v2613
        %s2618 = sld [smem:[#allocation4 + $0x65]]
        %v2619 = vstv %s2618
        %v2620 = vmul.f32 %v2619, %v2154
        %v2621 = vmul.f32 %v2619, %v2155
        %v2622 = vmul.f32 %v2619, %v2156
        %v2626 = vrot.slane %v2620, 2
        %v2627 = vrot.slane %v2621, 2
        %v2628 = vsel %vm590, %v2626, %v2627
        %v2629 = vrot.slane %v2622, 2
        %v2630 = vsel %vm590, %v2627, %v2629
        %2631 = vrot.lane.b32.xlu0 %v2628, 127
        %v2632 = vpop.permute.xlu0 %2631
        %2633 = vrot.lane.b32.xlu0 %v2630, 127
        %v2634 = vpop.permute.xlu0 %2633
        %v2637 = vadd.f32 %v2561, %v2632
        %v2638 = vadd.f32 %v2562, %v2634
        %s2639 = sld [smem:[#allocation4 + $0x89]]
        %v2640 = vstv %s2639
        %v2641 = vmul.f32 %v2640, %v2154
        %v2642 = vmul.f32 %v2640, %v2155
        %v2643 = vmul.f32 %v2640, %v2156
        %v2647 = vrot.slane %v2641, 2
        %v2648 = vrot.slane %v2642, 2
        %v2649 = vsel %vm590, %v2647, %v2648
        %v2650 = vrot.slane %v2643, 2
        %v2651 = vsel %vm590, %v2648, %v2650
        %2652 = vrot.lane.b32.xlu0 %v2649, 127
        %v2653 = vpop.permute.xlu0 %2652
        %2654 = vrot.lane.b32.xlu0 %v2651, 127
        %v2655 = vpop.permute.xlu0 %2654
        %v2658 = vadd.f32 %v2578, %v2653
        %v2659 = vadd.f32 %v2579, %v2655
        %s2660 = sld [smem:[#allocation4 + $0xad]]
        %v2661 = vstv %s2660
        %v2662 = vmul.f32 %v2661, %v2154
        %v2663 = vmul.f32 %v2661, %v2155
        %v2664 = vmul.f32 %v2661, %v2156
        %v2668 = vrot.slane %v2662, 2
        %v2669 = vrot.slane %v2663, 2
        %v2670 = vsel %vm590, %v2668, %v2669
        %v2671 = vrot.slane %v2664, 2
        %v2672 = vsel %vm590, %v2669, %v2671
        %2673 = vrot.lane.b32.xlu0 %v2670, 127
        %v2674 = vpop.permute.xlu0 %2673
        %2675 = vrot.lane.b32.xlu0 %v2672, 127
        %v2676 = vpop.permute.xlu0 %2675
        %v2679 = vadd.f32 %v2595, %v2674
        %v2680 = vadd.f32 %v2596, %v2676
        %s2681 = sld [smem:[#allocation4 + $0x42]]
        %v2682 = vstv %s2681
        %v2683 = vmul.f32 %v2682, %v2154
        %v2684 = vmul.f32 %v2682, %v2155
        %v2685 = vmul.f32 %v2682, %v2156
        %v2689 = vrot.slane %v2683, 2
        %v2690 = vrot.slane %v2684, 2
        %v2691 = vsel %vm590, %v2689, %v2690
        %v2692 = vrot.slane %v2685, 2
        %v2693 = vsel %vm590, %v2690, %v2692
        %2694 = vrot.lane.b32.xlu0 %v2691, 126
        %v2695 = vpop.permute.xlu0 %2694
        %2696 = vrot.lane.b32.xlu0 %v2693, 126
        %v2697 = vpop.permute.xlu0 %2696
        %v2700 = vadd.f32 %v2616, %v2695
        %v2701 = vadd.f32 %v2617, %v2697
        %s2702 = sld [smem:[#allocation4 + $0x66]]
        %v2703 = vstv %s2702
        %v2704 = vmul.f32 %v2703, %v2154
        %v2705 = vmul.f32 %v2703, %v2155
        %v2706 = vmul.f32 %v2703, %v2156
        %v2710 = vrot.slane %v2704, 2
        %v2711 = vrot.slane %v2705, 2
        %v2712 = vsel %vm590, %v2710, %v2711
        %v2713 = vrot.slane %v2706, 2
        %v2714 = vsel %vm590, %v2711, %v2713
        %2715 = vrot.lane.b32.xlu0 %v2712, 126
        %v2716 = vpop.permute.xlu0 %2715
        %2717 = vrot.lane.b32.xlu0 %v2714, 126
        %v2718 = vpop.permute.xlu0 %2717
        %v2721 = vadd.f32 %v2637, %v2716
        %v2722 = vadd.f32 %v2638, %v2718
        %s2723 = sld [smem:[#allocation4 + $0x8a]]
        %v2724 = vstv %s2723
        %v2725 = vmul.f32 %v2724, %v2154
        %v2726 = vmul.f32 %v2724, %v2155
        %v2727 = vmul.f32 %v2724, %v2156
        %v2731 = vrot.slane %v2725, 2
        %v2732 = vrot.slane %v2726, 2
        %v2733 = vsel %vm590, %v2731, %v2732
        %v2734 = vrot.slane %v2727, 2
        %v2735 = vsel %vm590, %v2732, %v2734
        %2736 = vrot.lane.b32.xlu0 %v2733, 126
        %v2737 = vpop.permute.xlu0 %2736
        %2738 = vrot.lane.b32.xlu0 %v2735, 126
        %v2739 = vpop.permute.xlu0 %2738
        %v2742 = vadd.f32 %v2658, %v2737
        %v2743 = vadd.f32 %v2659, %v2739
        %s2744 = sld [smem:[#allocation4 + $0xae]]
        %v2745 = vstv %s2744
        %v2746 = vmul.f32 %v2745, %v2154
        %v2747 = vmul.f32 %v2745, %v2155
        %v2748 = vmul.f32 %v2745, %v2156
        %v2752 = vrot.slane %v2746, 2
        %v2753 = vrot.slane %v2747, 2
        %v2754 = vsel %vm590, %v2752, %v2753
        %v2755 = vrot.slane %v2748, 2
        %v2756 = vsel %vm590, %v2753, %v2755
        %2757 = vrot.lane.b32.xlu0 %v2754, 126
        %v2758 = vpop.permute.xlu0 %2757
        %2759 = vrot.lane.b32.xlu0 %v2756, 126
        %v2760 = vpop.permute.xlu0 %2759
        %v2763 = vadd.f32 %v2679, %v2758
        %v2764 = vadd.f32 %v2680, %v2760
        %v2765 = vld [vmem:[%s920] sm:$0xff]
        %v2766 = vld [vmem:[%s920 + $0x8] sm:$0xff]
        %v2767 = vld [vmem:[%s920 + $0x10] sm:$0x3]
        %s2768 = sld [smem:[#allocation4 + $0x43]]
        %v2769 = vstv %s2768
        %v2770 = vmul.f32 %v2769, %v2765
        %v2771 = vmul.f32 %v2769, %v2766
        %v2772 = vadd.f32 %v2700, %v2770
        %v2773 = vadd.f32 %v2701, %v2771
        %s2774 = sld [smem:[#allocation4 + $0x67]]
        %v2775 = vstv %s2774
        %v2776 = vmul.f32 %v2775, %v2765
        %v2777 = vmul.f32 %v2775, %v2766
        %v2778 = vadd.f32 %v2721, %v2776
        %v2779 = vadd.f32 %v2722, %v2777
        %s2780 = sld [smem:[#allocation4 + $0x8b]]
        %v2781 = vstv %s2780
        %v2782 = vmul.f32 %v2781, %v2765
        %v2783 = vmul.f32 %v2781, %v2766
        %v2784 = vadd.f32 %v2742, %v2782
        %v2785 = vadd.f32 %v2743, %v2783
        %s2786 = sld [smem:[#allocation4 + $0xaf]]
        %v2787 = vstv %s2786
        %v2788 = vmul.f32 %v2787, %v2765
        %v2789 = vmul.f32 %v2787, %v2766
        %v2790 = vadd.f32 %v2763, %v2788
        %v2791 = vadd.f32 %v2764, %v2789
        %s2792 = sld [smem:[#allocation4 + $0x44]]
        %v2793 = vstv %s2792
        %v2794 = vmul.f32 %v2793, %v2765
        %v2795 = vmul.f32 %v2793, %v2766
        %2798 = vrot.lane.b32.xlu0 %v2794, 127
        %v2799 = vpop.permute.xlu0 %2798
        %2800 = vrot.lane.b32.xlu0 %v2795, 127
        %v2801 = vpop.permute.xlu0 %2800
        %v2804 = vadd.f32 %v2772, %v2799
        %v2805 = vadd.f32 %v2773, %v2801
        %s2806 = sld [smem:[#allocation4 + $0x68]]
        %v2807 = vstv %s2806
        %v2808 = vmul.f32 %v2807, %v2765
        %v2809 = vmul.f32 %v2807, %v2766
        %2812 = vrot.lane.b32.xlu0 %v2808, 127
        %v2813 = vpop.permute.xlu0 %2812
        %2814 = vrot.lane.b32.xlu0 %v2809, 127
        %v2815 = vpop.permute.xlu0 %2814
        %v2818 = vadd.f32 %v2778, %v2813
        %v2819 = vadd.f32 %v2779, %v2815
        %s2820 = sld [smem:[#allocation4 + $0x8c]]
        %v2821 = vstv %s2820
        %v2822 = vmul.f32 %v2821, %v2765
        %v2823 = vmul.f32 %v2821, %v2766
        %2826 = vrot.lane.b32.xlu0 %v2822, 127
        %v2827 = vpop.permute.xlu0 %2826
        %2828 = vrot.lane.b32.xlu0 %v2823, 127
        %v2829 = vpop.permute.xlu0 %2828
        %v2832 = vadd.f32 %v2784, %v2827
        %v2833 = vadd.f32 %v2785, %v2829
        %s2834 = sld [smem:[#allocation4 + $0xb0]]
        %v2835 = vstv %s2834
        %v2836 = vmul.f32 %v2835, %v2765
        %v2837 = vmul.f32 %v2835, %v2766
        %2840 = vrot.lane.b32.xlu0 %v2836, 127
        %v2841 = vpop.permute.xlu0 %2840
        %2842 = vrot.lane.b32.xlu0 %v2837, 127
        %v2843 = vpop.permute.xlu0 %2842
        %v2846 = vadd.f32 %v2790, %v2841
        %v2847 = vadd.f32 %v2791, %v2843
        %s2848 = sld [smem:[#allocation4 + $0x45]]
        %v2849 = vstv %s2848
        %v2850 = vmul.f32 %v2849, %v2765
        %v2851 = vmul.f32 %v2849, %v2766
        %2854 = vrot.lane.b32.xlu0 %v2850, 126
        %v2855 = vpop.permute.xlu0 %2854
        %2856 = vrot.lane.b32.xlu0 %v2851, 126
        %v2857 = vpop.permute.xlu0 %2856
        %v2860 = vadd.f32 %v2804, %v2855
        %v2861 = vadd.f32 %v2805, %v2857
        %s2862 = sld [smem:[#allocation4 + $0x69]]
        %v2863 = vstv %s2862
        %v2864 = vmul.f32 %v2863, %v2765
        %v2865 = vmul.f32 %v2863, %v2766
        %2868 = vrot.lane.b32.xlu0 %v2864, 126
        %v2869 = vpop.permute.xlu0 %2868
        %2870 = vrot.lane.b32.xlu0 %v2865, 126
        %v2871 = vpop.permute.xlu0 %2870
        %v2874 = vadd.f32 %v2818, %v2869
        %v2875 = vadd.f32 %v2819, %v2871
        %s2876 = sld [smem:[#allocation4 + $0x8d]]
        %v2877 = vstv %s2876
        %v2878 = vmul.f32 %v2877, %v2765
        %v2879 = vmul.f32 %v2877, %v2766
        %2882 = vrot.lane.b32.xlu0 %v2878, 126
        %v2883 = vpop.permute.xlu0 %2882
        %2884 = vrot.lane.b32.xlu0 %v2879, 126
        %v2885 = vpop.permute.xlu0 %2884
        %v2888 = vadd.f32 %v2832, %v2883
        %v2889 = vadd.f32 %v2833, %v2885
        %s2890 = sld [smem:[#allocation4 + $0xb1]]
        %v2891 = vstv %s2890
        %v2892 = vmul.f32 %v2891, %v2765
        %v2893 = vmul.f32 %v2891, %v2766
        %2896 = vrot.lane.b32.xlu0 %v2892, 126
        %v2897 = vpop.permute.xlu0 %2896
        %2898 = vrot.lane.b32.xlu0 %v2893, 126
        %v2899 = vpop.permute.xlu0 %2898
        %v2902 = vadd.f32 %v2846, %v2897
        %v2903 = vadd.f32 %v2847, %v2899
        %s2904 = sld [smem:[#allocation4 + $0x46]]
        %v2905 = vstv %s2904
        %v2906 = vmul.f32 %v2905, %v2765
        %v2907 = vmul.f32 %v2905, %v2766
        %v2908 = vmul.f32 %v2905, %v2767
        %v2912 = vrot.slane %v2906, 1
        %v2913 = vrot.slane %v2907, 1
        %v2914 = vsel %vm353, %v2912, %v2913
        %v2915 = vrot.slane %v2908, 1
        %v2916 = vsel %vm353, %v2913, %v2915
        %v2919 = vadd.f32 %v2860, %v2914
        %v2920 = vadd.f32 %v2861, %v2916
        %s2921 = sld [smem:[#allocation4 + $0x6a]]
        %v2922 = vstv %s2921
        %v2923 = vmul.f32 %v2922, %v2765
        %v2924 = vmul.f32 %v2922, %v2766
        %v2925 = vmul.f32 %v2922, %v2767
        %v2929 = vrot.slane %v2923, 1
        %v2930 = vrot.slane %v2924, 1
        %v2931 = vsel %vm353, %v2929, %v2930
        %v2932 = vrot.slane %v2925, 1
        %v2933 = vsel %vm353, %v2930, %v2932
        %v2936 = vadd.f32 %v2874, %v2931
        %v2937 = vadd.f32 %v2875, %v2933
        %s2938 = sld [smem:[#allocation4 + $0x8e]]
        %v2939 = vstv %s2938
        %v2940 = vmul.f32 %v2939, %v2765
        %v2941 = vmul.f32 %v2939, %v2766
        %v2942 = vmul.f32 %v2939, %v2767
        %v2946 = vrot.slane %v2940, 1
        %v2947 = vrot.slane %v2941, 1
        %v2948 = vsel %vm353, %v2946, %v2947
        %v2949 = vrot.slane %v2942, 1
        %v2950 = vsel %vm353, %v2947, %v2949
        %v2953 = vadd.f32 %v2888, %v2948
        %v2954 = vadd.f32 %v2889, %v2950
        %s2955 = sld [smem:[#allocation4 + $0xb2]]
        %v2956 = vstv %s2955
        %v2957 = vmul.f32 %v2956, %v2765
        %v2958 = vmul.f32 %v2956, %v2766
        %v2959 = vmul.f32 %v2956, %v2767
        %v2963 = vrot.slane %v2957, 1
        %v2964 = vrot.slane %v2958, 1
        %v2965 = vsel %vm353, %v2963, %v2964
        %v2966 = vrot.slane %v2959, 1
        %v2967 = vsel %vm353, %v2964, %v2966
        %v2970 = vadd.f32 %v2902, %v2965
        %v2971 = vadd.f32 %v2903, %v2967
        %s2972 = sld [smem:[#allocation4 + $0x47]]
        %v2973 = vstv %s2972
        %v2974 = vmul.f32 %v2973, %v2765
        %v2975 = vmul.f32 %v2973, %v2766
        %v2976 = vmul.f32 %v2973, %v2767
        %v2980 = vrot.slane %v2974, 1
        %v2981 = vrot.slane %v2975, 1
        %v2982 = vsel %vm353, %v2980, %v2981
        %v2983 = vrot.slane %v2976, 1
        %v2984 = vsel %vm353, %v2981, %v2983
        %2985 = vrot.lane.b32.xlu0 %v2982, 127
        %v2986 = vpop.permute.xlu0 %2985
        %2987 = vrot.lane.b32.xlu0 %v2984, 127
        %v2988 = vpop.permute.xlu0 %2987
        %v2991 = vadd.f32 %v2919, %v2986
        %v2992 = vadd.f32 %v2920, %v2988
        %s2993 = sld [smem:[#allocation4 + $0x6b]]
        %v2994 = vstv %s2993
        %v2995 = vmul.f32 %v2994, %v2765
        %v2996 = vmul.f32 %v2994, %v2766
        %v2997 = vmul.f32 %v2994, %v2767
        %v3001 = vrot.slane %v2995, 1
        %v3002 = vrot.slane %v2996, 1
        %v3003 = vsel %vm353, %v3001, %v3002
        %v3004 = vrot.slane %v2997, 1
        %v3005 = vsel %vm353, %v3002, %v3004
        %3006 = vrot.lane.b32.xlu0 %v3003, 127
        %v3007 = vpop.permute.xlu0 %3006
        %3008 = vrot.lane.b32.xlu0 %v3005, 127
        %v3009 = vpop.permute.xlu0 %3008
        %v3012 = vadd.f32 %v2936, %v3007
        %v3013 = vadd.f32 %v2937, %v3009
        %s3014 = sld [smem:[#allocation4 + $0x8f]]
        %v3015 = vstv %s3014
        %v3016 = vmul.f32 %v3015, %v2765
        %v3017 = vmul.f32 %v3015, %v2766
        %v3018 = vmul.f32 %v3015, %v2767
        %v3022 = vrot.slane %v3016, 1
        %v3023 = vrot.slane %v3017, 1
        %v3024 = vsel %vm353, %v3022, %v3023
        %v3025 = vrot.slane %v3018, 1
        %v3026 = vsel %vm353, %v3023, %v3025
        %3027 = vrot.lane.b32.xlu0 %v3024, 127
        %v3028 = vpop.permute.xlu0 %3027
        %3029 = vrot.lane.b32.xlu0 %v3026, 127
        %v3030 = vpop.permute.xlu0 %3029
        %v3033 = vadd.f32 %v2953, %v3028
        %v3034 = vadd.f32 %v2954, %v3030
        %s3035 = sld [smem:[#allocation4 + $0xb3]]
        %v3036 = vstv %s3035
        %v3037 = vmul.f32 %v3036, %v2765
        %v3038 = vmul.f32 %v3036, %v2766
        %v3039 = vmul.f32 %v3036, %v2767
        %v3043 = vrot.slane %v3037, 1
        %v3044 = vrot.slane %v3038, 1
        %v3045 = vsel %vm353, %v3043, %v3044
        %v3046 = vrot.slane %v3039, 1
        %v3047 = vsel %vm353, %v3044, %v3046
        %3048 = vrot.lane.b32.xlu0 %v3045, 127
        %v3049 = vpop.permute.xlu0 %3048
        %3050 = vrot.lane.b32.xlu0 %v3047, 127
        %v3051 = vpop.permute.xlu0 %3050
        %v3054 = vadd.f32 %v2970, %v3049
        %v3055 = vadd.f32 %v2971, %v3051
        %s3056 = sld [smem:[#allocation4 + $0x48]]
        %v3057 = vstv %s3056
        %v3058 = vmul.f32 %v3057, %v2765
        %v3059 = vmul.f32 %v3057, %v2766
        %v3060 = vmul.f32 %v3057, %v2767
        %v3064 = vrot.slane %v3058, 1
        %v3065 = vrot.slane %v3059, 1
        %v3066 = vsel %vm353, %v3064, %v3065
        %v3067 = vrot.slane %v3060, 1
        %v3068 = vsel %vm353, %v3065, %v3067
        %3069 = vrot.lane.b32.xlu0 %v3066, 126
        %v3070 = vpop.permute.xlu0 %3069
        %3071 = vrot.lane.b32.xlu0 %v3068, 126
        %v3072 = vpop.permute.xlu0 %3071
        %v3075 = vadd.f32 %v2991, %v3070
        %v3076 = vadd.f32 %v2992, %v3072
        %s3077 = sld [smem:[#allocation4 + $0x6c]]
        %v3078 = vstv %s3077
        %v3079 = vmul.f32 %v3078, %v2765
        %v3080 = vmul.f32 %v3078, %v2766
        %v3081 = vmul.f32 %v3078, %v2767
        %v3085 = vrot.slane %v3079, 1
        %v3086 = vrot.slane %v3080, 1
        %v3087 = vsel %vm353, %v3085, %v3086
        %v3088 = vrot.slane %v3081, 1
        %v3089 = vsel %vm353, %v3086, %v3088
        %3090 = vrot.lane.b32.xlu0 %v3087, 126
        %v3091 = vpop.permute.xlu0 %3090
        %3092 = vrot.lane.b32.xlu0 %v3089, 126
        %v3093 = vpop.permute.xlu0 %3092
        %v3096 = vadd.f32 %v3012, %v3091
        %v3097 = vadd.f32 %v3013, %v3093
        %s3098 = sld [smem:[#allocation4 + $0x90]]
        %v3099 = vstv %s3098
        %v3100 = vmul.f32 %v3099, %v2765
        %v3101 = vmul.f32 %v3099, %v2766
        %v3102 = vmul.f32 %v3099, %v2767
        %v3106 = vrot.slane %v3100, 1
        %v3107 = vrot.slane %v3101, 1
        %v3108 = vsel %vm353, %v3106, %v3107
        %v3109 = vrot.slane %v3102, 1
        %v3110 = vsel %vm353, %v3107, %v3109
        %3111 = vrot.lane.b32.xlu0 %v3108, 126
        %v3112 = vpop.permute.xlu0 %3111
        %3113 = vrot.lane.b32.xlu0 %v3110, 126
        %v3114 = vpop.permute.xlu0 %3113
        %v3117 = vadd.f32 %v3033, %v3112
        %v3118 = vadd.f32 %v3034, %v3114
        %s3119 = sld [smem:[#allocation4 + $0xb4]]
        %v3120 = vstv %s3119
        %v3121 = vmul.f32 %v3120, %v2765
        %v3122 = vmul.f32 %v3120, %v2766
        %v3123 = vmul.f32 %v3120, %v2767
        %v3127 = vrot.slane %v3121, 1
        %v3128 = vrot.slane %v3122, 1
        %v3129 = vsel %vm353, %v3127, %v3128
        %v3130 = vrot.slane %v3123, 1
        %v3131 = vsel %vm353, %v3128, %v3130
        %3132 = vrot.lane.b32.xlu0 %v3129, 126
        %v3133 = vpop.permute.xlu0 %3132
        %3134 = vrot.lane.b32.xlu0 %v3131, 126
        %v3135 = vpop.permute.xlu0 %3134
        %v3138 = vadd.f32 %v3054, %v3133
        %v3139 = vadd.f32 %v3055, %v3135
        %s3140 = sld [smem:[#allocation4 + $0x49]]
        %v3141 = vstv %s3140
        %v3142 = vmul.f32 %v3141, %v2765
        %v3143 = vmul.f32 %v3141, %v2766
        %v3144 = vmul.f32 %v3141, %v2767
        %v3148 = vrot.slane %v3142, 2
        %v3149 = vrot.slane %v3143, 2
        %v3150 = vsel %vm590, %v3148, %v3149
        %v3151 = vrot.slane %v3144, 2
        %v3152 = vsel %vm590, %v3149, %v3151
        %v3155 = vadd.f32 %v3075, %v3150
        %v3156 = vadd.f32 %v3076, %v3152
        %s3157 = sld [smem:[#allocation4 + $0x6d]]
        %v3158 = vstv %s3157
        %v3159 = vmul.f32 %v3158, %v2765
        %v3160 = vmul.f32 %v3158, %v2766
        %v3161 = vmul.f32 %v3158, %v2767
        %v3165 = vrot.slane %v3159, 2
        %v3166 = vrot.slane %v3160, 2
        %v3167 = vsel %vm590, %v3165, %v3166
        %v3168 = vrot.slane %v3161, 2
        %v3169 = vsel %vm590, %v3166, %v3168
        %v3172 = vadd.f32 %v3096, %v3167
        %v3173 = vadd.f32 %v3097, %v3169
        %s3174 = sld [smem:[#allocation4 + $0x91]]
        %v3175 = vstv %s3174
        %v3176 = vmul.f32 %v3175, %v2765
        %v3177 = vmul.f32 %v3175, %v2766
        %v3178 = vmul.f32 %v3175, %v2767
        %v3182 = vrot.slane %v3176, 2
        %v3183 = vrot.slane %v3177, 2
        %v3184 = vsel %vm590, %v3182, %v3183
        %v3185 = vrot.slane %v3178, 2
        %v3186 = vsel %vm590, %v3183, %v3185
        %v3189 = vadd.f32 %v3117, %v3184
        %v3190 = vadd.f32 %v3118, %v3186
        %s3191 = sld [smem:[#allocation4 + $0xb5]]
        %v3192 = vstv %s3191
        %v3193 = vmul.f32 %v3192, %v2765
        %v3194 = vmul.f32 %v3192, %v2766
        %v3195 = vmul.f32 %v3192, %v2767
        %v3199 = vrot.slane %v3193, 2
        %v3200 = vrot.slane %v3194, 2
        %v3201 = vsel %vm590, %v3199, %v3200
        %v3202 = vrot.slane %v3195, 2
        %v3203 = vsel %vm590, %v3200, %v3202
        %v3206 = vadd.f32 %v3138, %v3201
        %v3207 = vadd.f32 %v3139, %v3203
        %s3208 = sld [smem:[#allocation4 + $0x4a]]
        %v3209 = vstv %s3208
        %v3210 = vmul.f32 %v3209, %v2765
        %v3211 = vmul.f32 %v3209, %v2766
        %v3212 = vmul.f32 %v3209, %v2767
        %v3216 = vrot.slane %v3210, 2
        %v3217 = vrot.slane %v3211, 2
        %v3218 = vsel %vm590, %v3216, %v3217
        %v3219 = vrot.slane %v3212, 2
        %v3220 = vsel %vm590, %v3217, %v3219
        %3221 = vrot.lane.b32.xlu0 %v3218, 127
        %v3222 = vpop.permute.xlu0 %3221
        %3223 = vrot.lane.b32.xlu0 %v3220, 127
        %v3224 = vpop.permute.xlu0 %3223
        %v3227 = vadd.f32 %v3155, %v3222
        %v3228 = vadd.f32 %v3156, %v3224
        %s3229 = sld [smem:[#allocation4 + $0x6e]]
        %v3230 = vstv %s3229
        %v3231 = vmul.f32 %v3230, %v2765
        %v3232 = vmul.f32 %v3230, %v2766
        %v3233 = vmul.f32 %v3230, %v2767
        %v3237 = vrot.slane %v3231, 2
        %v3238 = vrot.slane %v3232, 2
        %v3239 = vsel %vm590, %v3237, %v3238
        %v3240 = vrot.slane %v3233, 2
        %v3241 = vsel %vm590, %v3238, %v3240
        %3242 = vrot.lane.b32.xlu0 %v3239, 127
        %v3243 = vpop.permute.xlu0 %3242
        %3244 = vrot.lane.b32.xlu0 %v3241, 127
        %v3245 = vpop.permute.xlu0 %3244
        %v3248 = vadd.f32 %v3172, %v3243
        %v3249 = vadd.f32 %v3173, %v3245
        %s3250 = sld [smem:[#allocation4 + $0x92]]
        %v3251 = vstv %s3250
        %v3252 = vmul.f32 %v3251, %v2765
        %v3253 = vmul.f32 %v3251, %v2766
        %v3254 = vmul.f32 %v3251, %v2767
        %v3258 = vrot.slane %v3252, 2
        %v3259 = vrot.slane %v3253, 2
        %v3260 = vsel %vm590, %v3258, %v3259
        %v3261 = vrot.slane %v3254, 2
        %v3262 = vsel %vm590, %v3259, %v3261
        %3263 = vrot.lane.b32.xlu0 %v3260, 127
        %v3264 = vpop.permute.xlu0 %3263
        %3265 = vrot.lane.b32.xlu0 %v3262, 127
        %v3266 = vpop.permute.xlu0 %3265
        %v3269 = vadd.f32 %v3189, %v3264
        %v3270 = vadd.f32 %v3190, %v3266
        %s3271 = sld [smem:[#allocation4 + $0xb6]]
        %v3272 = vstv %s3271
        %v3273 = vmul.f32 %v3272, %v2765
        %v3274 = vmul.f32 %v3272, %v2766
        %v3275 = vmul.f32 %v3272, %v2767
        %v3279 = vrot.slane %v3273, 2
        %v3280 = vrot.slane %v3274, 2
        %v3281 = vsel %vm590, %v3279, %v3280
        %v3282 = vrot.slane %v3275, 2
        %v3283 = vsel %vm590, %v3280, %v3282
        %3284 = vrot.lane.b32.xlu0 %v3281, 127
        %v3285 = vpop.permute.xlu0 %3284
        %3286 = vrot.lane.b32.xlu0 %v3283, 127
        %v3287 = vpop.permute.xlu0 %3286
        %v3290 = vadd.f32 %v3206, %v3285
        %v3291 = vadd.f32 %v3207, %v3287
        %s3292 = sld [smem:[#allocation4 + $0x4b]]
        %v3293 = vstv %s3292
        %v3294 = vmul.f32 %v3293, %v2765
        %v3295 = vmul.f32 %v3293, %v2766
        %v3296 = vmul.f32 %v3293, %v2767
        %v3300 = vrot.slane %v3294, 2
        %v3301 = vrot.slane %v3295, 2
        %v3302 = vsel %vm590, %v3300, %v3301
        %v3303 = vrot.slane %v3296, 2
        %v3304 = vsel %vm590, %v3301, %v3303
        %3305 = vrot.lane.b32.xlu0 %v3302, 126
        %v3306 = vpop.permute.xlu0 %3305
        %3307 = vrot.lane.b32.xlu0 %v3304, 126
        %v3308 = vpop.permute.xlu0 %3307
        %v3311 = vadd.f32 %v3227, %v3306
        %v3312 = vadd.f32 %v3228, %v3308
        %s3313 = sld [smem:[#allocation4 + $0x6f]]
        %v3314 = vstv %s3313
        %v3315 = vmul.f32 %v3314, %v2765
        %v3316 = vmul.f32 %v3314, %v2766
        %v3317 = vmul.f32 %v3314, %v2767
        %v3321 = vrot.slane %v3315, 2
        %v3322 = vrot.slane %v3316, 2
        %v3323 = vsel %vm590, %v3321, %v3322
        %v3324 = vrot.slane %v3317, 2
        %v3325 = vsel %vm590, %v3322, %v3324
        %3326 = vrot.lane.b32.xlu0 %v3323, 126
        %v3327 = vpop.permute.xlu0 %3326
        %3328 = vrot.lane.b32.xlu0 %v3325, 126
        %v3329 = vpop.permute.xlu0 %3328
        %v3332 = vadd.f32 %v3248, %v3327
        %v3333 = vadd.f32 %v3249, %v3329
        %s3334 = sld [smem:[#allocation4 + $0x93]]
        %v3335 = vstv %s3334
        %v3336 = vmul.f32 %v3335, %v2765
        %v3337 = vmul.f32 %v3335, %v2766
        %v3338 = vmul.f32 %v3335, %v2767
        %v3342 = vrot.slane %v3336, 2
        %v3343 = vrot.slane %v3337, 2
        %v3344 = vsel %vm590, %v3342, %v3343
        %v3345 = vrot.slane %v3338, 2
        %v3346 = vsel %vm590, %v3343, %v3345
        %3347 = vrot.lane.b32.xlu0 %v3344, 126
        %v3348 = vpop.permute.xlu0 %3347
        %3349 = vrot.lane.b32.xlu0 %v3346, 126
        %v3350 = vpop.permute.xlu0 %3349
        %v3353 = vadd.f32 %v3269, %v3348
        %v3354 = vadd.f32 %v3270, %v3350
        %s3355 = sld [smem:[#allocation4 + $0xb7]]
        %v3356 = vstv %s3355
        %v3357 = vmul.f32 %v3356, %v2765
        %v3358 = vmul.f32 %v3356, %v2766
        %v3359 = vmul.f32 %v3356, %v2767
        %v3363 = vrot.slane %v3357, 2
        %v3364 = vrot.slane %v3358, 2
        %v3365 = vsel %vm590, %v3363, %v3364
        %v3366 = vrot.slane %v3359, 2
        %v3367 = vsel %vm590, %v3364, %v3366
        %3368 = vrot.lane.b32.xlu0 %v3365, 126
        %v3369 = vpop.permute.xlu0 %3368
        %3370 = vrot.lane.b32.xlu0 %v3367, 126
        %v3371 = vpop.permute.xlu0 %3370
        %v3374 = vadd.f32 %v3290, %v3369
        %v3375 = vadd.f32 %v3291, %v3371
        %3378 = vrot.lane.b32.xlu0 %v3311, 1
        %v3379 = vpop.permute.xlu0 %3378
        %3380 = vrot.lane.b32.xlu0 %v3312, 1
        %v3381 = vpop.permute.xlu0 %3380
        %v3384 = vsel %vm192, 0.0, %v3379
        %v3385 = vsel %vm192, 0.0, %v3381
        %v3386 = vsel %vm195, %v3384, 0.0
        %v3387 = vsel %vm195, %v3385, 0.0
        %v3390 = vrot.slane %v3386, 7
        %v3391 = vrot.slane %v3387, 7
        %v3392 = vsel %vm200, %v3390, %v3391
        %v3396 = vsel %vm200, 0.0, %v3390
        %v3397 = vsel %vm200, %v3391, 0.0
        %3398 = vst.msk [vmem:[#allocation3] sm:$0xff] %vm841, %v3396
        %3399 = vst.msk [vmem:[#allocation3 + $0x8] sm:$0xff] %vm841, %v3392
        %3400 = vst.msk [vmem:[#allocation3 + $0x10] sm:$0x3] %vm844, %v3397
        %3403 = vrot.lane.b32.xlu0 %v3332, 1
        %v3404 = vpop.permute.xlu0 %3403
        %3405 = vrot.lane.b32.xlu0 %v3333, 1
        %v3406 = vpop.permute.xlu0 %3405
        %v3409 = vsel %vm192, 0.0, %v3404
        %v3410 = vsel %vm192, 0.0, %v3406
        %v3411 = vsel %vm195, %v3409, 0.0
        %v3412 = vsel %vm195, %v3410, 0.0
        %v3415 = vrot.slane %v3411, 7
        %v3416 = vrot.slane %v3412, 7
        %v3417 = vsel %vm200, %v3415, %v3416
        %v3421 = vsel %vm200, 0.0, %v3415
        %v3422 = vsel %vm200, %v3416, 0.0
        %s3423 = scalar_lea.vmem [#allocation3], 24
        %3424 = vst.msk [vmem:[%s3423] sm:$0xff] %vm841, %v3421
        %3425 = vst.msk [vmem:[%s3423 + $0x8] sm:$0xff] %vm841, %v3417
        %3426 = vst.msk [vmem:[%s3423 + $0x10] sm:$0x3] %vm844, %v3422
        %3429 = vrot.lane.b32.xlu0 %v3353, 1
        %v3430 = vpop.permute.xlu0 %3429
        %3431 = vrot.lane.b32.xlu0 %v3354, 1
        %v3432 = vpop.permute.xlu0 %3431
        %v3435 = vsel %vm192, 0.0, %v3430
        %v3436 = vsel %vm192, 0.0, %v3432
        %v3437 = vsel %vm195, %v3435, 0.0
        %v3438 = vsel %vm195, %v3436, 0.0
        %v3441 = vrot.slane %v3437, 7
        %v3442 = vrot.slane %v3438, 7
        %v3443 = vsel %vm200, %v3441, %v3442
        %v3447 = vsel %vm200, 0.0, %v3441
        %v3448 = vsel %vm200, %v3442, 0.0
        %s3449 = scalar_lea.vmem [#allocation3], 48
        %3450 = vst.msk [vmem:[%s3449] sm:$0xff] %vm841, %v3447
        %3451 = vst.msk [vmem:[%s3449 + $0x8] sm:$0xff] %vm841, %v3443
        %3452 = vst.msk [vmem:[%s3449 + $0x10] sm:$0x3] %vm844, %v3448
        %3455 = vrot.lane.b32.xlu0 %v3374, 1
        %v3456 = vpop.permute.xlu0 %3455
        %3457 = vrot.lane.b32.xlu0 %v3375, 1
        %v3458 = vpop.permute.xlu0 %3457
        %v3461 = vsel %vm192, 0.0, %v3456
        %v3462 = vsel %vm192, 0.0, %v3458
        %v3463 = vsel %vm195, %v3461, 0.0
        %v3464 = vsel %vm195, %v3462, 0.0
        %v3467 = vrot.slane %v3463, 7
        %v3468 = vrot.slane %v3464, 7
        %v3469 = vsel %vm200, %v3467, %v3468
        %v3473 = vsel %vm200, 0.0, %v3467
        %v3474 = vsel %vm200, %v3468, 0.0
        %s3475 = scalar_lea.vmem [#allocation3], 72
        %3476 = vst.msk [vmem:[%s3475] sm:$0xff] %vm841, %v3473
        %3477 = vst.msk [vmem:[%s3475 + $0x8] sm:$0xff] %vm841, %v3469
        %3478 = vst.msk [vmem:[%s3475 + $0x10] sm:$0x3] %vm844, %v3474
        %s3479 = sld [smem:[#allocation4 + $0x14c]]
        %v3480 = vstv %s3479
        %s3481 = sld [smem:[#allocation4 + $0x14d]]
        %v3482 = vstv %s3481
        %s3483 = sld [smem:[#allocation4 + $0x14e]]
        %v3484 = vstv %s3483
        %s3485 = sld [smem:[#allocation4 + $0x14f]]
        %v3486 = vstv %s3485
        %v3487 = vld [vmem:[#allocation3] sm:$0xff]
        %v3488 = vld [vmem:[#allocation3 + $0x8] sm:$0xff]
        %v3489 = vld [vmem:[#allocation3 + $0x10] sm:$0x3]
        %s3490 = sld [smem:[#allocation4 + $0xbc]]
        %v3491 = vstv %s3490
        %v3492 = vmul.f32 %v3491, %v3487
        %v3493 = vmul.f32 %v3491, %v3488
        %v3494 = vadd.f32 %v3480, %v3492
        %v3495 = vadd.f32 %v3480, %v3493
        %s3496 = sld [smem:[#allocation4 + $0xe0]]
        %v3497 = vstv %s3496
        %v3498 = vmul.f32 %v3497, %v3487
        %v3499 = vmul.f32 %v3497, %v3488
        %v3500 = vadd.f32 %v3482, %v3498
        %v3501 = vadd.f32 %v3482, %v3499
        %s3502 = sld [smem:[#allocation4 + $0x104]]
        %v3503 = vstv %s3502
        %v3504 = vmul.f32 %v3503, %v3487
        %v3505 = vmul.f32 %v3503, %v3488
        %v3506 = vadd.f32 %v3484, %v3504
        %v3507 = vadd.f32 %v3484, %v3505
        %s3508 = sld [smem:[#allocation4 + $0x128]]
        %v3509 = vstv %s3508
        %v3510 = vmul.f32 %v3509, %v3487
        %v3511 = vmul.f32 %v3509, %v3488
        %v3512 = vadd.f32 %v3486, %v3510
        %v3513 = vadd.f32 %v3486, %v3511
        %s3514 = sld [smem:[#allocation4 + $0xbd]]
        %v3515 = vstv %s3514
        %v3516 = vmul.f32 %v3515, %v3487
        %v3517 = vmul.f32 %v3515, %v3488
        %3520 = vrot.lane.b32.xlu0 %v3516, 127
        %v3521 = vpop.permute.xlu0 %3520
        %3522 = vrot.lane.b32.xlu0 %v3517, 127
        %v3523 = vpop.permute.xlu0 %3522
        %v3526 = vadd.f32 %v3494, %v3521
        %v3527 = vadd.f32 %v3495, %v3523
        %s3528 = sld [smem:[#allocation4 + $0xe1]]
        %v3529 = vstv %s3528
        %v3530 = vmul.f32 %v3529, %v3487
        %v3531 = vmul.f32 %v3529, %v3488
        %3534 = vrot.lane.b32.xlu0 %v3530, 127
        %v3535 = vpop.permute.xlu0 %3534
        %3536 = vrot.lane.b32.xlu0 %v3531, 127
        %v3537 = vpop.permute.xlu0 %3536
        %v3540 = vadd.f32 %v3500, %v3535
        %v3541 = vadd.f32 %v3501, %v3537
        %s3542 = sld [smem:[#allocation4 + $0x105]]
        %v3543 = vstv %s3542
        %v3544 = vmul.f32 %v3543, %v3487
        %v3545 = vmul.f32 %v3543, %v3488
        %3548 = vrot.lane.b32.xlu0 %v3544, 127
        %v3549 = vpop.permute.xlu0 %3548
        %3550 = vrot.lane.b32.xlu0 %v3545, 127
        %v3551 = vpop.permute.xlu0 %3550
        %v3554 = vadd.f32 %v3506, %v3549
        %v3555 = vadd.f32 %v3507, %v3551
        %s3556 = sld [smem:[#allocation4 + $0x129]]
        %v3557 = vstv %s3556
        %v3558 = vmul.f32 %v3557, %v3487
        %v3559 = vmul.f32 %v3557, %v3488
        %3562 = vrot.lane.b32.xlu0 %v3558, 127
        %v3563 = vpop.permute.xlu0 %3562
        %3564 = vrot.lane.b32.xlu0 %v3559, 127
        %v3565 = vpop.permute.xlu0 %3564
        %v3568 = vadd.f32 %v3512, %v3563
        %v3569 = vadd.f32 %v3513, %v3565
        %s3570 = sld [smem:[#allocation4 + $0xbe]]
        %v3571 = vstv %s3570
        %v3572 = vmul.f32 %v3571, %v3487
        %v3573 = vmul.f32 %v3571, %v3488
        %3576 = vrot.lane.b32.xlu0 %v3572, 126
        %v3577 = vpop.permute.xlu0 %3576
        %3578 = vrot.lane.b32.xlu0 %v3573, 126
        %v3579 = vpop.permute.xlu0 %3578
        %v3582 = vadd.f32 %v3526, %v3577
        %v3583 = vadd.f32 %v3527, %v3579
        %s3584 = sld [smem:[#allocation4 + $0xe2]]
        %v3585 = vstv %s3584
        %v3586 = vmul.f32 %v3585, %v3487
        %v3587 = vmul.f32 %v3585, %v3488
        %3590 = vrot.lane.b32.xlu0 %v3586, 126
        %v3591 = vpop.permute.xlu0 %3590
        %3592 = vrot.lane.b32.xlu0 %v3587, 126
        %v3593 = vpop.permute.xlu0 %3592
        %v3596 = vadd.f32 %v3540, %v3591
        %v3597 = vadd.f32 %v3541, %v3593
        %s3598 = sld [smem:[#allocation4 + $0x106]]
        %v3599 = vstv %s3598
        %v3600 = vmul.f32 %v3599, %v3487
        %v3601 = vmul.f32 %v3599, %v3488
        %3604 = vrot.lane.b32.xlu0 %v3600, 126
        %v3605 = vpop.permute.xlu0 %3604
        %3606 = vrot.lane.b32.xlu0 %v3601, 126
        %v3607 = vpop.permute.xlu0 %3606
        %v3610 = vadd.f32 %v3554, %v3605
        %v3611 = vadd.f32 %v3555, %v3607
        %s3612 = sld [smem:[#allocation4 + $0x12a]]
        %v3613 = vstv %s3612
        %v3614 = vmul.f32 %v3613, %v3487
        %v3615 = vmul.f32 %v3613, %v3488
        %3618 = vrot.lane.b32.xlu0 %v3614, 126
        %v3619 = vpop.permute.xlu0 %3618
        %3620 = vrot.lane.b32.xlu0 %v3615, 126
        %v3621 = vpop.permute.xlu0 %3620
        %v3624 = vadd.f32 %v3568, %v3619
        %v3625 = vadd.f32 %v3569, %v3621
        %s3626 = sld [smem:[#allocation4 + $0xbf]]
        %v3627 = vstv %s3626
        %v3628 = vmul.f32 %v3627, %v3487
        %v3629 = vmul.f32 %v3627, %v3488
        %v3630 = vmul.f32 %v3627, %v3489
        %v3634 = vrot.slane %v3628, 1
        %v3635 = vrot.slane %v3629, 1
        %v3636 = vsel %vm353, %v3634, %v3635
        %v3637 = vrot.slane %v3630, 1
        %v3638 = vsel %vm353, %v3635, %v3637
        %v3641 = vadd.f32 %v3582, %v3636
        %v3642 = vadd.f32 %v3583, %v3638
        %s3643 = sld [smem:[#allocation4 + $0xe3]]
        %v3644 = vstv %s3643
        %v3645 = vmul.f32 %v3644, %v3487
        %v3646 = vmul.f32 %v3644, %v3488
        %v3647 = vmul.f32 %v3644, %v3489
        %v3651 = vrot.slane %v3645, 1
        %v3652 = vrot.slane %v3646, 1
        %v3653 = vsel %vm353, %v3651, %v3652
        %v3654 = vrot.slane %v3647, 1
        %v3655 = vsel %vm353, %v3652, %v3654
        %v3658 = vadd.f32 %v3596, %v3653
        %v3659 = vadd.f32 %v3597, %v3655
        %s3660 = sld [smem:[#allocation4 + $0x107]]
        %v3661 = vstv %s3660
        %v3662 = vmul.f32 %v3661, %v3487
        %v3663 = vmul.f32 %v3661, %v3488
        %v3664 = vmul.f32 %v3661, %v3489
        %v3668 = vrot.slane %v3662, 1
        %v3669 = vrot.slane %v3663, 1
        %v3670 = vsel %vm353, %v3668, %v3669
        %v3671 = vrot.slane %v3664, 1
        %v3672 = vsel %vm353, %v3669, %v3671
        %v3675 = vadd.f32 %v3610, %v3670
        %v3676 = vadd.f32 %v3611, %v3672
        %s3677 = sld [smem:[#allocation4 + $0x12b]]
        %v3678 = vstv %s3677
        %v3679 = vmul.f32 %v3678, %v3487
        %v3680 = vmul.f32 %v3678, %v3488
        %v3681 = vmul.f32 %v3678, %v3489
        %v3685 = vrot.slane %v3679, 1
        %v3686 = vrot.slane %v3680, 1
        %v3687 = vsel %vm353, %v3685, %v3686
        %v3688 = vrot.slane %v3681, 1
        %v3689 = vsel %vm353, %v3686, %v3688
        %v3692 = vadd.f32 %v3624, %v3687
        %v3693 = vadd.f32 %v3625, %v3689
        %s3694 = sld [smem:[#allocation4 + $0xc0]]
        %v3695 = vstv %s3694
        %v3696 = vmul.f32 %v3695, %v3487
        %v3697 = vmul.f32 %v3695, %v3488
        %v3698 = vmul.f32 %v3695, %v3489
        %v3702 = vrot.slane %v3696, 1
        %v3703 = vrot.slane %v3697, 1
        %v3704 = vsel %vm353, %v3702, %v3703
        %v3705 = vrot.slane %v3698, 1
        %v3706 = vsel %vm353, %v3703, %v3705
        %3707 = vrot.lane.b32.xlu0 %v3704, 127
        %v3708 = vpop.permute.xlu0 %3707
        %3709 = vrot.lane.b32.xlu0 %v3706, 127
        %v3710 = vpop.permute.xlu0 %3709
        %v3713 = vadd.f32 %v3641, %v3708
        %v3714 = vadd.f32 %v3642, %v3710
        %s3715 = sld [smem:[#allocation4 + $0xe4]]
        %v3716 = vstv %s3715
        %v3717 = vmul.f32 %v3716, %v3487
        %v3718 = vmul.f32 %v3716, %v3488
        %v3719 = vmul.f32 %v3716, %v3489
        %v3723 = vrot.slane %v3717, 1
        %v3724 = vrot.slane %v3718, 1
        %v3725 = vsel %vm353, %v3723, %v3724
        %v3726 = vrot.slane %v3719, 1
        %v3727 = vsel %vm353, %v3724, %v3726
        %3728 = vrot.lane.b32.xlu0 %v3725, 127
        %v3729 = vpop.permute.xlu0 %3728
        %3730 = vrot.lane.b32.xlu0 %v3727, 127
        %v3731 = vpop.permute.xlu0 %3730
        %v3734 = vadd.f32 %v3658, %v3729
        %v3735 = vadd.f32 %v3659, %v3731
        %s3736 = sld [smem:[#allocation4 + $0x108]]
        %v3737 = vstv %s3736
        %v3738 = vmul.f32 %v3737, %v3487
        %v3739 = vmul.f32 %v3737, %v3488
        %v3740 = vmul.f32 %v3737, %v3489
        %v3744 = vrot.slane %v3738, 1
        %v3745 = vrot.slane %v3739, 1
        %v3746 = vsel %vm353, %v3744, %v3745
        %v3747 = vrot.slane %v3740, 1
        %v3748 = vsel %vm353, %v3745, %v3747
        %3749 = vrot.lane.b32.xlu0 %v3746, 127
        %v3750 = vpop.permute.xlu0 %3749
        %3751 = vrot.lane.b32.xlu0 %v3748, 127
        %v3752 = vpop.permute.xlu0 %3751
        %v3755 = vadd.f32 %v3675, %v3750
        %v3756 = vadd.f32 %v3676, %v3752
        %s3757 = sld [smem:[#allocation4 + $0x12c]]
        %v3758 = vstv %s3757
        %v3759 = vmul.f32 %v3758, %v3487
        %v3760 = vmul.f32 %v3758, %v3488
        %v3761 = vmul.f32 %v3758, %v3489
        %v3765 = vrot.slane %v3759, 1
        %v3766 = vrot.slane %v3760, 1
        %v3767 = vsel %vm353, %v3765, %v3766
        %v3768 = vrot.slane %v3761, 1
        %v3769 = vsel %vm353, %v3766, %v3768
        %3770 = vrot.lane.b32.xlu0 %v3767, 127
        %v3771 = vpop.permute.xlu0 %3770
        %3772 = vrot.lane.b32.xlu0 %v3769, 127
        %v3773 = vpop.permute.xlu0 %3772
        %v3776 = vadd.f32 %v3692, %v3771
        %v3777 = vadd.f32 %v3693, %v3773
        %s3778 = sld [smem:[#allocation4 + $0xc1]]
        %v3779 = vstv %s3778
        %v3780 = vmul.f32 %v3779, %v3487
        %v3781 = vmul.f32 %v3779, %v3488
        %v3782 = vmul.f32 %v3779, %v3489
        %v3786 = vrot.slane %v3780, 1
        %v3787 = vrot.slane %v3781, 1
        %v3788 = vsel %vm353, %v3786, %v3787
        %v3789 = vrot.slane %v3782, 1
        %v3790 = vsel %vm353, %v3787, %v3789
        %3791 = vrot.lane.b32.xlu0 %v3788, 126
        %v3792 = vpop.permute.xlu0 %3791
        %3793 = vrot.lane.b32.xlu0 %v3790, 126
        %v3794 = vpop.permute.xlu0 %3793
        %v3797 = vadd.f32 %v3713, %v3792
        %v3798 = vadd.f32 %v3714, %v3794
        %s3799 = sld [smem:[#allocation4 + $0xe5]]
        %v3800 = vstv %s3799
        %v3801 = vmul.f32 %v3800, %v3487
        %v3802 = vmul.f32 %v3800, %v3488
        %v3803 = vmul.f32 %v3800, %v3489
        %v3807 = vrot.slane %v3801, 1
        %v3808 = vrot.slane %v3802, 1
        %v3809 = vsel %vm353, %v3807, %v3808
        %v3810 = vrot.slane %v3803, 1
        %v3811 = vsel %vm353, %v3808, %v3810
        %3812 = vrot.lane.b32.xlu0 %v3809, 126
        %v3813 = vpop.permute.xlu0 %3812
        %3814 = vrot.lane.b32.xlu0 %v3811, 126
        %v3815 = vpop.permute.xlu0 %3814
        %v3818 = vadd.f32 %v3734, %v3813
        %v3819 = vadd.f32 %v3735, %v3815
        %s3820 = sld [smem:[#allocation4 + $0x109]]
        %v3821 = vstv %s3820
        %v3822 = vmul.f32 %v3821, %v3487
        %v3823 = vmul.f32 %v3821, %v3488
        %v3824 = vmul.f32 %v3821, %v3489
        %v3828 = vrot.slane %v3822, 1
        %v3829 = vrot.slane %v3823, 1
        %v3830 = vsel %vm353, %v3828, %v3829
        %v3831 = vrot.slane %v3824, 1
        %v3832 = vsel %vm353, %v3829, %v3831
        %3833 = vrot.lane.b32.xlu0 %v3830, 126
        %v3834 = vpop.permute.xlu0 %3833
        %3835 = vrot.lane.b32.xlu0 %v3832, 126
        %v3836 = vpop.permute.xlu0 %3835
        %v3839 = vadd.f32 %v3755, %v3834
        %v3840 = vadd.f32 %v3756, %v3836
        %s3841 = sld [smem:[#allocation4 + $0x12d]]
        %v3842 = vstv %s3841
        %v3843 = vmul.f32 %v3842, %v3487
        %v3844 = vmul.f32 %v3842, %v3488
        %v3845 = vmul.f32 %v3842, %v3489
        %v3849 = vrot.slane %v3843, 1
        %v3850 = vrot.slane %v3844, 1
        %v3851 = vsel %vm353, %v3849, %v3850
        %v3852 = vrot.slane %v3845, 1
        %v3853 = vsel %vm353, %v3850, %v3852
        %3854 = vrot.lane.b32.xlu0 %v3851, 126
        %v3855 = vpop.permute.xlu0 %3854
        %3856 = vrot.lane.b32.xlu0 %v3853, 126
        %v3857 = vpop.permute.xlu0 %3856
        %v3860 = vadd.f32 %v3776, %v3855
        %v3861 = vadd.f32 %v3777, %v3857
        %s3862 = sld [smem:[#allocation4 + $0xc2]]
        %v3863 = vstv %s3862
        %v3864 = vmul.f32 %v3863, %v3487
        %v3865 = vmul.f32 %v3863, %v3488
        %v3866 = vmul.f32 %v3863, %v3489
        %v3870 = vrot.slane %v3864, 2
        %v3871 = vrot.slane %v3865, 2
        %v3872 = vsel %vm590, %v3870, %v3871
        %v3873 = vrot.slane %v3866, 2
        %v3874 = vsel %vm590, %v3871, %v3873
        %v3877 = vadd.f32 %v3797, %v3872
        %v3878 = vadd.f32 %v3798, %v3874
        %s3879 = sld [smem:[#allocation4 + $0xe6]]
        %v3880 = vstv %s3879
        %v3881 = vmul.f32 %v3880, %v3487
        %v3882 = vmul.f32 %v3880, %v3488
        %v3883 = vmul.f32 %v3880, %v3489
        %v3887 = vrot.slane %v3881, 2
        %v3888 = vrot.slane %v3882, 2
        %v3889 = vsel %vm590, %v3887, %v3888
        %v3890 = vrot.slane %v3883, 2
        %v3891 = vsel %vm590, %v3888, %v3890
        %v3894 = vadd.f32 %v3818, %v3889
        %v3895 = vadd.f32 %v3819, %v3891
        %s3896 = sld [smem:[#allocation4 + $0x10a]]
        %v3897 = vstv %s3896
        %v3898 = vmul.f32 %v3897, %v3487
        %v3899 = vmul.f32 %v3897, %v3488
        %v3900 = vmul.f32 %v3897, %v3489
        %v3904 = vrot.slane %v3898, 2
        %v3905 = vrot.slane %v3899, 2
        %v3906 = vsel %vm590, %v3904, %v3905
        %v3907 = vrot.slane %v3900, 2
        %v3908 = vsel %vm590, %v3905, %v3907
        %v3911 = vadd.f32 %v3839, %v3906
        %v3912 = vadd.f32 %v3840, %v3908
        %s3913 = sld [smem:[#allocation4 + $0x12e]]
        %v3914 = vstv %s3913
        %v3915 = vmul.f32 %v3914, %v3487
        %v3916 = vmul.f32 %v3914, %v3488
        %v3917 = vmul.f32 %v3914, %v3489
        %v3921 = vrot.slane %v3915, 2
        %v3922 = vrot.slane %v3916, 2
        %v3923 = vsel %vm590, %v3921, %v3922
        %v3924 = vrot.slane %v3917, 2
        %v3925 = vsel %vm590, %v3922, %v3924
        %v3928 = vadd.f32 %v3860, %v3923
        %v3929 = vadd.f32 %v3861, %v3925
        %s3930 = sld [smem:[#allocation4 + $0xc3]]
        %v3931 = vstv %s3930
        %v3932 = vmul.f32 %v3931, %v3487
        %v3933 = vmul.f32 %v3931, %v3488
        %v3934 = vmul.f32 %v3931, %v3489
        %v3938 = vrot.slane %v3932, 2
        %v3939 = vrot.slane %v3933, 2
        %v3940 = vsel %vm590, %v3938, %v3939
        %v3941 = vrot.slane %v3934, 2
        %v3942 = vsel %vm590, %v3939, %v3941
        %3943 = vrot.lane.b32.xlu0 %v3940, 127
        %v3944 = vpop.permute.xlu0 %3943
        %3945 = vrot.lane.b32.xlu0 %v3942, 127
        %v3946 = vpop.permute.xlu0 %3945
        %v3949 = vadd.f32 %v3877, %v3944
        %v3950 = vadd.f32 %v3878, %v3946
        %s3951 = sld [smem:[#allocation4 + $0xe7]]
        %v3952 = vstv %s3951
        %v3953 = vmul.f32 %v3952, %v3487
        %v3954 = vmul.f32 %v3952, %v3488
        %v3955 = vmul.f32 %v3952, %v3489
        %v3959 = vrot.slane %v3953, 2
        %v3960 = vrot.slane %v3954, 2
        %v3961 = vsel %vm590, %v3959, %v3960
        %v3962 = vrot.slane %v3955, 2
        %v3963 = vsel %vm590, %v3960, %v3962
        %3964 = vrot.lane.b32.xlu0 %v3961, 127
        %v3965 = vpop.permute.xlu0 %3964
        %3966 = vrot.lane.b32.xlu0 %v3963, 127
        %v3967 = vpop.permute.xlu0 %3966
        %v3970 = vadd.f32 %v3894, %v3965
        %v3971 = vadd.f32 %v3895, %v3967
        %s3972 = sld [smem:[#allocation4 + $0x10b]]
        %v3973 = vstv %s3972
        %v3974 = vmul.f32 %v3973, %v3487
        %v3975 = vmul.f32 %v3973, %v3488
        %v3976 = vmul.f32 %v3973, %v3489
        %v3980 = vrot.slane %v3974, 2
        %v3981 = vrot.slane %v3975, 2
        %v3982 = vsel %vm590, %v3980, %v3981
        %v3983 = vrot.slane %v3976, 2
        %v3984 = vsel %vm590, %v3981, %v3983
        %3985 = vrot.lane.b32.xlu0 %v3982, 127
        %v3986 = vpop.permute.xlu0 %3985
        %3987 = vrot.lane.b32.xlu0 %v3984, 127
        %v3988 = vpop.permute.xlu0 %3987
        %v3991 = vadd.f32 %v3911, %v3986
        %v3992 = vadd.f32 %v3912, %v3988
        %s3993 = sld [smem:[#allocation4 + $0x12f]]
        %v3994 = vstv %s3993
        %v3995 = vmul.f32 %v3994, %v3487
        %v3996 = vmul.f32 %v3994, %v3488
        %v3997 = vmul.f32 %v3994, %v3489
        %v4001 = vrot.slane %v3995, 2
        %v4002 = vrot.slane %v3996, 2
        %v4003 = vsel %vm590, %v4001, %v4002
        %v4004 = vrot.slane %v3997, 2
        %v4005 = vsel %vm590, %v4002, %v4004
        %4006 = vrot.lane.b32.xlu0 %v4003, 127
        %v4007 = vpop.permute.xlu0 %4006
        %4008 = vrot.lane.b32.xlu0 %v4005, 127
        %v4009 = vpop.permute.xlu0 %4008
        %v4012 = vadd.f32 %v3928, %v4007
        %v4013 = vadd.f32 %v3929, %v4009
        %s4014 = sld [smem:[#allocation4 + $0xc4]]
        %v4015 = vstv %s4014
        %v4016 = vmul.f32 %v4015, %v3487
        %v4017 = vmul.f32 %v4015, %v3488
        %v4018 = vmul.f32 %v4015, %v3489
        %v4022 = vrot.slane %v4016, 2
        %v4023 = vrot.slane %v4017, 2
        %v4024 = vsel %vm590, %v4022, %v4023
        %v4025 = vrot.slane %v4018, 2
        %v4026 = vsel %vm590, %v4023, %v4025
        %4027 = vrot.lane.b32.xlu0 %v4024, 126
        %v4028 = vpop.permute.xlu0 %4027
        %4029 = vrot.lane.b32.xlu0 %v4026, 126
        %v4030 = vpop.permute.xlu0 %4029
        %v4033 = vadd.f32 %v3949, %v4028
        %v4034 = vadd.f32 %v3950, %v4030
        %s4035 = sld [smem:[#allocation4 + $0xe8]]
        %v4036 = vstv %s4035
        %v4037 = vmul.f32 %v4036, %v3487
        %v4038 = vmul.f32 %v4036, %v3488
        %v4039 = vmul.f32 %v4036, %v3489
        %v4043 = vrot.slane %v4037, 2
        %v4044 = vrot.slane %v4038, 2
        %v4045 = vsel %vm590, %v4043, %v4044
        %v4046 = vrot.slane %v4039, 2
        %v4047 = vsel %vm590, %v4044, %v4046
        %4048 = vrot.lane.b32.xlu0 %v4045, 126
        %v4049 = vpop.permute.xlu0 %4048
        %4050 = vrot.lane.b32.xlu0 %v4047, 126
        %v4051 = vpop.permute.xlu0 %4050
        %v4054 = vadd.f32 %v3970, %v4049
        %v4055 = vadd.f32 %v3971, %v4051
        %s4056 = sld [smem:[#allocation4 + $0x10c]]
        %v4057 = vstv %s4056
        %v4058 = vmul.f32 %v4057, %v3487
        %v4059 = vmul.f32 %v4057, %v3488
        %v4060 = vmul.f32 %v4057, %v3489
        %v4064 = vrot.slane %v4058, 2
        %v4065 = vrot.slane %v4059, 2
        %v4066 = vsel %vm590, %v4064, %v4065
        %v4067 = vrot.slane %v4060, 2
        %v4068 = vsel %vm590, %v4065, %v4067
        %4069 = vrot.lane.b32.xlu0 %v4066, 126
        %v4070 = vpop.permute.xlu0 %4069
        %4071 = vrot.lane.b32.xlu0 %v4068, 126
        %v4072 = vpop.permute.xlu0 %4071
        %v4075 = vadd.f32 %v3991, %v4070
        %v4076 = vadd.f32 %v3992, %v4072
        %s4077 = sld [smem:[#allocation4 + $0x130]]
        %v4078 = vstv %s4077
        %v4079 = vmul.f32 %v4078, %v3487
        %v4080 = vmul.f32 %v4078, %v3488
        %v4081 = vmul.f32 %v4078, %v3489
        %v4085 = vrot.slane %v4079, 2
        %v4086 = vrot.slane %v4080, 2
        %v4087 = vsel %vm590, %v4085, %v4086
        %v4088 = vrot.slane %v4081, 2
        %v4089 = vsel %vm590, %v4086, %v4088
        %4090 = vrot.lane.b32.xlu0 %v4087, 126
        %v4091 = vpop.permute.xlu0 %4090
        %4092 = vrot.lane.b32.xlu0 %v4089, 126
        %v4093 = vpop.permute.xlu0 %4092
        %v4096 = vadd.f32 %v4012, %v4091
        %v4097 = vadd.f32 %v4013, %v4093
        %v4098 = vld [vmem:[%s3423] sm:$0xff]
        %v4099 = vld [vmem:[%s3423 + $0x8] sm:$0xff]
        %v4100 = vld [vmem:[%s3423 + $0x10] sm:$0x3]
        %s4101 = sld [smem:[#allocation4 + $0xc5]]
        %v4102 = vstv %s4101
        %v4103 = vmul.f32 %v4102, %v4098
        %v4104 = vmul.f32 %v4102, %v4099
        %v4105 = vadd.f32 %v4033, %v4103
        %v4106 = vadd.f32 %v4034, %v4104
        %s4107 = sld [smem:[#allocation4 + $0xe9]]
        %v4108 = vstv %s4107
        %v4109 = vmul.f32 %v4108, %v4098
        %v4110 = vmul.f32 %v4108, %v4099
        %v4111 = vadd.f32 %v4054, %v4109
        %v4112 = vadd.f32 %v4055, %v4110
        %s4113 = sld [smem:[#allocation4 + $0x10d]]
        %v4114 = vstv %s4113
        %v4115 = vmul.f32 %v4114, %v4098
        %v4116 = vmul.f32 %v4114, %v4099
        %v4117 = vadd.f32 %v4075, %v4115
        %v4118 = vadd.f32 %v4076, %v4116
        %s4119 = sld [smem:[#allocation4 + $0x131]]
        %v4120 = vstv %s4119
        %v4121 = vmul.f32 %v4120, %v4098
        %v4122 = vmul.f32 %v4120, %v4099
        %v4123 = vadd.f32 %v4096, %v4121
        %v4124 = vadd.f32 %v4097, %v4122
        %s4125 = sld [smem:[#allocation4 + $0xc6]]
        %v4126 = vstv %s4125
        %v4127 = vmul.f32 %v4126, %v4098
        %v4128 = vmul.f32 %v4126, %v4099
        %4131 = vrot.lane.b32.xlu0 %v4127, 127
        %v4132 = vpop.permute.xlu0 %4131
        %4133 = vrot.lane.b32.xlu0 %v4128, 127
        %v4134 = vpop.permute.xlu0 %4133
        %v4137 = vadd.f32 %v4105, %v4132
        %v4138 = vadd.f32 %v4106, %v4134
        %s4139 = sld [smem:[#allocation4 + $0xea]]
        %v4140 = vstv %s4139
        %v4141 = vmul.f32 %v4140, %v4098
        %v4142 = vmul.f32 %v4140, %v4099
        %4145 = vrot.lane.b32.xlu0 %v4141, 127
        %v4146 = vpop.permute.xlu0 %4145
        %4147 = vrot.lane.b32.xlu0 %v4142, 127
        %v4148 = vpop.permute.xlu0 %4147
        %v4151 = vadd.f32 %v4111, %v4146
        %v4152 = vadd.f32 %v4112, %v4148
        %s4153 = sld [smem:[#allocation4 + $0x10e]]
        %v4154 = vstv %s4153
        %v4155 = vmul.f32 %v4154, %v4098
        %v4156 = vmul.f32 %v4154, %v4099
        %4159 = vrot.lane.b32.xlu0 %v4155, 127
        %v4160 = vpop.permute.xlu0 %4159
        %4161 = vrot.lane.b32.xlu0 %v4156, 127
        %v4162 = vpop.permute.xlu0 %4161
        %v4165 = vadd.f32 %v4117, %v4160
        %v4166 = vadd.f32 %v4118, %v4162
        %s4167 = sld [smem:[#allocation4 + $0x132]]
        %v4168 = vstv %s4167
        %v4169 = vmul.f32 %v4168, %v4098
        %v4170 = vmul.f32 %v4168, %v4099
        %4173 = vrot.lane.b32.xlu0 %v4169, 127
        %v4174 = vpop.permute.xlu0 %4173
        %4175 = vrot.lane.b32.xlu0 %v4170, 127
        %v4176 = vpop.permute.xlu0 %4175
        %v4179 = vadd.f32 %v4123, %v4174
        %v4180 = vadd.f32 %v4124, %v4176
        %s4181 = sld [smem:[#allocation4 + $0xc7]]
        %v4182 = vstv %s4181
        %v4183 = vmul.f32 %v4182, %v4098
        %v4184 = vmul.f32 %v4182, %v4099
        %4187 = vrot.lane.b32.xlu0 %v4183, 126
        %v4188 = vpop.permute.xlu0 %4187
        %4189 = vrot.lane.b32.xlu0 %v4184, 126
        %v4190 = vpop.permute.xlu0 %4189
        %v4193 = vadd.f32 %v4137, %v4188
        %v4194 = vadd.f32 %v4138, %v4190
        %s4195 = sld [smem:[#allocation4 + $0xeb]]
        %v4196 = vstv %s4195
        %v4197 = vmul.f32 %v4196, %v4098
        %v4198 = vmul.f32 %v4196, %v4099
        %4201 = vrot.lane.b32.xlu0 %v4197, 126
        %v4202 = vpop.permute.xlu0 %4201
        %4203 = vrot.lane.b32.xlu0 %v4198, 126
        %v4204 = vpop.permute.xlu0 %4203
        %v4207 = vadd.f32 %v4151, %v4202
        %v4208 = vadd.f32 %v4152, %v4204
        %s4209 = sld [smem:[#allocation4 + $0x10f]]
        %v4210 = vstv %s4209
        %v4211 = vmul.f32 %v4210, %v4098
        %v4212 = vmul.f32 %v4210, %v4099
        %4215 = vrot.lane.b32.xlu0 %v4211, 126
        %v4216 = vpop.permute.xlu0 %4215
        %4217 = vrot.lane.b32.xlu0 %v4212, 126
        %v4218 = vpop.permute.xlu0 %4217
        %v4221 = vadd.f32 %v4165, %v4216
        %v4222 = vadd.f32 %v4166, %v4218
        %s4223 = sld [smem:[#allocation4 + $0x133]]
        %v4224 = vstv %s4223
        %v4225 = vmul.f32 %v4224, %v4098
        %v4226 = vmul.f32 %v4224, %v4099
        %4229 = vrot.lane.b32.xlu0 %v4225, 126
        %v4230 = vpop.permute.xlu0 %4229
        %4231 = vrot.lane.b32.xlu0 %v4226, 126
        %v4232 = vpop.permute.xlu0 %4231
        %v4235 = vadd.f32 %v4179, %v4230
        %v4236 = vadd.f32 %v4180, %v4232
        %s4237 = sld [smem:[#allocation4 + $0xc8]]
        %v4238 = vstv %s4237
        %v4239 = vmul.f32 %v4238, %v4098
        %v4240 = vmul.f32 %v4238, %v4099
        %v4241 = vmul.f32 %v4238, %v4100
        %v4245 = vrot.slane %v4239, 1
        %v4246 = vrot.slane %v4240, 1
        %v4247 = vsel %vm353, %v4245, %v4246
        %v4248 = vrot.slane %v4241, 1
        %v4249 = vsel %vm353, %v4246, %v4248
        %v4252 = vadd.f32 %v4193, %v4247
        %v4253 = vadd.f32 %v4194, %v4249
        %s4254 = sld [smem:[#allocation4 + $0xec]]
        %v4255 = vstv %s4254
        %v4256 = vmul.f32 %v4255, %v4098
        %v4257 = vmul.f32 %v4255, %v4099
        %v4258 = vmul.f32 %v4255, %v4100
        %v4262 = vrot.slane %v4256, 1
        %v4263 = vrot.slane %v4257, 1
        %v4264 = vsel %vm353, %v4262, %v4263
        %v4265 = vrot.slane %v4258, 1
        %v4266 = vsel %vm353, %v4263, %v4265
        %v4269 = vadd.f32 %v4207, %v4264
        %v4270 = vadd.f32 %v4208, %v4266
        %s4271 = sld [smem:[#allocation4 + $0x110]]
        %v4272 = vstv %s4271
        %v4273 = vmul.f32 %v4272, %v4098
        %v4274 = vmul.f32 %v4272, %v4099
        %v4275 = vmul.f32 %v4272, %v4100
        %v4279 = vrot.slane %v4273, 1
        %v4280 = vrot.slane %v4274, 1
        %v4281 = vsel %vm353, %v4279, %v4280
        %v4282 = vrot.slane %v4275, 1
        %v4283 = vsel %vm353, %v4280, %v4282
        %v4286 = vadd.f32 %v4221, %v4281
        %v4287 = vadd.f32 %v4222, %v4283
        %s4288 = sld [smem:[#allocation4 + $0x134]]
        %v4289 = vstv %s4288
        %v4290 = vmul.f32 %v4289, %v4098
        %v4291 = vmul.f32 %v4289, %v4099
        %v4292 = vmul.f32 %v4289, %v4100
        %v4296 = vrot.slane %v4290, 1
        %v4297 = vrot.slane %v4291, 1
        %v4298 = vsel %vm353, %v4296, %v4297
        %v4299 = vrot.slane %v4292, 1
        %v4300 = vsel %vm353, %v4297, %v4299
        %v4303 = vadd.f32 %v4235, %v4298
        %v4304 = vadd.f32 %v4236, %v4300
        %s4305 = sld [smem:[#allocation4 + $0xc9]]
        %v4306 = vstv %s4305
        %v4307 = vmul.f32 %v4306, %v4098
        %v4308 = vmul.f32 %v4306, %v4099
        %v4309 = vmul.f32 %v4306, %v4100
        %v4313 = vrot.slane %v4307, 1
        %v4314 = vrot.slane %v4308, 1
        %v4315 = vsel %vm353, %v4313, %v4314
        %v4316 = vrot.slane %v4309, 1
        %v4317 = vsel %vm353, %v4314, %v4316
        %4318 = vrot.lane.b32.xlu0 %v4315, 127
        %v4319 = vpop.permute.xlu0 %4318
        %4320 = vrot.lane.b32.xlu0 %v4317, 127
        %v4321 = vpop.permute.xlu0 %4320
        %v4324 = vadd.f32 %v4252, %v4319
        %v4325 = vadd.f32 %v4253, %v4321
        %s4326 = sld [smem:[#allocation4 + $0xed]]
        %v4327 = vstv %s4326
        %v4328 = vmul.f32 %v4327, %v4098
        %v4329 = vmul.f32 %v4327, %v4099
        %v4330 = vmul.f32 %v4327, %v4100
        %v4334 = vrot.slane %v4328, 1
        %v4335 = vrot.slane %v4329, 1
        %v4336 = vsel %vm353, %v4334, %v4335
        %v4337 = vrot.slane %v4330, 1
        %v4338 = vsel %vm353, %v4335, %v4337
        %4339 = vrot.lane.b32.xlu0 %v4336, 127
        %v4340 = vpop.permute.xlu0 %4339
        %4341 = vrot.lane.b32.xlu0 %v4338, 127
        %v4342 = vpop.permute.xlu0 %4341
        %v4345 = vadd.f32 %v4269, %v4340
        %v4346 = vadd.f32 %v4270, %v4342
        %s4347 = sld [smem:[#allocation4 + $0x111]]
        %v4348 = vstv %s4347
        %v4349 = vmul.f32 %v4348, %v4098
        %v4350 = vmul.f32 %v4348, %v4099
        %v4351 = vmul.f32 %v4348, %v4100
        %v4355 = vrot.slane %v4349, 1
        %v4356 = vrot.slane %v4350, 1
        %v4357 = vsel %vm353, %v4355, %v4356
        %v4358 = vrot.slane %v4351, 1
        %v4359 = vsel %vm353, %v4356, %v4358
        %4360 = vrot.lane.b32.xlu0 %v4357, 127
        %v4361 = vpop.permute.xlu0 %4360
        %4362 = vrot.lane.b32.xlu0 %v4359, 127
        %v4363 = vpop.permute.xlu0 %4362
        %v4366 = vadd.f32 %v4286, %v4361
        %v4367 = vadd.f32 %v4287, %v4363
        %s4368 = sld [smem:[#allocation4 + $0x135]]
        %v4369 = vstv %s4368
        %v4370 = vmul.f32 %v4369, %v4098
        %v4371 = vmul.f32 %v4369, %v4099
        %v4372 = vmul.f32 %v4369, %v4100
        %v4376 = vrot.slane %v4370, 1
        %v4377 = vrot.slane %v4371, 1
        %v4378 = vsel %vm353, %v4376, %v4377
        %v4379 = vrot.slane %v4372, 1
        %v4380 = vsel %vm353, %v4377, %v4379
        %4381 = vrot.lane.b32.xlu0 %v4378, 127
        %v4382 = vpop.permute.xlu0 %4381
        %4383 = vrot.lane.b32.xlu0 %v4380, 127
        %v4384 = vpop.permute.xlu0 %4383
        %v4387 = vadd.f32 %v4303, %v4382
        %v4388 = vadd.f32 %v4304, %v4384
        %s4389 = sld [smem:[#allocation4 + $0xca]]
        %v4390 = vstv %s4389
        %v4391 = vmul.f32 %v4390, %v4098
        %v4392 = vmul.f32 %v4390, %v4099
        %v4393 = vmul.f32 %v4390, %v4100
        %v4397 = vrot.slane %v4391, 1
        %v4398 = vrot.slane %v4392, 1
        %v4399 = vsel %vm353, %v4397, %v4398
        %v4400 = vrot.slane %v4393, 1
        %v4401 = vsel %vm353, %v4398, %v4400
        %4402 = vrot.lane.b32.xlu0 %v4399, 126
        %v4403 = vpop.permute.xlu0 %4402
        %4404 = vrot.lane.b32.xlu0 %v4401, 126
        %v4405 = vpop.permute.xlu0 %4404
        %v4408 = vadd.f32 %v4324, %v4403
        %v4409 = vadd.f32 %v4325, %v4405
        %s4410 = sld [smem:[#allocation4 + $0xee]]
        %v4411 = vstv %s4410
        %v4412 = vmul.f32 %v4411, %v4098
        %v4413 = vmul.f32 %v4411, %v4099
        %v4414 = vmul.f32 %v4411, %v4100
        %v4418 = vrot.slane %v4412, 1
        %v4419 = vrot.slane %v4413, 1
        %v4420 = vsel %vm353, %v4418, %v4419
        %v4421 = vrot.slane %v4414, 1
        %v4422 = vsel %vm353, %v4419, %v4421
        %4423 = vrot.lane.b32.xlu0 %v4420, 126
        %v4424 = vpop.permute.xlu0 %4423
        %4425 = vrot.lane.b32.xlu0 %v4422, 126
        %v4426 = vpop.permute.xlu0 %4425
        %v4429 = vadd.f32 %v4345, %v4424
        %v4430 = vadd.f32 %v4346, %v4426
        %s4431 = sld [smem:[#allocation4 + $0x112]]
        %v4432 = vstv %s4431
        %v4433 = vmul.f32 %v4432, %v4098
        %v4434 = vmul.f32 %v4432, %v4099
        %v4435 = vmul.f32 %v4432, %v4100
        %v4439 = vrot.slane %v4433, 1
        %v4440 = vrot.slane %v4434, 1
        %v4441 = vsel %vm353, %v4439, %v4440
        %v4442 = vrot.slane %v4435, 1
        %v4443 = vsel %vm353, %v4440, %v4442
        %4444 = vrot.lane.b32.xlu0 %v4441, 126
        %v4445 = vpop.permute.xlu0 %4444
        %4446 = vrot.lane.b32.xlu0 %v4443, 126
        %v4447 = vpop.permute.xlu0 %4446
        %v4450 = vadd.f32 %v4366, %v4445
        %v4451 = vadd.f32 %v4367, %v4447
        %s4452 = sld [smem:[#allocation4 + $0x136]]
        %v4453 = vstv %s4452
        %v4454 = vmul.f32 %v4453, %v4098
        %v4455 = vmul.f32 %v4453, %v4099
        %v4456 = vmul.f32 %v4453, %v4100
        %v4460 = vrot.slane %v4454, 1
        %v4461 = vrot.slane %v4455, 1
        %v4462 = vsel %vm353, %v4460, %v4461
        %v4463 = vrot.slane %v4456, 1
        %v4464 = vsel %vm353, %v4461, %v4463
        %4465 = vrot.lane.b32.xlu0 %v4462, 126
        %v4466 = vpop.permute.xlu0 %4465
        %4467 = vrot.lane.b32.xlu0 %v4464, 126
        %v4468 = vpop.permute.xlu0 %4467
        %v4471 = vadd.f32 %v4387, %v4466
        %v4472 = vadd.f32 %v4388, %v4468
        %s4473 = sld [smem:[#allocation4 + $0xcb]]
        %v4474 = vstv %s4473
        %v4475 = vmul.f32 %v4474, %v4098
        %v4476 = vmul.f32 %v4474, %v4099
        %v4477 = vmul.f32 %v4474, %v4100
        %v4481 = vrot.slane %v4475, 2
        %v4482 = vrot.slane %v4476, 2
        %v4483 = vsel %vm590, %v4481, %v4482
        %v4484 = vrot.slane %v4477, 2
        %v4485 = vsel %vm590, %v4482, %v4484
        %v4488 = vadd.f32 %v4408, %v4483
        %v4489 = vadd.f32 %v4409, %v4485
        %s4490 = sld [smem:[#allocation4 + $0xef]]
        %v4491 = vstv %s4490
        %v4492 = vmul.f32 %v4491, %v4098
        %v4493 = vmul.f32 %v4491, %v4099
        %v4494 = vmul.f32 %v4491, %v4100
        %v4498 = vrot.slane %v4492, 2
        %v4499 = vrot.slane %v4493, 2
        %v4500 = vsel %vm590, %v4498, %v4499
        %v4501 = vrot.slane %v4494, 2
        %v4502 = vsel %vm590, %v4499, %v4501
        %v4505 = vadd.f32 %v4429, %v4500
        %v4506 = vadd.f32 %v4430, %v4502
        %s4507 = sld [smem:[#allocation4 + $0x113]]
        %v4508 = vstv %s4507
        %v4509 = vmul.f32 %v4508, %v4098
        %v4510 = vmul.f32 %v4508, %v4099
        %v4511 = vmul.f32 %v4508, %v4100
        %v4515 = vrot.slane %v4509, 2
        %v4516 = vrot.slane %v4510, 2
        %v4517 = vsel %vm590, %v4515, %v4516
        %v4518 = vrot.slane %v4511, 2
        %v4519 = vsel %vm590, %v4516, %v4518
        %v4522 = vadd.f32 %v4450, %v4517
        %v4523 = vadd.f32 %v4451, %v4519
        %s4524 = sld [smem:[#allocation4 + $0x137]]
        %v4525 = vstv %s4524
        %v4526 = vmul.f32 %v4525, %v4098
        %v4527 = vmul.f32 %v4525, %v4099
        %v4528 = vmul.f32 %v4525, %v4100
        %v4532 = vrot.slane %v4526, 2
        %v4533 = vrot.slane %v4527, 2
        %v4534 = vsel %vm590, %v4532, %v4533
        %v4535 = vrot.slane %v4528, 2
        %v4536 = vsel %vm590, %v4533, %v4535
        %v4539 = vadd.f32 %v4471, %v4534
        %v4540 = vadd.f32 %v4472, %v4536
        %s4541 = sld [smem:[#allocation4 + $0xcc]]
        %v4542 = vstv %s4541
        %v4543 = vmul.f32 %v4542, %v4098
        %v4544 = vmul.f32 %v4542, %v4099
        %v4545 = vmul.f32 %v4542, %v4100
        %v4549 = vrot.slane %v4543, 2
        %v4550 = vrot.slane %v4544, 2
        %v4551 = vsel %vm590, %v4549, %v4550
        %v4552 = vrot.slane %v4545, 2
        %v4553 = vsel %vm590, %v4550, %v4552
        %4554 = vrot.lane.b32.xlu0 %v4551, 127
        %v4555 = vpop.permute.xlu0 %4554
        %4556 = vrot.lane.b32.xlu0 %v4553, 127
        %v4557 = vpop.permute.xlu0 %4556
        %v4560 = vadd.f32 %v4488, %v4555
        %v4561 = vadd.f32 %v4489, %v4557
        %s4562 = sld [smem:[#allocation4 + $0xf0]]
        %v4563 = vstv %s4562
        %v4564 = vmul.f32 %v4563, %v4098
        %v4565 = vmul.f32 %v4563, %v4099
        %v4566 = vmul.f32 %v4563, %v4100
        %v4570 = vrot.slane %v4564, 2
        %v4571 = vrot.slane %v4565, 2
        %v4572 = vsel %vm590, %v4570, %v4571
        %v4573 = vrot.slane %v4566, 2
        %v4574 = vsel %vm590, %v4571, %v4573
        %4575 = vrot.lane.b32.xlu0 %v4572, 127
        %v4576 = vpop.permute.xlu0 %4575
        %4577 = vrot.lane.b32.xlu0 %v4574, 127
        %v4578 = vpop.permute.xlu0 %4577
        %v4581 = vadd.f32 %v4505, %v4576
        %v4582 = vadd.f32 %v4506, %v4578
        %s4583 = sld [smem:[#allocation4 + $0x114]]
        %v4584 = vstv %s4583
        %v4585 = vmul.f32 %v4584, %v4098
        %v4586 = vmul.f32 %v4584, %v4099
        %v4587 = vmul.f32 %v4584, %v4100
        %v4591 = vrot.slane %v4585, 2
        %v4592 = vrot.slane %v4586, 2
        %v4593 = vsel %vm590, %v4591, %v4592
        %v4594 = vrot.slane %v4587, 2
        %v4595 = vsel %vm590, %v4592, %v4594
        %4596 = vrot.lane.b32.xlu0 %v4593, 127
        %v4597 = vpop.permute.xlu0 %4596
        %4598 = vrot.lane.b32.xlu0 %v4595, 127
        %v4599 = vpop.permute.xlu0 %4598
        %v4602 = vadd.f32 %v4522, %v4597
        %v4603 = vadd.f32 %v4523, %v4599
        %s4604 = sld [smem:[#allocation4 + $0x138]]
        %v4605 = vstv %s4604
        %v4606 = vmul.f32 %v4605, %v4098
        %v4607 = vmul.f32 %v4605, %v4099
        %v4608 = vmul.f32 %v4605, %v4100
        %v4612 = vrot.slane %v4606, 2
        %v4613 = vrot.slane %v4607, 2
        %v4614 = vsel %vm590, %v4612, %v4613
        %v4615 = vrot.slane %v4608, 2
        %v4616 = vsel %vm590, %v4613, %v4615
        %4617 = vrot.lane.b32.xlu0 %v4614, 127
        %v4618 = vpop.permute.xlu0 %4617
        %4619 = vrot.lane.b32.xlu0 %v4616, 127
        %v4620 = vpop.permute.xlu0 %4619
        %v4623 = vadd.f32 %v4539, %v4618
        %v4624 = vadd.f32 %v4540, %v4620
        %s4625 = sld [smem:[#allocation4 + $0xcd]]
        %v4626 = vstv %s4625
        %v4627 = vmul.f32 %v4626, %v4098
        %v4628 = vmul.f32 %v4626, %v4099
        %v4629 = vmul.f32 %v4626, %v4100
        %v4633 = vrot.slane %v4627, 2
        %v4634 = vrot.slane %v4628, 2
        %v4635 = vsel %vm590, %v4633, %v4634
        %v4636 = vrot.slane %v4629, 2
        %v4637 = vsel %vm590, %v4634, %v4636
        %4638 = vrot.lane.b32.xlu0 %v4635, 126
        %v4639 = vpop.permute.xlu0 %4638
        %4640 = vrot.lane.b32.xlu0 %v4637, 126
        %v4641 = vpop.permute.xlu0 %4640
        %v4644 = vadd.f32 %v4560, %v4639
        %v4645 = vadd.f32 %v4561, %v4641
        %s4646 = sld [smem:[#allocation4 + $0xf1]]
        %v4647 = vstv %s4646
        %v4648 = vmul.f32 %v4647, %v4098
        %v4649 = vmul.f32 %v4647, %v4099
        %v4650 = vmul.f32 %v4647, %v4100
        %v4654 = vrot.slane %v4648, 2
        %v4655 = vrot.slane %v4649, 2
        %v4656 = vsel %vm590, %v4654, %v4655
        %v4657 = vrot.slane %v4650, 2
        %v4658 = vsel %vm590, %v4655, %v4657
        %4659 = vrot.lane.b32.xlu0 %v4656, 126
        %v4660 = vpop.permute.xlu0 %4659
        %4661 = vrot.lane.b32.xlu0 %v4658, 126
        %v4662 = vpop.permute.xlu0 %4661
        %v4665 = vadd.f32 %v4581, %v4660
        %v4666 = vadd.f32 %v4582, %v4662
        %s4667 = sld [smem:[#allocation4 + $0x115]]
        %v4668 = vstv %s4667
        %v4669 = vmul.f32 %v4668, %v4098
        %v4670 = vmul.f32 %v4668, %v4099
        %v4671 = vmul.f32 %v4668, %v4100
        %v4675 = vrot.slane %v4669, 2
        %v4676 = vrot.slane %v4670, 2
        %v4677 = vsel %vm590, %v4675, %v4676
        %v4678 = vrot.slane %v4671, 2
        %v4679 = vsel %vm590, %v4676, %v4678
        %4680 = vrot.lane.b32.xlu0 %v4677, 126
        %v4681 = vpop.permute.xlu0 %4680
        %4682 = vrot.lane.b32.xlu0 %v4679, 126
        %v4683 = vpop.permute.xlu0 %4682
        %v4686 = vadd.f32 %v4602, %v4681
        %v4687 = vadd.f32 %v4603, %v4683
        %s4688 = sld [smem:[#allocation4 + $0x139]]
        %v4689 = vstv %s4688
        %v4690 = vmul.f32 %v4689, %v4098
        %v4691 = vmul.f32 %v4689, %v4099
        %v4692 = vmul.f32 %v4689, %v4100
        %v4696 = vrot.slane %v4690, 2
        %v4697 = vrot.slane %v4691, 2
        %v4698 = vsel %vm590, %v4696, %v4697
        %v4699 = vrot.slane %v4692, 2
        %v4700 = vsel %vm590, %v4697, %v4699
        %4701 = vrot.lane.b32.xlu0 %v4698, 126
        %v4702 = vpop.permute.xlu0 %4701
        %4703 = vrot.lane.b32.xlu0 %v4700, 126
        %v4704 = vpop.permute.xlu0 %4703
        %v4707 = vadd.f32 %v4623, %v4702
        %v4708 = vadd.f32 %v4624, %v4704
        %v4709 = vld [vmem:[%s3449] sm:$0xff]
        %v4710 = vld [vmem:[%s3449 + $0x8] sm:$0xff]
        %v4711 = vld [vmem:[%s3449 + $0x10] sm:$0x3]
        %s4712 = sld [smem:[#allocation4 + $0xce]]
        %v4713 = vstv %s4712
        %v4714 = vmul.f32 %v4713, %v4709
        %v4715 = vmul.f32 %v4713, %v4710
        %v4716 = vadd.f32 %v4644, %v4714
        %v4717 = vadd.f32 %v4645, %v4715
        %s4718 = sld [smem:[#allocation4 + $0xf2]]
        %v4719 = vstv %s4718
        %v4720 = vmul.f32 %v4719, %v4709
        %v4721 = vmul.f32 %v4719, %v4710
        %v4722 = vadd.f32 %v4665, %v4720
        %v4723 = vadd.f32 %v4666, %v4721
        %s4724 = sld [smem:[#allocation4 + $0x116]]
        %v4725 = vstv %s4724
        %v4726 = vmul.f32 %v4725, %v4709
        %v4727 = vmul.f32 %v4725, %v4710
        %v4728 = vadd.f32 %v4686, %v4726
        %v4729 = vadd.f32 %v4687, %v4727
        %s4730 = sld [smem:[#allocation4 + $0x13a]]
        %v4731 = vstv %s4730
        %v4732 = vmul.f32 %v4731, %v4709
        %v4733 = vmul.f32 %v4731, %v4710
        %v4734 = vadd.f32 %v4707, %v4732
        %v4735 = vadd.f32 %v4708, %v4733
        %s4736 = sld [smem:[#allocation4 + $0xcf]]
        %v4737 = vstv %s4736
        %v4738 = vmul.f32 %v4737, %v4709
        %v4739 = vmul.f32 %v4737, %v4710
        %4742 = vrot.lane.b32.xlu0 %v4738, 127
        %v4743 = vpop.permute.xlu0 %4742
        %4744 = vrot.lane.b32.xlu0 %v4739, 127
        %v4745 = vpop.permute.xlu0 %4744
        %v4748 = vadd.f32 %v4716, %v4743
        %v4749 = vadd.f32 %v4717, %v4745
        %s4750 = sld [smem:[#allocation4 + $0xf3]]
        %v4751 = vstv %s4750
        %v4752 = vmul.f32 %v4751, %v4709
        %v4753 = vmul.f32 %v4751, %v4710
        %4756 = vrot.lane.b32.xlu0 %v4752, 127
        %v4757 = vpop.permute.xlu0 %4756
        %4758 = vrot.lane.b32.xlu0 %v4753, 127
        %v4759 = vpop.permute.xlu0 %4758
        %v4762 = vadd.f32 %v4722, %v4757
        %v4763 = vadd.f32 %v4723, %v4759
        %s4764 = sld [smem:[#allocation4 + $0x117]]
        %v4765 = vstv %s4764
        %v4766 = vmul.f32 %v4765, %v4709
        %v4767 = vmul.f32 %v4765, %v4710
        %4770 = vrot.lane.b32.xlu0 %v4766, 127
        %v4771 = vpop.permute.xlu0 %4770
        %4772 = vrot.lane.b32.xlu0 %v4767, 127
        %v4773 = vpop.permute.xlu0 %4772
        %v4776 = vadd.f32 %v4728, %v4771
        %v4777 = vadd.f32 %v4729, %v4773
        %s4778 = sld [smem:[#allocation4 + $0x13b]]
        %v4779 = vstv %s4778
        %v4780 = vmul.f32 %v4779, %v4709
        %v4781 = vmul.f32 %v4779, %v4710
        %4784 = vrot.lane.b32.xlu0 %v4780, 127
        %v4785 = vpop.permute.xlu0 %4784
        %4786 = vrot.lane.b32.xlu0 %v4781, 127
        %v4787 = vpop.permute.xlu0 %4786
        %v4790 = vadd.f32 %v4734, %v4785
        %v4791 = vadd.f32 %v4735, %v4787
        %s4792 = sld [smem:[#allocation4 + $0xd0]]
        %v4793 = vstv %s4792
        %v4794 = vmul.f32 %v4793, %v4709
        %v4795 = vmul.f32 %v4793, %v4710
        %4798 = vrot.lane.b32.xlu0 %v4794, 126
        %v4799 = vpop.permute.xlu0 %4798
        %4800 = vrot.lane.b32.xlu0 %v4795, 126
        %v4801 = vpop.permute.xlu0 %4800
        %v4804 = vadd.f32 %v4748, %v4799
        %v4805 = vadd.f32 %v4749, %v4801
        %s4806 = sld [smem:[#allocation4 + $0xf4]]
        %v4807 = vstv %s4806
        %v4808 = vmul.f32 %v4807, %v4709
        %v4809 = vmul.f32 %v4807, %v4710
        %4812 = vrot.lane.b32.xlu0 %v4808, 126
        %v4813 = vpop.permute.xlu0 %4812
        %4814 = vrot.lane.b32.xlu0 %v4809, 126
        %v4815 = vpop.permute.xlu0 %4814
        %v4818 = vadd.f32 %v4762, %v4813
        %v4819 = vadd.f32 %v4763, %v4815
        %s4820 = sld [smem:[#allocation4 + $0x118]]
        %v4821 = vstv %s4820
        %v4822 = vmul.f32 %v4821, %v4709
        %v4823 = vmul.f32 %v4821, %v4710
        %4826 = vrot.lane.b32.xlu0 %v4822, 126
        %v4827 = vpop.permute.xlu0 %4826
        %4828 = vrot.lane.b32.xlu0 %v4823, 126
        %v4829 = vpop.permute.xlu0 %4828
        %v4832 = vadd.f32 %v4776, %v4827
        %v4833 = vadd.f32 %v4777, %v4829
        %s4834 = sld [smem:[#allocation4 + $0x13c]]
        %v4835 = vstv %s4834
        %v4836 = vmul.f32 %v4835, %v4709
        %v4837 = vmul.f32 %v4835, %v4710
        %4840 = vrot.lane.b32.xlu0 %v4836, 126
        %v4841 = vpop.permute.xlu0 %4840
        %4842 = vrot.lane.b32.xlu0 %v4837, 126
        %v4843 = vpop.permute.xlu0 %4842
        %v4846 = vadd.f32 %v4790, %v4841
        %v4847 = vadd.f32 %v4791, %v4843
        %s4848 = sld [smem:[#allocation4 + $0xd1]]
        %v4849 = vstv %s4848
        %v4850 = vmul.f32 %v4849, %v4709
        %v4851 = vmul.f32 %v4849, %v4710
        %v4852 = vmul.f32 %v4849, %v4711
        %v4856 = vrot.slane %v4850, 1
        %v4857 = vrot.slane %v4851, 1
        %v4858 = vsel %vm353, %v4856, %v4857
        %v4859 = vrot.slane %v4852, 1
        %v4860 = vsel %vm353, %v4857, %v4859
        %v4863 = vadd.f32 %v4804, %v4858
        %v4864 = vadd.f32 %v4805, %v4860
        %s4865 = sld [smem:[#allocation4 + $0xf5]]
        %v4866 = vstv %s4865
        %v4867 = vmul.f32 %v4866, %v4709
        %v4868 = vmul.f32 %v4866, %v4710
        %v4869 = vmul.f32 %v4866, %v4711
        %v4873 = vrot.slane %v4867, 1
        %v4874 = vrot.slane %v4868, 1
        %v4875 = vsel %vm353, %v4873, %v4874
        %v4876 = vrot.slane %v4869, 1
        %v4877 = vsel %vm353, %v4874, %v4876
        %v4880 = vadd.f32 %v4818, %v4875
        %v4881 = vadd.f32 %v4819, %v4877
        %s4882 = sld [smem:[#allocation4 + $0x119]]
        %v4883 = vstv %s4882
        %v4884 = vmul.f32 %v4883, %v4709
        %v4885 = vmul.f32 %v4883, %v4710
        %v4886 = vmul.f32 %v4883, %v4711
        %v4890 = vrot.slane %v4884, 1
        %v4891 = vrot.slane %v4885, 1
        %v4892 = vsel %vm353, %v4890, %v4891
        %v4893 = vrot.slane %v4886, 1
        %v4894 = vsel %vm353, %v4891, %v4893
        %v4897 = vadd.f32 %v4832, %v4892
        %v4898 = vadd.f32 %v4833, %v4894
        %s4899 = sld [smem:[#allocation4 + $0x13d]]
        %v4900 = vstv %s4899
        %v4901 = vmul.f32 %v4900, %v4709
        %v4902 = vmul.f32 %v4900, %v4710
        %v4903 = vmul.f32 %v4900, %v4711
        %v4907 = vrot.slane %v4901, 1
        %v4908 = vrot.slane %v4902, 1
        %v4909 = vsel %vm353, %v4907, %v4908
        %v4910 = vrot.slane %v4903, 1
        %v4911 = vsel %vm353, %v4908, %v4910
        %v4914 = vadd.f32 %v4846, %v4909
        %v4915 = vadd.f32 %v4847, %v4911
        %s4916 = sld [smem:[#allocation4 + $0xd2]]
        %v4917 = vstv %s4916
        %v4918 = vmul.f32 %v4917, %v4709
        %v4919 = vmul.f32 %v4917, %v4710
        %v4920 = vmul.f32 %v4917, %v4711
        %v4924 = vrot.slane %v4918, 1
        %v4925 = vrot.slane %v4919, 1
        %v4926 = vsel %vm353, %v4924, %v4925
        %v4927 = vrot.slane %v4920, 1
        %v4928 = vsel %vm353, %v4925, %v4927
        %4929 = vrot.lane.b32.xlu0 %v4926, 127
        %v4930 = vpop.permute.xlu0 %4929
        %4931 = vrot.lane.b32.xlu0 %v4928, 127
        %v4932 = vpop.permute.xlu0 %4931
        %v4935 = vadd.f32 %v4863, %v4930
        %v4936 = vadd.f32 %v4864, %v4932
        %s4937 = sld [smem:[#allocation4 + $0xf6]]
        %v4938 = vstv %s4937
        %v4939 = vmul.f32 %v4938, %v4709
        %v4940 = vmul.f32 %v4938, %v4710
        %v4941 = vmul.f32 %v4938, %v4711
        %v4945 = vrot.slane %v4939, 1
        %v4946 = vrot.slane %v4940, 1
        %v4947 = vsel %vm353, %v4945, %v4946
        %v4948 = vrot.slane %v4941, 1
        %v4949 = vsel %vm353, %v4946, %v4948
        %4950 = vrot.lane.b32.xlu0 %v4947, 127
        %v4951 = vpop.permute.xlu0 %4950
        %4952 = vrot.lane.b32.xlu0 %v4949, 127
        %v4953 = vpop.permute.xlu0 %4952
        %v4956 = vadd.f32 %v4880, %v4951
        %v4957 = vadd.f32 %v4881, %v4953
        %s4958 = sld [smem:[#allocation4 + $0x11a]]
        %v4959 = vstv %s4958
        %v4960 = vmul.f32 %v4959, %v4709
        %v4961 = vmul.f32 %v4959, %v4710
        %v4962 = vmul.f32 %v4959, %v4711
        %v4966 = vrot.slane %v4960, 1
        %v4967 = vrot.slane %v4961, 1
        %v4968 = vsel %vm353, %v4966, %v4967
        %v4969 = vrot.slane %v4962, 1
        %v4970 = vsel %vm353, %v4967, %v4969
        %4971 = vrot.lane.b32.xlu0 %v4968, 127
        %v4972 = vpop.permute.xlu0 %4971
        %4973 = vrot.lane.b32.xlu0 %v4970, 127
        %v4974 = vpop.permute.xlu0 %4973
        %v4977 = vadd.f32 %v4897, %v4972
        %v4978 = vadd.f32 %v4898, %v4974
        %s4979 = sld [smem:[#allocation4 + $0x13e]]
        %v4980 = vstv %s4979
        %v4981 = vmul.f32 %v4980, %v4709
        %v4982 = vmul.f32 %v4980, %v4710
        %v4983 = vmul.f32 %v4980, %v4711
        %v4987 = vrot.slane %v4981, 1
        %v4988 = vrot.slane %v4982, 1
        %v4989 = vsel %vm353, %v4987, %v4988
        %v4990 = vrot.slane %v4983, 1
        %v4991 = vsel %vm353, %v4988, %v4990
        %4992 = vrot.lane.b32.xlu0 %v4989, 127
        %v4993 = vpop.permute.xlu0 %4992
        %4994 = vrot.lane.b32.xlu0 %v4991, 127
        %v4995 = vpop.permute.xlu0 %4994
        %v4998 = vadd.f32 %v4914, %v4993
        %v4999 = vadd.f32 %v4915, %v4995
        %s5000 = sld [smem:[#allocation4 + $0xd3]]
        %v5001 = vstv %s5000
        %v5002 = vmul.f32 %v5001, %v4709
        %v5003 = vmul.f32 %v5001, %v4710
        %v5004 = vmul.f32 %v5001, %v4711
        %v5008 = vrot.slane %v5002, 1
        %v5009 = vrot.slane %v5003, 1
        %v5010 = vsel %vm353, %v5008, %v5009
        %v5011 = vrot.slane %v5004, 1
        %v5012 = vsel %vm353, %v5009, %v5011
        %5013 = vrot.lane.b32.xlu0 %v5010, 126
        %v5014 = vpop.permute.xlu0 %5013
        %5015 = vrot.lane.b32.xlu0 %v5012, 126
        %v5016 = vpop.permute.xlu0 %5015
        %v5019 = vadd.f32 %v4935, %v5014
        %v5020 = vadd.f32 %v4936, %v5016
        %s5021 = sld [smem:[#allocation4 + $0xf7]]
        %v5022 = vstv %s5021
        %v5023 = vmul.f32 %v5022, %v4709
        %v5024 = vmul.f32 %v5022, %v4710
        %v5025 = vmul.f32 %v5022, %v4711
        %v5029 = vrot.slane %v5023, 1
        %v5030 = vrot.slane %v5024, 1
        %v5031 = vsel %vm353, %v5029, %v5030
        %v5032 = vrot.slane %v5025, 1
        %v5033 = vsel %vm353, %v5030, %v5032
        %5034 = vrot.lane.b32.xlu0 %v5031, 126
        %v5035 = vpop.permute.xlu0 %5034
        %5036 = vrot.lane.b32.xlu0 %v5033, 126
        %v5037 = vpop.permute.xlu0 %5036
        %v5040 = vadd.f32 %v4956, %v5035
        %v5041 = vadd.f32 %v4957, %v5037
        %s5042 = sld [smem:[#allocation4 + $0x11b]]
        %v5043 = vstv %s5042
        %v5044 = vmul.f32 %v5043, %v4709
        %v5045 = vmul.f32 %v5043, %v4710
        %v5046 = vmul.f32 %v5043, %v4711
        %v5050 = vrot.slane %v5044, 1
        %v5051 = vrot.slane %v5045, 1
        %v5052 = vsel %vm353, %v5050, %v5051
        %v5053 = vrot.slane %v5046, 1
        %v5054 = vsel %vm353, %v5051, %v5053
        %5055 = vrot.lane.b32.xlu0 %v5052, 126
        %v5056 = vpop.permute.xlu0 %5055
        %5057 = vrot.lane.b32.xlu0 %v5054, 126
        %v5058 = vpop.permute.xlu0 %5057
        %v5061 = vadd.f32 %v4977, %v5056
        %v5062 = vadd.f32 %v4978, %v5058
        %s5063 = sld [smem:[#allocation4 + $0x13f]]
        %v5064 = vstv %s5063
        %v5065 = vmul.f32 %v5064, %v4709
        %v5066 = vmul.f32 %v5064, %v4710
        %v5067 = vmul.f32 %v5064, %v4711
        %v5071 = vrot.slane %v5065, 1
        %v5072 = vrot.slane %v5066, 1
        %v5073 = vsel %vm353, %v5071, %v5072
        %v5074 = vrot.slane %v5067, 1
        %v5075 = vsel %vm353, %v5072, %v5074
        %5076 = vrot.lane.b32.xlu0 %v5073, 126
        %v5077 = vpop.permute.xlu0 %5076
        %5078 = vrot.lane.b32.xlu0 %v5075, 126
        %v5079 = vpop.permute.xlu0 %5078
        %v5082 = vadd.f32 %v4998, %v5077
        %v5083 = vadd.f32 %v4999, %v5079
        %s5084 = sld [smem:[#allocation4 + $0xd4]]
        %v5085 = vstv %s5084
        %v5086 = vmul.f32 %v5085, %v4709
        %v5087 = vmul.f32 %v5085, %v4710
        %v5088 = vmul.f32 %v5085, %v4711
        %v5092 = vrot.slane %v5086, 2
        %v5093 = vrot.slane %v5087, 2
        %v5094 = vsel %vm590, %v5092, %v5093
        %v5095 = vrot.slane %v5088, 2
        %v5096 = vsel %vm590, %v5093, %v5095
        %v5099 = vadd.f32 %v5019, %v5094
        %v5100 = vadd.f32 %v5020, %v5096
        %s5101 = sld [smem:[#allocation4 + $0xf8]]
        %v5102 = vstv %s5101
        %v5103 = vmul.f32 %v5102, %v4709
        %v5104 = vmul.f32 %v5102, %v4710
        %v5105 = vmul.f32 %v5102, %v4711
        %v5109 = vrot.slane %v5103, 2
        %v5110 = vrot.slane %v5104, 2
        %v5111 = vsel %vm590, %v5109, %v5110
        %v5112 = vrot.slane %v5105, 2
        %v5113 = vsel %vm590, %v5110, %v5112
        %v5116 = vadd.f32 %v5040, %v5111
        %v5117 = vadd.f32 %v5041, %v5113
        %s5118 = sld [smem:[#allocation4 + $0x11c]]
        %v5119 = vstv %s5118
        %v5120 = vmul.f32 %v5119, %v4709
        %v5121 = vmul.f32 %v5119, %v4710
        %v5122 = vmul.f32 %v5119, %v4711
        %v5126 = vrot.slane %v5120, 2
        %v5127 = vrot.slane %v5121, 2
        %v5128 = vsel %vm590, %v5126, %v5127
        %v5129 = vrot.slane %v5122, 2
        %v5130 = vsel %vm590, %v5127, %v5129
        %v5133 = vadd.f32 %v5061, %v5128
        %v5134 = vadd.f32 %v5062, %v5130
        %s5135 = sld [smem:[#allocation4 + $0x140]]
        %v5136 = vstv %s5135
        %v5137 = vmul.f32 %v5136, %v4709
        %v5138 = vmul.f32 %v5136, %v4710
        %v5139 = vmul.f32 %v5136, %v4711
        %v5143 = vrot.slane %v5137, 2
        %v5144 = vrot.slane %v5138, 2
        %v5145 = vsel %vm590, %v5143, %v5144
        %v5146 = vrot.slane %v5139, 2
        %v5147 = vsel %vm590, %v5144, %v5146
        %v5150 = vadd.f32 %v5082, %v5145
        %v5151 = vadd.f32 %v5083, %v5147
        %s5152 = sld [smem:[#allocation4 + $0xd5]]
        %v5153 = vstv %s5152
        %v5154 = vmul.f32 %v5153, %v4709
        %v5155 = vmul.f32 %v5153, %v4710
        %v5156 = vmul.f32 %v5153, %v4711
        %v5160 = vrot.slane %v5154, 2
        %v5161 = vrot.slane %v5155, 2
        %v5162 = vsel %vm590, %v5160, %v5161
        %v5163 = vrot.slane %v5156, 2
        %v5164 = vsel %vm590, %v5161, %v5163
        %5165 = vrot.lane.b32.xlu0 %v5162, 127
        %v5166 = vpop.permute.xlu0 %5165
        %5167 = vrot.lane.b32.xlu0 %v5164, 127
        %v5168 = vpop.permute.xlu0 %5167
        %v5171 = vadd.f32 %v5099, %v5166
        %v5172 = vadd.f32 %v5100, %v5168
        %s5173 = sld [smem:[#allocation4 + $0xf9]]
        %v5174 = vstv %s5173
        %v5175 = vmul.f32 %v5174, %v4709
        %v5176 = vmul.f32 %v5174, %v4710
        %v5177 = vmul.f32 %v5174, %v4711
        %v5181 = vrot.slane %v5175, 2
        %v5182 = vrot.slane %v5176, 2
        %v5183 = vsel %vm590, %v5181, %v5182
        %v5184 = vrot.slane %v5177, 2
        %v5185 = vsel %vm590, %v5182, %v5184
        %5186 = vrot.lane.b32.xlu0 %v5183, 127
        %v5187 = vpop.permute.xlu0 %5186
        %5188 = vrot.lane.b32.xlu0 %v5185, 127
        %v5189 = vpop.permute.xlu0 %5188
        %v5192 = vadd.f32 %v5116, %v5187
        %v5193 = vadd.f32 %v5117, %v5189
        %s5194 = sld [smem:[#allocation4 + $0x11d]]
        %v5195 = vstv %s5194
        %v5196 = vmul.f32 %v5195, %v4709
        %v5197 = vmul.f32 %v5195, %v4710
        %v5198 = vmul.f32 %v5195, %v4711
        %v5202 = vrot.slane %v5196, 2
        %v5203 = vrot.slane %v5197, 2
        %v5204 = vsel %vm590, %v5202, %v5203
        %v5205 = vrot.slane %v5198, 2
        %v5206 = vsel %vm590, %v5203, %v5205
        %5207 = vrot.lane.b32.xlu0 %v5204, 127
        %v5208 = vpop.permute.xlu0 %5207
        %5209 = vrot.lane.b32.xlu0 %v5206, 127
        %v5210 = vpop.permute.xlu0 %5209
        %v5213 = vadd.f32 %v5133, %v5208
        %v5214 = vadd.f32 %v5134, %v5210
        %s5215 = sld [smem:[#allocation4 + $0x141]]
        %v5216 = vstv %s5215
        %v5217 = vmul.f32 %v5216, %v4709
        %v5218 = vmul.f32 %v5216, %v4710
        %v5219 = vmul.f32 %v5216, %v4711
        %v5223 = vrot.slane %v5217, 2
        %v5224 = vrot.slane %v5218, 2
        %v5225 = vsel %vm590, %v5223, %v5224
        %v5226 = vrot.slane %v5219, 2
        %v5227 = vsel %vm590, %v5224, %v5226
        %5228 = vrot.lane.b32.xlu0 %v5225, 127
        %v5229 = vpop.permute.xlu0 %5228
        %5230 = vrot.lane.b32.xlu0 %v5227, 127
        %v5231 = vpop.permute.xlu0 %5230
        %v5234 = vadd.f32 %v5150, %v5229
        %v5235 = vadd.f32 %v5151, %v5231
        %s5236 = sld [smem:[#allocation4 + $0xd6]]
        %v5237 = vstv %s5236
        %v5238 = vmul.f32 %v5237, %v4709
        %v5239 = vmul.f32 %v5237, %v4710
        %v5240 = vmul.f32 %v5237, %v4711
        %v5244 = vrot.slane %v5238, 2
        %v5245 = vrot.slane %v5239, 2
        %v5246 = vsel %vm590, %v5244, %v5245
        %v5247 = vrot.slane %v5240, 2
        %v5248 = vsel %vm590, %v5245, %v5247
        %5249 = vrot.lane.b32.xlu0 %v5246, 126
        %v5250 = vpop.permute.xlu0 %5249
        %5251 = vrot.lane.b32.xlu0 %v5248, 126
        %v5252 = vpop.permute.xlu0 %5251
        %v5255 = vadd.f32 %v5171, %v5250
        %v5256 = vadd.f32 %v5172, %v5252
        %s5257 = sld [smem:[#allocation4 + $0xfa]]
        %v5258 = vstv %s5257
        %v5259 = vmul.f32 %v5258, %v4709
        %v5260 = vmul.f32 %v5258, %v4710
        %v5261 = vmul.f32 %v5258, %v4711
        %v5265 = vrot.slane %v5259, 2
        %v5266 = vrot.slane %v5260, 2
        %v5267 = vsel %vm590, %v5265, %v5266
        %v5268 = vrot.slane %v5261, 2
        %v5269 = vsel %vm590, %v5266, %v5268
        %5270 = vrot.lane.b32.xlu0 %v5267, 126
        %v5271 = vpop.permute.xlu0 %5270
        %5272 = vrot.lane.b32.xlu0 %v5269, 126
        %v5273 = vpop.permute.xlu0 %5272
        %v5276 = vadd.f32 %v5192, %v5271
        %v5277 = vadd.f32 %v5193, %v5273
        %s5278 = sld [smem:[#allocation4 + $0x11e]]
        %v5279 = vstv %s5278
        %v5280 = vmul.f32 %v5279, %v4709
        %v5281 = vmul.f32 %v5279, %v4710
        %v5282 = vmul.f32 %v5279, %v4711
        %v5286 = vrot.slane %v5280, 2
        %v5287 = vrot.slane %v5281, 2
        %v5288 = vsel %vm590, %v5286, %v5287
        %v5289 = vrot.slane %v5282, 2
        %v5290 = vsel %vm590, %v5287, %v5289
        %5291 = vrot.lane.b32.xlu0 %v5288, 126
        %v5292 = vpop.permute.xlu0 %5291
        %5293 = vrot.lane.b32.xlu0 %v5290, 126
        %v5294 = vpop.permute.xlu0 %5293
        %v5297 = vadd.f32 %v5213, %v5292
        %v5298 = vadd.f32 %v5214, %v5294
        %s5299 = sld [smem:[#allocation4 + $0x142]]
        %v5300 = vstv %s5299
        %v5301 = vmul.f32 %v5300, %v4709
        %v5302 = vmul.f32 %v5300, %v4710
        %v5303 = vmul.f32 %v5300, %v4711
        %v5307 = vrot.slane %v5301, 2
        %v5308 = vrot.slane %v5302, 2
        %v5309 = vsel %vm590, %v5307, %v5308
        %v5310 = vrot.slane %v5303, 2
        %v5311 = vsel %vm590, %v5308, %v5310
        %5312 = vrot.lane.b32.xlu0 %v5309, 126
        %v5313 = vpop.permute.xlu0 %5312
        %5314 = vrot.lane.b32.xlu0 %v5311, 126
        %v5315 = vpop.permute.xlu0 %5314
        %v5318 = vadd.f32 %v5234, %v5313
        %v5319 = vadd.f32 %v5235, %v5315
        %v5320 = vld [vmem:[%s3475] sm:$0xff]
        %v5321 = vld [vmem:[%s3475 + $0x8] sm:$0xff]
        %v5322 = vld [vmem:[%s3475 + $0x10] sm:$0x3]
        %s5323 = sld [smem:[#allocation4 + $0xd7]]
        %v5324 = vstv %s5323
        %v5325 = vmul.f32 %v5324, %v5320
        %v5326 = vmul.f32 %v5324, %v5321
        %v5327 = vadd.f32 %v5255, %v5325
        %v5328 = vadd.f32 %v5256, %v5326
        %s5329 = sld [smem:[#allocation4 + $0xfb]]
        %v5330 = vstv %s5329
        %v5331 = vmul.f32 %v5330, %v5320
        %v5332 = vmul.f32 %v5330, %v5321
        %v5333 = vadd.f32 %v5276, %v5331
        %v5334 = vadd.f32 %v5277, %v5332
        %s5335 = sld [smem:[#allocation4 + $0x11f]]
        %v5336 = vstv %s5335
        %v5337 = vmul.f32 %v5336, %v5320
        %v5338 = vmul.f32 %v5336, %v5321
        %v5339 = vadd.f32 %v5297, %v5337
        %v5340 = vadd.f32 %v5298, %v5338
        %s5341 = sld [smem:[#allocation4 + $0x143]]
        %v5342 = vstv %s5341
        %v5343 = vmul.f32 %v5342, %v5320
        %v5344 = vmul.f32 %v5342, %v5321
        %v5345 = vadd.f32 %v5318, %v5343
        %v5346 = vadd.f32 %v5319, %v5344
        %s5347 = sld [smem:[#allocation4 + $0xd8]]
        %v5348 = vstv %s5347
        %v5349 = vmul.f32 %v5348, %v5320
        %v5350 = vmul.f32 %v5348, %v5321
        %5353 = vrot.lane.b32.xlu0 %v5349, 127
        %v5354 = vpop.permute.xlu0 %5353
        %5355 = vrot.lane.b32.xlu0 %v5350, 127
        %v5356 = vpop.permute.xlu0 %5355
        %v5359 = vadd.f32 %v5327, %v5354
        %v5360 = vadd.f32 %v5328, %v5356
        %s5361 = sld [smem:[#allocation4 + $0xfc]]
        %v5362 = vstv %s5361
        %v5363 = vmul.f32 %v5362, %v5320
        %v5364 = vmul.f32 %v5362, %v5321
        %5367 = vrot.lane.b32.xlu0 %v5363, 127
        %v5368 = vpop.permute.xlu0 %5367
        %5369 = vrot.lane.b32.xlu0 %v5364, 127
        %v5370 = vpop.permute.xlu0 %5369
        %v5373 = vadd.f32 %v5333, %v5368
        %v5374 = vadd.f32 %v5334, %v5370
        %s5375 = sld [smem:[#allocation4 + $0x120]]
        %v5376 = vstv %s5375
        %v5377 = vmul.f32 %v5376, %v5320
        %v5378 = vmul.f32 %v5376, %v5321
        %5381 = vrot.lane.b32.xlu0 %v5377, 127
        %v5382 = vpop.permute.xlu0 %5381
        %5383 = vrot.lane.b32.xlu0 %v5378, 127
        %v5384 = vpop.permute.xlu0 %5383
        %v5387 = vadd.f32 %v5339, %v5382
        %v5388 = vadd.f32 %v5340, %v5384
        %s5389 = sld [smem:[#allocation4 + $0x144]]
        %v5390 = vstv %s5389
        %v5391 = vmul.f32 %v5390, %v5320
        %v5392 = vmul.f32 %v5390, %v5321
        %5395 = vrot.lane.b32.xlu0 %v5391, 127
        %v5396 = vpop.permute.xlu0 %5395
        %5397 = vrot.lane.b32.xlu0 %v5392, 127
        %v5398 = vpop.permute.xlu0 %5397
        %v5401 = vadd.f32 %v5345, %v5396
        %v5402 = vadd.f32 %v5346, %v5398
        %s5403 = sld [smem:[#allocation4 + $0xd9]]
        %v5404 = vstv %s5403
        %v5405 = vmul.f32 %v5404, %v5320
        %v5406 = vmul.f32 %v5404, %v5321
        %5409 = vrot.lane.b32.xlu0 %v5405, 126
        %v5410 = vpop.permute.xlu0 %5409
        %5411 = vrot.lane.b32.xlu0 %v5406, 126
        %v5412 = vpop.permute.xlu0 %5411
        %v5415 = vadd.f32 %v5359, %v5410
        %v5416 = vadd.f32 %v5360, %v5412
        %s5417 = sld [smem:[#allocation4 + $0xfd]]
        %v5418 = vstv %s5417
        %v5419 = vmul.f32 %v5418, %v5320
        %v5420 = vmul.f32 %v5418, %v5321
        %5423 = vrot.lane.b32.xlu0 %v5419, 126
        %v5424 = vpop.permute.xlu0 %5423
        %5425 = vrot.lane.b32.xlu0 %v5420, 126
        %v5426 = vpop.permute.xlu0 %5425
        %v5429 = vadd.f32 %v5373, %v5424
        %v5430 = vadd.f32 %v5374, %v5426
        %s5431 = sld [smem:[#allocation4 + $0x121]]
        %v5432 = vstv %s5431
        %v5433 = vmul.f32 %v5432, %v5320
        %v5434 = vmul.f32 %v5432, %v5321
        %5437 = vrot.lane.b32.xlu0 %v5433, 126
        %v5438 = vpop.permute.xlu0 %5437
        %5439 = vrot.lane.b32.xlu0 %v5434, 126
        %v5440 = vpop.permute.xlu0 %5439
        %v5443 = vadd.f32 %v5387, %v5438
        %v5444 = vadd.f32 %v5388, %v5440
        %s5445 = sld [smem:[#allocation4 + $0x145]]
        %v5446 = vstv %s5445
        %v5447 = vmul.f32 %v5446, %v5320
        %v5448 = vmul.f32 %v5446, %v5321
        %5451 = vrot.lane.b32.xlu0 %v5447, 126
        %v5452 = vpop.permute.xlu0 %5451
        %5453 = vrot.lane.b32.xlu0 %v5448, 126
        %v5454 = vpop.permute.xlu0 %5453
        %v5457 = vadd.f32 %v5401, %v5452
        %v5458 = vadd.f32 %v5402, %v5454
        %s5459 = sld [smem:[#allocation4 + $0xda]]
        %v5460 = vstv %s5459
        %v5461 = vmul.f32 %v5460, %v5320
        %v5462 = vmul.f32 %v5460, %v5321
        %v5463 = vmul.f32 %v5460, %v5322
        %v5467 = vrot.slane %v5461, 1
        %v5468 = vrot.slane %v5462, 1
        %v5469 = vsel %vm353, %v5467, %v5468
        %v5470 = vrot.slane %v5463, 1
        %v5471 = vsel %vm353, %v5468, %v5470
        %v5474 = vadd.f32 %v5415, %v5469
        %v5475 = vadd.f32 %v5416, %v5471
        %s5476 = sld [smem:[#allocation4 + $0xfe]]
        %v5477 = vstv %s5476
        %v5478 = vmul.f32 %v5477, %v5320
        %v5479 = vmul.f32 %v5477, %v5321
        %v5480 = vmul.f32 %v5477, %v5322
        %v5484 = vrot.slane %v5478, 1
        %v5485 = vrot.slane %v5479, 1
        %v5486 = vsel %vm353, %v5484, %v5485
        %v5487 = vrot.slane %v5480, 1
        %v5488 = vsel %vm353, %v5485, %v5487
        %v5491 = vadd.f32 %v5429, %v5486
        %v5492 = vadd.f32 %v5430, %v5488
        %s5493 = sld [smem:[#allocation4 + $0x122]]
        %v5494 = vstv %s5493
        %v5495 = vmul.f32 %v5494, %v5320
        %v5496 = vmul.f32 %v5494, %v5321
        %v5497 = vmul.f32 %v5494, %v5322
        %v5501 = vrot.slane %v5495, 1
        %v5502 = vrot.slane %v5496, 1
        %v5503 = vsel %vm353, %v5501, %v5502
        %v5504 = vrot.slane %v5497, 1
        %v5505 = vsel %vm353, %v5502, %v5504
        %v5508 = vadd.f32 %v5443, %v5503
        %v5509 = vadd.f32 %v5444, %v5505
        %s5510 = sld [smem:[#allocation4 + $0x146]]
        %v5511 = vstv %s5510
        %v5512 = vmul.f32 %v5511, %v5320
        %v5513 = vmul.f32 %v5511, %v5321
        %v5514 = vmul.f32 %v5511, %v5322
        %v5518 = vrot.slane %v5512, 1
        %v5519 = vrot.slane %v5513, 1
        %v5520 = vsel %vm353, %v5518, %v5519
        %v5521 = vrot.slane %v5514, 1
        %v5522 = vsel %vm353, %v5519, %v5521
        %v5525 = vadd.f32 %v5457, %v5520
        %v5526 = vadd.f32 %v5458, %v5522
        %s5527 = sld [smem:[#allocation4 + $0xdb]]
        %v5528 = vstv %s5527
        %v5529 = vmul.f32 %v5528, %v5320
        %v5530 = vmul.f32 %v5528, %v5321
        %v5531 = vmul.f32 %v5528, %v5322
        %v5535 = vrot.slane %v5529, 1
        %v5536 = vrot.slane %v5530, 1
        %v5537 = vsel %vm353, %v5535, %v5536
        %v5538 = vrot.slane %v5531, 1
        %v5539 = vsel %vm353, %v5536, %v5538
        %5540 = vrot.lane.b32.xlu0 %v5537, 127
        %v5541 = vpop.permute.xlu0 %5540
        %5542 = vrot.lane.b32.xlu0 %v5539, 127
        %v5543 = vpop.permute.xlu0 %5542
        %v5546 = vadd.f32 %v5474, %v5541
        %v5547 = vadd.f32 %v5475, %v5543
        %s5548 = sld [smem:[#allocation4 + $0xff]]
        %v5549 = vstv %s5548
        %v5550 = vmul.f32 %v5549, %v5320
        %v5551 = vmul.f32 %v5549, %v5321
        %v5552 = vmul.f32 %v5549, %v5322
        %v5556 = vrot.slane %v5550, 1
        %v5557 = vrot.slane %v5551, 1
        %v5558 = vsel %vm353, %v5556, %v5557
        %v5559 = vrot.slane %v5552, 1
        %v5560 = vsel %vm353, %v5557, %v5559
        %5561 = vrot.lane.b32.xlu0 %v5558, 127
        %v5562 = vpop.permute.xlu0 %5561
        %5563 = vrot.lane.b32.xlu0 %v5560, 127
        %v5564 = vpop.permute.xlu0 %5563
        %v5567 = vadd.f32 %v5491, %v5562
        %v5568 = vadd.f32 %v5492, %v5564
        %s5569 = sld [smem:[#allocation4 + $0x123]]
        %v5570 = vstv %s5569
        %v5571 = vmul.f32 %v5570, %v5320
        %v5572 = vmul.f32 %v5570, %v5321
        %v5573 = vmul.f32 %v5570, %v5322
        %v5577 = vrot.slane %v5571, 1
        %v5578 = vrot.slane %v5572, 1
        %v5579 = vsel %vm353, %v5577, %v5578
        %v5580 = vrot.slane %v5573, 1
        %v5581 = vsel %vm353, %v5578, %v5580
        %5582 = vrot.lane.b32.xlu0 %v5579, 127
        %v5583 = vpop.permute.xlu0 %5582
        %5584 = vrot.lane.b32.xlu0 %v5581, 127
        %v5585 = vpop.permute.xlu0 %5584
        %v5588 = vadd.f32 %v5508, %v5583
        %v5589 = vadd.f32 %v5509, %v5585
        %s5590 = sld [smem:[#allocation4 + $0x147]]
        %v5591 = vstv %s5590
        %v5592 = vmul.f32 %v5591, %v5320
        %v5593 = vmul.f32 %v5591, %v5321
        %v5594 = vmul.f32 %v5591, %v5322
        %v5598 = vrot.slane %v5592, 1
        %v5599 = vrot.slane %v5593, 1
        %v5600 = vsel %vm353, %v5598, %v5599
        %v5601 = vrot.slane %v5594, 1
        %v5602 = vsel %vm353, %v5599, %v5601
        %5603 = vrot.lane.b32.xlu0 %v5600, 127
        %v5604 = vpop.permute.xlu0 %5603
        %5605 = vrot.lane.b32.xlu0 %v5602, 127
        %v5606 = vpop.permute.xlu0 %5605
        %v5609 = vadd.f32 %v5525, %v5604
        %v5610 = vadd.f32 %v5526, %v5606
        %s5611 = sld [smem:[#allocation4 + $0xdc]]
        %v5612 = vstv %s5611
        %v5613 = vmul.f32 %v5612, %v5320
        %v5614 = vmul.f32 %v5612, %v5321
        %v5615 = vmul.f32 %v5612, %v5322
        %v5619 = vrot.slane %v5613, 1
        %v5620 = vrot.slane %v5614, 1
        %v5621 = vsel %vm353, %v5619, %v5620
        %v5622 = vrot.slane %v5615, 1
        %v5623 = vsel %vm353, %v5620, %v5622
        %5624 = vrot.lane.b32.xlu0 %v5621, 126
        %v5625 = vpop.permute.xlu0 %5624
        %5626 = vrot.lane.b32.xlu0 %v5623, 126
        %v5627 = vpop.permute.xlu0 %5626
        %v5630 = vadd.f32 %v5546, %v5625
        %v5631 = vadd.f32 %v5547, %v5627
        %s5632 = sld [smem:[#allocation4 + $0x100]]
        %v5633 = vstv %s5632
        %v5634 = vmul.f32 %v5633, %v5320
        %v5635 = vmul.f32 %v5633, %v5321
        %v5636 = vmul.f32 %v5633, %v5322
        %v5640 = vrot.slane %v5634, 1
        %v5641 = vrot.slane %v5635, 1
        %v5642 = vsel %vm353, %v5640, %v5641
        %v5643 = vrot.slane %v5636, 1
        %v5644 = vsel %vm353, %v5641, %v5643
        %5645 = vrot.lane.b32.xlu0 %v5642, 126
        %v5646 = vpop.permute.xlu0 %5645
        %5647 = vrot.lane.b32.xlu0 %v5644, 126
        %v5648 = vpop.permute.xlu0 %5647
        %v5651 = vadd.f32 %v5567, %v5646
        %v5652 = vadd.f32 %v5568, %v5648
        %s5653 = sld [smem:[#allocation4 + $0x124]]
        %v5654 = vstv %s5653
        %v5655 = vmul.f32 %v5654, %v5320
        %v5656 = vmul.f32 %v5654, %v5321
        %v5657 = vmul.f32 %v5654, %v5322
        %v5661 = vrot.slane %v5655, 1
        %v5662 = vrot.slane %v5656, 1
        %v5663 = vsel %vm353, %v5661, %v5662
        %v5664 = vrot.slane %v5657, 1
        %v5665 = vsel %vm353, %v5662, %v5664
        %5666 = vrot.lane.b32.xlu0 %v5663, 126
        %v5667 = vpop.permute.xlu0 %5666
        %5668 = vrot.lane.b32.xlu0 %v5665, 126
        %v5669 = vpop.permute.xlu0 %5668
        %v5672 = vadd.f32 %v5588, %v5667
        %v5673 = vadd.f32 %v5589, %v5669
        %s5674 = sld [smem:[#allocation4 + $0x148]]
        %v5675 = vstv %s5674
        %v5676 = vmul.f32 %v5675, %v5320
        %v5677 = vmul.f32 %v5675, %v5321
        %v5678 = vmul.f32 %v5675, %v5322
        %v5682 = vrot.slane %v5676, 1
        %v5683 = vrot.slane %v5677, 1
        %v5684 = vsel %vm353, %v5682, %v5683
        %v5685 = vrot.slane %v5678, 1
        %v5686 = vsel %vm353, %v5683, %v5685
        %5687 = vrot.lane.b32.xlu0 %v5684, 126
        %v5688 = vpop.permute.xlu0 %5687
        %5689 = vrot.lane.b32.xlu0 %v5686, 126
        %v5690 = vpop.permute.xlu0 %5689
        %v5693 = vadd.f32 %v5609, %v5688
        %v5694 = vadd.f32 %v5610, %v5690
        %s5695 = sld [smem:[#allocation4 + $0xdd]]
        %v5696 = vstv %s5695
        %v5697 = vmul.f32 %v5696, %v5320
        %v5698 = vmul.f32 %v5696, %v5321
        %v5699 = vmul.f32 %v5696, %v5322
        %v5703 = vrot.slane %v5697, 2
        %v5704 = vrot.slane %v5698, 2
        %v5705 = vsel %vm590, %v5703, %v5704
        %v5706 = vrot.slane %v5699, 2
        %v5707 = vsel %vm590, %v5704, %v5706
        %v5710 = vadd.f32 %v5630, %v5705
        %v5711 = vadd.f32 %v5631, %v5707
        %s5712 = sld [smem:[#allocation4 + $0x101]]
        %v5713 = vstv %s5712
        %v5714 = vmul.f32 %v5713, %v5320
        %v5715 = vmul.f32 %v5713, %v5321
        %v5716 = vmul.f32 %v5713, %v5322
        %v5720 = vrot.slane %v5714, 2
        %v5721 = vrot.slane %v5715, 2
        %v5722 = vsel %vm590, %v5720, %v5721
        %v5723 = vrot.slane %v5716, 2
        %v5724 = vsel %vm590, %v5721, %v5723
        %v5727 = vadd.f32 %v5651, %v5722
        %v5728 = vadd.f32 %v5652, %v5724
        %s5729 = sld [smem:[#allocation4 + $0x125]]
        %v5730 = vstv %s5729
        %v5731 = vmul.f32 %v5730, %v5320
        %v5732 = vmul.f32 %v5730, %v5321
        %v5733 = vmul.f32 %v5730, %v5322
        %v5737 = vrot.slane %v5731, 2
        %v5738 = vrot.slane %v5732, 2
        %v5739 = vsel %vm590, %v5737, %v5738
        %v5740 = vrot.slane %v5733, 2
        %v5741 = vsel %vm590, %v5738, %v5740
        %v5744 = vadd.f32 %v5672, %v5739
        %v5745 = vadd.f32 %v5673, %v5741
        %s5746 = sld [smem:[#allocation4 + $0x149]]
        %v5747 = vstv %s5746
        %v5748 = vmul.f32 %v5747, %v5320
        %v5749 = vmul.f32 %v5747, %v5321
        %v5750 = vmul.f32 %v5747, %v5322
        %v5754 = vrot.slane %v5748, 2
        %v5755 = vrot.slane %v5749, 2
        %v5756 = vsel %vm590, %v5754, %v5755
        %v5757 = vrot.slane %v5750, 2
        %v5758 = vsel %vm590, %v5755, %v5757
        %v5761 = vadd.f32 %v5693, %v5756
        %v5762 = vadd.f32 %v5694, %v5758
        %s5763 = sld [smem:[#allocation4 + $0xde]]
        %v5764 = vstv %s5763
        %v5765 = vmul.f32 %v5764, %v5320
        %v5766 = vmul.f32 %v5764, %v5321
        %v5767 = vmul.f32 %v5764, %v5322
        %v5771 = vrot.slane %v5765, 2
        %v5772 = vrot.slane %v5766, 2
        %v5773 = vsel %vm590, %v5771, %v5772
        %v5774 = vrot.slane %v5767, 2
        %v5775 = vsel %vm590, %v5772, %v5774
        %5776 = vrot.lane.b32.xlu0 %v5773, 127
        %v5777 = vpop.permute.xlu0 %5776
        %5778 = vrot.lane.b32.xlu0 %v5775, 127
        %v5779 = vpop.permute.xlu0 %5778
        %v5782 = vadd.f32 %v5710, %v5777
        %v5783 = vadd.f32 %v5711, %v5779
        %s5784 = sld [smem:[#allocation4 + $0x102]]
        %v5785 = vstv %s5784
        %v5786 = vmul.f32 %v5785, %v5320
        %v5787 = vmul.f32 %v5785, %v5321
        %v5788 = vmul.f32 %v5785, %v5322
        %v5792 = vrot.slane %v5786, 2
        %v5793 = vrot.slane %v5787, 2
        %v5794 = vsel %vm590, %v5792, %v5793
        %v5795 = vrot.slane %v5788, 2
        %v5796 = vsel %vm590, %v5793, %v5795
        %5797 = vrot.lane.b32.xlu0 %v5794, 127
        %v5798 = vpop.permute.xlu0 %5797
        %5799 = vrot.lane.b32.xlu0 %v5796, 127
        %v5800 = vpop.permute.xlu0 %5799
        %v5803 = vadd.f32 %v5727, %v5798
        %v5804 = vadd.f32 %v5728, %v5800
        %s5805 = sld [smem:[#allocation4 + $0x126]]
        %v5806 = vstv %s5805
        %v5807 = vmul.f32 %v5806, %v5320
        %v5808 = vmul.f32 %v5806, %v5321
        %v5809 = vmul.f32 %v5806, %v5322
        %v5813 = vrot.slane %v5807, 2
        %v5814 = vrot.slane %v5808, 2
        %v5815 = vsel %vm590, %v5813, %v5814
        %v5816 = vrot.slane %v5809, 2
        %v5817 = vsel %vm590, %v5814, %v5816
        %5818 = vrot.lane.b32.xlu0 %v5815, 127
        %v5819 = vpop.permute.xlu0 %5818
        %5820 = vrot.lane.b32.xlu0 %v5817, 127
        %v5821 = vpop.permute.xlu0 %5820
        %v5824 = vadd.f32 %v5744, %v5819
        %v5825 = vadd.f32 %v5745, %v5821
        %s5826 = sld [smem:[#allocation4 + $0x14a]]
        %v5827 = vstv %s5826
        %v5828 = vmul.f32 %v5827, %v5320
        %v5829 = vmul.f32 %v5827, %v5321
        %v5830 = vmul.f32 %v5827, %v5322
        %v5834 = vrot.slane %v5828, 2
        %v5835 = vrot.slane %v5829, 2
        %v5836 = vsel %vm590, %v5834, %v5835
        %v5837 = vrot.slane %v5830, 2
        %v5838 = vsel %vm590, %v5835, %v5837
        %5839 = vrot.lane.b32.xlu0 %v5836, 127
        %v5840 = vpop.permute.xlu0 %5839
        %5841 = vrot.lane.b32.xlu0 %v5838, 127
        %v5842 = vpop.permute.xlu0 %5841
        %v5845 = vadd.f32 %v5761, %v5840
        %v5846 = vadd.f32 %v5762, %v5842
        %s5847 = sld [smem:[#allocation4 + $0xdf]]
        %v5848 = vstv %s5847
        %v5849 = vmul.f32 %v5848, %v5320
        %v5850 = vmul.f32 %v5848, %v5321
        %v5851 = vmul.f32 %v5848, %v5322
        %v5855 = vrot.slane %v5849, 2
        %v5856 = vrot.slane %v5850, 2
        %v5857 = vsel %vm590, %v5855, %v5856
        %v5858 = vrot.slane %v5851, 2
        %v5859 = vsel %vm590, %v5856, %v5858
        %5860 = vrot.lane.b32.xlu0 %v5857, 126
        %v5861 = vpop.permute.xlu0 %5860
        %5862 = vrot.lane.b32.xlu0 %v5859, 126
        %v5863 = vpop.permute.xlu0 %5862
        %v5866 = vadd.f32 %v5782, %v5861
        %v5867 = vadd.f32 %v5783, %v5863
        %s5868 = sld [smem:[#allocation4 + $0x103]]
        %v5869 = vstv %s5868
        %v5870 = vmul.f32 %v5869, %v5320
        %v5871 = vmul.f32 %v5869, %v5321
        %v5872 = vmul.f32 %v5869, %v5322
        %v5876 = vrot.slane %v5870, 2
        %v5877 = vrot.slane %v5871, 2
        %v5878 = vsel %vm590, %v5876, %v5877
        %v5879 = vrot.slane %v5872, 2
        %v5880 = vsel %vm590, %v5877, %v5879
        %5881 = vrot.lane.b32.xlu0 %v5878, 126
        %v5882 = vpop.permute.xlu0 %5881
        %5883 = vrot.lane.b32.xlu0 %v5880, 126
        %v5884 = vpop.permute.xlu0 %5883
        %v5887 = vadd.f32 %v5803, %v5882
        %v5888 = vadd.f32 %v5804, %v5884
        %s5889 = sld [smem:[#allocation4 + $0x127]]
        %v5890 = vstv %s5889
        %v5891 = vmul.f32 %v5890, %v5320
        %v5892 = vmul.f32 %v5890, %v5321
        %v5893 = vmul.f32 %v5890, %v5322
        %v5897 = vrot.slane %v5891, 2
        %v5898 = vrot.slane %v5892, 2
        %v5899 = vsel %vm590, %v5897, %v5898
        %v5900 = vrot.slane %v5893, 2
        %v5901 = vsel %vm590, %v5898, %v5900
        %5902 = vrot.lane.b32.xlu0 %v5899, 126
        %v5903 = vpop.permute.xlu0 %5902
        %5904 = vrot.lane.b32.xlu0 %v5901, 126
        %v5905 = vpop.permute.xlu0 %5904
        %v5908 = vadd.f32 %v5824, %v5903
        %v5909 = vadd.f32 %v5825, %v5905
        %s5910 = sld [smem:[#allocation4 + $0x14b]]
        %v5911 = vstv %s5910
        %v5912 = vmul.f32 %v5911, %v5320
        %v5913 = vmul.f32 %v5911, %v5321
        %v5914 = vmul.f32 %v5911, %v5322
        %v5918 = vrot.slane %v5912, 2
        %v5919 = vrot.slane %v5913, 2
        %v5920 = vsel %vm590, %v5918, %v5919
        %v5921 = vrot.slane %v5914, 2
        %v5922 = vsel %vm590, %v5919, %v5921
        %5923 = vrot.lane.b32.xlu0 %v5920, 126
        %v5924 = vpop.permute.xlu0 %5923
        %5925 = vrot.lane.b32.xlu0 %v5922, 126
        %v5926 = vpop.permute.xlu0 %5925
        %v5929 = vadd.f32 %v5845, %v5924
        %v5930 = vadd.f32 %v5846, %v5926
        %5933 = vrot.lane.b32.xlu0 %v5866, 1
        %v5934 = vpop.permute.xlu0 %5933
        %5935 = vrot.lane.b32.xlu0 %v5867, 1
        %v5936 = vpop.permute.xlu0 %5935
        %v5939 = vsel %vm192, 0.0, %v5934
        %v5940 = vsel %vm192, 0.0, %v5936
        %v5941 = vsel %vm195, %v5939, 0.0
        %v5942 = vsel %vm195, %v5940, 0.0
        %v5945 = vrot.slane %v5941, 7
        %v5946 = vrot.slane %v5942, 7
        %v5947 = vsel %vm200, %v5945, %v5946
        %v5951 = vsel %vm200, 0.0, %v5945
        %v5952 = vsel %vm200, %v5946, 0.0
        %5953 = vst.msk [vmem:[#allocation2] sm:$0xff] %vm841, %v5951
        %5954 = vst.msk [vmem:[#allocation2 + $0x8] sm:$0xff] %vm841, %v5947
        %5955 = vst.msk [vmem:[#allocation2 + $0x10] sm:$0x3] %vm844, %v5952
        %5958 = vrot.lane.b32.xlu0 %v5887, 1
        %v5959 = vpop.permute.xlu0 %5958
        %5960 = vrot.lane.b32.xlu0 %v5888, 1
        %v5961 = vpop.permute.xlu0 %5960
        %v5964 = vsel %vm192, 0.0, %v5959
        %v5965 = vsel %vm192, 0.0, %v5961
        %v5966 = vsel %vm195, %v5964, 0.0
        %v5967 = vsel %vm195, %v5965, 0.0
        %v5970 = vrot.slane %v5966, 7
        %v5971 = vrot.slane %v5967, 7
        %v5972 = vsel %vm200, %v5970, %v5971
        %v5976 = vsel %vm200, 0.0, %v5970
        %v5977 = vsel %vm200, %v5971, 0.0
        %5978 = vst.msk [vmem:[%s868] sm:$0xff] %vm841, %v5976
        %5979 = vst.msk [vmem:[%s868 + $0x8] sm:$0xff] %vm841, %v5972
        %5980 = vst.msk [vmem:[%s868 + $0x10] sm:$0x3] %vm844, %v5977
        %5983 = vrot.lane.b32.xlu0 %v5908, 1
        %v5984 = vpop.permute.xlu0 %5983
        %5985 = vrot.lane.b32.xlu0 %v5909, 1
        %v5986 = vpop.permute.xlu0 %5985
        %v5989 = vsel %vm192, 0.0, %v5984
        %v5990 = vsel %vm192, 0.0, %v5986
        %v5991 = vsel %vm195, %v5989, 0.0
        %v5992 = vsel %vm195, %v5990, 0.0
        %v5995 = vrot.slane %v5991, 7
        %v5996 = vrot.slane %v5992, 7
        %v5997 = vsel %vm200, %v5995, %v5996
        %v6001 = vsel %vm200, 0.0, %v5995
        %v6002 = vsel %vm200, %v5996, 0.0
        %6003 = vst.msk [vmem:[%s894] sm:$0xff] %vm841, %v6001
        %6004 = vst.msk [vmem:[%s894 + $0x8] sm:$0xff] %vm841, %v5997
        %6005 = vst.msk [vmem:[%s894 + $0x10] sm:$0x3] %vm844, %v6002
        %6008 = vrot.lane.b32.xlu0 %v5929, 1
        %v6009 = vpop.permute.xlu0 %6008
        %6010 = vrot.lane.b32.xlu0 %v5930, 1
        %v6011 = vpop.permute.xlu0 %6010
        %v6014 = vsel %vm192, 0.0, %v6009
        %v6015 = vsel %vm192, 0.0, %v6011
        %v6016 = vsel %vm195, %v6014, 0.0
        %v6017 = vsel %vm195, %v6015, 0.0
        %v6020 = vrot.slane %v6016, 7
        %v6021 = vrot.slane %v6017, 7
        %v6022 = vsel %vm200, %v6020, %v6021
        %v6026 = vsel %vm200, 0.0, %v6020
        %v6027 = vsel %vm200, %v6021, 0.0
        %6028 = vst.msk [vmem:[%s920] sm:$0xff] %vm841, %v6026
        %6029 = vst.msk [vmem:[%s920 + $0x8] sm:$0xff] %vm841, %v6022
        %6030 = vst.msk [vmem:[%s920 + $0x10] sm:$0x3] %vm844, %v6027
        %s6031 = sld [smem:[#allocation4 + $0x174]]
        %v6032 = vstv %s6031
        %v6033 = vld [vmem:[#allocation2] sm:$0xff]
        %v6034 = vld [vmem:[#allocation2 + $0x8] sm:$0xff]
        %v6035 = vld [vmem:[#allocation2 + $0x10] sm:$0x3]
        %s6036 = sld [smem:[#allocation4 + $0x150]]
        %v6037 = vstv %s6036
        %v6038 = vmul.f32 %v6037, %v6033
        %v6039 = vmul.f32 %v6037, %v6034
        %v6040 = vadd.f32 %v6032, %v6038
        %v6041 = vadd.f32 %v6032, %v6039
        %s6042 = sld [smem:[#allocation4 + $0x151]]
        %v6043 = vstv %s6042
        %v6044 = vmul.f32 %v6043, %v6033
        %v6045 = vmul.f32 %v6043, %v6034
        %6048 = vrot.lane.b32.xlu0 %v6044, 127
        %v6049 = vpop.permute.xlu0 %6048
        %6050 = vrot.lane.b32.xlu0 %v6045, 127
        %v6051 = vpop.permute.xlu0 %6050
        %v6054 = vadd.f32 %v6040, %v6049
        %v6055 = vadd.f32 %v6041, %v6051
        %s6056 = sld [smem:[#allocation4 + $0x152]]
        %v6057 = vstv %s6056
        %v6058 = vmul.f32 %v6057, %v6033
        %v6059 = vmul.f32 %v6057, %v6034
        %6062 = vrot.lane.b32.xlu0 %v6058, 126
        %v6063 = vpop.permute.xlu0 %6062
        %6064 = vrot.lane.b32.xlu0 %v6059, 126
        %v6065 = vpop.permute.xlu0 %6064
        %v6068 = vadd.f32 %v6054, %v6063
        %v6069 = vadd.f32 %v6055, %v6065
        %s6070 = sld [smem:[#allocation4 + $0x153]]
        %v6071 = vstv %s6070
        %v6072 = vmul.f32 %v6071, %v6033
        %v6073 = vmul.f32 %v6071, %v6034
        %v6074 = vmul.f32 %v6071, %v6035
        %v6078 = vrot.slane %v6072, 1
        %v6079 = vrot.slane %v6073, 1
        %v6080 = vsel %vm353, %v6078, %v6079
        %v6081 = vrot.slane %v6074, 1
        %v6082 = vsel %vm353, %v6079, %v6081
        %v6085 = vadd.f32 %v6068, %v6080
        %v6086 = vadd.f32 %v6069, %v6082
        %s6087 = sld [smem:[#allocation4 + $0x154]]
        %v6088 = vstv %s6087
        %v6089 = vmul.f32 %v6088, %v6033
        %v6090 = vmul.f32 %v6088, %v6034
        %v6091 = vmul.f32 %v6088, %v6035
        %v6095 = vrot.slane %v6089, 1
        %v6096 = vrot.slane %v6090, 1
        %v6097 = vsel %vm353, %v6095, %v6096
        %v6098 = vrot.slane %v6091, 1
        %v6099 = vsel %vm353, %v6096, %v6098
        %6100 = vrot.lane.b32.xlu0 %v6097, 127
        %v6101 = vpop.permute.xlu0 %6100
        %6102 = vrot.lane.b32.xlu0 %v6099, 127
        %v6103 = vpop.permute.xlu0 %6102
        %v6106 = vadd.f32 %v6085, %v6101
        %v6107 = vadd.f32 %v6086, %v6103
        %s6108 = sld [smem:[#allocation4 + $0x155]]
        %v6109 = vstv %s6108
        %v6110 = vmul.f32 %v6109, %v6033
        %v6111 = vmul.f32 %v6109, %v6034
        %v6112 = vmul.f32 %v6109, %v6035
        %v6116 = vrot.slane %v6110, 1
        %v6117 = vrot.slane %v6111, 1
        %v6118 = vsel %vm353, %v6116, %v6117
        %v6119 = vrot.slane %v6112, 1
        %v6120 = vsel %vm353, %v6117, %v6119
        %6121 = vrot.lane.b32.xlu0 %v6118, 126
        %v6122 = vpop.permute.xlu0 %6121
        %6123 = vrot.lane.b32.xlu0 %v6120, 126
        %v6124 = vpop.permute.xlu0 %6123
        %v6127 = vadd.f32 %v6106, %v6122
        %v6128 = vadd.f32 %v6107, %v6124
        %s6129 = sld [smem:[#allocation4 + $0x156]]
        %v6130 = vstv %s6129
        %v6131 = vmul.f32 %v6130, %v6033
        %v6132 = vmul.f32 %v6130, %v6034
        %v6133 = vmul.f32 %v6130, %v6035
        %v6137 = vrot.slane %v6131, 2
        %v6138 = vrot.slane %v6132, 2
        %v6139 = vsel %vm590, %v6137, %v6138
        %v6140 = vrot.slane %v6133, 2
        %v6141 = vsel %vm590, %v6138, %v6140
        %v6144 = vadd.f32 %v6127, %v6139
        %v6145 = vadd.f32 %v6128, %v6141
        %s6146 = sld [smem:[#allocation4 + $0x157]]
        %v6147 = vstv %s6146
        %v6148 = vmul.f32 %v6147, %v6033
        %v6149 = vmul.f32 %v6147, %v6034
        %v6150 = vmul.f32 %v6147, %v6035
        %v6154 = vrot.slane %v6148, 2
        %v6155 = vrot.slane %v6149, 2
        %v6156 = vsel %vm590, %v6154, %v6155
        %v6157 = vrot.slane %v6150, 2
        %v6158 = vsel %vm590, %v6155, %v6157
        %6159 = vrot.lane.b32.xlu0 %v6156, 127
        %v6160 = vpop.permute.xlu0 %6159
        %6161 = vrot.lane.b32.xlu0 %v6158, 127
        %v6162 = vpop.permute.xlu0 %6161
        %v6165 = vadd.f32 %v6144, %v6160
        %v6166 = vadd.f32 %v6145, %v6162
        %s6167 = sld [smem:[#allocation4 + $0x158]]
        %v6168 = vstv %s6167
        %v6169 = vmul.f32 %v6168, %v6033
        %v6170 = vmul.f32 %v6168, %v6034
        %v6171 = vmul.f32 %v6168, %v6035
        %v6175 = vrot.slane %v6169, 2
        %v6176 = vrot.slane %v6170, 2
        %v6177 = vsel %vm590, %v6175, %v6176
        %v6178 = vrot.slane %v6171, 2
        %v6179 = vsel %vm590, %v6176, %v6178
        %6180 = vrot.lane.b32.xlu0 %v6177, 126
        %v6181 = vpop.permute.xlu0 %6180
        %6182 = vrot.lane.b32.xlu0 %v6179, 126
        %v6183 = vpop.permute.xlu0 %6182
        %v6186 = vadd.f32 %v6165, %v6181
        %v6187 = vadd.f32 %v6166, %v6183
        %v6188 = vld [vmem:[%s868] sm:$0xff]
        %v6189 = vld [vmem:[%s868 + $0x8] sm:$0xff]
        %v6190 = vld [vmem:[%s868 + $0x10] sm:$0x3]
        %s6191 = sld [smem:[#allocation4 + $0x159]]
        %v6192 = vstv %s6191
        %v6193 = vmul.f32 %v6192, %v6188
        %v6194 = vmul.f32 %v6192, %v6189
        %v6195 = vadd.f32 %v6186, %v6193
        %v6196 = vadd.f32 %v6187, %v6194
        %s6197 = sld [smem:[#allocation4 + $0x15a]]
        %v6198 = vstv %s6197
        %v6199 = vmul.f32 %v6198, %v6188
        %v6200 = vmul.f32 %v6198, %v6189
        %6203 = vrot.lane.b32.xlu0 %v6199, 127
        %v6204 = vpop.permute.xlu0 %6203
        %6205 = vrot.lane.b32.xlu0 %v6200, 127
        %v6206 = vpop.permute.xlu0 %6205
        %v6209 = vadd.f32 %v6195, %v6204
        %v6210 = vadd.f32 %v6196, %v6206
        %s6211 = sld [smem:[#allocation4 + $0x15b]]
        %v6212 = vstv %s6211
        %v6213 = vmul.f32 %v6212, %v6188
        %v6214 = vmul.f32 %v6212, %v6189
        %6217 = vrot.lane.b32.xlu0 %v6213, 126
        %v6218 = vpop.permute.xlu0 %6217
        %6219 = vrot.lane.b32.xlu0 %v6214, 126
        %v6220 = vpop.permute.xlu0 %6219
        %v6223 = vadd.f32 %v6209, %v6218
        %v6224 = vadd.f32 %v6210, %v6220
        %s6225 = sld [smem:[#allocation4 + $0x15c]]
        %v6226 = vstv %s6225
        %v6227 = vmul.f32 %v6226, %v6188
        %v6228 = vmul.f32 %v6226, %v6189
        %v6229 = vmul.f32 %v6226, %v6190
        %v6233 = vrot.slane %v6227, 1
        %v6234 = vrot.slane %v6228, 1
        %v6235 = vsel %vm353, %v6233, %v6234
        %v6236 = vrot.slane %v6229, 1
        %v6237 = vsel %vm353, %v6234, %v6236
        %v6240 = vadd.f32 %v6223, %v6235
        %v6241 = vadd.f32 %v6224, %v6237
        %s6242 = sld [smem:[#allocation4 + $0x15d]]
        %v6243 = vstv %s6242
        %v6244 = vmul.f32 %v6243, %v6188
        %v6245 = vmul.f32 %v6243, %v6189
        %v6246 = vmul.f32 %v6243, %v6190
        %v6250 = vrot.slane %v6244, 1
        %v6251 = vrot.slane %v6245, 1
        %v6252 = vsel %vm353, %v6250, %v6251
        %v6253 = vrot.slane %v6246, 1
        %v6254 = vsel %vm353, %v6251, %v6253
        %6255 = vrot.lane.b32.xlu0 %v6252, 127
        %v6256 = vpop.permute.xlu0 %6255
        %6257 = vrot.lane.b32.xlu0 %v6254, 127
        %v6258 = vpop.permute.xlu0 %6257
        %v6261 = vadd.f32 %v6240, %v6256
        %v6262 = vadd.f32 %v6241, %v6258
        %s6263 = sld [smem:[#allocation4 + $0x15e]]
        %v6264 = vstv %s6263
        %v6265 = vmul.f32 %v6264, %v6188
        %v6266 = vmul.f32 %v6264, %v6189
        %v6267 = vmul.f32 %v6264, %v6190
        %v6271 = vrot.slane %v6265, 1
        %v6272 = vrot.slane %v6266, 1
        %v6273 = vsel %vm353, %v6271, %v6272
        %v6274 = vrot.slane %v6267, 1
        %v6275 = vsel %vm353, %v6272, %v6274
        %6276 = vrot.lane.b32.xlu0 %v6273, 126
        %v6277 = vpop.permute.xlu0 %6276
        %6278 = vrot.lane.b32.xlu0 %v6275, 126
        %v6279 = vpop.permute.xlu0 %6278
        %v6282 = vadd.f32 %v6261, %v6277
        %v6283 = vadd.f32 %v6262, %v6279
        %s6284 = sld [smem:[#allocation4 + $0x15f]]
        %v6285 = vstv %s6284
        %v6286 = vmul.f32 %v6285, %v6188
        %v6287 = vmul.f32 %v6285, %v6189
        %v6288 = vmul.f32 %v6285, %v6190
        %v6292 = vrot.slane %v6286, 2
        %v6293 = vrot.slane %v6287, 2
        %v6294 = vsel %vm590, %v6292, %v6293
        %v6295 = vrot.slane %v6288, 2
        %v6296 = vsel %vm590, %v6293, %v6295
        %v6299 = vadd.f32 %v6282, %v6294
        %v6300 = vadd.f32 %v6283, %v6296
        %s6301 = sld [smem:[#allocation4 + $0x160]]
        %v6302 = vstv %s6301
        %v6303 = vmul.f32 %v6302, %v6188
        %v6304 = vmul.f32 %v6302, %v6189
        %v6305 = vmul.f32 %v6302, %v6190
        %v6309 = vrot.slane %v6303, 2
        %v6310 = vrot.slane %v6304, 2
        %v6311 = vsel %vm590, %v6309, %v6310
        %v6312 = vrot.slane %v6305, 2
        %v6313 = vsel %vm590, %v6310, %v6312
        %6314 = vrot.lane.b32.xlu0 %v6311, 127
        %v6315 = vpop.permute.xlu0 %6314
        %6316 = vrot.lane.b32.xlu0 %v6313, 127
        %v6317 = vpop.permute.xlu0 %6316
        %v6320 = vadd.f32 %v6299, %v6315
        %v6321 = vadd.f32 %v6300, %v6317
        %s6322 = sld [smem:[#allocation4 + $0x161]]
        %v6323 = vstv %s6322
        %v6324 = vmul.f32 %v6323, %v6188
        %v6325 = vmul.f32 %v6323, %v6189
        %v6326 = vmul.f32 %v6323, %v6190
        %v6330 = vrot.slane %v6324, 2
        %v6331 = vrot.slane %v6325, 2
        %v6332 = vsel %vm590, %v6330, %v6331
        %v6333 = vrot.slane %v6326, 2
        %v6334 = vsel %vm590, %v6331, %v6333
        %6335 = vrot.lane.b32.xlu0 %v6332, 126
        %v6336 = vpop.permute.xlu0 %6335
        %6337 = vrot.lane.b32.xlu0 %v6334, 126
        %v6338 = vpop.permute.xlu0 %6337
        %v6341 = vadd.f32 %v6320, %v6336
        %v6342 = vadd.f32 %v6321, %v6338
        %v6343 = vld [vmem:[%s894] sm:$0xff]
        %v6344 = vld [vmem:[%s894 + $0x8] sm:$0xff]
        %v6345 = vld [vmem:[%s894 + $0x10] sm:$0x3]
        %s6346 = sld [smem:[#allocation4 + $0x162]]
        %v6347 = vstv %s6346
        %v6348 = vmul.f32 %v6347, %v6343
        %v6349 = vmul.f32 %v6347, %v6344
        %v6350 = vadd.f32 %v6341, %v6348
        %v6351 = vadd.f32 %v6342, %v6349
        %s6352 = sld [smem:[#allocation4 + $0x163]]
        %v6353 = vstv %s6352
        %v6354 = vmul.f32 %v6353, %v6343
        %v6355 = vmul.f32 %v6353, %v6344
        %6358 = vrot.lane.b32.xlu0 %v6354, 127
        %v6359 = vpop.permute.xlu0 %6358
        %6360 = vrot.lane.b32.xlu0 %v6355, 127
        %v6361 = vpop.permute.xlu0 %6360
        %v6364 = vadd.f32 %v6350, %v6359
        %v6365 = vadd.f32 %v6351, %v6361
        %s6366 = sld [smem:[#allocation4 + $0x164]]
        %v6367 = vstv %s6366
        %v6368 = vmul.f32 %v6367, %v6343
        %v6369 = vmul.f32 %v6367, %v6344
        %6372 = vrot.lane.b32.xlu0 %v6368, 126
        %v6373 = vpop.permute.xlu0 %6372
        %6374 = vrot.lane.b32.xlu0 %v6369, 126
        %v6375 = vpop.permute.xlu0 %6374
        %v6378 = vadd.f32 %v6364, %v6373
        %v6379 = vadd.f32 %v6365, %v6375
        %s6380 = sld [smem:[#allocation4 + $0x165]]
        %v6381 = vstv %s6380
        %v6382 = vmul.f32 %v6381, %v6343
        %v6383 = vmul.f32 %v6381, %v6344
        %v6384 = vmul.f32 %v6381, %v6345
        %v6388 = vrot.slane %v6382, 1
        %v6389 = vrot.slane %v6383, 1
        %v6390 = vsel %vm353, %v6388, %v6389
        %v6391 = vrot.slane %v6384, 1
        %v6392 = vsel %vm353, %v6389, %v6391
        %v6395 = vadd.f32 %v6378, %v6390
        %v6396 = vadd.f32 %v6379, %v6392
        %s6397 = sld [smem:[#allocation4 + $0x166]]
        %v6398 = vstv %s6397
        %v6399 = vmul.f32 %v6398, %v6343
        %v6400 = vmul.f32 %v6398, %v6344
        %v6401 = vmul.f32 %v6398, %v6345
        %v6405 = vrot.slane %v6399, 1
        %v6406 = vrot.slane %v6400, 1
        %v6407 = vsel %vm353, %v6405, %v6406
        %v6408 = vrot.slane %v6401, 1
        %v6409 = vsel %vm353, %v6406, %v6408
        %6410 = vrot.lane.b32.xlu0 %v6407, 127
        %v6411 = vpop.permute.xlu0 %6410
        %6412 = vrot.lane.b32.xlu0 %v6409, 127
        %v6413 = vpop.permute.xlu0 %6412
        %v6416 = vadd.f32 %v6395, %v6411
        %v6417 = vadd.f32 %v6396, %v6413
        %s6418 = sld [smem:[#allocation4 + $0x167]]
        %v6419 = vstv %s6418
        %v6420 = vmul.f32 %v6419, %v6343
        %v6421 = vmul.f32 %v6419, %v6344
        %v6422 = vmul.f32 %v6419, %v6345
        %v6426 = vrot.slane %v6420, 1
        %v6427 = vrot.slane %v6421, 1
        %v6428 = vsel %vm353, %v6426, %v6427
        %v6429 = vrot.slane %v6422, 1
        %v6430 = vsel %vm353, %v6427, %v6429
        %6431 = vrot.lane.b32.xlu0 %v6428, 126
        %v6432 = vpop.permute.xlu0 %6431
        %6433 = vrot.lane.b32.xlu0 %v6430, 126
        %v6434 = vpop.permute.xlu0 %6433
        %v6437 = vadd.f32 %v6416, %v6432
        %v6438 = vadd.f32 %v6417, %v6434
        %s6439 = sld [smem:[#allocation4 + $0x168]]
        %v6440 = vstv %s6439
        %v6441 = vmul.f32 %v6440, %v6343
        %v6442 = vmul.f32 %v6440, %v6344
        %v6443 = vmul.f32 %v6440, %v6345
        %v6447 = vrot.slane %v6441, 2
        %v6448 = vrot.slane %v6442, 2
        %v6449 = vsel %vm590, %v6447, %v6448
        %v6450 = vrot.slane %v6443, 2
        %v6451 = vsel %vm590, %v6448, %v6450
        %v6454 = vadd.f32 %v6437, %v6449
        %v6455 = vadd.f32 %v6438, %v6451
        %s6456 = sld [smem:[#allocation4 + $0x169]]
        %v6457 = vstv %s6456
        %v6458 = vmul.f32 %v6457, %v6343
        %v6459 = vmul.f32 %v6457, %v6344
        %v6460 = vmul.f32 %v6457, %v6345
        %v6464 = vrot.slane %v6458, 2
        %v6465 = vrot.slane %v6459, 2
        %v6466 = vsel %vm590, %v6464, %v6465
        %v6467 = vrot.slane %v6460, 2
        %v6468 = vsel %vm590, %v6465, %v6467
        %6469 = vrot.lane.b32.xlu0 %v6466, 127
        %v6470 = vpop.permute.xlu0 %6469
        %6471 = vrot.lane.b32.xlu0 %v6468, 127
        %v6472 = vpop.permute.xlu0 %6471
        %v6475 = vadd.f32 %v6454, %v6470
        %v6476 = vadd.f32 %v6455, %v6472
        %s6477 = sld [smem:[#allocation4 + $0x16a]]
        %v6478 = vstv %s6477
        %v6479 = vmul.f32 %v6478, %v6343
        %v6480 = vmul.f32 %v6478, %v6344
        %v6481 = vmul.f32 %v6478, %v6345
        %v6485 = vrot.slane %v6479, 2
        %v6486 = vrot.slane %v6480, 2
        %v6487 = vsel %vm590, %v6485, %v6486
        %v6488 = vrot.slane %v6481, 2
        %v6489 = vsel %vm590, %v6486, %v6488
        %6490 = vrot.lane.b32.xlu0 %v6487, 126
        %v6491 = vpop.permute.xlu0 %6490
        %6492 = vrot.lane.b32.xlu0 %v6489, 126
        %v6493 = vpop.permute.xlu0 %6492
        %v6496 = vadd.f32 %v6475, %v6491
        %v6497 = vadd.f32 %v6476, %v6493
        %v6498 = vld [vmem:[%s920] sm:$0xff]
        %v6499 = vld [vmem:[%s920 + $0x8] sm:$0xff]
        %v6500 = vld [vmem:[%s920 + $0x10] sm:$0x3]
        %s6501 = sld [smem:[#allocation4 + $0x16b]]
        %v6502 = vstv %s6501
        %v6503 = vmul.f32 %v6502, %v6498
        %v6504 = vmul.f32 %v6502, %v6499
        %v6505 = vadd.f32 %v6496, %v6503
        %v6506 = vadd.f32 %v6497, %v6504
        %s6507 = sld [smem:[#allocation4 + $0x16c]]
        %v6508 = vstv %s6507
        %v6509 = vmul.f32 %v6508, %v6498
        %v6510 = vmul.f32 %v6508, %v6499
        %6513 = vrot.lane.b32.xlu0 %v6509, 127
        %v6514 = vpop.permute.xlu0 %6513
        %6515 = vrot.lane.b32.xlu0 %v6510, 127
        %v6516 = vpop.permute.xlu0 %6515
        %v6519 = vadd.f32 %v6505, %v6514
        %v6520 = vadd.f32 %v6506, %v6516
        %s6521 = sld [smem:[#allocation4 + $0x16d]]
        %v6522 = vstv %s6521
        %v6523 = vmul.f32 %v6522, %v6498
        %v6524 = vmul.f32 %v6522, %v6499
        %6527 = vrot.lane.b32.xlu0 %v6523, 126
        %v6528 = vpop.permute.xlu0 %6527
        %6529 = vrot.lane.b32.xlu0 %v6524, 126
        %v6530 = vpop.permute.xlu0 %6529
        %v6533 = vadd.f32 %v6519, %v6528
        %v6534 = vadd.f32 %v6520, %v6530
        %s6535 = sld [smem:[#allocation4 + $0x16e]]
        %v6536 = vstv %s6535
        %v6537 = vmul.f32 %v6536, %v6498
        %v6538 = vmul.f32 %v6536, %v6499
        %v6539 = vmul.f32 %v6536, %v6500
        %v6543 = vrot.slane %v6537, 1
        %v6544 = vrot.slane %v6538, 1
        %v6545 = vsel %vm353, %v6543, %v6544
        %v6546 = vrot.slane %v6539, 1
        %v6547 = vsel %vm353, %v6544, %v6546
        %v6550 = vadd.f32 %v6533, %v6545
        %v6551 = vadd.f32 %v6534, %v6547
        %s6552 = sld [smem:[#allocation4 + $0x16f]]
        %v6553 = vstv %s6552
        %v6554 = vmul.f32 %v6553, %v6498
        %v6555 = vmul.f32 %v6553, %v6499
        %v6556 = vmul.f32 %v6553, %v6500
        %v6560 = vrot.slane %v6554, 1
        %v6561 = vrot.slane %v6555, 1
        %v6562 = vsel %vm353, %v6560, %v6561
        %v6563 = vrot.slane %v6556, 1
        %v6564 = vsel %vm353, %v6561, %v6563
        %6565 = vrot.lane.b32.xlu0 %v6562, 127
        %v6566 = vpop.permute.xlu0 %6565
        %6567 = vrot.lane.b32.xlu0 %v6564, 127
        %v6568 = vpop.permute.xlu0 %6567
        %v6571 = vadd.f32 %v6550, %v6566
        %v6572 = vadd.f32 %v6551, %v6568
        %s6573 = sld [smem:[#allocation4 + $0x170]]
        %v6574 = vstv %s6573
        %v6575 = vmul.f32 %v6574, %v6498
        %v6576 = vmul.f32 %v6574, %v6499
        %v6577 = vmul.f32 %v6574, %v6500
        %v6581 = vrot.slane %v6575, 1
        %v6582 = vrot.slane %v6576, 1
        %v6583 = vsel %vm353, %v6581, %v6582
        %v6584 = vrot.slane %v6577, 1
        %v6585 = vsel %vm353, %v6582, %v6584
        %6586 = vrot.lane.b32.xlu0 %v6583, 126
        %v6587 = vpop.permute.xlu0 %6586
        %6588 = vrot.lane.b32.xlu0 %v6585, 126
        %v6589 = vpop.permute.xlu0 %6588
        %v6592 = vadd.f32 %v6571, %v6587
        %v6593 = vadd.f32 %v6572, %v6589
        %s6594 = sld [smem:[#allocation4 + $0x171]]
        %v6595 = vstv %s6594
        %v6596 = vmul.f32 %v6595, %v6498
        %v6597 = vmul.f32 %v6595, %v6499
        %v6598 = vmul.f32 %v6595, %v6500
        %v6602 = vrot.slane %v6596, 2
        %v6603 = vrot.slane %v6597, 2
        %v6604 = vsel %vm590, %v6602, %v6603
        %v6605 = vrot.slane %v6598, 2
        %v6606 = vsel %vm590, %v6603, %v6605
        %v6609 = vadd.f32 %v6592, %v6604
        %v6610 = vadd.f32 %v6593, %v6606
        %s6611 = sld [smem:[#allocation4 + $0x172]]
        %v6612 = vstv %s6611
        %v6613 = vmul.f32 %v6612, %v6498
        %v6614 = vmul.f32 %v6612, %v6499
        %v6615 = vmul.f32 %v6612, %v6500
        %v6619 = vrot.slane %v6613, 2
        %v6620 = vrot.slane %v6614, 2
        %v6621 = vsel %vm590, %v6619, %v6620
        %v6622 = vrot.slane %v6615, 2
        %v6623 = vsel %vm590, %v6620, %v6622
        %6624 = vrot.lane.b32.xlu0 %v6621, 127
        %v6625 = vpop.permute.xlu0 %6624
        %6626 = vrot.lane.b32.xlu0 %v6623, 127
        %v6627 = vpop.permute.xlu0 %6626
        %v6630 = vadd.f32 %v6609, %v6625
        %v6631 = vadd.f32 %v6610, %v6627
        %s6632 = sld [smem:[#allocation4 + $0x173]]
        %v6633 = vstv %s6632
        %v6634 = vmul.f32 %v6633, %v6498
        %v6635 = vmul.f32 %v6633, %v6499
        %v6636 = vmul.f32 %v6633, %v6500
        %v6640 = vrot.slane %v6634, 2
        %v6641 = vrot.slane %v6635, 2
        %v6642 = vsel %vm590, %v6640, %v6641
        %v6643 = vrot.slane %v6636, 2
        %v6644 = vsel %vm590, %v6641, %v6643
        %6645 = vrot.lane.b32.xlu0 %v6642, 126
        %v6646 = vpop.permute.xlu0 %6645
        %6647 = vrot.lane.b32.xlu0 %v6644, 126
        %v6648 = vpop.permute.xlu0 %6647
        %v6651 = vadd.f32 %v6630, %v6646
        %v6652 = vadd.f32 %v6631, %v6648
        %vm6653 = vcmask 130048
        %6654 = vst.msk [vmem:[%s173] sm:$0xff] %vm6653, %v6651
        %6655 = vst.msk [vmem:[%s173 + $0x8] sm:$0xff] %vm6653, %v6652
        %s6656 = sand.u32 %s75, 1
        %s6657 = scalar_lea.sflag [#allocation6], %s6656
        %s6658 = sand.u32 %s75, 1
        %s6659 = smul.addr %s6658, 16
        %s6660 = scalar_lea.vmem [#allocation9], %s6659
        // Predicated region
        $region37: #{tpu_custom_call.1} parent=27 // pred_check
          %p6661 = pneg %p85
        $region38: #{tpu_custom_call.1} parent=27 // pred_check_branch
          %6663 = sbr.rel (%p6661) target = $region40
        $region39: #{tpu_custom_call.1} parent=27 // pred_region
          %s6665 = ssub.s32 256, 256
          %6666 = vsyncadd %s6657, %s6665
          %s6667 = smul.addr %s20, 2
          %s6668 = smul.addr %s6667, 128
          %s6669 = scalar_lea.hbm %s2, %s6668
          %s6670 = sshll.u32 %s6660, 4
          %s6671 = int_to_ptr.vmem [resolvable:$true] %s6670
          %6676 = dma.vmem_to_hbm [thread:$0]  %s6671, 256, %s6669, %s6657, 128, 128, 8
        $region40: #{tpu_custom_call.1} parent=27 // pred_fallthru
          _
      $region28: #{tpu_custom_call.1} parent=5 // pred_fallthru
        _
      %p6677 = scmp.le.s32.totalorder 2, %s15
      // Predicated region
      $region41: #{tpu_custom_call.1} parent=5 // pred_check
        %p6678 = pneg %p6677
      $region42: #{tpu_custom_call.1} parent=5 // pred_check_branch
        %6680 = sbr.rel (%p6678) target = $region44
      $region43: #{tpu_custom_call.1} parent=5 // pred_region
        %s6681 = ssub.s32 %s15, 2
        // Predicated region
        $region45: #{tpu_custom_call.1} parent=43 // pred_check
          %p6682 = pneg %p91
        $region46: #{tpu_custom_call.1} parent=43 // pred_check_branch
          %6684 = sbr.rel (%p6682) target = $region48
        $region47: #{tpu_custom_call.1} parent=43 // pred_region
          %s6685 = sand.u32 %s76, 1
          %s6686 = scalar_lea.sflag [#allocation6], %s6685
          %s6687 = sand.u32 %s76, 1
          %s6688 = smul.addr %s6687, 16
          %s6689 = scalar_lea.vmem [#allocation9], %s6688
          %6690 = dma.done %s6686, 256
        $region48: #{tpu_custom_call.1} parent=43 // pred_fallthru
          _
      $region44: #{tpu_custom_call.1} parent=5 // pred_fallthru
        _
    $region6: #{tpu_custom_call.1} parent=1 // loop_footer
      %s19 = sadd.s32 1, %s15
    $region7: #{tpu_custom_call.1} parent=1 // loop_footer_branch
      %14 = sbr.rel target = $region3
    $region8: #{tpu_custom_call.1} parent=1 // loop_exit
      _
    %6691 = vsyncpa [#allocation5], 1
    %s6692 = scalar_lea.sflag [#allocation5], 1
    %6693 = vsyncpa %s6692, 1
    %6694 = vsyncpa [#allocation6], 1
    %s6695 = scalar_lea.sflag [#allocation6], 1
    %6696 = vsyncpa %s6695, 1
    %6697 = vsyncpa [#allocation7], 1
    %s6698 = scalar_lea.sflag [#allocation7], 1
    %6699 = vsyncpa %s6698, 1

</llo_original>
